<compile_context>
chip_gen: v7x
topology: tpu7x:2x2x1
jax: 0.10.0
libtpu: 0.0.40
codegen_flags: <defaults>
</compile_context>

<pallas_src>
import functools

import jax
import jax.numpy as jnp
from jax.experimental import pallas as pl

# ----------------------------- configuration --------------------------------
BATCH = 2
SEQ = 8
HIDDEN1 = 32      # hidden_size1 (embed dim)
HIDDEN2 = 16      # hidden_size2
NUM_HEADS = 4
NUM_LAYERS = 2
OUT_FEATURES = 8
EPS = 1e-5        # PyTorch LayerNorm default eps


# ------------------------------ kernel helpers -------------------------------
def _layer_norm(x, g, b):
    # PyTorch LayerNorm: biased variance over the last dim.
    mean = jnp.mean(x, axis=-1, keepdims=True)
    var = jnp.mean(jnp.square(x - mean), axis=-1, keepdims=True)
    return (x - mean) * jax.lax.rsqrt(var + EPS) * g + b


# ------------------------------- fused kernel --------------------------------
def bert_kernel(x_ref, vecs_ref, bqkv_ref, wqkv_ref, wo_ref, wmats_ref, out_ref, *,
                num_layers, num_heads, batch, seq, hidden):
    nh = num_heads
    hd = hidden // nh

    vecs = vecs_ref[...].astype(jnp.float32)        # (R, hidden) row-vector slab
    bqkv = bqkv_ref[...].astype(jnp.float32)        # (L*3*nh, hd) per-head qkv biases

    def vrow(r):                                    # static sublane slice -> (1, hidden)
        return vecs[r:r + 1, :]

    def brow(r):                                    # static sublane slice -> (1, hd)
        return bqkv[r:r + 1, :]

    # whole batch folded into sublanes: (B*S, H)
    x = x_ref[...].astype(jnp.float32)
    x = _layer_norm(x, vrow(0), vrow(1))            # initial LayerNorm

    for l in range(num_layers):
        vb = 2 + 6 * l
        b_out, g1, be1, b_ff, g2, be2 = (vrow(vb + i) for i in range(6))

        # ---- multi-head self-attention ----
        # per-head projections over the whole batch, per-batch (S,S) softmax blocks,
        # output projection accumulated per head (no lane concat of heads).
        attn_blocks = [None] * batch
        for h in range(nh):
            iq = (l * 3 + 0) * nh + h
            ik = (l * 3 + 1) * nh + h
            iv = (l * 3 + 2) * nh + h
            q = jnp.dot(x, wqkv_ref[iq], preferred_element_type=jnp.float32) + brow(iq)
            k = jnp.dot(x, wqkv_ref[ik], preferred_element_type=jnp.float32) + brow(ik)
            v = jnp.dot(x, wqkv_ref[iv], preferred_element_type=jnp.float32) + brow(iv)
            wo = wo_ref[l * nh + h]                 # (hd, hidden) row-block of out-proj

            for b in range(batch):
                sl = slice(b * seq, (b + 1) * seq)  # sublane-aligned (seq == 8)
                s = jnp.dot(q[sl], k[sl].T, preferred_element_type=jnp.float32)   # (S, S)
                s = s - jnp.max(s, axis=-1, keepdims=True)
                p = jnp.exp(s)
                p = p * pl.reciprocal(jnp.sum(p, axis=-1, keepdims=True))          # exact
                ctx = jnp.dot(p, v[sl], preferred_element_type=jnp.float32)        # (S, hd)
                delta = jnp.dot(ctx, wo, preferred_element_type=jnp.float32)       # (S, H)
                attn_blocks[b] = delta if attn_blocks[b] is None else attn_blocks[b] + delta

        attn = jnp.concatenate(attn_blocks, axis=0)  # (B*S, H), sublane-aligned concat

        # AddNorm1 (dropout identity in eval) -> FF -> AddNorm2
        y1 = _layer_norm(x + attn + b_out, g1, be1)
        y2 = jnp.dot(y1, wmats_ref[l], preferred_element_type=jnp.float32) + b_ff
        x = _layer_norm(y1 + y2, g2, be2)

    # ---- head: [CLS] rows + two linears on zero-padded (H, H) weights ----
    hb = 2 + 6 * num_layers
    b1p, b2p = vrow(hb), vrow(hb + 1)                # zero-padded to width H
    # B is tiny (2 rows); concat of aligned single-row slices is cheap here.
    vec = jnp.concatenate([x[b * seq:b * seq + 1, :] for b in range(batch)], axis=0)  # (B, H)
    h1 = jnp.dot(vec, wmats_ref[num_layers], preferred_element_type=jnp.float32) + b1p
    out = jnp.dot(h1, wmats_ref[num_layers + 1], preferred_element_type=jnp.float32) + b2p
    # single lane-packed output slab: [:, :H] = vec, [:, H:H+out_features] = head output
    out_ref[...] = jnp.concatenate([vec, out], axis=-1).astype(out_ref.dtype)


# ------------------------------- wrapper --------------------------------------
def bert_forward(x, params, num_heads=NUM_HEADS):
    bsz, seq, hid = x.shape
    num_layers = len(params["blocks"])
    hidden2 = params["w1"].shape[1]
    out_features = params["w2"].shape[1]
    nh = num_heads
    assert hid % nh == 0
    hd = hid // nh
    assert hidden2 <= hid and out_features <= hid
    scale = 1.0 / float(hd) ** 0.5
    f32 = jnp.float32

    x2d = x.reshape(bsz * seq, hid)

    # --- slab 1: every (1, hid) row vector, indexed by static row offset in-kernel ---
    rows = [params["norm_g"].reshape(1, hid), params["norm_b"].reshape(1, hid)]
    for blk in params["blocks"]:
        rows += [blk["b_out"].reshape(1, hid), blk["g1"].reshape(1, hid),
                 blk["be1"].reshape(1, hid), blk["b_ff"].reshape(1, hid),
                 blk["g2"].reshape(1, hid), blk["be2"].reshape(1, hid)]
    rows.append(jnp.zeros((1, hid), f32).at[0, :hidden2].set(params["b1"].reshape(-1)))
    rows.append(jnp.zeros((1, hid), f32).at[0, :out_features].set(params["b2"].reshape(-1)))
    vecs = jnp.concatenate(rows, axis=0)                      # (2 + 6L + 2, hid)

    # --- slabs 2-4: per-head QKV weights/biases (scale folded into Q) and out-proj rows ---
    wq_blocks, bq_blocks, wo_blocks = [], [], []
    for blk in params["blocks"]:
        w3 = blk["w_in"].reshape(hid, 3, nh, hd).astype(f32)   # cols: (proj, head, dim)
        w3 = w3.at[:, 0].multiply(scale)                       # fold 1/sqrt(hd) into Q
        wq_blocks.append(jnp.transpose(w3, (1, 2, 0, 3)).reshape(3 * nh, hid, hd))
        b3 = blk["b_in"].reshape(3, nh, hd).astype(f32)
        b3 = b3.at[0].multiply(scale)
        bq_blocks.append(b3.reshape(3 * nh, hd))
        wo_blocks.append(blk["w_out"].reshape(nh, hd, hid).astype(f32))
    wqkv = jnp.concatenate(wq_blocks, axis=0)                  # (L*3*nh, hid, hd)
    bqkv = jnp.concatenate(bq_blocks, axis=0)                  # (L*3*nh, hd)
    wo_all = jnp.concatenate(wo_blocks, axis=0)                # (L*nh, hd, hid)

    # --- slab 5: (hid, hid) dense mats: per-layer FF + zero-padded head linears ---
    mats = [blk["w_ff"].astype(f32) for blk in params["blocks"]]
    mats.append(jnp.zeros((hid, hid), f32).at[:, :hidden2].set(params["w1"]))
    mats.append(jnp.zeros((hid, hid), f32).at[:hidden2, :out_features].set(params["w2"]))
    wmats = jnp.stack(mats, axis=0)                            # (L+2, hid, hid)

    kern = functools.partial(bert_kernel, num_layers=num_layers, num_heads=nh,
                             batch=bsz, seq=seq, hidden=hid)

    # Grid-less, everything resident in VMEM (total footprint << 1 MiB).
    # TODO(synk): add a "parallel" batch/seq grid axis for v7x dual-TC once shapes grow.
    slab = pl.pallas_call(
        kern,
        out_shape=jax.ShapeDtypeStruct((bsz, 2 * hid), x.dtype),
    )(x2d, vecs, bqkv, wqkv, wo_all, wmats)

    vec = slab[:, :hid]
    output = slab[:, hid:hid + out_features]
    return vec, output


# ------------------------------ parameter init --------------------------------
def init_params(key, hidden1, hidden2, num_layers, out_features):
    keys = jax.random.split(key, num_layers + 1)
    params = {
        "norm_g": jnp.ones((hidden1,), jnp.float32),
        "norm_b": jnp.zeros((hidden1,), jnp.float32),
        "blocks": [],
    }
    for i in range(num_layers):
        ks = jax.random.split(keys[i], 6)
        # Weights stored as (in_dim, out_dim) == torch weight transposed.
        params["blocks"].append({
            "w_in": 0.02 * jax.random.normal(ks[0], (hidden1, 3 * hidden1), jnp.float32),
            "b_in": 0.02 * jax.random.normal(ks[1], (1, 3 * hidden1), jnp.float32),
            "w_out": 0.02 * jax.random.normal(ks[2], (hidden1, hidden1), jnp.float32),
            "b_out": 0.02 * jax.random.normal(ks[3], (1, hidden1), jnp.float32),
            "g1": jnp.ones((1, hidden1), jnp.float32),
            "be1": jnp.zeros((1, hidden1), jnp.float32),
            "w_ff": 0.02 * jax.random.normal(ks[4], (hidden1, hidden1), jnp.float32),
            "b_ff": 0.02 * jax.random.normal(ks[5], (1, hidden1), jnp.float32),
            "g2": jnp.ones((1, hidden1), jnp.float32),
            "be2": jnp.zeros((1, hidden1), jnp.float32),
        })
    k1, k2, k3, k4 = jax.random.split(keys[num_layers], 4)
    params["w1"] = 0.02 * jax.random.normal(k1, (hidden1, hidden2), jnp.float32)
    params["b1"] = 0.02 * jax.random.normal(k2, (hidden2,), jnp.float32)
    params["w2"] = 0.02 * jax.random.normal(k3, (hidden2, out_features), jnp.float32)
    params["b2"] = 0.02 * jax.random.normal(k4, (out_features,), jnp.float32)
    return params


# ----------------------------------- main --------------------------------------
if __name__ == "__main__":
    key = jax.random.PRNGKey(0)
    kx, kp = jax.random.split(key)
    x = jax.random.normal(kx, (BATCH, SEQ, HIDDEN1), jnp.float32)
    params = init_params(kp, HIDDEN1, HIDDEN2, NUM_LAYERS, OUT_FEATURES)

    fwd = jax.jit(bert_forward)
    vec, output = fwd(x, params)
    jax.block_until_ready(vec)
    jax.block_until_ready(output)

    assert vec.shape == (BATCH, HIDDEN1)
    assert output.shape == (BATCH, OUT_FEATURES)
    print("KERNEL_OK")
</pallas_src>

<mosaic_0001>
module attributes {stable_mosaic.version = 11 : i64} {
  func.func @bert_kernel(%arg0: memref<16x32xf32, #tpu.memory_space<vmem>>, %arg1: memref<16x32xf32, #tpu.memory_space<vmem>>, %arg2: memref<24x8xf32, #tpu.memory_space<vmem>>, %arg3: memref<24x32x8xf32, #tpu.memory_space<vmem>>, %arg4: memref<8x8x32xf32, #tpu.memory_space<vmem>>, %arg5: memref<4x32x32xf32, #tpu.memory_space<vmem>>, %arg6: memref<2x64xf32, #tpu.memory_space<vmem>>) attributes {dimension_semantics = [], scalar_prefetch = 0 : i64, scratch_operands = 0 : i64, tpu.core_type = #tpu.core_type<tc>} {
    %c0 = arith.constant 0 : index
    %c0_0 = arith.constant 0 : index
    %0 = vector.load %arg1[%c0, %c0_0] : memref<16x32xf32, #tpu.memory_space<vmem>>, vector<16x32xf32>
    %c0_1 = arith.constant 0 : index
    %c0_2 = arith.constant 0 : index
    %1 = vector.load %arg2[%c0_1, %c0_2] : memref<24x8xf32, #tpu.memory_space<vmem>>, vector<24x8xf32>
    %c0_3 = arith.constant 0 : index
    %c0_4 = arith.constant 0 : index
    %2 = vector.load %arg0[%c0_3, %c0_4] : memref<16x32xf32, #tpu.memory_space<vmem>>, vector<16x32xf32>
    %3 = vector.extract_strided_slice %0 {offsets = [0, 0], sizes = [1, 32], strides = [1, 1]} : vector<16x32xf32> to vector<1x32xf32>
    %4 = vector.extract_strided_slice %0 {offsets = [1, 0], sizes = [1, 32], strides = [1, 1]} : vector<16x32xf32> to vector<1x32xf32>
    %cst = arith.constant dense<0.000000e+00> : vector<16xf32>
    %5 = vector.multi_reduction <add>, %2, %cst [1] : vector<16x32xf32> to vector<16xf32>
    %6 = vector.shape_cast %5 : vector<16xf32> to vector<16x1xf32>
    %cst_5 = arith.constant 3.200000e+01 : f32
    %7 = vector.broadcast %cst_5 : f32 to vector<16x1xf32>
    %8 = arith.divf %6, %7 : vector<16x1xf32>
    %9 = vector.broadcast %8 : vector<16x1xf32> to vector<16x32xf32>
    %10 = arith.subf %2, %9 : vector<16x32xf32>
    %11 = arith.mulf %10, %10 : vector<16x32xf32>
    %cst_6 = arith.constant dense<0.000000e+00> : vector<16xf32>
    %12 = vector.multi_reduction <add>, %11, %cst_6 [1] : vector<16x32xf32> to vector<16xf32>
    %13 = vector.shape_cast %12 : vector<16xf32> to vector<16x1xf32>
    %cst_7 = arith.constant 3.200000e+01 : f32
    %14 = vector.broadcast %cst_7 : f32 to vector<16x1xf32>
    %15 = arith.divf %13, %14 : vector<16x1xf32>
    %16 = vector.broadcast %8 : vector<16x1xf32> to vector<16x32xf32>
    %17 = arith.subf %2, %16 : vector<16x32xf32>
    %cst_8 = arith.constant 9.99999974E-6 : f32
    %18 = vector.broadcast %cst_8 : f32 to vector<16x1xf32>
    %19 = arith.addf %15, %18 : vector<16x1xf32>
    %20 = math.rsqrt %19 : vector<16x1xf32>
    %21 = vector.broadcast %20 : vector<16x1xf32> to vector<16x32xf32>
    %22 = arith.mulf %17, %21 : vector<16x32xf32>
    %23 = vector.broadcast %3 : vector<1x32xf32> to vector<16x32xf32>
    %24 = arith.mulf %22, %23 : vector<16x32xf32>
    %25 = vector.broadcast %4 : vector<1x32xf32> to vector<16x32xf32>
    %26 = arith.addf %24, %25 : vector<16x32xf32>
    %27 = vector.extract_strided_slice %0 {offsets = [2, 0], sizes = [1, 32], strides = [1, 1]} : vector<16x32xf32> to vector<1x32xf32>
    %28 = vector.extract_strided_slice %0 {offsets = [3, 0], sizes = [1, 32], strides = [1, 1]} : vector<16x32xf32> to vector<1x32xf32>
    %29 = vector.extract_strided_slice %0 {offsets = [4, 0], sizes = [1, 32], strides = [1, 1]} : vector<16x32xf32> to vector<1x32xf32>
    %30 = vector.extract_strided_slice %0 {offsets = [5, 0], sizes = [1, 32], strides = [1, 1]} : vector<16x32xf32> to vector<1x32xf32>
    %31 = vector.extract_strided_slice %0 {offsets = [6, 0], sizes = [1, 32], strides = [1, 1]} : vector<16x32xf32> to vector<1x32xf32>
    %32 = vector.extract_strided_slice %0 {offsets = [7, 0], sizes = [1, 32], strides = [1, 1]} : vector<16x32xf32> to vector<1x32xf32>
    %c0_9 = arith.constant 0 : index
    %c0_10 = arith.constant 0 : index
    %c0_11 = arith.constant 0 : index
    %33 = vector.load %arg3[%c0_9, %c0_10, %c0_11] : memref<24x32x8xf32, #tpu.memory_space<vmem>>, vector<1x32x8xf32>
    %34 = vector.shape_cast %33 : vector<1x32x8xf32> to vector<32x8xf32>
    %cst_12 = arith.constant dense<0.000000e+00> : vector<16x8xf32>
    %35 = tpu.matmul %26, %34, %cst_12 {dimension_numbers = #tpu.dot_dimension_numbers<[1], [0], [0], [1], [0, 0, 1, 1], [], []>} : vector<16x32xf32>, vector<32x8xf32>, vector<16x8xf32> -> vector<16x8xf32>
    %36 = vector.extract_strided_slice %1 {offsets = [0, 0], sizes = [1, 8], strides = [1, 1]} : vector<24x8xf32> to vector<1x8xf32>
    %37 = vector.broadcast %36 : vector<1x8xf32> to vector<16x8xf32>
    %38 = arith.addf %35, %37 : vector<16x8xf32>
    %c4 = arith.constant 4 : index
    %c0_13 = arith.constant 0 : index
    %c0_14 = arith.constant 0 : index
    %39 = vector.load %arg3[%c4, %c0_13, %c0_14] : memref<24x32x8xf32, #tpu.memory_space<vmem>>, vector<1x32x8xf32>
    %40 = vector.shape_cast %39 : vector<1x32x8xf32> to vector<32x8xf32>
    %cst_15 = arith.constant dense<0.000000e+00> : vector<16x8xf32>
    %41 = tpu.matmul %26, %40, %cst_15 {dimension_numbers = #tpu.dot_dimension_numbers<[1], [0], [0], [1], [0, 0, 1, 1], [], []>} : vector<16x32xf32>, vector<32x8xf32>, vector<16x8xf32> -> vector<16x8xf32>
    %42 = vector.extract_strided_slice %1 {offsets = [4, 0], sizes = [1, 8], strides = [1, 1]} : vector<24x8xf32> to vector<1x8xf32>
    %43 = vector.broadcast %42 : vector<1x8xf32> to vector<16x8xf32>
    %44 = arith.addf %41, %43 : vector<16x8xf32>
    %c8 = arith.constant 8 : index
    %c0_16 = arith.constant 0 : index
    %c0_17 = arith.constant 0 : index
    %45 = vector.load %arg3[%c8, %c0_16, %c0_17] : memref<24x32x8xf32, #tpu.memory_space<vmem>>, vector<1x32x8xf32>
    %46 = vector.shape_cast %45 : vector<1x32x8xf32> to vector<32x8xf32>
    %cst_18 = arith.constant dense<0.000000e+00> : vector<16x8xf32>
    %47 = tpu.matmul %26, %46, %cst_18 {dimension_numbers = #tpu.dot_dimension_numbers<[1], [0], [0], [1], [0, 0, 1, 1], [], []>} : vector<16x32xf32>, vector<32x8xf32>, vector<16x8xf32> -> vector<16x8xf32>
    %48 = vector.extract_strided_slice %1 {offsets = [8, 0], sizes = [1, 8], strides = [1, 1]} : vector<24x8xf32> to vector<1x8xf32>
    %49 = vector.broadcast %48 : vector<1x8xf32> to vector<16x8xf32>
    %50 = arith.addf %47, %49 : vector<16x8xf32>
    %c0_19 = arith.constant 0 : index
    %c0_20 = arith.constant 0 : index
    %c0_21 = arith.constant 0 : index
    %51 = vector.load %arg4[%c0_19, %c0_20, %c0_21] : memref<8x8x32xf32, #tpu.memory_space<vmem>>, vector<1x8x32xf32>
    %52 = vector.shape_cast %51 : vector<1x8x32xf32> to vector<8x32xf32>
    %53 = vector.extract_strided_slice %38 {offsets = [0, 0], sizes = [8, 8], strides = [1, 1]} : vector<16x8xf32> to vector<8x8xf32>
    %54 = vector.extract_strided_slice %44 {offsets = [0, 0], sizes = [8, 8], strides = [1, 1]} : vector<16x8xf32> to vector<8x8xf32>
    %55 = tpu.transpose %54, [1, 0] : vector<8x8xf32> -> vector<8x8xf32>
    %cst_22 = arith.constant dense<0.000000e+00> : vector<8x8xf32>
    %56 = tpu.matmul %53, %55, %cst_22 {dimension_numbers = #tpu.dot_dimension_numbers<[1], [0], [0], [1], [0, 0, 1, 1], [], []>} : vector<8x8xf32>, vector<8x8xf32>, vector<8x8xf32> -> vector<8x8xf32>
    %cst_23 = arith.constant dense<0xFF800000> : vector<8xf32>
    %57 = vector.multi_reduction <maximumf>, %56, %cst_23 [1] : vector<8x8xf32> to vector<8xf32>
    %58 = vector.shape_cast %57 : vector<8xf32> to vector<8x1xf32>
    %59 = vector.broadcast %58 : vector<8x1xf32> to vector<8x8xf32>
    %60 = arith.subf %56, %59 : vector<8x8xf32>
    %61 = math.exp %60 : vector<8x8xf32>
    %cst_24 = arith.constant dense<0.000000e+00> : vector<8xf32>
    %62 = vector.multi_reduction <add>, %61, %cst_24 [1] : vector<8x8xf32> to vector<8xf32>
    %63 = vector.shape_cast %62 : vector<8xf32> to vector<8x1xf32>
    %64 = tpu.reciprocal %63 : vector<8x1xf32> -> vector<8x1xf32>
    %65 = vector.broadcast %64 : vector<8x1xf32> to vector<8x8xf32>
    %66 = arith.mulf %61, %65 : vector<8x8xf32>
    %67 = vector.extract_strided_slice %50 {offsets = [0, 0], sizes = [8, 8], strides = [1, 1]} : vector<16x8xf32> to vector<8x8xf32>
    %cst_25 = arith.constant dense<0.000000e+00> : vector<8x8xf32>
    %68 = tpu.matmul %66, %67, %cst_25 {dimension_numbers = #tpu.dot_dimension_numbers<[1], [0], [0], [1], [0, 0, 1, 1], [], []>} : vector<8x8xf32>, vector<8x8xf32>, vector<8x8xf32> -> vector<8x8xf32>
    %cst_26 = arith.constant dense<0.000000e+00> : vector<8x32xf32>
    %69 = tpu.matmul %68, %52, %cst_26 {dimension_numbers = #tpu.dot_dimension_numbers<[1], [0], [0], [1], [0, 0, 1, 1], [], []>} : vector<8x8xf32>, vector<8x32xf32>, vector<8x32xf32> -> vector<8x32xf32>
    %70 = vector.extract_strided_slice %38 {offsets = [8, 0], sizes = [8, 8], strides = [1, 1]} : vector<16x8xf32> to vector<8x8xf32>
    %71 = vector.extract_strided_slice %44 {offsets = [8, 0], sizes = [8, 8], strides = [1, 1]} : vector<16x8xf32> to vector<8x8xf32>
    %72 = tpu.transpose %71, [1, 0] : vector<8x8xf32> -> vector<8x8xf32>
    %cst_27 = arith.constant dense<0.000000e+00> : vector<8x8xf32>
    %73 = tpu.matmul %70, %72, %cst_27 {dimension_numbers = #tpu.dot_dimension_numbers<[1], [0], [0], [1], [0, 0, 1, 1], [], []>} : vector<8x8xf32>, vector<8x8xf32>, vector<8x8xf32> -> vector<8x8xf32>
    %cst_28 = arith.constant dense<0xFF800000> : vector<8xf32>
    %74 = vector.multi_reduction <maximumf>, %73, %cst_28 [1] : vector<8x8xf32> to vector<8xf32>
    %75 = vector.shape_cast %74 : vector<8xf32> to vector<8x1xf32>
    %76 = vector.broadcast %75 : vector<8x1xf32> to vector<8x8xf32>
    %77 = arith.subf %73, %76 : vector<8x8xf32>
    %78 = math.exp %77 : vector<8x8xf32>
    %cst_29 = arith.constant dense<0.000000e+00> : vector<8xf32>
    %79 = vector.multi_reduction <add>, %78, %cst_29 [1] : vector<8x8xf32> to vector<8xf32>
    %80 = vector.shape_cast %79 : vector<8xf32> to vector<8x1xf32>
    %81 = tpu.reciprocal %80 : vector<8x1xf32> -> vector<8x1xf32>
    %82 = vector.broadcast %81 : vector<8x1xf32> to vector<8x8xf32>
    %83 = arith.mulf %78, %82 : vector<8x8xf32>
    %84 = vector.extract_strided_slice %50 {offsets = [8, 0], sizes = [8, 8], strides = [1, 1]} : vector<16x8xf32> to vector<8x8xf32>
    %cst_30 = arith.constant dense<0.000000e+00> : vector<8x8xf32>
    %85 = tpu.matmul %83, %84, %cst_30 {dimension_numbers = #tpu.dot_dimension_numbers<[1], [0], [0], [1], [0, 0, 1, 1], [], []>} : vector<8x8xf32>, vector<8x8xf32>, vector<8x8xf32> -> vector<8x8xf32>
    %cst_31 = arith.constant dense<0.000000e+00> : vector<8x32xf32>
    %86 = tpu.matmul %85, %52, %cst_31 {dimension_numbers = #tpu.dot_dimension_numbers<[1], [0], [0], [1], [0, 0, 1, 1], [], []>} : vector<8x8xf32>, vector<8x32xf32>, vector<8x32xf32> -> vector<8x32xf32>
    %c1 = arith.constant 1 : index
    %c0_32 = arith.constant 0 : index
    %c0_33 = arith.constant 0 : index
    %87 = vector.load %arg3[%c1, %c0_32, %c0_33] : memref<24x32x8xf32, #tpu.memory_space<vmem>>, vector<1x32x8xf32>
    %88 = vector.shape_cast %87 : vector<1x32x8xf32> to vector<32x8xf32>
    %cst_34 = arith.constant dense<0.000000e+00> : vector<16x8xf32>
    %89 = tpu.matmul %26, %88, %cst_34 {dimension_numbers = #tpu.dot_dimension_numbers<[1], [0], [0], [1], [0, 0, 1, 1], [], []>} : vector<16x32xf32>, vector<32x8xf32>, vector<16x8xf32> -> vector<16x8xf32>
    %90 = vector.extract_strided_slice %1 {offsets = [1, 0], sizes = [1, 8], strides = [1, 1]} : vector<24x8xf32> to vector<1x8xf32>
    %91 = vector.broadcast %90 : vector<1x8xf32> to vector<16x8xf32>
    %92 = arith.addf %89, %91 : vector<16x8xf32>
    %c5 = arith.constant 5 : index
    %c0_35 = arith.constant 0 : index
    %c0_36 = arith.constant 0 : index
    %93 = vector.load %arg3[%c5, %c0_35, %c0_36] : memref<24x32x8xf32, #tpu.memory_space<vmem>>, vector<1x32x8xf32>
    %94 = vector.shape_cast %93 : vector<1x32x8xf32> to vector<32x8xf32>
    %cst_37 = arith.constant dense<0.000000e+00> : vector<16x8xf32>
    %95 = tpu.matmul %26, %94, %cst_37 {dimension_numbers = #tpu.dot_dimension_numbers<[1], [0], [0], [1], [0, 0, 1, 1], [], []>} : vector<16x32xf32>, vector<32x8xf32>, vector<16x8xf32> -> vector<16x8xf32>
    %96 = vector.extract_strided_slice %1 {offsets = [5, 0], sizes = [1, 8], strides = [1, 1]} : vector<24x8xf32> to vector<1x8xf32>
    %97 = vector.broadcast %96 : vector<1x8xf32> to vector<16x8xf32>
    %98 = arith.addf %95, %97 : vector<16x8xf32>
    %c9 = arith.constant 9 : index
    %c0_38 = arith.constant 0 : index
    %c0_39 = arith.constant 0 : index
    %99 = vector.load %arg3[%c9, %c0_38, %c0_39] : memref<24x32x8xf32, #tpu.memory_space<vmem>>, vector<1x32x8xf32>
    %100 = vector.shape_cast %99 : vector<1x32x8xf32> to vector<32x8xf32>
    %cst_40 = arith.constant dense<0.000000e+00> : vector<16x8xf32>
    %101 = tpu.matmul %26, %100, %cst_40 {dimension_numbers = #tpu.dot_dimension_numbers<[1], [0], [0], [1], [0, 0, 1, 1], [], []>} : vector<16x32xf32>, vector<32x8xf32>, vector<16x8xf32> -> vector<16x8xf32>
    %102 = vector.extract_strided_slice %1 {offsets = [9, 0], sizes = [1, 8], strides = [1, 1]} : vector<24x8xf32> to vector<1x8xf32>
    %103 = vector.broadcast %102 : vector<1x8xf32> to vector<16x8xf32>
    %104 = arith.addf %101, %103 : vector<16x8xf32>
    %c1_41 = arith.constant 1 : index
    %c0_42 = arith.constant 0 : index
    %c0_43 = arith.constant 0 : index
    %105 = vector.load %arg4[%c1_41, %c0_42, %c0_43] : memref<8x8x32xf32, #tpu.memory_space<vmem>>, vector<1x8x32xf32>
    %106 = vector.shape_cast %105 : vector<1x8x32xf32> to vector<8x32xf32>
    %107 = vector.extract_strided_slice %92 {offsets = [0, 0], sizes = [8, 8], strides = [1, 1]} : vector<16x8xf32> to vector<8x8xf32>
    %108 = vector.extract_strided_slice %98 {offsets = [0, 0], sizes = [8, 8], strides = [1, 1]} : vector<16x8xf32> to vector<8x8xf32>
    %109 = tpu.transpose %108, [1, 0] : vector<8x8xf32> -> vector<8x8xf32>
    %cst_44 = arith.constant dense<0.000000e+00> : vector<8x8xf32>
    %110 = tpu.matmul %107, %109, %cst_44 {dimension_numbers = #tpu.dot_dimension_numbers<[1], [0], [0], [1], [0, 0, 1, 1], [], []>} : vector<8x8xf32>, vector<8x8xf32>, vector<8x8xf32> -> vector<8x8xf32>
    %cst_45 = arith.constant dense<0xFF800000> : vector<8xf32>
    %111 = vector.multi_reduction <maximumf>, %110, %cst_45 [1] : vector<8x8xf32> to vector<8xf32>
    %112 = vector.shape_cast %111 : vector<8xf32> to vector<8x1xf32>
    %113 = vector.broadcast %112 : vector<8x1xf32> to vector<8x8xf32>
    %114 = arith.subf %110, %113 : vector<8x8xf32>
    %115 = math.exp %114 : vector<8x8xf32>
    %cst_46 = arith.constant dense<0.000000e+00> : vector<8xf32>
    %116 = vector.multi_reduction <add>, %115, %cst_46 [1] : vector<8x8xf32> to vector<8xf32>
    %117 = vector.shape_cast %116 : vector<8xf32> to vector<8x1xf32>
    %118 = tpu.reciprocal %117 : vector<8x1xf32> -> vector<8x1xf32>
    %119 = vector.broadcast %118 : vector<8x1xf32> to vector<8x8xf32>
    %120 = arith.mulf %115, %119 : vector<8x8xf32>
    %121 = vector.extract_strided_slice %104 {offsets = [0, 0], sizes = [8, 8], strides = [1, 1]} : vector<16x8xf32> to vector<8x8xf32>
    %cst_47 = arith.constant dense<0.000000e+00> : vector<8x8xf32>
    %122 = tpu.matmul %120, %121, %cst_47 {dimension_numbers = #tpu.dot_dimension_numbers<[1], [0], [0], [1], [0, 0, 1, 1], [], []>} : vector<8x8xf32>, vector<8x8xf32>, vector<8x8xf32> -> vector<8x8xf32>
    %cst_48 = arith.constant dense<0.000000e+00> : vector<8x32xf32>
    %123 = tpu.matmul %122, %106, %cst_48 {dimension_numbers = #tpu.dot_dimension_numbers<[1], [0], [0], [1], [0, 0, 1, 1], [], []>} : vector<8x8xf32>, vector<8x32xf32>, vector<8x32xf32> -> vector<8x32xf32>
    %124 = arith.addf %69, %123 : vector<8x32xf32>
    %125 = vector.extract_strided_slice %92 {offsets = [8, 0], sizes = [8, 8], strides = [1, 1]} : vector<16x8xf32> to vector<8x8xf32>
    %126 = vector.extract_strided_slice %98 {offsets = [8, 0], sizes = [8, 8], strides = [1, 1]} : vector<16x8xf32> to vector<8x8xf32>
    %127 = tpu.transpose %126, [1, 0] : vector<8x8xf32> -> vector<8x8xf32>
    %cst_49 = arith.constant dense<0.000000e+00> : vector<8x8xf32>
    %128 = tpu.matmul %125, %127, %cst_49 {dimension_numbers = #tpu.dot_dimension_numbers<[1], [0], [0], [1], [0, 0, 1, 1], [], []>} : vector<8x8xf32>, vector<8x8xf32>, vector<8x8xf32> -> vector<8x8xf32>
    %cst_50 = arith.constant dense<0xFF800000> : vector<8xf32>
    %129 = vector.multi_reduction <maximumf>, %128, %cst_50 [1] : vector<8x8xf32> to vector<8xf32>
    %130 = vector.shape_cast %129 : vector<8xf32> to vector<8x1xf32>
    %131 = vector.broadcast %130 : vector<8x1xf32> to vector<8x8xf32>
    %132 = arith.subf %128, %131 : vector<8x8xf32>
    %133 = math.exp %132 : vector<8x8xf32>
    %cst_51 = arith.constant dense<0.000000e+00> : vector<8xf32>
    %134 = vector.multi_reduction <add>, %133, %cst_51 [1] : vector<8x8xf32> to vector<8xf32>
    %135 = vector.shape_cast %134 : vector<8xf32> to vector<8x1xf32>
    %136 = tpu.reciprocal %135 : vector<8x1xf32> -> vector<8x1xf32>
    %137 = vector.broadcast %136 : vector<8x1xf32> to vector<8x8xf32>
    %138 = arith.mulf %133, %137 : vector<8x8xf32>
    %139 = vector.extract_strided_slice %104 {offsets = [8, 0], sizes = [8, 8], strides = [1, 1]} : vector<16x8xf32> to vector<8x8xf32>
    %cst_52 = arith.constant dense<0.000000e+00> : vector<8x8xf32>
    %140 = tpu.matmul %138, %139, %cst_52 {dimension_numbers = #tpu.dot_dimension_numbers<[1], [0], [0], [1], [0, 0, 1, 1], [], []>} : vector<8x8xf32>, vector<8x8xf32>, vector<8x8xf32> -> vector<8x8xf32>
    %cst_53 = arith.constant dense<0.000000e+00> : vector<8x32xf32>
    %141 = tpu.matmul %140, %106, %cst_53 {dimension_numbers = #tpu.dot_dimension_numbers<[1], [0], [0], [1], [0, 0, 1, 1], [], []>} : vector<8x8xf32>, vector<8x32xf32>, vector<8x32xf32> -> vector<8x32xf32>
    %142 = arith.addf %86, %141 : vector<8x32xf32>
    %c2 = arith.constant 2 : index
    %c0_54 = arith.constant 0 : index
    %c0_55 = arith.constant 0 : index
    %143 = vector.load %arg3[%c2, %c0_54, %c0_55] : memref<24x32x8xf32, #tpu.memory_space<vmem>>, vector<1x32x8xf32>
    %144 = vector.shape_cast %143 : vector<1x32x8xf32> to vector<32x8xf32>
    %cst_56 = arith.constant dense<0.000000e+00> : vector<16x8xf32>
    %145 = tpu.matmul %26, %144, %cst_56 {dimension_numbers = #tpu.dot_dimension_numbers<[1], [0], [0], [1], [0, 0, 1, 1], [], []>} : vector<16x32xf32>, vector<32x8xf32>, vector<16x8xf32> -> vector<16x8xf32>
    %146 = vector.extract_strided_slice %1 {offsets = [2, 0], sizes = [1, 8], strides = [1, 1]} : vector<24x8xf32> to vector<1x8xf32>
    %147 = vector.broadcast %146 : vector<1x8xf32> to vector<16x8xf32>
    %148 = arith.addf %145, %147 : vector<16x8xf32>
    %c6 = arith.constant 6 : index
    %c0_57 = arith.constant 0 : index
    %c0_58 = arith.constant 0 : index
    %149 = vector.load %arg3[%c6, %c0_57, %c0_58] : memref<24x32x8xf32, #tpu.memory_space<vmem>>, vector<1x32x8xf32>
    %150 = vector.shape_cast %149 : vector<1x32x8xf32> to vector<32x8xf32>
    %cst_59 = arith.constant dense<0.000000e+00> : vector<16x8xf32>
    %151 = tpu.matmul %26, %150, %cst_59 {dimension_numbers = #tpu.dot_dimension_numbers<[1], [0], [0], [1], [0, 0, 1, 1], [], []>} : vector<16x32xf32>, vector<32x8xf32>, vector<16x8xf32> -> vector<16x8xf32>
    %152 = vector.extract_strided_slice %1 {offsets = [6, 0], sizes = [1, 8], strides = [1, 1]} : vector<24x8xf32> to vector<1x8xf32>
    %153 = vector.broadcast %152 : vector<1x8xf32> to vector<16x8xf32>
    %154 = arith.addf %151, %153 : vector<16x8xf32>
    %c10 = arith.constant 10 : index
    %c0_60 = arith.constant 0 : index
    %c0_61 = arith.constant 0 : index
    %155 = vector.load %arg3[%c10, %c0_60, %c0_61] : memref<24x32x8xf32, #tpu.memory_space<vmem>>, vector<1x32x8xf32>
    %156 = vector.shape_cast %155 : vector<1x32x8xf32> to vector<32x8xf32>
    %cst_62 = arith.constant dense<0.000000e+00> : vector<16x8xf32>
    %157 = tpu.matmul %26, %156, %cst_62 {dimension_numbers = #tpu.dot_dimension_numbers<[1], [0], [0], [1], [0, 0, 1, 1], [], []>} : vector<16x32xf32>, vector<32x8xf32>, vector<16x8xf32> -> vector<16x8xf32>
    %158 = vector.extract_strided_slice %1 {offsets = [10, 0], sizes = [1, 8], strides = [1, 1]} : vector<24x8xf32> to vector<1x8xf32>
    %159 = vector.broadcast %158 : vector<1x8xf32> to vector<16x8xf32>
    %160 = arith.addf %157, %159 : vector<16x8xf32>
    %c2_63 = arith.constant 2 : index
    %c0_64 = arith.constant 0 : index
    %c0_65 = arith.constant 0 : index
    %161 = vector.load %arg4[%c2_63, %c0_64, %c0_65] : memref<8x8x32xf32, #tpu.memory_space<vmem>>, vector<1x8x32xf32>
    %162 = vector.shape_cast %161 : vector<1x8x32xf32> to vector<8x32xf32>
    %163 = vector.extract_strided_slice %148 {offsets = [0, 0], sizes = [8, 8], strides = [1, 1]} : vector<16x8xf32> to vector<8x8xf32>
    %164 = vector.extract_strided_slice %154 {offsets = [0, 0], sizes = [8, 8], strides = [1, 1]} : vector<16x8xf32> to vector<8x8xf32>
    %165 = tpu.transpose %164, [1, 0] : vector<8x8xf32> -> vector<8x8xf32>
    %cst_66 = arith.constant dense<0.000000e+00> : vector<8x8xf32>
    %166 = tpu.matmul %163, %165, %cst_66 {dimension_numbers = #tpu.dot_dimension_numbers<[1], [0], [0], [1], [0, 0, 1, 1], [], []>} : vector<8x8xf32>, vector<8x8xf32>, vector<8x8xf32> -> vector<8x8xf32>
    %cst_67 = arith.constant dense<0xFF800000> : vector<8xf32>
    %167 = vector.multi_reduction <maximumf>, %166, %cst_67 [1] : vector<8x8xf32> to vector<8xf32>
    %168 = vector.shape_cast %167 : vector<8xf32> to vector<8x1xf32>
    %169 = vector.broadcast %168 : vector<8x1xf32> to vector<8x8xf32>
    %170 = arith.subf %166, %169 : vector<8x8xf32>
    %171 = math.exp %170 : vector<8x8xf32>
    %cst_68 = arith.constant dense<0.000000e+00> : vector<8xf32>
    %172 = vector.multi_reduction <add>, %171, %cst_68 [1] : vector<8x8xf32> to vector<8xf32>
    %173 = vector.shape_cast %172 : vector<8xf32> to vector<8x1xf32>
    %174 = tpu.reciprocal %173 : vector<8x1xf32> -> vector<8x1xf32>
    %175 = vector.broadcast %174 : vector<8x1xf32> to vector<8x8xf32>
    %176 = arith.mulf %171, %175 : vector<8x8xf32>
    %177 = vector.extract_strided_slice %160 {offsets = [0, 0], sizes = [8, 8], strides = [1, 1]} : vector<16x8xf32> to vector<8x8xf32>
    %cst_69 = arith.constant dense<0.000000e+00> : vector<8x8xf32>
    %178 = tpu.matmul %176, %177, %cst_69 {dimension_numbers = #tpu.dot_dimension_numbers<[1], [0], [0], [1], [0, 0, 1, 1], [], []>} : vector<8x8xf32>, vector<8x8xf32>, vector<8x8xf32> -> vector<8x8xf32>
    %cst_70 = arith.constant dense<0.000000e+00> : vector<8x32xf32>
    %179 = tpu.matmul %178, %162, %cst_70 {dimension_numbers = #tpu.dot_dimension_numbers<[1], [0], [0], [1], [0, 0, 1, 1], [], []>} : vector<8x8xf32>, vector<8x32xf32>, vector<8x32xf32> -> vector<8x32xf32>
    %180 = arith.addf %124, %179 : vector<8x32xf32>
    %181 = vector.extract_strided_slice %148 {offsets = [8, 0], sizes = [8, 8], strides = [1, 1]} : vector<16x8xf32> to vector<8x8xf32>
    %182 = vector.extract_strided_slice %154 {offsets = [8, 0], sizes = [8, 8], strides = [1, 1]} : vector<16x8xf32> to vector<8x8xf32>
    %183 = tpu.transpose %182, [1, 0] : vector<8x8xf32> -> vector<8x8xf32>
    %cst_71 = arith.constant dense<0.000000e+00> : vector<8x8xf32>
    %184 = tpu.matmul %181, %183, %cst_71 {dimension_numbers = #tpu.dot_dimension_numbers<[1], [0], [0], [1], [0, 0, 1, 1], [], []>} : vector<8x8xf32>, vector<8x8xf32>, vector<8x8xf32> -> vector<8x8xf32>
    %cst_72 = arith.constant dense<0xFF800000> : vector<8xf32>
    %185 = vector.multi_reduction <maximumf>, %184, %cst_72 [1] : vector<8x8xf32> to vector<8xf32>
    %186 = vector.shape_cast %185 : vector<8xf32> to vector<8x1xf32>
    %187 = vector.broadcast %186 : vector<8x1xf32> to vector<8x8xf32>
    %188 = arith.subf %184, %187 : vector<8x8xf32>
    %189 = math.exp %188 : vector<8x8xf32>
    %cst_73 = arith.constant dense<0.000000e+00> : vector<8xf32>
    %190 = vector.multi_reduction <add>, %189, %cst_73 [1] : vector<8x8xf32> to vector<8xf32>
    %191 = vector.shape_cast %190 : vector<8xf32> to vector<8x1xf32>
    %192 = tpu.reciprocal %191 : vector<8x1xf32> -> vector<8x1xf32>
    %193 = vector.broadcast %192 : vector<8x1xf32> to vector<8x8xf32>
    %194 = arith.mulf %189, %193 : vector<8x8xf32>
    %195 = vector.extract_strided_slice %160 {offsets = [8, 0], sizes = [8, 8], strides = [1, 1]} : vector<16x8xf32> to vector<8x8xf32>
    %cst_74 = arith.constant dense<0.000000e+00> : vector<8x8xf32>
    %196 = tpu.matmul %194, %195, %cst_74 {dimension_numbers = #tpu.dot_dimension_numbers<[1], [0], [0], [1], [0, 0, 1, 1], [], []>} : vector<8x8xf32>, vector<8x8xf32>, vector<8x8xf32> -> vector<8x8xf32>
    %cst_75 = arith.constant dense<0.000000e+00> : vector<8x32xf32>
    %197 = tpu.matmul %196, %162, %cst_75 {dimension_numbers = #tpu.dot_dimension_numbers<[1], [0], [0], [1], [0, 0, 1, 1], [], []>} : vector<8x8xf32>, vector<8x32xf32>, vector<8x32xf32> -> vector<8x32xf32>
    %198 = arith.addf %142, %197 : vector<8x32xf32>
    %c3 = arith.constant 3 : index
    %c0_76 = arith.constant 0 : index
    %c0_77 = arith.constant 0 : index
    %199 = vector.load %arg3[%c3, %c0_76, %c0_77] : memref<24x32x8xf32, #tpu.memory_space<vmem>>, vector<1x32x8xf32>
    %200 = vector.shape_cast %199 : vector<1x32x8xf32> to vector<32x8xf32>
    %cst_78 = arith.constant dense<0.000000e+00> : vector<16x8xf32>
    %201 = tpu.matmul %26, %200, %cst_78 {dimension_numbers = #tpu.dot_dimension_numbers<[1], [0], [0], [1], [0, 0, 1, 1], [], []>} : vector<16x32xf32>, vector<32x8xf32>, vector<16x8xf32> -> vector<16x8xf32>
    %202 = vector.extract_strided_slice %1 {offsets = [3, 0], sizes = [1, 8], strides = [1, 1]} : vector<24x8xf32> to vector<1x8xf32>
    %203 = vector.broadcast %202 : vector<1x8xf32> to vector<16x8xf32>
    %204 = arith.addf %201, %203 : vector<16x8xf32>
    %c7 = arith.constant 7 : index
    %c0_79 = arith.constant 0 : index
    %c0_80 = arith.constant 0 : index
    %205 = vector.load %arg3[%c7, %c0_79, %c0_80] : memref<24x32x8xf32, #tpu.memory_space<vmem>>, vector<1x32x8xf32>
    %206 = vector.shape_cast %205 : vector<1x32x8xf32> to vector<32x8xf32>
    %cst_81 = arith.constant dense<0.000000e+00> : vector<16x8xf32>
    %207 = tpu.matmul %26, %206, %cst_81 {dimension_numbers = #tpu.dot_dimension_numbers<[1], [0], [0], [1], [0, 0, 1, 1], [], []>} : vector<16x32xf32>, vector<32x8xf32>, vector<16x8xf32> -> vector<16x8xf32>
    %208 = vector.extract_strided_slice %1 {offsets = [7, 0], sizes = [1, 8], strides = [1, 1]} : vector<24x8xf32> to vector<1x8xf32>
    %209 = vector.broadcast %208 : vector<1x8xf32> to vector<16x8xf32>
    %210 = arith.addf %207, %209 : vector<16x8xf32>
    %c11 = arith.constant 11 : index
    %c0_82 = arith.constant 0 : index
    %c0_83 = arith.constant 0 : index
    %211 = vector.load %arg3[%c11, %c0_82, %c0_83] : memref<24x32x8xf32, #tpu.memory_space<vmem>>, vector<1x32x8xf32>
    %212 = vector.shape_cast %211 : vector<1x32x8xf32> to vector<32x8xf32>
    %cst_84 = arith.constant dense<0.000000e+00> : vector<16x8xf32>
    %213 = tpu.matmul %26, %212, %cst_84 {dimension_numbers = #tpu.dot_dimension_numbers<[1], [0], [0], [1], [0, 0, 1, 1], [], []>} : vector<16x32xf32>, vector<32x8xf32>, vector<16x8xf32> -> vector<16x8xf32>
    %214 = vector.extract_strided_slice %1 {offsets = [11, 0], sizes = [1, 8], strides = [1, 1]} : vector<24x8xf32> to vector<1x8xf32>
    %215 = vector.broadcast %214 : vector<1x8xf32> to vector<16x8xf32>
    %216 = arith.addf %213, %215 : vector<16x8xf32>
    %c3_85 = arith.constant 3 : index
    %c0_86 = arith.constant 0 : index
    %c0_87 = arith.constant 0 : index
    %217 = vector.load %arg4[%c3_85, %c0_86, %c0_87] : memref<8x8x32xf32, #tpu.memory_space<vmem>>, vector<1x8x32xf32>
    %218 = vector.shape_cast %217 : vector<1x8x32xf32> to vector<8x32xf32>
    %219 = vector.extract_strided_slice %204 {offsets = [0, 0], sizes = [8, 8], strides = [1, 1]} : vector<16x8xf32> to vector<8x8xf32>
    %220 = vector.extract_strided_slice %210 {offsets = [0, 0], sizes = [8, 8], strides = [1, 1]} : vector<16x8xf32> to vector<8x8xf32>
    %221 = tpu.transpose %220, [1, 0] : vector<8x8xf32> -> vector<8x8xf32>
    %cst_88 = arith.constant dense<0.000000e+00> : vector<8x8xf32>
    %222 = tpu.matmul %219, %221, %cst_88 {dimension_numbers = #tpu.dot_dimension_numbers<[1], [0], [0], [1], [0, 0, 1, 1], [], []>} : vector<8x8xf32>, vector<8x8xf32>, vector<8x8xf32> -> vector<8x8xf32>
    %cst_89 = arith.constant dense<0xFF800000> : vector<8xf32>
    %223 = vector.multi_reduction <maximumf>, %222, %cst_89 [1] : vector<8x8xf32> to vector<8xf32>
    %224 = vector.shape_cast %223 : vector<8xf32> to vector<8x1xf32>
    %225 = vector.broadcast %224 : vector<8x1xf32> to vector<8x8xf32>
    %226 = arith.subf %222, %225 : vector<8x8xf32>
    %227 = math.exp %226 : vector<8x8xf32>
    %cst_90 = arith.constant dense<0.000000e+00> : vector<8xf32>
    %228 = vector.multi_reduction <add>, %227, %cst_90 [1] : vector<8x8xf32> to vector<8xf32>
    %229 = vector.shape_cast %228 : vector<8xf32> to vector<8x1xf32>
    %230 = tpu.reciprocal %229 : vector<8x1xf32> -> vector<8x1xf32>
    %231 = vector.broadcast %230 : vector<8x1xf32> to vector<8x8xf32>
    %232 = arith.mulf %227, %231 : vector<8x8xf32>
    %233 = vector.extract_strided_slice %216 {offsets = [0, 0], sizes = [8, 8], strides = [1, 1]} : vector<16x8xf32> to vector<8x8xf32>
    %cst_91 = arith.constant dense<0.000000e+00> : vector<8x8xf32>
    %234 = tpu.matmul %232, %233, %cst_91 {dimension_numbers = #tpu.dot_dimension_numbers<[1], [0], [0], [1], [0, 0, 1, 1], [], []>} : vector<8x8xf32>, vector<8x8xf32>, vector<8x8xf32> -> vector<8x8xf32>
    %cst_92 = arith.constant dense<0.000000e+00> : vector<8x32xf32>
    %235 = tpu.matmul %234, %218, %cst_92 {dimension_numbers = #tpu.dot_dimension_numbers<[1], [0], [0], [1], [0, 0, 1, 1], [], []>} : vector<8x8xf32>, vector<8x32xf32>, vector<8x32xf32> -> vector<8x32xf32>
    %236 = arith.addf %180, %235 : vector<8x32xf32>
    %237 = vector.extract_strided_slice %204 {offsets = [8, 0], sizes = [8, 8], strides = [1, 1]} : vector<16x8xf32> to vector<8x8xf32>
    %238 = vector.extract_strided_slice %210 {offsets = [8, 0], sizes = [8, 8], strides = [1, 1]} : vector<16x8xf32> to vector<8x8xf32>
    %239 = tpu.transpose %238, [1, 0] : vector<8x8xf32> -> vector<8x8xf32>
    %cst_93 = arith.constant dense<0.000000e+00> : vector<8x8xf32>
    %240 = tpu.matmul %237, %239, %cst_93 {dimension_numbers = #tpu.dot_dimension_numbers<[1], [0], [0], [1], [0, 0, 1, 1], [], []>} : vector<8x8xf32>, vector<8x8xf32>, vector<8x8xf32> -> vector<8x8xf32>
    %cst_94 = arith.constant dense<0xFF800000> : vector<8xf32>
    %241 = vector.multi_reduction <maximumf>, %240, %cst_94 [1] : vector<8x8xf32> to vector<8xf32>
    %242 = vector.shape_cast %241 : vector<8xf32> to vector<8x1xf32>
    %243 = vector.broadcast %242 : vector<8x1xf32> to vector<8x8xf32>
    %244 = arith.subf %240, %243 : vector<8x8xf32>
    %245 = math.exp %244 : vector<8x8xf32>
    %cst_95 = arith.constant dense<0.000000e+00> : vector<8xf32>
    %246 = vector.multi_reduction <add>, %245, %cst_95 [1] : vector<8x8xf32> to vector<8xf32>
    %247 = vector.shape_cast %246 : vector<8xf32> to vector<8x1xf32>
    %248 = tpu.reciprocal %247 : vector<8x1xf32> -> vector<8x1xf32>
    %249 = vector.broadcast %248 : vector<8x1xf32> to vector<8x8xf32>
    %250 = arith.mulf %245, %249 : vector<8x8xf32>
    %251 = vector.extract_strided_slice %216 {offsets = [8, 0], sizes = [8, 8], strides = [1, 1]} : vector<16x8xf32> to vector<8x8xf32>
    %cst_96 = arith.constant dense<0.000000e+00> : vector<8x8xf32>
    %252 = tpu.matmul %250, %251, %cst_96 {dimension_numbers = #tpu.dot_dimension_numbers<[1], [0], [0], [1], [0, 0, 1, 1], [], []>} : vector<8x8xf32>, vector<8x8xf32>, vector<8x8xf32> -> vector<8x8xf32>
    %cst_97 = arith.constant dense<0.000000e+00> : vector<8x32xf32>
    %253 = tpu.matmul %252, %218, %cst_97 {dimension_numbers = #tpu.dot_dimension_numbers<[1], [0], [0], [1], [0, 0, 1, 1], [], []>} : vector<8x8xf32>, vector<8x32xf32>, vector<8x32xf32> -> vector<8x32xf32>
    %254 = arith.addf %198, %253 : vector<8x32xf32>
    %255 = tpu.concatenate %236, %254 in 0 : vector<8x32xf32>, vector<8x32xf32> -> vector<16x32xf32>
    %256 = arith.addf %26, %255 : vector<16x32xf32>
    %257 = vector.broadcast %27 : vector<1x32xf32> to vector<16x32xf32>
    %258 = arith.addf %256, %257 : vector<16x32xf32>
    %cst_98 = arith.constant dense<0.000000e+00> : vector<16xf32>
    %259 = vector.multi_reduction <add>, %258, %cst_98 [1] : vector<16x32xf32> to vector<16xf32>
    %260 = vector.shape_cast %259 : vector<16xf32> to vector<16x1xf32>
    %cst_99 = arith.constant 3.200000e+01 : f32
    %261 = vector.broadcast %cst_99 : f32 to vector<16x1xf32>
    %262 = arith.divf %260, %261 : vector<16x1xf32>
    %263 = vector.broadcast %262 : vector<16x1xf32> to vector<16x32xf32>
    %264 = arith.subf %258, %263 : vector<16x32xf32>
    %265 = arith.mulf %264, %264 : vector<16x32xf32>
    %cst_100 = arith.constant dense<0.000000e+00> : vector<16xf32>
    %266 = vector.multi_reduction <add>, %265, %cst_100 [1] : vector<16x32xf32> to vector<16xf32>
    %267 = vector.shape_cast %266 : vector<16xf32> to vector<16x1xf32>
    %cst_101 = arith.constant 3.200000e+01 : f32
    %268 = vector.broadcast %cst_101 : f32 to vector<16x1xf32>
    %269 = arith.divf %267, %268 : vector<16x1xf32>
    %270 = vector.broadcast %262 : vector<16x1xf32> to vector<16x32xf32>
    %271 = arith.subf %258, %270 : vector<16x32xf32>
    %cst_102 = arith.constant 9.99999974E-6 : f32
    %272 = vector.broadcast %cst_102 : f32 to vector<16x1xf32>
    %273 = arith.addf %269, %272 : vector<16x1xf32>
    %274 = math.rsqrt %273 : vector<16x1xf32>
    %275 = vector.broadcast %274 : vector<16x1xf32> to vector<16x32xf32>
    %276 = arith.mulf %271, %275 : vector<16x32xf32>
    %277 = vector.broadcast %28 : vector<1x32xf32> to vector<16x32xf32>
    %278 = arith.mulf %276, %277 : vector<16x32xf32>
    %279 = vector.broadcast %29 : vector<1x32xf32> to vector<16x32xf32>
    %280 = arith.addf %278, %279 : vector<16x32xf32>
    %c0_103 = arith.constant 0 : index
    %c0_104 = arith.constant 0 : index
    %c0_105 = arith.constant 0 : index
    %281 = vector.load %arg5[%c0_103, %c0_104, %c0_105] : memref<4x32x32xf32, #tpu.memory_space<vmem>>, vector<1x32x32xf32>
    %282 = vector.shape_cast %281 : vector<1x32x32xf32> to vector<32x32xf32>
    %cst_106 = arith.constant dense<0.000000e+00> : vector<16x32xf32>
    %283 = tpu.matmul %280, %282, %cst_106 {dimension_numbers = #tpu.dot_dimension_numbers<[1], [0], [0], [1], [0, 0, 1, 1], [], []>} : vector<16x32xf32>, vector<32x32xf32>, vector<16x32xf32> -> vector<16x32xf32>
    %284 = vector.broadcast %30 : vector<1x32xf32> to vector<16x32xf32>
    %285 = arith.addf %283, %284 : vector<16x32xf32>
    %286 = arith.addf %280, %285 : vector<16x32xf32>
    %cst_107 = arith.constant dense<0.000000e+00> : vector<16xf32>
    %287 = vector.multi_reduction <add>, %286, %cst_107 [1] : vector<16x32xf32> to vector<16xf32>
    %288 = vector.shape_cast %287 : vector<16xf32> to vector<16x1xf32>
    %cst_108 = arith.constant 3.200000e+01 : f32
    %289 = vector.broadcast %cst_108 : f32 to vector<16x1xf32>
    %290 = arith.divf %288, %289 : vector<16x1xf32>
    %291 = vector.broadcast %290 : vector<16x1xf32> to vector<16x32xf32>
    %292 = arith.subf %286, %291 : vector<16x32xf32>
    %293 = arith.mulf %292, %292 : vector<16x32xf32>
    %cst_109 = arith.constant dense<0.000000e+00> : vector<16xf32>
    %294 = vector.multi_reduction <add>, %293, %cst_109 [1] : vector<16x32xf32> to vector<16xf32>
    %295 = vector.shape_cast %294 : vector<16xf32> to vector<16x1xf32>
    %cst_110 = arith.constant 3.200000e+01 : f32
    %296 = vector.broadcast %cst_110 : f32 to vector<16x1xf32>
    %297 = arith.divf %295, %296 : vector<16x1xf32>
    %298 = vector.broadcast %290 : vector<16x1xf32> to vector<16x32xf32>
    %299 = arith.subf %286, %298 : vector<16x32xf32>
    %cst_111 = arith.constant 9.99999974E-6 : f32
    %300 = vector.broadcast %cst_111 : f32 to vector<16x1xf32>
    %301 = arith.addf %297, %300 : vector<16x1xf32>
    %302 = math.rsqrt %301 : vector<16x1xf32>
    %303 = vector.broadcast %302 : vector<16x1xf32> to vector<16x32xf32>
    %304 = arith.mulf %299, %303 : vector<16x32xf32>
    %305 = vector.broadcast %31 : vector<1x32xf32> to vector<16x32xf32>
    %306 = arith.mulf %304, %305 : vector<16x32xf32>
    %307 = vector.broadcast %32 : vector<1x32xf32> to vector<16x32xf32>
    %308 = arith.addf %306, %307 : vector<16x32xf32>
    %309 = vector.extract_strided_slice %0 {offsets = [8, 0], sizes = [1, 32], strides = [1, 1]} : vector<16x32xf32> to vector<1x32xf32>
    %310 = vector.extract_strided_slice %0 {offsets = [9, 0], sizes = [1, 32], strides = [1, 1]} : vector<16x32xf32> to vector<1x32xf32>
    %311 = vector.extract_strided_slice %0 {offsets = [10, 0], sizes = [1, 32], strides = [1, 1]} : vector<16x32xf32> to vector<1x32xf32>
    %312 = vector.extract_strided_slice %0 {offsets = [11, 0], sizes = [1, 32], strides = [1, 1]} : vector<16x32xf32> to vector<1x32xf32>
    %313 = vector.extract_strided_slice %0 {offsets = [12, 0], sizes = [1, 32], strides = [1, 1]} : vector<16x32xf32> to vector<1x32xf32>
    %314 = vector.extract_strided_slice %0 {offsets = [13, 0], sizes = [1, 32], strides = [1, 1]} : vector<16x32xf32> to vector<1x32xf32>
    %c12 = arith.constant 12 : index
    %c0_112 = arith.constant 0 : index
    %c0_113 = arith.constant 0 : index
    %315 = vector.load %arg3[%c12, %c0_112, %c0_113] : memref<24x32x8xf32, #tpu.memory_space<vmem>>, vector<1x32x8xf32>
    %316 = vector.shape_cast %315 : vector<1x32x8xf32> to vector<32x8xf32>
    %cst_114 = arith.constant dense<0.000000e+00> : vector<16x8xf32>
    %317 = tpu.matmul %308, %316, %cst_114 {dimension_numbers = #tpu.dot_dimension_numbers<[1], [0], [0], [1], [0, 0, 1, 1], [], []>} : vector<16x32xf32>, vector<32x8xf32>, vector<16x8xf32> -> vector<16x8xf32>
    %318 = vector.extract_strided_slice %1 {offsets = [12, 0], sizes = [1, 8], strides = [1, 1]} : vector<24x8xf32> to vector<1x8xf32>
    %319 = vector.broadcast %318 : vector<1x8xf32> to vector<16x8xf32>
    %320 = arith.addf %317, %319 : vector<16x8xf32>
    %c16 = arith.constant 16 : index
    %c0_115 = arith.constant 0 : index
    %c0_116 = arith.constant 0 : index
    %321 = vector.load %arg3[%c16, %c0_115, %c0_116] : memref<24x32x8xf32, #tpu.memory_space<vmem>>, vector<1x32x8xf32>
    %322 = vector.shape_cast %321 : vector<1x32x8xf32> to vector<32x8xf32>
    %cst_117 = arith.constant dense<0.000000e+00> : vector<16x8xf32>
    %323 = tpu.matmul %308, %322, %cst_117 {dimension_numbers = #tpu.dot_dimension_numbers<[1], [0], [0], [1], [0, 0, 1, 1], [], []>} : vector<16x32xf32>, vector<32x8xf32>, vector<16x8xf32> -> vector<16x8xf32>
    %324 = vector.extract_strided_slice %1 {offsets = [16, 0], sizes = [1, 8], strides = [1, 1]} : vector<24x8xf32> to vector<1x8xf32>
    %325 = vector.broadcast %324 : vector<1x8xf32> to vector<16x8xf32>
    %326 = arith.addf %323, %325 : vector<16x8xf32>
    %c20 = arith.constant 20 : index
    %c0_118 = arith.constant 0 : index
    %c0_119 = arith.constant 0 : index
    %327 = vector.load %arg3[%c20, %c0_118, %c0_119] : memref<24x32x8xf32, #tpu.memory_space<vmem>>, vector<1x32x8xf32>
    %328 = vector.shape_cast %327 : vector<1x32x8xf32> to vector<32x8xf32>
    %cst_120 = arith.constant dense<0.000000e+00> : vector<16x8xf32>
    %329 = tpu.matmul %308, %328, %cst_120 {dimension_numbers = #tpu.dot_dimension_numbers<[1], [0], [0], [1], [0, 0, 1, 1], [], []>} : vector<16x32xf32>, vector<32x8xf32>, vector<16x8xf32> -> vector<16x8xf32>
    %330 = vector.extract_strided_slice %1 {offsets = [20, 0], sizes = [1, 8], strides = [1, 1]} : vector<24x8xf32> to vector<1x8xf32>
    %331 = vector.broadcast %330 : vector<1x8xf32> to vector<16x8xf32>
    %332 = arith.addf %329, %331 : vector<16x8xf32>
    %c4_121 = arith.constant 4 : index
    %c0_122 = arith.constant 0 : index
    %c0_123 = arith.constant 0 : index
    %333 = vector.load %arg4[%c4_121, %c0_122, %c0_123] : memref<8x8x32xf32, #tpu.memory_space<vmem>>, vector<1x8x32xf32>
    %334 = vector.shape_cast %333 : vector<1x8x32xf32> to vector<8x32xf32>
    %335 = vector.extract_strided_slice %320 {offsets = [0, 0], sizes = [8, 8], strides = [1, 1]} : vector<16x8xf32> to vector<8x8xf32>
    %336 = vector.extract_strided_slice %326 {offsets = [0, 0], sizes = [8, 8], strides = [1, 1]} : vector<16x8xf32> to vector<8x8xf32>
    %337 = tpu.transpose %336, [1, 0] : vector<8x8xf32> -> vector<8x8xf32>
    %cst_124 = arith.constant dense<0.000000e+00> : vector<8x8xf32>
    %338 = tpu.matmul %335, %337, %cst_124 {dimension_numbers = #tpu.dot_dimension_numbers<[1], [0], [0], [1], [0, 0, 1, 1], [], []>} : vector<8x8xf32>, vector<8x8xf32>, vector<8x8xf32> -> vector<8x8xf32>
    %cst_125 = arith.constant dense<0xFF800000> : vector<8xf32>
    %339 = vector.multi_reduction <maximumf>, %338, %cst_125 [1] : vector<8x8xf32> to vector<8xf32>
    %340 = vector.shape_cast %339 : vector<8xf32> to vector<8x1xf32>
    %341 = vector.broadcast %340 : vector<8x1xf32> to vector<8x8xf32>
    %342 = arith.subf %338, %341 : vector<8x8xf32>
    %343 = math.exp %342 : vector<8x8xf32>
    %cst_126 = arith.constant dense<0.000000e+00> : vector<8xf32>
    %344 = vector.multi_reduction <add>, %343, %cst_126 [1] : vector<8x8xf32> to vector<8xf32>
    %345 = vector.shape_cast %344 : vector<8xf32> to vector<8x1xf32>
    %346 = tpu.reciprocal %345 : vector<8x1xf32> -> vector<8x1xf32>
    %347 = vector.broadcast %346 : vector<8x1xf32> to vector<8x8xf32>
    %348 = arith.mulf %343, %347 : vector<8x8xf32>
    %349 = vector.extract_strided_slice %332 {offsets = [0, 0], sizes = [8, 8], strides = [1, 1]} : vector<16x8xf32> to vector<8x8xf32>
    %cst_127 = arith.constant dense<0.000000e+00> : vector<8x8xf32>
    %350 = tpu.matmul %348, %349, %cst_127 {dimension_numbers = #tpu.dot_dimension_numbers<[1], [0], [0], [1], [0, 0, 1, 1], [], []>} : vector<8x8xf32>, vector<8x8xf32>, vector<8x8xf32> -> vector<8x8xf32>
    %cst_128 = arith.constant dense<0.000000e+00> : vector<8x32xf32>
    %351 = tpu.matmul %350, %334, %cst_128 {dimension_numbers = #tpu.dot_dimension_numbers<[1], [0], [0], [1], [0, 0, 1, 1], [], []>} : vector<8x8xf32>, vector<8x32xf32>, vector<8x32xf32> -> vector<8x32xf32>
    %352 = vector.extract_strided_slice %320 {offsets = [8, 0], sizes = [8, 8], strides = [1, 1]} : vector<16x8xf32> to vector<8x8xf32>
    %353 = vector.extract_strided_slice %326 {offsets = [8, 0], sizes = [8, 8], strides = [1, 1]} : vector<16x8xf32> to vector<8x8xf32>
    %354 = tpu.transpose %353, [1, 0] : vector<8x8xf32> -> vector<8x8xf32>
    %cst_129 = arith.constant dense<0.000000e+00> : vector<8x8xf32>
    %355 = tpu.matmul %352, %354, %cst_129 {dimension_numbers = #tpu.dot_dimension_numbers<[1], [0], [0], [1], [0, 0, 1, 1], [], []>} : vector<8x8xf32>, vector<8x8xf32>, vector<8x8xf32> -> vector<8x8xf32>
    %cst_130 = arith.constant dense<0xFF800000> : vector<8xf32>
    %356 = vector.multi_reduction <maximumf>, %355, %cst_130 [1] : vector<8x8xf32> to vector<8xf32>
    %357 = vector.shape_cast %356 : vector<8xf32> to vector<8x1xf32>
    %358 = vector.broadcast %357 : vector<8x1xf32> to vector<8x8xf32>
    %359 = arith.subf %355, %358 : vector<8x8xf32>
    %360 = math.exp %359 : vector<8x8xf32>
    %cst_131 = arith.constant dense<0.000000e+00> : vector<8xf32>
    %361 = vector.multi_reduction <add>, %360, %cst_131 [1] : vector<8x8xf32> to vector<8xf32>
    %362 = vector.shape_cast %361 : vector<8xf32> to vector<8x1xf32>
    %363 = tpu.reciprocal %362 : vector<8x1xf32> -> vector<8x1xf32>
    %364 = vector.broadcast %363 : vector<8x1xf32> to vector<8x8xf32>
    %365 = arith.mulf %360, %364 : vector<8x8xf32>
    %366 = vector.extract_strided_slice %332 {offsets = [8, 0], sizes = [8, 8], strides = [1, 1]} : vector<16x8xf32> to vector<8x8xf32>
    %cst_132 = arith.constant dense<0.000000e+00> : vector<8x8xf32>
    %367 = tpu.matmul %365, %366, %cst_132 {dimension_numbers = #tpu.dot_dimension_numbers<[1], [0], [0], [1], [0, 0, 1, 1], [], []>} : vector<8x8xf32>, vector<8x8xf32>, vector<8x8xf32> -> vector<8x8xf32>
    %cst_133 = arith.constant dense<0.000000e+00> : vector<8x32xf32>
    %368 = tpu.matmul %367, %334, %cst_133 {dimension_numbers = #tpu.dot_dimension_numbers<[1], [0], [0], [1], [0, 0, 1, 1], [], []>} : vector<8x8xf32>, vector<8x32xf32>, vector<8x32xf32> -> vector<8x32xf32>
    %c13 = arith.constant 13 : index
    %c0_134 = arith.constant 0 : index
    %c0_135 = arith.constant 0 : index
    %369 = vector.load %arg3[%c13, %c0_134, %c0_135] : memref<24x32x8xf32, #tpu.memory_space<vmem>>, vector<1x32x8xf32>
    %370 = vector.shape_cast %369 : vector<1x32x8xf32> to vector<32x8xf32>
    %cst_136 = arith.constant dense<0.000000e+00> : vector<16x8xf32>
    %371 = tpu.matmul %308, %370, %cst_136 {dimension_numbers = #tpu.dot_dimension_numbers<[1], [0], [0], [1], [0, 0, 1, 1], [], []>} : vector<16x32xf32>, vector<32x8xf32>, vector<16x8xf32> -> vector<16x8xf32>
    %372 = vector.extract_strided_slice %1 {offsets = [13, 0], sizes = [1, 8], strides = [1, 1]} : vector<24x8xf32> to vector<1x8xf32>
    %373 = vector.broadcast %372 : vector<1x8xf32> to vector<16x8xf32>
    %374 = arith.addf %371, %373 : vector<16x8xf32>
    %c17 = arith.constant 17 : index
    %c0_137 = arith.constant 0 : index
    %c0_138 = arith.constant 0 : index
    %375 = vector.load %arg3[%c17, %c0_137, %c0_138] : memref<24x32x8xf32, #tpu.memory_space<vmem>>, vector<1x32x8xf32>
    %376 = vector.shape_cast %375 : vector<1x32x8xf32> to vector<32x8xf32>
    %cst_139 = arith.constant dense<0.000000e+00> : vector<16x8xf32>
    %377 = tpu.matmul %308, %376, %cst_139 {dimension_numbers = #tpu.dot_dimension_numbers<[1], [0], [0], [1], [0, 0, 1, 1], [], []>} : vector<16x32xf32>, vector<32x8xf32>, vector<16x8xf32> -> vector<16x8xf32>
    %378 = vector.extract_strided_slice %1 {offsets = [17, 0], sizes = [1, 8], strides = [1, 1]} : vector<24x8xf32> to vector<1x8xf32>
    %379 = vector.broadcast %378 : vector<1x8xf32> to vector<16x8xf32>
    %380 = arith.addf %377, %379 : vector<16x8xf32>
    %c21 = arith.constant 21 : index
    %c0_140 = arith.constant 0 : index
    %c0_141 = arith.constant 0 : index
    %381 = vector.load %arg3[%c21, %c0_140, %c0_141] : memref<24x32x8xf32, #tpu.memory_space<vmem>>, vector<1x32x8xf32>
    %382 = vector.shape_cast %381 : vector<1x32x8xf32> to vector<32x8xf32>
    %cst_142 = arith.constant dense<0.000000e+00> : vector<16x8xf32>
    %383 = tpu.matmul %308, %382, %cst_142 {dimension_numbers = #tpu.dot_dimension_numbers<[1], [0], [0], [1], [0, 0, 1, 1], [], []>} : vector<16x32xf32>, vector<32x8xf32>, vector<16x8xf32> -> vector<16x8xf32>
    %384 = vector.extract_strided_slice %1 {offsets = [21, 0], sizes = [1, 8], strides = [1, 1]} : vector<24x8xf32> to vector<1x8xf32>
    %385 = vector.broadcast %384 : vector<1x8xf32> to vector<16x8xf32>
    %386 = arith.addf %383, %385 : vector<16x8xf32>
    %c5_143 = arith.constant 5 : index
    %c0_144 = arith.constant 0 : index
    %c0_145 = arith.constant 0 : index
    %387 = vector.load %arg4[%c5_143, %c0_144, %c0_145] : memref<8x8x32xf32, #tpu.memory_space<vmem>>, vector<1x8x32xf32>
    %388 = vector.shape_cast %387 : vector<1x8x32xf32> to vector<8x32xf32>
    %389 = vector.extract_strided_slice %374 {offsets = [0, 0], sizes = [8, 8], strides = [1, 1]} : vector<16x8xf32> to vector<8x8xf32>
    %390 = vector.extract_strided_slice %380 {offsets = [0, 0], sizes = [8, 8], strides = [1, 1]} : vector<16x8xf32> to vector<8x8xf32>
    %391 = tpu.transpose %390, [1, 0] : vector<8x8xf32> -> vector<8x8xf32>
    %cst_146 = arith.constant dense<0.000000e+00> : vector<8x8xf32>
    %392 = tpu.matmul %389, %391, %cst_146 {dimension_numbers = #tpu.dot_dimension_numbers<[1], [0], [0], [1], [0, 0, 1, 1], [], []>} : vector<8x8xf32>, vector<8x8xf32>, vector<8x8xf32> -> vector<8x8xf32>
    %cst_147 = arith.constant dense<0xFF800000> : vector<8xf32>
    %393 = vector.multi_reduction <maximumf>, %392, %cst_147 [1] : vector<8x8xf32> to vector<8xf32>
    %394 = vector.shape_cast %393 : vector<8xf32> to vector<8x1xf32>
    %395 = vector.broadcast %394 : vector<8x1xf32> to vector<8x8xf32>
    %396 = arith.subf %392, %395 : vector<8x8xf32>
    %397 = math.exp %396 : vector<8x8xf32>
    %cst_148 = arith.constant dense<0.000000e+00> : vector<8xf32>
    %398 = vector.multi_reduction <add>, %397, %cst_148 [1] : vector<8x8xf32> to vector<8xf32>
    %399 = vector.shape_cast %398 : vector<8xf32> to vector<8x1xf32>
    %400 = tpu.reciprocal %399 : vector<8x1xf32> -> vector<8x1xf32>
    %401 = vector.broadcast %400 : vector<8x1xf32> to vector<8x8xf32>
    %402 = arith.mulf %397, %401 : vector<8x8xf32>
    %403 = vector.extract_strided_slice %386 {offsets = [0, 0], sizes = [8, 8], strides = [1, 1]} : vector<16x8xf32> to vector<8x8xf32>
    %cst_149 = arith.constant dense<0.000000e+00> : vector<8x8xf32>
    %404 = tpu.matmul %402, %403, %cst_149 {dimension_numbers = #tpu.dot_dimension_numbers<[1], [0], [0], [1], [0, 0, 1, 1], [], []>} : vector<8x8xf32>, vector<8x8xf32>, vector<8x8xf32> -> vector<8x8xf32>
    %cst_150 = arith.constant dense<0.000000e+00> : vector<8x32xf32>
    %405 = tpu.matmul %404, %388, %cst_150 {dimension_numbers = #tpu.dot_dimension_numbers<[1], [0], [0], [1], [0, 0, 1, 1], [], []>} : vector<8x8xf32>, vector<8x32xf32>, vector<8x32xf32> -> vector<8x32xf32>
    %406 = arith.addf %351, %405 : vector<8x32xf32>
    %407 = vector.extract_strided_slice %374 {offsets = [8, 0], sizes = [8, 8], strides = [1, 1]} : vector<16x8xf32> to vector<8x8xf32>
    %408 = vector.extract_strided_slice %380 {offsets = [8, 0], sizes = [8, 8], strides = [1, 1]} : vector<16x8xf32> to vector<8x8xf32>
    %409 = tpu.transpose %408, [1, 0] : vector<8x8xf32> -> vector<8x8xf32>
    %cst_151 = arith.constant dense<0.000000e+00> : vector<8x8xf32>
    %410 = tpu.matmul %407, %409, %cst_151 {dimension_numbers = #tpu.dot_dimension_numbers<[1], [0], [0], [1], [0, 0, 1, 1], [], []>} : vector<8x8xf32>, vector<8x8xf32>, vector<8x8xf32> -> vector<8x8xf32>
    %cst_152 = arith.constant dense<0xFF800000> : vector<8xf32>
    %411 = vector.multi_reduction <maximumf>, %410, %cst_152 [1] : vector<8x8xf32> to vector<8xf32>
    %412 = vector.shape_cast %411 : vector<8xf32> to vector<8x1xf32>
    %413 = vector.broadcast %412 : vector<8x1xf32> to vector<8x8xf32>
    %414 = arith.subf %410, %413 : vector<8x8xf32>
    %415 = math.exp %414 : vector<8x8xf32>
    %cst_153 = arith.constant dense<0.000000e+00> : vector<8xf32>
    %416 = vector.multi_reduction <add>, %415, %cst_153 [1] : vector<8x8xf32> to vector<8xf32>
    %417 = vector.shape_cast %416 : vector<8xf32> to vector<8x1xf32>
    %418 = tpu.reciprocal %417 : vector<8x1xf32> -> vector<8x1xf32>
    %419 = vector.broadcast %418 : vector<8x1xf32> to vector<8x8xf32>
    %420 = arith.mulf %415, %419 : vector<8x8xf32>
    %421 = vector.extract_strided_slice %386 {offsets = [8, 0], sizes = [8, 8], strides = [1, 1]} : vector<16x8xf32> to vector<8x8xf32>
    %cst_154 = arith.constant dense<0.000000e+00> : vector<8x8xf32>
    %422 = tpu.matmul %420, %421, %cst_154 {dimension_numbers = #tpu.dot_dimension_numbers<[1], [0], [0], [1], [0, 0, 1, 1], [], []>} : vector<8x8xf32>, vector<8x8xf32>, vector<8x8xf32> -> vector<8x8xf32>
    %cst_155 = arith.constant dense<0.000000e+00> : vector<8x32xf32>
    %423 = tpu.matmul %422, %388, %cst_155 {dimension_numbers = #tpu.dot_dimension_numbers<[1], [0], [0], [1], [0, 0, 1, 1], [], []>} : vector<8x8xf32>, vector<8x32xf32>, vector<8x32xf32> -> vector<8x32xf32>
    %424 = arith.addf %368, %423 : vector<8x32xf32>
    %c14 = arith.constant 14 : index
    %c0_156 = arith.constant 0 : index
    %c0_157 = arith.constant 0 : index
    %425 = vector.load %arg3[%c14, %c0_156, %c0_157] : memref<24x32x8xf32, #tpu.memory_space<vmem>>, vector<1x32x8xf32>
    %426 = vector.shape_cast %425 : vector<1x32x8xf32> to vector<32x8xf32>
    %cst_158 = arith.constant dense<0.000000e+00> : vector<16x8xf32>
    %427 = tpu.matmul %308, %426, %cst_158 {dimension_numbers = #tpu.dot_dimension_numbers<[1], [0], [0], [1], [0, 0, 1, 1], [], []>} : vector<16x32xf32>, vector<32x8xf32>, vector<16x8xf32> -> vector<16x8xf32>
    %428 = vector.extract_strided_slice %1 {offsets = [14, 0], sizes = [1, 8], strides = [1, 1]} : vector<24x8xf32> to vector<1x8xf32>
    %429 = vector.broadcast %428 : vector<1x8xf32> to vector<16x8xf32>
    %430 = arith.addf %427, %429 : vector<16x8xf32>
    %c18 = arith.constant 18 : index
    %c0_159 = arith.constant 0 : index
    %c0_160 = arith.constant 0 : index
    %431 = vector.load %arg3[%c18, %c0_159, %c0_160] : memref<24x32x8xf32, #tpu.memory_space<vmem>>, vector<1x32x8xf32>
    %432 = vector.shape_cast %431 : vector<1x32x8xf32> to vector<32x8xf32>
    %cst_161 = arith.constant dense<0.000000e+00> : vector<16x8xf32>
    %433 = tpu.matmul %308, %432, %cst_161 {dimension_numbers = #tpu.dot_dimension_numbers<[1], [0], [0], [1], [0, 0, 1, 1], [], []>} : vector<16x32xf32>, vector<32x8xf32>, vector<16x8xf32> -> vector<16x8xf32>
    %434 = vector.extract_strided_slice %1 {offsets = [18, 0], sizes = [1, 8], strides = [1, 1]} : vector<24x8xf32> to vector<1x8xf32>
    %435 = vector.broadcast %434 : vector<1x8xf32> to vector<16x8xf32>
    %436 = arith.addf %433, %435 : vector<16x8xf32>
    %c22 = arith.constant 22 : index
    %c0_162 = arith.constant 0 : index
    %c0_163 = arith.constant 0 : index
    %437 = vector.load %arg3[%c22, %c0_162, %c0_163] : memref<24x32x8xf32, #tpu.memory_space<vmem>>, vector<1x32x8xf32>
    %438 = vector.shape_cast %437 : vector<1x32x8xf32> to vector<32x8xf32>
    %cst_164 = arith.constant dense<0.000000e+00> : vector<16x8xf32>
    %439 = tpu.matmul %308, %438, %cst_164 {dimension_numbers = #tpu.dot_dimension_numbers<[1], [0], [0], [1], [0, 0, 1, 1], [], []>} : vector<16x32xf32>, vector<32x8xf32>, vector<16x8xf32> -> vector<16x8xf32>
    %440 = vector.extract_strided_slice %1 {offsets = [22, 0], sizes = [1, 8], strides = [1, 1]} : vector<24x8xf32> to vector<1x8xf32>
    %441 = vector.broadcast %440 : vector<1x8xf32> to vector<16x8xf32>
    %442 = arith.addf %439, %441 : vector<16x8xf32>
    %c6_165 = arith.constant 6 : index
    %c0_166 = arith.constant 0 : index
    %c0_167 = arith.constant 0 : index
    %443 = vector.load %arg4[%c6_165, %c0_166, %c0_167] : memref<8x8x32xf32, #tpu.memory_space<vmem>>, vector<1x8x32xf32>
    %444 = vector.shape_cast %443 : vector<1x8x32xf32> to vector<8x32xf32>
    %445 = vector.extract_strided_slice %430 {offsets = [0, 0], sizes = [8, 8], strides = [1, 1]} : vector<16x8xf32> to vector<8x8xf32>
    %446 = vector.extract_strided_slice %436 {offsets = [0, 0], sizes = [8, 8], strides = [1, 1]} : vector<16x8xf32> to vector<8x8xf32>
    %447 = tpu.transpose %446, [1, 0] : vector<8x8xf32> -> vector<8x8xf32>
    %cst_168 = arith.constant dense<0.000000e+00> : vector<8x8xf32>
    %448 = tpu.matmul %445, %447, %cst_168 {dimension_numbers = #tpu.dot_dimension_numbers<[1], [0], [0], [1], [0, 0, 1, 1], [], []>} : vector<8x8xf32>, vector<8x8xf32>, vector<8x8xf32> -> vector<8x8xf32>
    %cst_169 = arith.constant dense<0xFF800000> : vector<8xf32>
    %449 = vector.multi_reduction <maximumf>, %448, %cst_169 [1] : vector<8x8xf32> to vector<8xf32>
    %450 = vector.shape_cast %449 : vector<8xf32> to vector<8x1xf32>
    %451 = vector.broadcast %450 : vector<8x1xf32> to vector<8x8xf32>
    %452 = arith.subf %448, %451 : vector<8x8xf32>
    %453 = math.exp %452 : vector<8x8xf32>
    %cst_170 = arith.constant dense<0.000000e+00> : vector<8xf32>
    %454 = vector.multi_reduction <add>, %453, %cst_170 [1] : vector<8x8xf32> to vector<8xf32>
    %455 = vector.shape_cast %454 : vector<8xf32> to vector<8x1xf32>
    %456 = tpu.reciprocal %455 : vector<8x1xf32> -> vector<8x1xf32>
    %457 = vector.broadcast %456 : vector<8x1xf32> to vector<8x8xf32>
    %458 = arith.mulf %453, %457 : vector<8x8xf32>
    %459 = vector.extract_strided_slice %442 {offsets = [0, 0], sizes = [8, 8], strides = [1, 1]} : vector<16x8xf32> to vector<8x8xf32>
    %cst_171 = arith.constant dense<0.000000e+00> : vector<8x8xf32>
    %460 = tpu.matmul %458, %459, %cst_171 {dimension_numbers = #tpu.dot_dimension_numbers<[1], [0], [0], [1], [0, 0, 1, 1], [], []>} : vector<8x8xf32>, vector<8x8xf32>, vector<8x8xf32> -> vector<8x8xf32>
    %cst_172 = arith.constant dense<0.000000e+00> : vector<8x32xf32>
    %461 = tpu.matmul %460, %444, %cst_172 {dimension_numbers = #tpu.dot_dimension_numbers<[1], [0], [0], [1], [0, 0, 1, 1], [], []>} : vector<8x8xf32>, vector<8x32xf32>, vector<8x32xf32> -> vector<8x32xf32>
    %462 = arith.addf %406, %461 : vector<8x32xf32>
    %463 = vector.extract_strided_slice %430 {offsets = [8, 0], sizes = [8, 8], strides = [1, 1]} : vector<16x8xf32> to vector<8x8xf32>
    %464 = vector.extract_strided_slice %436 {offsets = [8, 0], sizes = [8, 8], strides = [1, 1]} : vector<16x8xf32> to vector<8x8xf32>
    %465 = tpu.transpose %464, [1, 0] : vector<8x8xf32> -> vector<8x8xf32>
    %cst_173 = arith.constant dense<0.000000e+00> : vector<8x8xf32>
    %466 = tpu.matmul %463, %465, %cst_173 {dimension_numbers = #tpu.dot_dimension_numbers<[1], [0], [0], [1], [0, 0, 1, 1], [], []>} : vector<8x8xf32>, vector<8x8xf32>, vector<8x8xf32> -> vector<8x8xf32>
    %cst_174 = arith.constant dense<0xFF800000> : vector<8xf32>
    %467 = vector.multi_reduction <maximumf>, %466, %cst_174 [1] : vector<8x8xf32> to vector<8xf32>
    %468 = vector.shape_cast %467 : vector<8xf32> to vector<8x1xf32>
    %469 = vector.broadcast %468 : vector<8x1xf32> to vector<8x8xf32>
    %470 = arith.subf %466, %469 : vector<8x8xf32>
    %471 = math.exp %470 : vector<8x8xf32>
    %cst_175 = arith.constant dense<0.000000e+00> : vector<8xf32>
    %472 = vector.multi_reduction <add>, %471, %cst_175 [1] : vector<8x8xf32> to vector<8xf32>
    %473 = vector.shape_cast %472 : vector<8xf32> to vector<8x1xf32>
    %474 = tpu.reciprocal %473 : vector<8x1xf32> -> vector<8x1xf32>
    %475 = vector.broadcast %474 : vector<8x1xf32> to vector<8x8xf32>
    %476 = arith.mulf %471, %475 : vector<8x8xf32>
    %477 = vector.extract_strided_slice %442 {offsets = [8, 0], sizes = [8, 8], strides = [1, 1]} : vector<16x8xf32> to vector<8x8xf32>
    %cst_176 = arith.constant dense<0.000000e+00> : vector<8x8xf32>
    %478 = tpu.matmul %476, %477, %cst_176 {dimension_numbers = #tpu.dot_dimension_numbers<[1], [0], [0], [1], [0, 0, 1, 1], [], []>} : vector<8x8xf32>, vector<8x8xf32>, vector<8x8xf32> -> vector<8x8xf32>
    %cst_177 = arith.constant dense<0.000000e+00> : vector<8x32xf32>
    %479 = tpu.matmul %478, %444, %cst_177 {dimension_numbers = #tpu.dot_dimension_numbers<[1], [0], [0], [1], [0, 0, 1, 1], [], []>} : vector<8x8xf32>, vector<8x32xf32>, vector<8x32xf32> -> vector<8x32xf32>
    %480 = arith.addf %424, %479 : vector<8x32xf32>
    %c15 = arith.constant 15 : index
    %c0_178 = arith.constant 0 : index
    %c0_179 = arith.constant 0 : index
    %481 = vector.load %arg3[%c15, %c0_178, %c0_179] : memref<24x32x8xf32, #tpu.memory_space<vmem>>, vector<1x32x8xf32>
    %482 = vector.shape_cast %481 : vector<1x32x8xf32> to vector<32x8xf32>
    %cst_180 = arith.constant dense<0.000000e+00> : vector<16x8xf32>
    %483 = tpu.matmul %308, %482, %cst_180 {dimension_numbers = #tpu.dot_dimension_numbers<[1], [0], [0], [1], [0, 0, 1, 1], [], []>} : vector<16x32xf32>, vector<32x8xf32>, vector<16x8xf32> -> vector<16x8xf32>
    %484 = vector.extract_strided_slice %1 {offsets = [15, 0], sizes = [1, 8], strides = [1, 1]} : vector<24x8xf32> to vector<1x8xf32>
    %485 = vector.broadcast %484 : vector<1x8xf32> to vector<16x8xf32>
    %486 = arith.addf %483, %485 : vector<16x8xf32>
    %c19 = arith.constant 19 : index
    %c0_181 = arith.constant 0 : index
    %c0_182 = arith.constant 0 : index
    %487 = vector.load %arg3[%c19, %c0_181, %c0_182] : memref<24x32x8xf32, #tpu.memory_space<vmem>>, vector<1x32x8xf32>
    %488 = vector.shape_cast %487 : vector<1x32x8xf32> to vector<32x8xf32>
    %cst_183 = arith.constant dense<0.000000e+00> : vector<16x8xf32>
    %489 = tpu.matmul %308, %488, %cst_183 {dimension_numbers = #tpu.dot_dimension_numbers<[1], [0], [0], [1], [0, 0, 1, 1], [], []>} : vector<16x32xf32>, vector<32x8xf32>, vector<16x8xf32> -> vector<16x8xf32>
    %490 = vector.extract_strided_slice %1 {offsets = [19, 0], sizes = [1, 8], strides = [1, 1]} : vector<24x8xf32> to vector<1x8xf32>
    %491 = vector.broadcast %490 : vector<1x8xf32> to vector<16x8xf32>
    %492 = arith.addf %489, %491 : vector<16x8xf32>
    %c23 = arith.constant 23 : index
    %c0_184 = arith.constant 0 : index
    %c0_185 = arith.constant 0 : index
    %493 = vector.load %arg3[%c23, %c0_184, %c0_185] : memref<24x32x8xf32, #tpu.memory_space<vmem>>, vector<1x32x8xf32>
    %494 = vector.shape_cast %493 : vector<1x32x8xf32> to vector<32x8xf32>
    %cst_186 = arith.constant dense<0.000000e+00> : vector<16x8xf32>
    %495 = tpu.matmul %308, %494, %cst_186 {dimension_numbers = #tpu.dot_dimension_numbers<[1], [0], [0], [1], [0, 0, 1, 1], [], []>} : vector<16x32xf32>, vector<32x8xf32>, vector<16x8xf32> -> vector<16x8xf32>
    %496 = vector.extract_strided_slice %1 {offsets = [23, 0], sizes = [1, 8], strides = [1, 1]} : vector<24x8xf32> to vector<1x8xf32>
    %497 = vector.broadcast %496 : vector<1x8xf32> to vector<16x8xf32>
    %498 = arith.addf %495, %497 : vector<16x8xf32>
    %c7_187 = arith.constant 7 : index
    %c0_188 = arith.constant 0 : index
    %c0_189 = arith.constant 0 : index
    %499 = vector.load %arg4[%c7_187, %c0_188, %c0_189] : memref<8x8x32xf32, #tpu.memory_space<vmem>>, vector<1x8x32xf32>
    %500 = vector.shape_cast %499 : vector<1x8x32xf32> to vector<8x32xf32>
    %501 = vector.extract_strided_slice %486 {offsets = [0, 0], sizes = [8, 8], strides = [1, 1]} : vector<16x8xf32> to vector<8x8xf32>
    %502 = vector.extract_strided_slice %492 {offsets = [0, 0], sizes = [8, 8], strides = [1, 1]} : vector<16x8xf32> to vector<8x8xf32>
    %503 = tpu.transpose %502, [1, 0] : vector<8x8xf32> -> vector<8x8xf32>
    %cst_190 = arith.constant dense<0.000000e+00> : vector<8x8xf32>
    %504 = tpu.matmul %501, %503, %cst_190 {dimension_numbers = #tpu.dot_dimension_numbers<[1], [0], [0], [1], [0, 0, 1, 1], [], []>} : vector<8x8xf32>, vector<8x8xf32>, vector<8x8xf32> -> vector<8x8xf32>
    %cst_191 = arith.constant dense<0xFF800000> : vector<8xf32>
    %505 = vector.multi_reduction <maximumf>, %504, %cst_191 [1] : vector<8x8xf32> to vector<8xf32>
    %506 = vector.shape_cast %505 : vector<8xf32> to vector<8x1xf32>
    %507 = vector.broadcast %506 : vector<8x1xf32> to vector<8x8xf32>
    %508 = arith.subf %504, %507 : vector<8x8xf32>
    %509 = math.exp %508 : vector<8x8xf32>
    %cst_192 = arith.constant dense<0.000000e+00> : vector<8xf32>
    %510 = vector.multi_reduction <add>, %509, %cst_192 [1] : vector<8x8xf32> to vector<8xf32>
    %511 = vector.shape_cast %510 : vector<8xf32> to vector<8x1xf32>
    %512 = tpu.reciprocal %511 : vector<8x1xf32> -> vector<8x1xf32>
    %513 = vector.broadcast %512 : vector<8x1xf32> to vector<8x8xf32>
    %514 = arith.mulf %509, %513 : vector<8x8xf32>
    %515 = vector.extract_strided_slice %498 {offsets = [0, 0], sizes = [8, 8], strides = [1, 1]} : vector<16x8xf32> to vector<8x8xf32>
    %cst_193 = arith.constant dense<0.000000e+00> : vector<8x8xf32>
    %516 = tpu.matmul %514, %515, %cst_193 {dimension_numbers = #tpu.dot_dimension_numbers<[1], [0], [0], [1], [0, 0, 1, 1], [], []>} : vector<8x8xf32>, vector<8x8xf32>, vector<8x8xf32> -> vector<8x8xf32>
    %cst_194 = arith.constant dense<0.000000e+00> : vector<8x32xf32>
    %517 = tpu.matmul %516, %500, %cst_194 {dimension_numbers = #tpu.dot_dimension_numbers<[1], [0], [0], [1], [0, 0, 1, 1], [], []>} : vector<8x8xf32>, vector<8x32xf32>, vector<8x32xf32> -> vector<8x32xf32>
    %518 = arith.addf %462, %517 : vector<8x32xf32>
    %519 = vector.extract_strided_slice %486 {offsets = [8, 0], sizes = [8, 8], strides = [1, 1]} : vector<16x8xf32> to vector<8x8xf32>
    %520 = vector.extract_strided_slice %492 {offsets = [8, 0], sizes = [8, 8], strides = [1, 1]} : vector<16x8xf32> to vector<8x8xf32>
    %521 = tpu.transpose %520, [1, 0] : vector<8x8xf32> -> vector<8x8xf32>
    %cst_195 = arith.constant dense<0.000000e+00> : vector<8x8xf32>
    %522 = tpu.matmul %519, %521, %cst_195 {dimension_numbers = #tpu.dot_dimension_numbers<[1], [0], [0], [1], [0, 0, 1, 1], [], []>} : vector<8x8xf32>, vector<8x8xf32>, vector<8x8xf32> -> vector<8x8xf32>
    %cst_196 = arith.constant dense<0xFF800000> : vector<8xf32>
    %523 = vector.multi_reduction <maximumf>, %522, %cst_196 [1] : vector<8x8xf32> to vector<8xf32>
    %524 = vector.shape_cast %523 : vector<8xf32> to vector<8x1xf32>
    %525 = vector.broadcast %524 : vector<8x1xf32> to vector<8x8xf32>
    %526 = arith.subf %522, %525 : vector<8x8xf32>
    %527 = math.exp %526 : vector<8x8xf32>
    %cst_197 = arith.constant dense<0.000000e+00> : vector<8xf32>
    %528 = vector.multi_reduction <add>, %527, %cst_197 [1] : vector<8x8xf32> to vector<8xf32>
    %529 = vector.shape_cast %528 : vector<8xf32> to vector<8x1xf32>
    %530 = tpu.reciprocal %529 : vector<8x1xf32> -> vector<8x1xf32>
    %531 = vector.broadcast %530 : vector<8x1xf32> to vector<8x8xf32>
    %532 = arith.mulf %527, %531 : vector<8x8xf32>
    %533 = vector.extract_strided_slice %498 {offsets = [8, 0], sizes = [8, 8], strides = [1, 1]} : vector<16x8xf32> to vector<8x8xf32>
    %cst_198 = arith.constant dense<0.000000e+00> : vector<8x8xf32>
    %534 = tpu.matmul %532, %533, %cst_198 {dimension_numbers = #tpu.dot_dimension_numbers<[1], [0], [0], [1], [0, 0, 1, 1], [], []>} : vector<8x8xf32>, vector<8x8xf32>, vector<8x8xf32> -> vector<8x8xf32>
    %cst_199 = arith.constant dense<0.000000e+00> : vector<8x32xf32>
    %535 = tpu.matmul %534, %500, %cst_199 {dimension_numbers = #tpu.dot_dimension_numbers<[1], [0], [0], [1], [0, 0, 1, 1], [], []>} : vector<8x8xf32>, vector<8x32xf32>, vector<8x32xf32> -> vector<8x32xf32>
    %536 = arith.addf %480, %535 : vector<8x32xf32>
    %537 = tpu.concatenate %518, %536 in 0 : vector<8x32xf32>, vector<8x32xf32> -> vector<16x32xf32>
    %538 = arith.addf %308, %537 : vector<16x32xf32>
    %539 = vector.broadcast %309 : vector<1x32xf32> to vector<16x32xf32>
    %540 = arith.addf %538, %539 : vector<16x32xf32>
    %cst_200 = arith.constant dense<0.000000e+00> : vector<16xf32>
    %541 = vector.multi_reduction <add>, %540, %cst_200 [1] : vector<16x32xf32> to vector<16xf32>
    %542 = vector.shape_cast %541 : vector<16xf32> to vector<16x1xf32>
    %cst_201 = arith.constant 3.200000e+01 : f32
    %543 = vector.broadcast %cst_201 : f32 to vector<16x1xf32>
    %544 = arith.divf %542, %543 : vector<16x1xf32>
    %545 = vector.broadcast %544 : vector<16x1xf32> to vector<16x32xf32>
    %546 = arith.subf %540, %545 : vector<16x32xf32>
    %547 = arith.mulf %546, %546 : vector<16x32xf32>
    %cst_202 = arith.constant dense<0.000000e+00> : vector<16xf32>
    %548 = vector.multi_reduction <add>, %547, %cst_202 [1] : vector<16x32xf32> to vector<16xf32>
    %549 = vector.shape_cast %548 : vector<16xf32> to vector<16x1xf32>
    %cst_203 = arith.constant 3.200000e+01 : f32
    %550 = vector.broadcast %cst_203 : f32 to vector<16x1xf32>
    %551 = arith.divf %549, %550 : vector<16x1xf32>
    %552 = vector.broadcast %544 : vector<16x1xf32> to vector<16x32xf32>
    %553 = arith.subf %540, %552 : vector<16x32xf32>
    %cst_204 = arith.constant 9.99999974E-6 : f32
    %554 = vector.broadcast %cst_204 : f32 to vector<16x1xf32>
    %555 = arith.addf %551, %554 : vector<16x1xf32>
    %556 = math.rsqrt %555 : vector<16x1xf32>
    %557 = vector.broadcast %556 : vector<16x1xf32> to vector<16x32xf32>
    %558 = arith.mulf %553, %557 : vector<16x32xf32>
    %559 = vector.broadcast %310 : vector<1x32xf32> to vector<16x32xf32>
    %560 = arith.mulf %558, %559 : vector<16x32xf32>
    %561 = vector.broadcast %311 : vector<1x32xf32> to vector<16x32xf32>
    %562 = arith.addf %560, %561 : vector<16x32xf32>
    %c1_205 = arith.constant 1 : index
    %c0_206 = arith.constant 0 : index
    %c0_207 = arith.constant 0 : index
    %563 = vector.load %arg5[%c1_205, %c0_206, %c0_207] : memref<4x32x32xf32, #tpu.memory_space<vmem>>, vector<1x32x32xf32>
    %564 = vector.shape_cast %563 : vector<1x32x32xf32> to vector<32x32xf32>
    %cst_208 = arith.constant dense<0.000000e+00> : vector<16x32xf32>
    %565 = tpu.matmul %562, %564, %cst_208 {dimension_numbers = #tpu.dot_dimension_numbers<[1], [0], [0], [1], [0, 0, 1, 1], [], []>} : vector<16x32xf32>, vector<32x32xf32>, vector<16x32xf32> -> vector<16x32xf32>
    %566 = vector.broadcast %312 : vector<1x32xf32> to vector<16x32xf32>
    %567 = arith.addf %565, %566 : vector<16x32xf32>
    %568 = arith.addf %562, %567 : vector<16x32xf32>
    %cst_209 = arith.constant dense<0.000000e+00> : vector<16xf32>
    %569 = vector.multi_reduction <add>, %568, %cst_209 [1] : vector<16x32xf32> to vector<16xf32>
    %570 = vector.shape_cast %569 : vector<16xf32> to vector<16x1xf32>
    %cst_210 = arith.constant 3.200000e+01 : f32
    %571 = vector.broadcast %cst_210 : f32 to vector<16x1xf32>
    %572 = arith.divf %570, %571 : vector<16x1xf32>
    %573 = vector.broadcast %572 : vector<16x1xf32> to vector<16x32xf32>
    %574 = arith.subf %568, %573 : vector<16x32xf32>
    %575 = arith.mulf %574, %574 : vector<16x32xf32>
    %cst_211 = arith.constant dense<0.000000e+00> : vector<16xf32>
    %576 = vector.multi_reduction <add>, %575, %cst_211 [1] : vector<16x32xf32> to vector<16xf32>
    %577 = vector.shape_cast %576 : vector<16xf32> to vector<16x1xf32>
    %cst_212 = arith.constant 3.200000e+01 : f32
    %578 = vector.broadcast %cst_212 : f32 to vector<16x1xf32>
    %579 = arith.divf %577, %578 : vector<16x1xf32>
    %580 = vector.broadcast %572 : vector<16x1xf32> to vector<16x32xf32>
    %581 = arith.subf %568, %580 : vector<16x32xf32>
    %cst_213 = arith.constant 9.99999974E-6 : f32
    %582 = vector.broadcast %cst_213 : f32 to vector<16x1xf32>
    %583 = arith.addf %579, %582 : vector<16x1xf32>
    %584 = math.rsqrt %583 : vector<16x1xf32>
    %585 = vector.broadcast %584 : vector<16x1xf32> to vector<16x32xf32>
    %586 = arith.mulf %581, %585 : vector<16x32xf32>
    %587 = vector.broadcast %313 : vector<1x32xf32> to vector<16x32xf32>
    %588 = arith.mulf %586, %587 : vector<16x32xf32>
    %589 = vector.broadcast %314 : vector<1x32xf32> to vector<16x32xf32>
    %590 = arith.addf %588, %589 : vector<16x32xf32>
    %591 = vector.extract_strided_slice %0 {offsets = [14, 0], sizes = [1, 32], strides = [1, 1]} : vector<16x32xf32> to vector<1x32xf32>
    %592 = vector.extract_strided_slice %0 {offsets = [15, 0], sizes = [1, 32], strides = [1, 1]} : vector<16x32xf32> to vector<1x32xf32>
    %593 = vector.extract_strided_slice %590 {offsets = [0, 0], sizes = [1, 32], strides = [1, 1]} : vector<16x32xf32> to vector<1x32xf32>
    %594 = vector.extract_strided_slice %590 {offsets = [8, 0], sizes = [1, 32], strides = [1, 1]} : vector<16x32xf32> to vector<1x32xf32>
    %595 = tpu.concatenate %593, %594 in 0 : vector<1x32xf32>, vector<1x32xf32> -> vector<2x32xf32>
    %c2_214 = arith.constant 2 : index
    %c0_215 = arith.constant 0 : index
    %c0_216 = arith.constant 0 : index
    %596 = vector.load %arg5[%c2_214, %c0_215, %c0_216] : memref<4x32x32xf32, #tpu.memory_space<vmem>>, vector<1x32x32xf32>
    %597 = vector.shape_cast %596 : vector<1x32x32xf32> to vector<32x32xf32>
    %cst_217 = arith.constant dense<0.000000e+00> : vector<2x32xf32>
    %598 = tpu.matmul %595, %597, %cst_217 {dimension_numbers = #tpu.dot_dimension_numbers<[1], [0], [0], [1], [0, 0, 1, 1], [], []>} : vector<2x32xf32>, vector<32x32xf32>, vector<2x32xf32> -> vector<2x32xf32>
    %599 = vector.broadcast %591 : vector<1x32xf32> to vector<2x32xf32>
    %600 = arith.addf %598, %599 : vector<2x32xf32>
    %c3_218 = arith.constant 3 : index
    %c0_219 = arith.constant 0 : index
    %c0_220 = arith.constant 0 : index
    %601 = vector.load %arg5[%c3_218, %c0_219, %c0_220] : memref<4x32x32xf32, #tpu.memory_space<vmem>>, vector<1x32x32xf32>
    %602 = vector.shape_cast %601 : vector<1x32x32xf32> to vector<32x32xf32>
    %cst_221 = arith.constant dense<0.000000e+00> : vector<2x32xf32>
    %603 = tpu.matmul %600, %602, %cst_221 {dimension_numbers = #tpu.dot_dimension_numbers<[1], [0], [0], [1], [0, 0, 1, 1], [], []>} : vector<2x32xf32>, vector<32x32xf32>, vector<2x32xf32> -> vector<2x32xf32>
    %604 = vector.broadcast %592 : vector<1x32xf32> to vector<2x32xf32>
    %605 = arith.addf %603, %604 : vector<2x32xf32>
    %606 = tpu.concatenate %595, %605 in 1 : vector<2x32xf32>, vector<2x32xf32> -> vector<2x64xf32>
    %c0_222 = arith.constant 0 : index
    %c0_223 = arith.constant 0 : index
    %607 = vector.load %arg6[%c0_222, %c0_223] : memref<2x64xf32, #tpu.memory_space<vmem>>, vector<2x64xf32>
    tpu.vector_store %arg6[%c0_222, %c0_223], %606 {strides = array<i32>} : memref<2x64xf32, #tpu.memory_space<vmem>>, vector<2x64xf32>,
    return
  }
}

</mosaic_0001>

<llo_original>
// kernel: bert_forward.1
$region0: #{bert_forward.1}
  #allocation0 [shape = 'u32[]', space=smem, size = 0x4, offset = 0x4, fixed_abs, tag = 'smem constant byte address 0x4 - core index']
  #allocation1 [shape = 'u32[144,128]{1,0:T(1,128)}', space=vmem, size = 0x12000, scoped, tag = 'internal scratch']
  %s0 = inlined_call_operand.vmem [shape: f32[16,32], index: 0, kind: input, shape index: {}]
  %s1 = inlined_call_operand.vmem [shape: f32[16,32], index: 1, kind: input, shape index: {}]
  %s2 = inlined_call_operand.vmem [shape: f32[24,8], index: 2, kind: input, shape index: {}]
  %s3 = inlined_call_operand.vmem [shape: f32[24,32,8], index: 3, kind: input, shape index: {}]
  %s4 = inlined_call_operand.vmem [shape: f32[8,8,32], index: 4, kind: input, shape index: {}]
  %s5 = inlined_call_operand.vmem [shape: f32[4,32,32], index: 5, kind: input, shape index: {}]
  %s6 = inlined_call_operand.vmem [shape: f32[2,64], index: 6, kind: output, shape index: {}]
  %s7 = sld [smem:[#allocation0]]
  $region34: #{bert_forward.1} parent=0
    _
  %s9 = ssub.s32 1, %s7
  %s10 = scalar_select 0, %s9, %s7
  // Predicated region
  $region2: #{bert_forward.1} parent=0 // pred_check
    _
  $region3: #{bert_forward.1} parent=0 // pred_check_branch
    %12 = sbr.rel (0) target = $region5
  $region4: #{bert_forward.1} parent=0 // pred_region
    _
  $region5: #{bert_forward.1} parent=0 // pred_fallthru
    _
  // Predicated region
  $region6: #{bert_forward.1} parent=0 // pred_check
    _
  $region7: #{bert_forward.1} parent=0 // pred_check_branch
    %14 = sbr.rel (0) target = $region9
  $region8: #{bert_forward.1} parent=0 // pred_region
    _
  $region9: #{bert_forward.1} parent=0 // pred_fallthru
    _
  // Predicated region
  $region10: #{bert_forward.1} parent=0 // pred_check
    _
  $region11: #{bert_forward.1} parent=0 // pred_check_branch
    %16 = sbr.rel (0) target = $region13
  $region12: #{bert_forward.1} parent=0 // pred_region
    _
  $region13: #{bert_forward.1} parent=0 // pred_fallthru
    _
  // Predicated region
  $region14: #{bert_forward.1} parent=0 // pred_check
    _
  $region15: #{bert_forward.1} parent=0 // pred_check_branch
    %18 = sbr.rel (0) target = $region17
  $region16: #{bert_forward.1} parent=0 // pred_region
    _
  $region17: #{bert_forward.1} parent=0 // pred_fallthru
    _
  // Predicated region
  $region18: #{bert_forward.1} parent=0 // pred_check
    _
  $region19: #{bert_forward.1} parent=0 // pred_check_branch
    %20 = sbr.rel (0) target = $region21
  $region20: #{bert_forward.1} parent=0 // pred_region
    _
  $region21: #{bert_forward.1} parent=0 // pred_fallthru
    _
  // Predicated region
  $region22: #{bert_forward.1} parent=0 // pred_check
    _
  $region23: #{bert_forward.1} parent=0 // pred_check_branch
    %22 = sbr.rel (0) target = $region25
  $region24: #{bert_forward.1} parent=0 // pred_region
    _
  $region25: #{bert_forward.1} parent=0 // pred_fallthru
    _
  %v23 = vld [vmem:[%s1] sm:$0xff]
  %v24 = vld [vmem:[%s1 + $0x8] sm:$0xff]
  %v25 = vld [vmem:[%s2] sm:$0xff]
  %v26 = vld [vmem:[%s2 + $0x8] sm:$0xff]
  %v27 = vld [vmem:[%s2 + $0x10] sm:$0xff]
  %v28 = vld [vmem:[%s0] sm:$0xff]
  %v29 = vld [vmem:[%s0 + $0x8] sm:$0xff]
  %vm30 = vcmask 261120
  %v31 = vsel %vm30, %v28, 0.0
  %32 = vadd.xlane.f32.xlu0 %v31
  %v33 = vpop.xlane.xlu0 %32
  %v34 = vsel %vm30, %v29, 0.0
  %35 = vadd.xlane.f32.xlu0 %v34
  %v36 = vpop.xlane.xlu0 %35
  %v37 = vrcp.pop 32.0
  %v38 = vmul.f32 %v33, %v37
  %v39 = vmul.f32 %v36, %v37
  %v40 = vsub.f32 %v28, %v38
  %v41 = vsub.f32 %v29, %v39
  %v42 = vmul.f32 %v40, %v40
  %v43 = vmul.f32 %v41, %v41
  %v44 = vsel %vm30, %v42, 0.0
  %45 = vadd.xlane.f32.xlu0 %v44
  %v46 = vpop.xlane.xlu0 %45
  %v47 = vsel %vm30, %v43, 0.0
  %48 = vadd.xlane.f32.xlu0 %v47
  %v49 = vpop.xlane.xlu0 %48
  %v50 = vmul.f32 %v46, %v37
  %v51 = vmul.f32 %v49, %v37
  %v52 = vadd.f32 %v50, 1e-05
  %v53 = vadd.f32 %v51, 1e-05
  %v54 = vrsqrt.pop %v52
  %v55 = vrsqrt.pop %v53
  %v56 = vmul.f32 %v40, %v54
  %v57 = vmul.f32 %v41, %v55
  %v58 = vlaneseq
  %v59 = vshrl.u32 %v58, 7
  %v60 = vsub.s32 0, %v59
  %v61 = vrot.slane %v23, %v60
  %v62 = vmul.f32 %v56, %v61
  %v63 = vmul.f32 %v57, %v61
  %v64 = vlaneseq
  %v65 = vshrl.u32 %v64, 7
  %v66 = vsub.s32 1, %v65
  %v67 = vrot.slane %v23, %v66
  %v68 = vadd.f32 %v62, %v67
  %v69 = vadd.f32 %v63, %v67
  %v70 = vld [vmem:[%s3] sm:$0xff]
  %v71 = vld [vmem:[%s3 + $0x8] sm:$0xff]
  %v72 = vld [vmem:[%s3 + $0x10] sm:$0xff]
  %v73 = vld [vmem:[%s3 + $0x18] sm:$0xff]
  %v74 = vlaneseq
  %v75 = vshrl.u32 %v74, 7
  %v76 = vsub.s32 0, %v75
  %v77 = vrot.slane %v25, %v76
  %v79 = vsel %vm30, %v68, 0
  %v82 = vsel %vm30, %v69, 0
  %84 = vmatprep.subr.mxu0 0.0
  %85 = vmatpush1.msra.mxu0 %v70
  %86 = vmatprep.subr.mxu0 0.0
  %87 = vmatpush1.msra.mxu0 %v71
  %88 = vmatprep.subr.mxu0 0.0
  %89 = vmatpush1.msra.mxu0 %v72
  %90 = vmatprep.subr.mxu0 0.0
  %91 = vmatpush1.msra.mxu0 %v73
  %92 = vmatprep.subr.mxu0 0.0
  %93 = vmatpush1.msra.mxu0 0.0
  %94 = vmatprep.subr.mxu0 0.0
  %95 = vmatpush1.msra.mxu0 0.0
  %96 = vmatprep.subr.mxu0 0.0
  %97 = vmatpush1.msra.mxu0 0.0
  %98 = vmatprep.subr.mxu0 0.0
  %99 = vmatpush1.msra.mxu0 0.0
  %100 = vmatprep.subr.mxu0 0.0
  %101 = vmatpush1.msra.mxu0 0.0
  %102 = vmatprep.subr.mxu0 0.0
  %103 = vmatpush1.msra.mxu0 0.0
  %104 = vmatprep.subr.mxu0 0.0
  %105 = vmatpush1.msra.mxu0 0.0
  %106 = vmatprep.subr.mxu0 0.0
  %107 = vmatpush1.msra.mxu0 0.0
  %108 = vmatprep.subr.mxu0 0.0
  %109 = vmatpush1.msra.mxu0 0.0
  %110 = vmatprep.subr.mxu0 0.0
  %111 = vmatpush1.msra.mxu0 0.0
  %112 = vmatprep.subr.mxu0 0.0
  %113 = vmatpush1.msra.mxu0 0.0
  %114 = vmatprep.subr.mxu0 0.0
  %115 = vmatpush1.msra.mxu0 0.0
  %116 = vmatprep.subr.mxu0 0.0
  %117 = vmatpush1.msra.mxu0 0.0
  %118 = vmatprep.subr.mxu0 0.0
  %119 = vmatpush1.msra.mxu0 0.0
  %120 = vmatprep.subr.mxu0 0.0
  %121 = vmatpush1.msra.mxu0 0.0
  %122 = vmatprep.subr.mxu0 0.0
  %123 = vmatpush1.msra.mxu0 0.0
  %124 = vmatprep.subr.mxu0 0.0
  %125 = vmatpush1.msra.mxu0 0.0
  %126 = vmatprep.subr.mxu0 0.0
  %127 = vmatpush1.msra.mxu0 0.0
  %128 = vmatprep.subr.mxu0 0.0
  %129 = vmatpush1.msra.mxu0 0.0
  %130 = vmatprep.subr.mxu0 0.0
  %131 = vmatpush1.msra.mxu0 0.0
  %132 = vmatprep.subr.mxu0 0.0
  %133 = vmatpush1.msra.mxu0 0.0
  %134 = vmatprep.subr.mxu0 0.0
  %135 = vmatpush1.msra.mxu0 0.0
  %136 = vmatprep.subr.mxu0 0.0
  %137 = vmatpush1.msra.mxu0 0.0
  %138 = vmatprep.subr.mxu0 0.0
  %139 = vmatpush1.msra.mxu0 0.0
  %140 = vmatprep.subr.mxu0 0.0
  %141 = vmatpush1.msra.mxu0 0.0
  %142 = vmatprep.subr.mxu0 0.0
  %143 = vmatpush1.msra.mxu0 0.0
  %144 = vmatprep.subr.mxu0 0.0
  %145 = vmatpush1.msra.mxu0 0.0
  %146 = vmatprep.subr.mxu0 0.0
  %147 = vmatpush1.msra.mxu0 0.0
  %148 = vmatprep.mubr.f32.mxu0 0.0
  %149 = vmatmul.mubr.f32.gmra.mrb[0].mxu0 %v79
  %v150 = vpop.f32.mrb[0].mxu0
  %v151 = vadd.f32 %v77, %v150
  %v152 = vpop.f32.mrb[0].mxu0
  %153 = vmatprep.mubr.f32.mxu0 0.0
  %154 = vmatmul.mubr.f32.gmra.mrb[0].mxu0 %v82
  %v155 = vpop.f32.mrb[0].mxu0
  %v156 = vadd.f32 %v77, %v155
  %v157 = vpop.f32.mrb[0].mxu0
  %158 = vdwg.mxu0
  %s159 = scalar_lea.vmem %s3, 128
  %v160 = vld [vmem:[%s159] sm:$0xff]
  %v161 = vld [vmem:[%s159 + $0x8] sm:$0xff]
  %v162 = vld [vmem:[%s159 + $0x10] sm:$0xff]
  %v163 = vld [vmem:[%s159 + $0x18] sm:$0xff]
  %v164 = vlaneseq
  %v165 = vshrl.u32 %v164, 7
  %v166 = vsub.s32 4, %v165
  %v167 = vrot.slane %v25, %v166
  %168 = vmatprep.subr.mxu0 0.0
  %169 = vmatpush1.msra.mxu0 %v160
  %170 = vmatprep.subr.mxu0 0.0
  %171 = vmatpush1.msra.mxu0 %v161
  %172 = vmatprep.subr.mxu0 0.0
  %173 = vmatpush1.msra.mxu0 %v162
  %174 = vmatprep.subr.mxu0 0.0
  %175 = vmatpush1.msra.mxu0 %v163
  %176 = vmatprep.subr.mxu0 0.0
  %177 = vmatpush1.msra.mxu0 0.0
  %178 = vmatprep.subr.mxu0 0.0
  %179 = vmatpush1.msra.mxu0 0.0
  %180 = vmatprep.subr.mxu0 0.0
  %181 = vmatpush1.msra.mxu0 0.0
  %182 = vmatprep.subr.mxu0 0.0
  %183 = vmatpush1.msra.mxu0 0.0
  %184 = vmatprep.subr.mxu0 0.0
  %185 = vmatpush1.msra.mxu0 0.0
  %186 = vmatprep.subr.mxu0 0.0
  %187 = vmatpush1.msra.mxu0 0.0
  %188 = vmatprep.subr.mxu0 0.0
  %189 = vmatpush1.msra.mxu0 0.0
  %190 = vmatprep.subr.mxu0 0.0
  %191 = vmatpush1.msra.mxu0 0.0
  %192 = vmatprep.subr.mxu0 0.0
  %193 = vmatpush1.msra.mxu0 0.0
  %194 = vmatprep.subr.mxu0 0.0
  %195 = vmatpush1.msra.mxu0 0.0
  %196 = vmatprep.subr.mxu0 0.0
  %197 = vmatpush1.msra.mxu0 0.0
  %198 = vmatprep.subr.mxu0 0.0
  %199 = vmatpush1.msra.mxu0 0.0
  %200 = vmatprep.subr.mxu0 0.0
  %201 = vmatpush1.msra.mxu0 0.0
  %202 = vmatprep.subr.mxu0 0.0
  %203 = vmatpush1.msra.mxu0 0.0
  %204 = vmatprep.subr.mxu0 0.0
  %205 = vmatpush1.msra.mxu0 0.0
  %206 = vmatprep.subr.mxu0 0.0
  %207 = vmatpush1.msra.mxu0 0.0
  %208 = vmatprep.subr.mxu0 0.0
  %209 = vmatpush1.msra.mxu0 0.0
  %210 = vmatprep.subr.mxu0 0.0
  %211 = vmatpush1.msra.mxu0 0.0
  %212 = vmatprep.subr.mxu0 0.0
  %213 = vmatpush1.msra.mxu0 0.0
  %214 = vmatprep.subr.mxu0 0.0
  %215 = vmatpush1.msra.mxu0 0.0
  %216 = vmatprep.subr.mxu0 0.0
  %217 = vmatpush1.msra.mxu0 0.0
  %218 = vmatprep.subr.mxu0 0.0
  %219 = vmatpush1.msra.mxu0 0.0
  %220 = vmatprep.subr.mxu0 0.0
  %221 = vmatpush1.msra.mxu0 0.0
  %222 = vmatprep.subr.mxu0 0.0
  %223 = vmatpush1.msra.mxu0 0.0
  %224 = vmatprep.subr.mxu0 0.0
  %225 = vmatpush1.msra.mxu0 0.0
  %226 = vmatprep.subr.mxu0 0.0
  %227 = vmatpush1.msra.mxu0 0.0
  %228 = vmatprep.subr.mxu0 0.0
  %229 = vmatpush1.msra.mxu0 0.0
  %230 = vmatprep.subr.mxu0 0.0
  %231 = vmatpush1.msra.mxu0 0.0
  %232 = vmatprep.mubr.f32.mxu0 0.0
  %233 = vmatmul.mubr.f32.gmra.mrb[0].mxu0 %v79
  %v234 = vpop.f32.mrb[0].mxu0
  %v235 = vadd.f32 %v167, %v234
  %v236 = vpop.f32.mrb[0].mxu0
  %237 = vmatprep.mubr.f32.mxu0 0.0
  %238 = vmatmul.mubr.f32.gmra.mrb[0].mxu0 %v82
  %v239 = vpop.f32.mrb[0].mxu0
  %v240 = vadd.f32 %v167, %v239
  %v241 = vpop.f32.mrb[0].mxu0
  %242 = vdwg.mxu0
  %s243 = scalar_lea.vmem %s3, 256
  %v244 = vld [vmem:[%s243] sm:$0xff]
  %v245 = vld [vmem:[%s243 + $0x8] sm:$0xff]
  %v246 = vld [vmem:[%s243 + $0x10] sm:$0xff]
  %v247 = vld [vmem:[%s243 + $0x18] sm:$0xff]
  %v248 = vlaneseq
  %v249 = vshrl.u32 %v248, 7
  %v250 = vsub.s32 0, %v249
  %v251 = vrot.slane %v26, %v250
  %252 = vmatprep.subr.mxu0 0.0
  %253 = vmatpush1.msra.mxu0 %v244
  %254 = vmatprep.subr.mxu0 0.0
  %255 = vmatpush1.msra.mxu0 %v245
  %256 = vmatprep.subr.mxu0 0.0
  %257 = vmatpush1.msra.mxu0 %v246
  %258 = vmatprep.subr.mxu0 0.0
  %259 = vmatpush1.msra.mxu0 %v247
  %260 = vmatprep.subr.mxu0 0.0
  %261 = vmatpush1.msra.mxu0 0.0
  %262 = vmatprep.subr.mxu0 0.0
  %263 = vmatpush1.msra.mxu0 0.0
  %264 = vmatprep.subr.mxu0 0.0
  %265 = vmatpush1.msra.mxu0 0.0
  %266 = vmatprep.subr.mxu0 0.0
  %267 = vmatpush1.msra.mxu0 0.0
  %268 = vmatprep.subr.mxu0 0.0
  %269 = vmatpush1.msra.mxu0 0.0
  %270 = vmatprep.subr.mxu0 0.0
  %271 = vmatpush1.msra.mxu0 0.0
  %272 = vmatprep.subr.mxu0 0.0
  %273 = vmatpush1.msra.mxu0 0.0
  %274 = vmatprep.subr.mxu0 0.0
  %275 = vmatpush1.msra.mxu0 0.0
  %276 = vmatprep.subr.mxu0 0.0
  %277 = vmatpush1.msra.mxu0 0.0
  %278 = vmatprep.subr.mxu0 0.0
  %279 = vmatpush1.msra.mxu0 0.0
  %280 = vmatprep.subr.mxu0 0.0
  %281 = vmatpush1.msra.mxu0 0.0
  %282 = vmatprep.subr.mxu0 0.0
  %283 = vmatpush1.msra.mxu0 0.0
  %284 = vmatprep.subr.mxu0 0.0
  %285 = vmatpush1.msra.mxu0 0.0
  %286 = vmatprep.subr.mxu0 0.0
  %287 = vmatpush1.msra.mxu0 0.0
  %288 = vmatprep.subr.mxu0 0.0
  %289 = vmatpush1.msra.mxu0 0.0
  %290 = vmatprep.subr.mxu0 0.0
  %291 = vmatpush1.msra.mxu0 0.0
  %292 = vmatprep.subr.mxu0 0.0
  %293 = vmatpush1.msra.mxu0 0.0
  %294 = vmatprep.subr.mxu0 0.0
  %295 = vmatpush1.msra.mxu0 0.0
  %296 = vmatprep.subr.mxu0 0.0
  %297 = vmatpush1.msra.mxu0 0.0
  %298 = vmatprep.subr.mxu0 0.0
  %299 = vmatpush1.msra.mxu0 0.0
  %300 = vmatprep.subr.mxu0 0.0
  %301 = vmatpush1.msra.mxu0 0.0
  %302 = vmatprep.subr.mxu0 0.0
  %303 = vmatpush1.msra.mxu0 0.0
  %304 = vmatprep.subr.mxu0 0.0
  %305 = vmatpush1.msra.mxu0 0.0
  %306 = vmatprep.subr.mxu0 0.0
  %307 = vmatpush1.msra.mxu0 0.0
  %308 = vmatprep.subr.mxu0 0.0
  %309 = vmatpush1.msra.mxu0 0.0
  %310 = vmatprep.subr.mxu0 0.0
  %311 = vmatpush1.msra.mxu0 0.0
  %312 = vmatprep.subr.mxu0 0.0
  %313 = vmatpush1.msra.mxu0 0.0
  %314 = vmatprep.subr.mxu0 0.0
  %315 = vmatpush1.msra.mxu0 0.0
  %316 = vmatprep.mubr.f32.mxu0 0.0
  %317 = vmatmul.mubr.f32.gmra.mrb[0].mxu0 %v79
  %v318 = vpop.f32.mrb[0].mxu0
  %v319 = vadd.f32 %v251, %v318
  %v320 = vpop.f32.mrb[0].mxu0
  %321 = vmatprep.mubr.f32.mxu0 0.0
  %322 = vmatmul.mubr.f32.gmra.mrb[0].mxu0 %v82
  %v323 = vpop.f32.mrb[0].mxu0
  %v324 = vadd.f32 %v251, %v323
  %v325 = vpop.f32.mrb[0].mxu0
  %326 = vdwg.mxu0
  %v327 = vld [vmem:[%s4] sm:$0xff]
  %vm328 = vcmask 64512
  %v330 = vsel %vm328, %v151, 0
  %v333 = vsel %vm328, %v235, 0
  %335 = vmatprep.subr.mxu0 0.0
  %336 = vmatpush1.xpose.msra.mxu0 %v333
  %337 = vmatprep.subr.mxu0 0.0
  %338 = vmatpush1.xpose.msra.mxu0 0.0
  %339 = vmatprep.subr.mxu0 0.0
  %340 = vmatpush1.xpose.msra.mxu0 0.0
  %341 = vmatprep.subr.mxu0 0.0
  %342 = vmatpush1.xpose.msra.mxu0 0.0
  %343 = vmatprep.subr.mxu0 0.0
  %344 = vmatpush1.xpose.msra.mxu0 0.0
  %345 = vmatprep.subr.mxu0 0.0
  %346 = vmatpush1.xpose.msra.mxu0 0.0
  %347 = vmatprep.subr.mxu0 0.0
  %348 = vmatpush1.xpose.msra.mxu0 0.0
  %349 = vmatprep.subr.mxu0 0.0
  %350 = vmatpush1.xpose.msra.mxu0 0.0
  %351 = vmatprep.subr.mxu0 0.0
  %352 = vmatpush1.xpose.msra.mxu0 0.0
  %353 = vmatprep.subr.mxu0 0.0
  %354 = vmatpush1.xpose.msra.mxu0 0.0
  %355 = vmatprep.subr.mxu0 0.0
  %356 = vmatpush1.xpose.msra.mxu0 0.0
  %357 = vmatprep.subr.mxu0 0.0
  %358 = vmatpush1.xpose.msra.mxu0 0.0
  %359 = vmatprep.subr.mxu0 0.0
  %360 = vmatpush1.xpose.msra.mxu0 0.0
  %361 = vmatprep.subr.mxu0 0.0
  %362 = vmatpush1.xpose.msra.mxu0 0.0
  %363 = vmatprep.subr.mxu0 0.0
  %364 = vmatpush1.xpose.msra.mxu0 0.0
  %365 = vmatprep.subr.mxu0 0.0
  %366 = vmatpush1.xpose.msra.mxu0 0.0
  %367 = vmatprep.subr.mxu0 0.0
  %368 = vmatpush1.xpose.msra.mxu0 0.0
  %369 = vmatprep.subr.mxu0 0.0
  %370 = vmatpush1.xpose.msra.mxu0 0.0
  %371 = vmatprep.subr.mxu0 0.0
  %372 = vmatpush1.xpose.msra.mxu0 0.0
  %373 = vmatprep.subr.mxu0 0.0
  %374 = vmatpush1.xpose.msra.mxu0 0.0
  %375 = vmatprep.subr.mxu0 0.0
  %376 = vmatpush1.xpose.msra.mxu0 0.0
  %377 = vmatprep.subr.mxu0 0.0
  %378 = vmatpush1.xpose.msra.mxu0 0.0
  %379 = vmatprep.subr.mxu0 0.0
  %380 = vmatpush1.xpose.msra.mxu0 0.0
  %381 = vmatprep.subr.mxu0 0.0
  %382 = vmatpush1.xpose.msra.mxu0 0.0
  %383 = vmatprep.subr.mxu0 0.0
  %384 = vmatpush1.xpose.msra.mxu0 0.0
  %385 = vmatprep.subr.mxu0 0.0
  %386 = vmatpush1.xpose.msra.mxu0 0.0
  %387 = vmatprep.subr.mxu0 0.0
  %388 = vmatpush1.xpose.msra.mxu0 0.0
  %389 = vmatprep.subr.mxu0 0.0
  %390 = vmatpush1.xpose.msra.mxu0 0.0
  %391 = vmatprep.subr.mxu0 0.0
  %392 = vmatpush1.xpose.msra.mxu0 0.0
  %393 = vmatprep.subr.mxu0 0.0
  %394 = vmatpush1.xpose.msra.mxu0 0.0
  %395 = vmatprep.subr.mxu0 0.0
  %396 = vmatpush1.xpose.msra.mxu0 0.0
  %397 = vmatprep.subr.mxu0 0.0
  %398 = vmatpush1.xpose.msra.mxu0 0.0
  %399 = vmatprep.mubr.f32.mxu0 0.0
  %400 = vmatmul.mubr.f32.gmra.mrb[0].mxu0 %v330
  %v401 = vpop.f32.mrb[0].mxu0
  %v402 = vadd.f32 0.0, %v401
  %v403 = vpop.f32.mrb[0].mxu0
  %404 = vdwg.mxu0
  %v405 = vsel %vm328, %v402, -inf
  %406 = vmax.xlane.f32.xlu0 %v405
  %v407 = vpop.xlane.xlu0 %406
  %v408 = vsub.f32 %v402, %v407
  %v409 = vmul.f32 %v408, 1.442695
  %v410 = vpow.pop %v409
  %v411 = vsel %vm328, %v410, 0.0
  %412 = vadd.xlane.f32.xlu0 %v411
  %v413 = vpop.xlane.xlu0 %412
  %v414 = vrcp.pop %v413
  %v415 = vmul.f32 %v410, %v414
  %v417 = vsel %vm328, %v415, 0
  %419 = vmatprep.subr.mxu0 0.0
  %420 = vmatpush1.msra.mxu0 %v319
  %421 = vmatprep.subr.mxu0 0.0
  %422 = vmatpush1.msra.mxu0 0.0
  %423 = vmatprep.subr.mxu0 0.0
  %424 = vmatpush1.msra.mxu0 0.0
  %425 = vmatprep.subr.mxu0 0.0
  %426 = vmatpush1.msra.mxu0 0.0
  %427 = vmatprep.subr.mxu0 0.0
  %428 = vmatpush1.msra.mxu0 0.0
  %429 = vmatprep.subr.mxu0 0.0
  %430 = vmatpush1.msra.mxu0 0.0
  %431 = vmatprep.subr.mxu0 0.0
  %432 = vmatpush1.msra.mxu0 0.0
  %433 = vmatprep.subr.mxu0 0.0
  %434 = vmatpush1.msra.mxu0 0.0
  %435 = vmatprep.subr.mxu0 0.0
  %436 = vmatpush1.msra.mxu0 0.0
  %437 = vmatprep.subr.mxu0 0.0
  %438 = vmatpush1.msra.mxu0 0.0
  %439 = vmatprep.subr.mxu0 0.0
  %440 = vmatpush1.msra.mxu0 0.0
  %441 = vmatprep.subr.mxu0 0.0
  %442 = vmatpush1.msra.mxu0 0.0
  %443 = vmatprep.subr.mxu0 0.0
  %444 = vmatpush1.msra.mxu0 0.0
  %445 = vmatprep.subr.mxu0 0.0
  %446 = vmatpush1.msra.mxu0 0.0
  %447 = vmatprep.subr.mxu0 0.0
  %448 = vmatpush1.msra.mxu0 0.0
  %449 = vmatprep.subr.mxu0 0.0
  %450 = vmatpush1.msra.mxu0 0.0
  %451 = vmatprep.subr.mxu0 0.0
  %452 = vmatpush1.msra.mxu0 0.0
  %453 = vmatprep.subr.mxu0 0.0
  %454 = vmatpush1.msra.mxu0 0.0
  %455 = vmatprep.subr.mxu0 0.0
  %456 = vmatpush1.msra.mxu0 0.0
  %457 = vmatprep.subr.mxu0 0.0
  %458 = vmatpush1.msra.mxu0 0.0
  %459 = vmatprep.subr.mxu0 0.0
  %460 = vmatpush1.msra.mxu0 0.0
  %461 = vmatprep.subr.mxu0 0.0
  %462 = vmatpush1.msra.mxu0 0.0
  %463 = vmatprep.subr.mxu0 0.0
  %464 = vmatpush1.msra.mxu0 0.0
  %465 = vmatprep.subr.mxu0 0.0
  %466 = vmatpush1.msra.mxu0 0.0
  %467 = vmatprep.subr.mxu0 0.0
  %468 = vmatpush1.msra.mxu0 0.0
  %469 = vmatprep.subr.mxu0 0.0
  %470 = vmatpush1.msra.mxu0 0.0
  %471 = vmatprep.subr.mxu0 0.0
  %472 = vmatpush1.msra.mxu0 0.0
  %473 = vmatprep.subr.mxu0 0.0
  %474 = vmatpush1.msra.mxu0 0.0
  %475 = vmatprep.subr.mxu0 0.0
  %476 = vmatpush1.msra.mxu0 0.0
  %477 = vmatprep.subr.mxu0 0.0
  %478 = vmatpush1.msra.mxu0 0.0
  %479 = vmatprep.subr.mxu0 0.0
  %480 = vmatpush1.msra.mxu0 0.0
  %481 = vmatprep.subr.mxu0 0.0
  %482 = vmatpush1.msra.mxu0 0.0
  %483 = vmatprep.mubr.f32.mxu0 0.0
  %484 = vmatmul.mubr.f32.gmra.mrb[0].mxu0 %v417
  %v485 = vpop.f32.mrb[0].mxu0
  %v486 = vadd.f32 0.0, %v485
  %v487 = vpop.f32.mrb[0].mxu0
  %488 = vdwg.mxu0
  %v490 = vsel %vm328, %v156, 0
  %v493 = vsel %vm328, %v240, 0
  %495 = vmatprep.subr.mxu0 0.0
  %496 = vmatpush1.xpose.msra.mxu0 %v493
  %497 = vmatprep.subr.mxu0 0.0
  %498 = vmatpush1.xpose.msra.mxu0 0.0
  %499 = vmatprep.subr.mxu0 0.0
  %500 = vmatpush1.xpose.msra.mxu0 0.0
  %501 = vmatprep.subr.mxu0 0.0
  %502 = vmatpush1.xpose.msra.mxu0 0.0
  %503 = vmatprep.subr.mxu0 0.0
  %504 = vmatpush1.xpose.msra.mxu0 0.0
  %505 = vmatprep.subr.mxu0 0.0
  %506 = vmatpush1.xpose.msra.mxu0 0.0
  %507 = vmatprep.subr.mxu0 0.0
  %508 = vmatpush1.xpose.msra.mxu0 0.0
  %509 = vmatprep.subr.mxu0 0.0
  %510 = vmatpush1.xpose.msra.mxu0 0.0
  %511 = vmatprep.subr.mxu0 0.0
  %512 = vmatpush1.xpose.msra.mxu0 0.0
  %513 = vmatprep.subr.mxu0 0.0
  %514 = vmatpush1.xpose.msra.mxu0 0.0
  %515 = vmatprep.subr.mxu0 0.0
  %516 = vmatpush1.xpose.msra.mxu0 0.0
  %517 = vmatprep.subr.mxu0 0.0
  %518 = vmatpush1.xpose.msra.mxu0 0.0
  %519 = vmatprep.subr.mxu0 0.0
  %520 = vmatpush1.xpose.msra.mxu0 0.0
  %521 = vmatprep.subr.mxu0 0.0
  %522 = vmatpush1.xpose.msra.mxu0 0.0
  %523 = vmatprep.subr.mxu0 0.0
  %524 = vmatpush1.xpose.msra.mxu0 0.0
  %525 = vmatprep.subr.mxu0 0.0
  %526 = vmatpush1.xpose.msra.mxu0 0.0
  %527 = vmatprep.subr.mxu0 0.0
  %528 = vmatpush1.xpose.msra.mxu0 0.0
  %529 = vmatprep.subr.mxu0 0.0
  %530 = vmatpush1.xpose.msra.mxu0 0.0
  %531 = vmatprep.subr.mxu0 0.0
  %532 = vmatpush1.xpose.msra.mxu0 0.0
  %533 = vmatprep.subr.mxu0 0.0
  %534 = vmatpush1.xpose.msra.mxu0 0.0
  %535 = vmatprep.subr.mxu0 0.0
  %536 = vmatpush1.xpose.msra.mxu0 0.0
  %537 = vmatprep.subr.mxu0 0.0
  %538 = vmatpush1.xpose.msra.mxu0 0.0
  %539 = vmatprep.subr.mxu0 0.0
  %540 = vmatpush1.xpose.msra.mxu0 0.0
  %541 = vmatprep.subr.mxu0 0.0
  %542 = vmatpush1.xpose.msra.mxu0 0.0
  %543 = vmatprep.subr.mxu0 0.0
  %544 = vmatpush1.xpose.msra.mxu0 0.0
  %545 = vmatprep.subr.mxu0 0.0
  %546 = vmatpush1.xpose.msra.mxu0 0.0
  %547 = vmatprep.subr.mxu0 0.0
  %548 = vmatpush1.xpose.msra.mxu0 0.0
  %549 = vmatprep.subr.mxu0 0.0
  %550 = vmatpush1.xpose.msra.mxu0 0.0
  %551 = vmatprep.subr.mxu0 0.0
  %552 = vmatpush1.xpose.msra.mxu0 0.0
  %553 = vmatprep.subr.mxu0 0.0
  %554 = vmatpush1.xpose.msra.mxu0 0.0
  %555 = vmatprep.subr.mxu0 0.0
  %556 = vmatpush1.xpose.msra.mxu0 0.0
  %557 = vmatprep.subr.mxu0 0.0
  %558 = vmatpush1.xpose.msra.mxu0 0.0
  %559 = vmatprep.mubr.f32.mxu0 0.0
  %560 = vmatmul.mubr.f32.gmra.mrb[0].mxu0 %v490
  %v561 = vpop.f32.mrb[0].mxu0
  %v562 = vadd.f32 0.0, %v561
  %v563 = vpop.f32.mrb[0].mxu0
  %564 = vdwg.mxu0
  %v565 = vsel %vm328, %v562, -inf
  %566 = vmax.xlane.f32.xlu0 %v565
  %v567 = vpop.xlane.xlu0 %566
  %v568 = vsub.f32 %v562, %v567
  %v569 = vmul.f32 %v568, 1.442695
  %v570 = vpow.pop %v569
  %v571 = vsel %vm328, %v570, 0.0
  %572 = vadd.xlane.f32.xlu0 %v571
  %v573 = vpop.xlane.xlu0 %572
  %v574 = vrcp.pop %v573
  %v575 = vmul.f32 %v570, %v574
  %v577 = vsel %vm328, %v575, 0
  %579 = vmatprep.subr.mxu0 0.0
  %580 = vmatpush1.msra.mxu0 %v324
  %581 = vmatprep.subr.mxu0 0.0
  %582 = vmatpush1.msra.mxu0 0.0
  %583 = vmatprep.subr.mxu0 0.0
  %584 = vmatpush1.msra.mxu0 0.0
  %585 = vmatprep.subr.mxu0 0.0
  %586 = vmatpush1.msra.mxu0 0.0
  %587 = vmatprep.subr.mxu0 0.0
  %588 = vmatpush1.msra.mxu0 0.0
  %589 = vmatprep.subr.mxu0 0.0
  %590 = vmatpush1.msra.mxu0 0.0
  %591 = vmatprep.subr.mxu0 0.0
  %592 = vmatpush1.msra.mxu0 0.0
  %593 = vmatprep.subr.mxu0 0.0
  %594 = vmatpush1.msra.mxu0 0.0
  %595 = vmatprep.subr.mxu0 0.0
  %596 = vmatpush1.msra.mxu0 0.0
  %597 = vmatprep.subr.mxu0 0.0
  %598 = vmatpush1.msra.mxu0 0.0
  %599 = vmatprep.subr.mxu0 0.0
  %600 = vmatpush1.msra.mxu0 0.0
  %601 = vmatprep.subr.mxu0 0.0
  %602 = vmatpush1.msra.mxu0 0.0
  %603 = vmatprep.subr.mxu0 0.0
  %604 = vmatpush1.msra.mxu0 0.0
  %605 = vmatprep.subr.mxu0 0.0
  %606 = vmatpush1.msra.mxu0 0.0
  %607 = vmatprep.subr.mxu0 0.0
  %608 = vmatpush1.msra.mxu0 0.0
  %609 = vmatprep.subr.mxu0 0.0
  %610 = vmatpush1.msra.mxu0 0.0
  %611 = vmatprep.subr.mxu0 0.0
  %612 = vmatpush1.msra.mxu0 0.0
  %613 = vmatprep.subr.mxu0 0.0
  %614 = vmatpush1.msra.mxu0 0.0
  %615 = vmatprep.subr.mxu0 0.0
  %616 = vmatpush1.msra.mxu0 0.0
  %617 = vmatprep.subr.mxu0 0.0
  %618 = vmatpush1.msra.mxu0 0.0
  %619 = vmatprep.subr.mxu0 0.0
  %620 = vmatpush1.msra.mxu0 0.0
  %621 = vmatprep.subr.mxu0 0.0
  %622 = vmatpush1.msra.mxu0 0.0
  %623 = vmatprep.subr.mxu0 0.0
  %624 = vmatpush1.msra.mxu0 0.0
  %625 = vmatprep.subr.mxu0 0.0
  %626 = vmatpush1.msra.mxu0 0.0
  %627 = vmatprep.subr.mxu0 0.0
  %628 = vmatpush1.msra.mxu0 0.0
  %629 = vmatprep.subr.mxu0 0.0
  %630 = vmatpush1.msra.mxu0 0.0
  %631 = vmatprep.subr.mxu0 0.0
  %632 = vmatpush1.msra.mxu0 0.0
  %633 = vmatprep.subr.mxu0 0.0
  %634 = vmatpush1.msra.mxu0 0.0
  %635 = vmatprep.subr.mxu0 0.0
  %636 = vmatpush1.msra.mxu0 0.0
  %637 = vmatprep.subr.mxu0 0.0
  %638 = vmatpush1.msra.mxu0 0.0
  %639 = vmatprep.subr.mxu0 0.0
  %640 = vmatpush1.msra.mxu0 0.0
  %641 = vmatprep.subr.mxu0 0.0
  %642 = vmatpush1.msra.mxu0 0.0
  %643 = vmatprep.mubr.f32.mxu0 0.0
  %644 = vmatmul.mubr.f32.gmra.mrb[0].mxu0 %v577
  %v645 = vpop.f32.mrb[0].mxu0
  %v646 = vadd.f32 0.0, %v645
  %v647 = vpop.f32.mrb[0].mxu0
  %648 = vdwg.mxu0
  %s649 = scalar_lea.vmem %s3, 32
  %v650 = vld [vmem:[%s649] sm:$0xff]
  %v651 = vld [vmem:[%s649 + $0x8] sm:$0xff]
  %v652 = vld [vmem:[%s649 + $0x10] sm:$0xff]
  %v653 = vld [vmem:[%s649 + $0x18] sm:$0xff]
  %v654 = vlaneseq
  %v655 = vshrl.u32 %v654, 7
  %v656 = vsub.s32 1, %v655
  %v657 = vrot.slane %v25, %v656
  %658 = vmatprep.subr.mxu0 0.0
  %659 = vmatpush1.msra.mxu0 %v650
  %660 = vmatprep.subr.mxu0 0.0
  %661 = vmatpush1.msra.mxu0 %v651
  %662 = vmatprep.subr.mxu0 0.0
  %663 = vmatpush1.msra.mxu0 %v652
  %664 = vmatprep.subr.mxu0 0.0
  %665 = vmatpush1.msra.mxu0 %v653
  %666 = vmatprep.subr.mxu0 0.0
  %667 = vmatpush1.msra.mxu0 0.0
  %668 = vmatprep.subr.mxu0 0.0
  %669 = vmatpush1.msra.mxu0 0.0
  %670 = vmatprep.subr.mxu0 0.0
  %671 = vmatpush1.msra.mxu0 0.0
  %672 = vmatprep.subr.mxu0 0.0
  %673 = vmatpush1.msra.mxu0 0.0
  %674 = vmatprep.subr.mxu0 0.0
  %675 = vmatpush1.msra.mxu0 0.0
  %676 = vmatprep.subr.mxu0 0.0
  %677 = vmatpush1.msra.mxu0 0.0
  %678 = vmatprep.subr.mxu0 0.0
  %679 = vmatpush1.msra.mxu0 0.0
  %680 = vmatprep.subr.mxu0 0.0
  %681 = vmatpush1.msra.mxu0 0.0
  %682 = vmatprep.subr.mxu0 0.0
  %683 = vmatpush1.msra.mxu0 0.0
  %684 = vmatprep.subr.mxu0 0.0
  %685 = vmatpush1.msra.mxu0 0.0
  %686 = vmatprep.subr.mxu0 0.0
  %687 = vmatpush1.msra.mxu0 0.0
  %688 = vmatprep.subr.mxu0 0.0
  %689 = vmatpush1.msra.mxu0 0.0
  %690 = vmatprep.subr.mxu0 0.0
  %691 = vmatpush1.msra.mxu0 0.0
  %692 = vmatprep.subr.mxu0 0.0
  %693 = vmatpush1.msra.mxu0 0.0
  %694 = vmatprep.subr.mxu0 0.0
  %695 = vmatpush1.msra.mxu0 0.0
  %696 = vmatprep.subr.mxu0 0.0
  %697 = vmatpush1.msra.mxu0 0.0
  %698 = vmatprep.subr.mxu0 0.0
  %699 = vmatpush1.msra.mxu0 0.0
  %700 = vmatprep.subr.mxu0 0.0
  %701 = vmatpush1.msra.mxu0 0.0
  %702 = vmatprep.subr.mxu0 0.0
  %703 = vmatpush1.msra.mxu0 0.0
  %704 = vmatprep.subr.mxu0 0.0
  %705 = vmatpush1.msra.mxu0 0.0
  %706 = vmatprep.subr.mxu0 0.0
  %707 = vmatpush1.msra.mxu0 0.0
  %708 = vmatprep.subr.mxu0 0.0
  %709 = vmatpush1.msra.mxu0 0.0
  %710 = vmatprep.subr.mxu0 0.0
  %711 = vmatpush1.msra.mxu0 0.0
  %712 = vmatprep.subr.mxu0 0.0
  %713 = vmatpush1.msra.mxu0 0.0
  %714 = vmatprep.subr.mxu0 0.0
  %715 = vmatpush1.msra.mxu0 0.0
  %716 = vmatprep.subr.mxu0 0.0
  %717 = vmatpush1.msra.mxu0 0.0
  %718 = vmatprep.subr.mxu0 0.0
  %719 = vmatpush1.msra.mxu0 0.0
  %720 = vmatprep.subr.mxu0 0.0
  %721 = vmatpush1.msra.mxu0 0.0
  %722 = vmatprep.mubr.f32.mxu0 0.0
  %723 = vmatmul.mubr.f32.gmra.mrb[0].mxu0 %v79
  %v724 = vpop.f32.mrb[0].mxu0
  %v725 = vadd.f32 %v657, %v724
  %v726 = vpop.f32.mrb[0].mxu0
  %727 = vmatprep.mubr.f32.mxu0 0.0
  %728 = vmatmul.mubr.f32.gmra.mrb[0].mxu0 %v82
  %v729 = vpop.f32.mrb[0].mxu0
  %v730 = vadd.f32 %v657, %v729
  %v731 = vpop.f32.mrb[0].mxu0
  %732 = vdwg.mxu0
  %s733 = scalar_lea.vmem %s3, 160
  %v734 = vld [vmem:[%s733] sm:$0xff]
  %v735 = vld [vmem:[%s733 + $0x8] sm:$0xff]
  %v736 = vld [vmem:[%s733 + $0x10] sm:$0xff]
  %v737 = vld [vmem:[%s733 + $0x18] sm:$0xff]
  %v738 = vlaneseq
  %v739 = vshrl.u32 %v738, 7
  %v740 = vsub.s32 5, %v739
  %v741 = vrot.slane %v25, %v740
  %742 = vmatprep.subr.mxu0 0.0
  %743 = vmatpush1.msra.mxu0 %v734
  %744 = vmatprep.subr.mxu0 0.0
  %745 = vmatpush1.msra.mxu0 %v735
  %746 = vmatprep.subr.mxu0 0.0
  %747 = vmatpush1.msra.mxu0 %v736
  %748 = vmatprep.subr.mxu0 0.0
  %749 = vmatpush1.msra.mxu0 %v737
  %750 = vmatprep.subr.mxu0 0.0
  %751 = vmatpush1.msra.mxu0 0.0
  %752 = vmatprep.subr.mxu0 0.0
  %753 = vmatpush1.msra.mxu0 0.0
  %754 = vmatprep.subr.mxu0 0.0
  %755 = vmatpush1.msra.mxu0 0.0
  %756 = vmatprep.subr.mxu0 0.0
  %757 = vmatpush1.msra.mxu0 0.0
  %758 = vmatprep.subr.mxu0 0.0
  %759 = vmatpush1.msra.mxu0 0.0
  %760 = vmatprep.subr.mxu0 0.0
  %761 = vmatpush1.msra.mxu0 0.0
  %762 = vmatprep.subr.mxu0 0.0
  %763 = vmatpush1.msra.mxu0 0.0
  %764 = vmatprep.subr.mxu0 0.0
  %765 = vmatpush1.msra.mxu0 0.0
  %766 = vmatprep.subr.mxu0 0.0
  %767 = vmatpush1.msra.mxu0 0.0
  %768 = vmatprep.subr.mxu0 0.0
  %769 = vmatpush1.msra.mxu0 0.0
  %770 = vmatprep.subr.mxu0 0.0
  %771 = vmatpush1.msra.mxu0 0.0
  %772 = vmatprep.subr.mxu0 0.0
  %773 = vmatpush1.msra.mxu0 0.0
  %774 = vmatprep.subr.mxu0 0.0
  %775 = vmatpush1.msra.mxu0 0.0
  %776 = vmatprep.subr.mxu0 0.0
  %777 = vmatpush1.msra.mxu0 0.0
  %778 = vmatprep.subr.mxu0 0.0
  %779 = vmatpush1.msra.mxu0 0.0
  %780 = vmatprep.subr.mxu0 0.0
  %781 = vmatpush1.msra.mxu0 0.0
  %782 = vmatprep.subr.mxu0 0.0
  %783 = vmatpush1.msra.mxu0 0.0
  %784 = vmatprep.subr.mxu0 0.0
  %785 = vmatpush1.msra.mxu0 0.0
  %786 = vmatprep.subr.mxu0 0.0
  %787 = vmatpush1.msra.mxu0 0.0
  %788 = vmatprep.subr.mxu0 0.0
  %789 = vmatpush1.msra.mxu0 0.0
  %790 = vmatprep.subr.mxu0 0.0
  %791 = vmatpush1.msra.mxu0 0.0
  %792 = vmatprep.subr.mxu0 0.0
  %793 = vmatpush1.msra.mxu0 0.0
  %794 = vmatprep.subr.mxu0 0.0
  %795 = vmatpush1.msra.mxu0 0.0
  %796 = vmatprep.subr.mxu0 0.0
  %797 = vmatpush1.msra.mxu0 0.0
  %798 = vmatprep.subr.mxu0 0.0
  %799 = vmatpush1.msra.mxu0 0.0
  %800 = vmatprep.subr.mxu0 0.0
  %801 = vmatpush1.msra.mxu0 0.0
  %802 = vmatprep.subr.mxu0 0.0
  %803 = vmatpush1.msra.mxu0 0.0
  %804 = vmatprep.subr.mxu0 0.0
  %805 = vmatpush1.msra.mxu0 0.0
  %806 = vmatprep.mubr.f32.mxu0 0.0
  %807 = vmatmul.mubr.f32.gmra.mrb[0].mxu0 %v79
  %v808 = vpop.f32.mrb[0].mxu0
  %v809 = vadd.f32 %v741, %v808
  %v810 = vpop.f32.mrb[0].mxu0
  %811 = vmatprep.mubr.f32.mxu0 0.0
  %812 = vmatmul.mubr.f32.gmra.mrb[0].mxu0 %v82
  %v813 = vpop.f32.mrb[0].mxu0
  %v814 = vadd.f32 %v741, %v813
  %v815 = vpop.f32.mrb[0].mxu0
  %816 = vdwg.mxu0
  %s817 = scalar_lea.vmem %s3, 288
  %v818 = vld [vmem:[%s817] sm:$0xff]
  %v819 = vld [vmem:[%s817 + $0x8] sm:$0xff]
  %v820 = vld [vmem:[%s817 + $0x10] sm:$0xff]
  %v821 = vld [vmem:[%s817 + $0x18] sm:$0xff]
  %v822 = vlaneseq
  %v823 = vshrl.u32 %v822, 7
  %v824 = vsub.s32 1, %v823
  %v825 = vrot.slane %v26, %v824
  %826 = vmatprep.subr.mxu0 0.0
  %827 = vmatpush1.msra.mxu0 %v818
  %828 = vmatprep.subr.mxu0 0.0
  %829 = vmatpush1.msra.mxu0 %v819
  %830 = vmatprep.subr.mxu0 0.0
  %831 = vmatpush1.msra.mxu0 %v820
  %832 = vmatprep.subr.mxu0 0.0
  %833 = vmatpush1.msra.mxu0 %v821
  %834 = vmatprep.subr.mxu0 0.0
  %835 = vmatpush1.msra.mxu0 0.0
  %836 = vmatprep.subr.mxu0 0.0
  %837 = vmatpush1.msra.mxu0 0.0
  %838 = vmatprep.subr.mxu0 0.0
  %839 = vmatpush1.msra.mxu0 0.0
  %840 = vmatprep.subr.mxu0 0.0
  %841 = vmatpush1.msra.mxu0 0.0
  %842 = vmatprep.subr.mxu0 0.0
  %843 = vmatpush1.msra.mxu0 0.0
  %844 = vmatprep.subr.mxu0 0.0
  %845 = vmatpush1.msra.mxu0 0.0
  %846 = vmatprep.subr.mxu0 0.0
  %847 = vmatpush1.msra.mxu0 0.0
  %848 = vmatprep.subr.mxu0 0.0
  %849 = vmatpush1.msra.mxu0 0.0
  %850 = vmatprep.subr.mxu0 0.0
  %851 = vmatpush1.msra.mxu0 0.0
  %852 = vmatprep.subr.mxu0 0.0
  %853 = vmatpush1.msra.mxu0 0.0
  %854 = vmatprep.subr.mxu0 0.0
  %855 = vmatpush1.msra.mxu0 0.0
  %856 = vmatprep.subr.mxu0 0.0
  %857 = vmatpush1.msra.mxu0 0.0
  %858 = vmatprep.subr.mxu0 0.0
  %859 = vmatpush1.msra.mxu0 0.0
  %860 = vmatprep.subr.mxu0 0.0
  %861 = vmatpush1.msra.mxu0 0.0
  %862 = vmatprep.subr.mxu0 0.0
  %863 = vmatpush1.msra.mxu0 0.0
  %864 = vmatprep.subr.mxu0 0.0
  %865 = vmatpush1.msra.mxu0 0.0
  %866 = vmatprep.subr.mxu0 0.0
  %867 = vmatpush1.msra.mxu0 0.0
  %868 = vmatprep.subr.mxu0 0.0
  %869 = vmatpush1.msra.mxu0 0.0
  %870 = vmatprep.subr.mxu0 0.0
  %871 = vmatpush1.msra.mxu0 0.0
  %872 = vmatprep.subr.mxu0 0.0
  %873 = vmatpush1.msra.mxu0 0.0
  %874 = vmatprep.subr.mxu0 0.0
  %875 = vmatpush1.msra.mxu0 0.0
  %876 = vmatprep.subr.mxu0 0.0
  %877 = vmatpush1.msra.mxu0 0.0
  %878 = vmatprep.subr.mxu0 0.0
  %879 = vmatpush1.msra.mxu0 0.0
  %880 = vmatprep.subr.mxu0 0.0
  %881 = vmatpush1.msra.mxu0 0.0
  %882 = vmatprep.subr.mxu0 0.0
  %883 = vmatpush1.msra.mxu0 0.0
  %884 = vmatprep.subr.mxu0 0.0
  %885 = vmatpush1.msra.mxu0 0.0
  %886 = vmatprep.subr.mxu0 0.0
  %887 = vmatpush1.msra.mxu0 0.0
  %888 = vmatprep.subr.mxu0 0.0
  %889 = vmatpush1.msra.mxu0 0.0
  %890 = vmatprep.mubr.f32.mxu0 0.0
  %891 = vmatmul.mubr.f32.gmra.mrb[0].mxu0 %v79
  %v892 = vpop.f32.mrb[0].mxu0
  %v893 = vadd.f32 %v825, %v892
  %v894 = vpop.f32.mrb[0].mxu0
  %895 = vmatprep.mubr.f32.mxu0 0.0
  %896 = vmatmul.mubr.f32.gmra.mrb[0].mxu0 %v82
  %v897 = vpop.f32.mrb[0].mxu0
  %v898 = vadd.f32 %v825, %v897
  %v899 = vpop.f32.mrb[0].mxu0
  %900 = vdwg.mxu0
  %s901 = scalar_lea.vmem %s4, 8
  %v902 = vld [vmem:[%s901] sm:$0xff]
  %v904 = vsel %vm328, %v725, 0
  %v907 = vsel %vm328, %v809, 0
  %909 = vmatprep.subr.mxu0 0.0
  %910 = vmatpush1.xpose.msra.mxu0 %v907
  %911 = vmatprep.subr.mxu0 0.0
  %912 = vmatpush1.xpose.msra.mxu0 0.0
  %913 = vmatprep.subr.mxu0 0.0
  %914 = vmatpush1.xpose.msra.mxu0 0.0
  %915 = vmatprep.subr.mxu0 0.0
  %916 = vmatpush1.xpose.msra.mxu0 0.0
  %917 = vmatprep.subr.mxu0 0.0
  %918 = vmatpush1.xpose.msra.mxu0 0.0
  %919 = vmatprep.subr.mxu0 0.0
  %920 = vmatpush1.xpose.msra.mxu0 0.0
  %921 = vmatprep.subr.mxu0 0.0
  %922 = vmatpush1.xpose.msra.mxu0 0.0
  %923 = vmatprep.subr.mxu0 0.0
  %924 = vmatpush1.xpose.msra.mxu0 0.0
  %925 = vmatprep.subr.mxu0 0.0
  %926 = vmatpush1.xpose.msra.mxu0 0.0
  %927 = vmatprep.subr.mxu0 0.0
  %928 = vmatpush1.xpose.msra.mxu0 0.0
  %929 = vmatprep.subr.mxu0 0.0
  %930 = vmatpush1.xpose.msra.mxu0 0.0
  %931 = vmatprep.subr.mxu0 0.0
  %932 = vmatpush1.xpose.msra.mxu0 0.0
  %933 = vmatprep.subr.mxu0 0.0
  %934 = vmatpush1.xpose.msra.mxu0 0.0
  %935 = vmatprep.subr.mxu0 0.0
  %936 = vmatpush1.xpose.msra.mxu0 0.0
  %937 = vmatprep.subr.mxu0 0.0
  %938 = vmatpush1.xpose.msra.mxu0 0.0
  %939 = vmatprep.subr.mxu0 0.0
  %940 = vmatpush1.xpose.msra.mxu0 0.0
  %941 = vmatprep.subr.mxu0 0.0
  %942 = vmatpush1.xpose.msra.mxu0 0.0
  %943 = vmatprep.subr.mxu0 0.0
  %944 = vmatpush1.xpose.msra.mxu0 0.0
  %945 = vmatprep.subr.mxu0 0.0
  %946 = vmatpush1.xpose.msra.mxu0 0.0
  %947 = vmatprep.subr.mxu0 0.0
  %948 = vmatpush1.xpose.msra.mxu0 0.0
  %949 = vmatprep.subr.mxu0 0.0
  %950 = vmatpush1.xpose.msra.mxu0 0.0
  %951 = vmatprep.subr.mxu0 0.0
  %952 = vmatpush1.xpose.msra.mxu0 0.0
  %953 = vmatprep.subr.mxu0 0.0
  %954 = vmatpush1.xpose.msra.mxu0 0.0
  %955 = vmatprep.subr.mxu0 0.0
  %956 = vmatpush1.xpose.msra.mxu0 0.0
  %957 = vmatprep.subr.mxu0 0.0
  %958 = vmatpush1.xpose.msra.mxu0 0.0
  %959 = vmatprep.subr.mxu0 0.0
  %960 = vmatpush1.xpose.msra.mxu0 0.0
  %961 = vmatprep.subr.mxu0 0.0
  %962 = vmatpush1.xpose.msra.mxu0 0.0
  %963 = vmatprep.subr.mxu0 0.0
  %964 = vmatpush1.xpose.msra.mxu0 0.0
  %965 = vmatprep.subr.mxu0 0.0
  %966 = vmatpush1.xpose.msra.mxu0 0.0
  %967 = vmatprep.subr.mxu0 0.0
  %968 = vmatpush1.xpose.msra.mxu0 0.0
  %969 = vmatprep.subr.mxu0 0.0
  %970 = vmatpush1.xpose.msra.mxu0 0.0
  %971 = vmatprep.subr.mxu0 0.0
  %972 = vmatpush1.xpose.msra.mxu0 0.0
  %973 = vmatprep.mubr.f32.mxu0 0.0
  %974 = vmatmul.mubr.f32.gmra.mrb[0].mxu0 %v904
  %v975 = vpop.f32.mrb[0].mxu0
  %v976 = vadd.f32 0.0, %v975
  %v977 = vpop.f32.mrb[0].mxu0
  %978 = vdwg.mxu0
  %v979 = vsel %vm328, %v976, -inf
  %980 = vmax.xlane.f32.xlu0 %v979
  %v981 = vpop.xlane.xlu0 %980
  %v982 = vsub.f32 %v976, %v981
  %v983 = vmul.f32 %v982, 1.442695
  %v984 = vpow.pop %v983
  %v985 = vsel %vm328, %v984, 0.0
  %986 = vadd.xlane.f32.xlu0 %v985
  %v987 = vpop.xlane.xlu0 %986
  %v988 = vrcp.pop %v987
  %v989 = vmul.f32 %v984, %v988
  %v991 = vsel %vm328, %v989, 0
  %993 = vmatprep.subr.mxu0 0.0
  %994 = vmatpush1.msra.mxu0 %v893
  %995 = vmatprep.subr.mxu0 0.0
  %996 = vmatpush1.msra.mxu0 0.0
  %997 = vmatprep.subr.mxu0 0.0
  %998 = vmatpush1.msra.mxu0 0.0
  %999 = vmatprep.subr.mxu0 0.0
  %1000 = vmatpush1.msra.mxu0 0.0
  %1001 = vmatprep.subr.mxu0 0.0
  %1002 = vmatpush1.msra.mxu0 0.0
  %1003 = vmatprep.subr.mxu0 0.0
  %1004 = vmatpush1.msra.mxu0 0.0
  %1005 = vmatprep.subr.mxu0 0.0
  %1006 = vmatpush1.msra.mxu0 0.0
  %1007 = vmatprep.subr.mxu0 0.0
  %1008 = vmatpush1.msra.mxu0 0.0
  %1009 = vmatprep.subr.mxu0 0.0
  %1010 = vmatpush1.msra.mxu0 0.0
  %1011 = vmatprep.subr.mxu0 0.0
  %1012 = vmatpush1.msra.mxu0 0.0
  %1013 = vmatprep.subr.mxu0 0.0
  %1014 = vmatpush1.msra.mxu0 0.0
  %1015 = vmatprep.subr.mxu0 0.0
  %1016 = vmatpush1.msra.mxu0 0.0
  %1017 = vmatprep.subr.mxu0 0.0
  %1018 = vmatpush1.msra.mxu0 0.0
  %1019 = vmatprep.subr.mxu0 0.0
  %1020 = vmatpush1.msra.mxu0 0.0
  %1021 = vmatprep.subr.mxu0 0.0
  %1022 = vmatpush1.msra.mxu0 0.0
  %1023 = vmatprep.subr.mxu0 0.0
  %1024 = vmatpush1.msra.mxu0 0.0
  %1025 = vmatprep.subr.mxu0 0.0
  %1026 = vmatpush1.msra.mxu0 0.0
  %1027 = vmatprep.subr.mxu0 0.0
  %1028 = vmatpush1.msra.mxu0 0.0
  %1029 = vmatprep.subr.mxu0 0.0
  %1030 = vmatpush1.msra.mxu0 0.0
  %1031 = vmatprep.subr.mxu0 0.0
  %1032 = vmatpush1.msra.mxu0 0.0
  %1033 = vmatprep.subr.mxu0 0.0
  %1034 = vmatpush1.msra.mxu0 0.0
  %1035 = vmatprep.subr.mxu0 0.0
  %1036 = vmatpush1.msra.mxu0 0.0
  %1037 = vmatprep.subr.mxu0 0.0
  %1038 = vmatpush1.msra.mxu0 0.0
  %1039 = vmatprep.subr.mxu0 0.0
  %1040 = vmatpush1.msra.mxu0 0.0
  %1041 = vmatprep.subr.mxu0 0.0
  %1042 = vmatpush1.msra.mxu0 0.0
  %1043 = vmatprep.subr.mxu0 0.0
  %1044 = vmatpush1.msra.mxu0 0.0
  %1045 = vmatprep.subr.mxu0 0.0
  %1046 = vmatpush1.msra.mxu0 0.0
  %1047 = vmatprep.subr.mxu0 0.0
  %1048 = vmatpush1.msra.mxu0 0.0
  %1049 = vmatprep.subr.mxu0 0.0
  %1050 = vmatpush1.msra.mxu0 0.0
  %1051 = vmatprep.subr.mxu0 0.0
  %1052 = vmatpush1.msra.mxu0 0.0
  %1053 = vmatprep.subr.mxu0 0.0
  %1054 = vmatpush1.msra.mxu0 0.0
  %1055 = vmatprep.subr.mxu0 0.0
  %1056 = vmatpush1.msra.mxu0 0.0
  %1057 = vmatprep.mubr.f32.mxu0 0.0
  %1058 = vmatmul.mubr.f32.gmra.mrb[0].mxu0 %v991
  %v1059 = vpop.f32.mrb[0].mxu0
  %v1060 = vadd.f32 0.0, %v1059
  %v1061 = vpop.f32.mrb[0].mxu0
  %1062 = vdwg.mxu0
  %v1064 = vsel %vm328, %v1060, 0
  %1066 = vmatprep.subr.mxu0 0.0
  %1067 = vmatpush1.msra.mxu0 %v902
  %1068 = vmatprep.subr.mxu0 0.0
  %1069 = vmatpush1.msra.mxu0 0.0
  %1070 = vmatprep.subr.mxu0 0.0
  %1071 = vmatpush1.msra.mxu0 0.0
  %1072 = vmatprep.subr.mxu0 0.0
  %1073 = vmatpush1.msra.mxu0 0.0
  %1074 = vmatprep.subr.mxu0 0.0
  %1075 = vmatpush1.msra.mxu0 0.0
  %1076 = vmatprep.subr.mxu0 0.0
  %1077 = vmatpush1.msra.mxu0 0.0
  %1078 = vmatprep.subr.mxu0 0.0
  %1079 = vmatpush1.msra.mxu0 0.0
  %1080 = vmatprep.subr.mxu0 0.0
  %1081 = vmatpush1.msra.mxu0 0.0
  %1082 = vmatprep.subr.mxu0 0.0
  %1083 = vmatpush1.msra.mxu0 0.0
  %1084 = vmatprep.subr.mxu0 0.0
  %1085 = vmatpush1.msra.mxu0 0.0
  %1086 = vmatprep.subr.mxu0 0.0
  %1087 = vmatpush1.msra.mxu0 0.0
  %1088 = vmatprep.subr.mxu0 0.0
  %1089 = vmatpush1.msra.mxu0 0.0
  %1090 = vmatprep.subr.mxu0 0.0
  %1091 = vmatpush1.msra.mxu0 0.0
  %1092 = vmatprep.subr.mxu0 0.0
  %1093 = vmatpush1.msra.mxu0 0.0
  %1094 = vmatprep.subr.mxu0 0.0
  %1095 = vmatpush1.msra.mxu0 0.0
  %1096 = vmatprep.subr.mxu0 0.0
  %1097 = vmatpush1.msra.mxu0 0.0
  %1098 = vmatprep.subr.mxu0 0.0
  %1099 = vmatpush1.msra.mxu0 0.0
  %1100 = vmatprep.subr.mxu0 0.0
  %1101 = vmatpush1.msra.mxu0 0.0
  %1102 = vmatprep.subr.mxu0 0.0
  %1103 = vmatpush1.msra.mxu0 0.0
  %1104 = vmatprep.subr.mxu0 0.0
  %1105 = vmatpush1.msra.mxu0 0.0
  %1106 = vmatprep.subr.mxu0 0.0
  %1107 = vmatpush1.msra.mxu0 0.0
  %1108 = vmatprep.subr.mxu0 0.0
  %1109 = vmatpush1.msra.mxu0 0.0
  %1110 = vmatprep.subr.mxu0 0.0
  %1111 = vmatpush1.msra.mxu0 0.0
  %1112 = vmatprep.subr.mxu0 0.0
  %1113 = vmatpush1.msra.mxu0 0.0
  %1114 = vmatprep.subr.mxu0 0.0
  %1115 = vmatpush1.msra.mxu0 0.0
  %1116 = vmatprep.subr.mxu0 0.0
  %1117 = vmatpush1.msra.mxu0 0.0
  %1118 = vmatprep.subr.mxu0 0.0
  %1119 = vmatpush1.msra.mxu0 0.0
  %1120 = vmatprep.subr.mxu0 0.0
  %1121 = vmatpush1.msra.mxu0 0.0
  %1122 = vmatprep.subr.mxu0 0.0
  %1123 = vmatpush1.msra.mxu0 0.0
  %1124 = vmatprep.subr.mxu0 0.0
  %1125 = vmatpush1.msra.mxu0 0.0
  %1126 = vmatprep.subr.mxu0 0.0
  %1127 = vmatpush1.msra.mxu0 0.0
  %1128 = vmatprep.subr.mxu0 0.0
  %1129 = vmatpush1.msra.mxu0 0.0
  %1130 = vmatprep.mubr.f32.mxu0 0.0
  %1131 = vmatmul.mubr.f32.gmra.mrb[0].mxu0 %v1064
  %v1132 = vpop.f32.mrb[0].mxu0
  %v1133 = vadd.f32 0.0, %v1132
  %v1134 = vpop.f32.mrb[0].mxu0
  %1135 = vdwg.mxu0
  %v1137 = vsel %vm328, %v486, 0
  %1139 = vmatprep.subr.mxu0 0.0
  %1140 = vmatpush1.msra.mxu0 %v327
  %1141 = vmatprep.subr.mxu0 0.0
  %1142 = vmatpush1.msra.mxu0 0.0
  %1143 = vmatprep.subr.mxu0 0.0
  %1144 = vmatpush1.msra.mxu0 0.0
  %1145 = vmatprep.subr.mxu0 0.0
  %1146 = vmatpush1.msra.mxu0 0.0
  %1147 = vmatprep.subr.mxu0 0.0
  %1148 = vmatpush1.msra.mxu0 0.0
  %1149 = vmatprep.subr.mxu0 0.0
  %1150 = vmatpush1.msra.mxu0 0.0
  %1151 = vmatprep.subr.mxu0 0.0
  %1152 = vmatpush1.msra.mxu0 0.0
  %1153 = vmatprep.subr.mxu0 0.0
  %1154 = vmatpush1.msra.mxu0 0.0
  %1155 = vmatprep.subr.mxu0 0.0
  %1156 = vmatpush1.msra.mxu0 0.0
  %1157 = vmatprep.subr.mxu0 0.0
  %1158 = vmatpush1.msra.mxu0 0.0
  %1159 = vmatprep.subr.mxu0 0.0
  %1160 = vmatpush1.msra.mxu0 0.0
  %1161 = vmatprep.subr.mxu0 0.0
  %1162 = vmatpush1.msra.mxu0 0.0
  %1163 = vmatprep.subr.mxu0 0.0
  %1164 = vmatpush1.msra.mxu0 0.0
  %1165 = vmatprep.subr.mxu0 0.0
  %1166 = vmatpush1.msra.mxu0 0.0
  %1167 = vmatprep.subr.mxu0 0.0
  %1168 = vmatpush1.msra.mxu0 0.0
  %1169 = vmatprep.subr.mxu0 0.0
  %1170 = vmatpush1.msra.mxu0 0.0
  %1171 = vmatprep.subr.mxu0 0.0
  %1172 = vmatpush1.msra.mxu0 0.0
  %1173 = vmatprep.subr.mxu0 0.0
  %1174 = vmatpush1.msra.mxu0 0.0
  %1175 = vmatprep.subr.mxu0 0.0
  %1176 = vmatpush1.msra.mxu0 0.0
  %1177 = vmatprep.subr.mxu0 0.0
  %1178 = vmatpush1.msra.mxu0 0.0
  %1179 = vmatprep.subr.mxu0 0.0
  %1180 = vmatpush1.msra.mxu0 0.0
  %1181 = vmatprep.subr.mxu0 0.0
  %1182 = vmatpush1.msra.mxu0 0.0
  %1183 = vmatprep.subr.mxu0 0.0
  %1184 = vmatpush1.msra.mxu0 0.0
  %1185 = vmatprep.subr.mxu0 0.0
  %1186 = vmatpush1.msra.mxu0 0.0
  %1187 = vmatprep.subr.mxu0 0.0
  %1188 = vmatpush1.msra.mxu0 0.0
  %1189 = vmatprep.subr.mxu0 0.0
  %1190 = vmatpush1.msra.mxu0 0.0
  %1191 = vmatprep.subr.mxu0 0.0
  %1192 = vmatpush1.msra.mxu0 0.0
  %1193 = vmatprep.subr.mxu0 0.0
  %1194 = vmatpush1.msra.mxu0 0.0
  %1195 = vmatprep.subr.mxu0 0.0
  %1196 = vmatpush1.msra.mxu0 0.0
  %1197 = vmatprep.subr.mxu0 0.0
  %1198 = vmatpush1.msra.mxu0 0.0
  %1199 = vmatprep.subr.mxu0 0.0
  %1200 = vmatpush1.msra.mxu0 0.0
  %1201 = vmatprep.subr.mxu0 0.0
  %1202 = vmatpush1.msra.mxu0 0.0
  %1203 = vmatprep.mubr.f32.mxu0 0.0
  %1204 = vmatmul.mubr.f32.gmra.mrb[0].mxu0 %v1137
  %v1205 = vpop.f32.mrb[0].mxu0
  %v1206 = vadd.f32 %v1133, %v1205
  %v1207 = vpop.f32.mrb[0].mxu0
  %1208 = vdwg.mxu0
  %v1210 = vsel %vm328, %v730, 0
  %v1213 = vsel %vm328, %v814, 0
  %1215 = vmatprep.subr.mxu0 0.0
  %1216 = vmatpush1.xpose.msra.mxu0 %v1213
  %1217 = vmatprep.subr.mxu0 0.0
  %1218 = vmatpush1.xpose.msra.mxu0 0.0
  %1219 = vmatprep.subr.mxu0 0.0
  %1220 = vmatpush1.xpose.msra.mxu0 0.0
  %1221 = vmatprep.subr.mxu0 0.0
  %1222 = vmatpush1.xpose.msra.mxu0 0.0
  %1223 = vmatprep.subr.mxu0 0.0
  %1224 = vmatpush1.xpose.msra.mxu0 0.0
  %1225 = vmatprep.subr.mxu0 0.0
  %1226 = vmatpush1.xpose.msra.mxu0 0.0
  %1227 = vmatprep.subr.mxu0 0.0
  %1228 = vmatpush1.xpose.msra.mxu0 0.0
  %1229 = vmatprep.subr.mxu0 0.0
  %1230 = vmatpush1.xpose.msra.mxu0 0.0
  %1231 = vmatprep.subr.mxu0 0.0
  %1232 = vmatpush1.xpose.msra.mxu0 0.0
  %1233 = vmatprep.subr.mxu0 0.0
  %1234 = vmatpush1.xpose.msra.mxu0 0.0
  %1235 = vmatprep.subr.mxu0 0.0
  %1236 = vmatpush1.xpose.msra.mxu0 0.0
  %1237 = vmatprep.subr.mxu0 0.0
  %1238 = vmatpush1.xpose.msra.mxu0 0.0
  %1239 = vmatprep.subr.mxu0 0.0
  %1240 = vmatpush1.xpose.msra.mxu0 0.0
  %1241 = vmatprep.subr.mxu0 0.0
  %1242 = vmatpush1.xpose.msra.mxu0 0.0
  %1243 = vmatprep.subr.mxu0 0.0
  %1244 = vmatpush1.xpose.msra.mxu0 0.0
  %1245 = vmatprep.subr.mxu0 0.0
  %1246 = vmatpush1.xpose.msra.mxu0 0.0
  %1247 = vmatprep.subr.mxu0 0.0
  %1248 = vmatpush1.xpose.msra.mxu0 0.0
  %1249 = vmatprep.subr.mxu0 0.0
  %1250 = vmatpush1.xpose.msra.mxu0 0.0
  %1251 = vmatprep.subr.mxu0 0.0
  %1252 = vmatpush1.xpose.msra.mxu0 0.0
  %1253 = vmatprep.subr.mxu0 0.0
  %1254 = vmatpush1.xpose.msra.mxu0 0.0
  %1255 = vmatprep.subr.mxu0 0.0
  %1256 = vmatpush1.xpose.msra.mxu0 0.0
  %1257 = vmatprep.subr.mxu0 0.0
  %1258 = vmatpush1.xpose.msra.mxu0 0.0
  %1259 = vmatprep.subr.mxu0 0.0
  %1260 = vmatpush1.xpose.msra.mxu0 0.0
  %1261 = vmatprep.subr.mxu0 0.0
  %1262 = vmatpush1.xpose.msra.mxu0 0.0
  %1263 = vmatprep.subr.mxu0 0.0
  %1264 = vmatpush1.xpose.msra.mxu0 0.0
  %1265 = vmatprep.subr.mxu0 0.0
  %1266 = vmatpush1.xpose.msra.mxu0 0.0
  %1267 = vmatprep.subr.mxu0 0.0
  %1268 = vmatpush1.xpose.msra.mxu0 0.0
  %1269 = vmatprep.subr.mxu0 0.0
  %1270 = vmatpush1.xpose.msra.mxu0 0.0
  %1271 = vmatprep.subr.mxu0 0.0
  %1272 = vmatpush1.xpose.msra.mxu0 0.0
  %1273 = vmatprep.subr.mxu0 0.0
  %1274 = vmatpush1.xpose.msra.mxu0 0.0
  %1275 = vmatprep.subr.mxu0 0.0
  %1276 = vmatpush1.xpose.msra.mxu0 0.0
  %1277 = vmatprep.subr.mxu0 0.0
  %1278 = vmatpush1.xpose.msra.mxu0 0.0
  %1279 = vmatprep.mubr.f32.mxu0 0.0
  %1280 = vmatmul.mubr.f32.gmra.mrb[0].mxu0 %v1210
  %v1281 = vpop.f32.mrb[0].mxu0
  %v1282 = vadd.f32 0.0, %v1281
  %v1283 = vpop.f32.mrb[0].mxu0
  %1284 = vdwg.mxu0
  %v1285 = vsel %vm328, %v1282, -inf
  %1286 = vmax.xlane.f32.xlu0 %v1285
  %v1287 = vpop.xlane.xlu0 %1286
  %v1288 = vsub.f32 %v1282, %v1287
  %v1289 = vmul.f32 %v1288, 1.442695
  %v1290 = vpow.pop %v1289
  %v1291 = vsel %vm328, %v1290, 0.0
  %1292 = vadd.xlane.f32.xlu0 %v1291
  %v1293 = vpop.xlane.xlu0 %1292
  %v1294 = vrcp.pop %v1293
  %v1295 = vmul.f32 %v1290, %v1294
  %v1297 = vsel %vm328, %v1295, 0
  %1299 = vmatprep.subr.mxu0 0.0
  %1300 = vmatpush1.msra.mxu0 %v898
  %1301 = vmatprep.subr.mxu0 0.0
  %1302 = vmatpush1.msra.mxu0 0.0
  %1303 = vmatprep.subr.mxu0 0.0
  %1304 = vmatpush1.msra.mxu0 0.0
  %1305 = vmatprep.subr.mxu0 0.0
  %1306 = vmatpush1.msra.mxu0 0.0
  %1307 = vmatprep.subr.mxu0 0.0
  %1308 = vmatpush1.msra.mxu0 0.0
  %1309 = vmatprep.subr.mxu0 0.0
  %1310 = vmatpush1.msra.mxu0 0.0
  %1311 = vmatprep.subr.mxu0 0.0
  %1312 = vmatpush1.msra.mxu0 0.0
  %1313 = vmatprep.subr.mxu0 0.0
  %1314 = vmatpush1.msra.mxu0 0.0
  %1315 = vmatprep.subr.mxu0 0.0
  %1316 = vmatpush1.msra.mxu0 0.0
  %1317 = vmatprep.subr.mxu0 0.0
  %1318 = vmatpush1.msra.mxu0 0.0
  %1319 = vmatprep.subr.mxu0 0.0
  %1320 = vmatpush1.msra.mxu0 0.0
  %1321 = vmatprep.subr.mxu0 0.0
  %1322 = vmatpush1.msra.mxu0 0.0
  %1323 = vmatprep.subr.mxu0 0.0
  %1324 = vmatpush1.msra.mxu0 0.0
  %1325 = vmatprep.subr.mxu0 0.0
  %1326 = vmatpush1.msra.mxu0 0.0
  %1327 = vmatprep.subr.mxu0 0.0
  %1328 = vmatpush1.msra.mxu0 0.0
  %1329 = vmatprep.subr.mxu0 0.0
  %1330 = vmatpush1.msra.mxu0 0.0
  %1331 = vmatprep.subr.mxu0 0.0
  %1332 = vmatpush1.msra.mxu0 0.0
  %1333 = vmatprep.subr.mxu0 0.0
  %1334 = vmatpush1.msra.mxu0 0.0
  %1335 = vmatprep.subr.mxu0 0.0
  %1336 = vmatpush1.msra.mxu0 0.0
  %1337 = vmatprep.subr.mxu0 0.0
  %1338 = vmatpush1.msra.mxu0 0.0
  %1339 = vmatprep.subr.mxu0 0.0
  %1340 = vmatpush1.msra.mxu0 0.0
  %1341 = vmatprep.subr.mxu0 0.0
  %1342 = vmatpush1.msra.mxu0 0.0
  %1343 = vmatprep.subr.mxu0 0.0
  %1344 = vmatpush1.msra.mxu0 0.0
  %1345 = vmatprep.subr.mxu0 0.0
  %1346 = vmatpush1.msra.mxu0 0.0
  %1347 = vmatprep.subr.mxu0 0.0
  %1348 = vmatpush1.msra.mxu0 0.0
  %1349 = vmatprep.subr.mxu0 0.0
  %1350 = vmatpush1.msra.mxu0 0.0
  %1351 = vmatprep.subr.mxu0 0.0
  %1352 = vmatpush1.msra.mxu0 0.0
  %1353 = vmatprep.subr.mxu0 0.0
  %1354 = vmatpush1.msra.mxu0 0.0
  %1355 = vmatprep.subr.mxu0 0.0
  %1356 = vmatpush1.msra.mxu0 0.0
  %1357 = vmatprep.subr.mxu0 0.0
  %1358 = vmatpush1.msra.mxu0 0.0
  %1359 = vmatprep.subr.mxu0 0.0
  %1360 = vmatpush1.msra.mxu0 0.0
  %1361 = vmatprep.subr.mxu0 0.0
  %1362 = vmatpush1.msra.mxu0 0.0
  %1363 = vmatprep.mubr.f32.mxu0 0.0
  %1364 = vmatmul.mubr.f32.gmra.mrb[0].mxu0 %v1297
  %v1365 = vpop.f32.mrb[0].mxu0
  %v1366 = vadd.f32 0.0, %v1365
  %v1367 = vpop.f32.mrb[0].mxu0
  %1368 = vdwg.mxu0
  %v1370 = vsel %vm328, %v1366, 0
  %1372 = vmatprep.subr.mxu0 0.0
  %1373 = vmatpush1.msra.mxu0 %v902
  %1374 = vmatprep.subr.mxu0 0.0
  %1375 = vmatpush1.msra.mxu0 0.0
  %1376 = vmatprep.subr.mxu0 0.0
  %1377 = vmatpush1.msra.mxu0 0.0
  %1378 = vmatprep.subr.mxu0 0.0
  %1379 = vmatpush1.msra.mxu0 0.0
  %1380 = vmatprep.subr.mxu0 0.0
  %1381 = vmatpush1.msra.mxu0 0.0
  %1382 = vmatprep.subr.mxu0 0.0
  %1383 = vmatpush1.msra.mxu0 0.0
  %1384 = vmatprep.subr.mxu0 0.0
  %1385 = vmatpush1.msra.mxu0 0.0
  %1386 = vmatprep.subr.mxu0 0.0
  %1387 = vmatpush1.msra.mxu0 0.0
  %1388 = vmatprep.subr.mxu0 0.0
  %1389 = vmatpush1.msra.mxu0 0.0
  %1390 = vmatprep.subr.mxu0 0.0
  %1391 = vmatpush1.msra.mxu0 0.0
  %1392 = vmatprep.subr.mxu0 0.0
  %1393 = vmatpush1.msra.mxu0 0.0
  %1394 = vmatprep.subr.mxu0 0.0
  %1395 = vmatpush1.msra.mxu0 0.0
  %1396 = vmatprep.subr.mxu0 0.0
  %1397 = vmatpush1.msra.mxu0 0.0
  %1398 = vmatprep.subr.mxu0 0.0
  %1399 = vmatpush1.msra.mxu0 0.0
  %1400 = vmatprep.subr.mxu0 0.0
  %1401 = vmatpush1.msra.mxu0 0.0
  %1402 = vmatprep.subr.mxu0 0.0
  %1403 = vmatpush1.msra.mxu0 0.0
  %1404 = vmatprep.subr.mxu0 0.0
  %1405 = vmatpush1.msra.mxu0 0.0
  %1406 = vmatprep.subr.mxu0 0.0
  %1407 = vmatpush1.msra.mxu0 0.0
  %1408 = vmatprep.subr.mxu0 0.0
  %1409 = vmatpush1.msra.mxu0 0.0
  %1410 = vmatprep.subr.mxu0 0.0
  %1411 = vmatpush1.msra.mxu0 0.0
  %1412 = vmatprep.subr.mxu0 0.0
  %1413 = vmatpush1.msra.mxu0 0.0
  %1414 = vmatprep.subr.mxu0 0.0
  %1415 = vmatpush1.msra.mxu0 0.0
  %1416 = vmatprep.subr.mxu0 0.0
  %1417 = vmatpush1.msra.mxu0 0.0
  %1418 = vmatprep.subr.mxu0 0.0
  %1419 = vmatpush1.msra.mxu0 0.0
  %1420 = vmatprep.subr.mxu0 0.0
  %1421 = vmatpush1.msra.mxu0 0.0
  %1422 = vmatprep.subr.mxu0 0.0
  %1423 = vmatpush1.msra.mxu0 0.0
  %1424 = vmatprep.subr.mxu0 0.0
  %1425 = vmatpush1.msra.mxu0 0.0
  %1426 = vmatprep.subr.mxu0 0.0
  %1427 = vmatpush1.msra.mxu0 0.0
  %1428 = vmatprep.subr.mxu0 0.0
  %1429 = vmatpush1.msra.mxu0 0.0
  %1430 = vmatprep.subr.mxu0 0.0
  %1431 = vmatpush1.msra.mxu0 0.0
  %1432 = vmatprep.subr.mxu0 0.0
  %1433 = vmatpush1.msra.mxu0 0.0
  %1434 = vmatprep.subr.mxu0 0.0
  %1435 = vmatpush1.msra.mxu0 0.0
  %1436 = vmatprep.mubr.f32.mxu0 0.0
  %1437 = vmatmul.mubr.f32.gmra.mrb[0].mxu0 %v1370
  %v1438 = vpop.f32.mrb[0].mxu0
  %v1439 = vadd.f32 0.0, %v1438
  %v1440 = vpop.f32.mrb[0].mxu0
  %1441 = vdwg.mxu0
  %v1443 = vsel %vm328, %v646, 0
  %1445 = vmatprep.subr.mxu0 0.0
  %1446 = vmatpush1.msra.mxu0 %v327
  %1447 = vmatprep.subr.mxu0 0.0
  %1448 = vmatpush1.msra.mxu0 0.0
  %1449 = vmatprep.subr.mxu0 0.0
  %1450 = vmatpush1.msra.mxu0 0.0
  %1451 = vmatprep.subr.mxu0 0.0
  %1452 = vmatpush1.msra.mxu0 0.0
  %1453 = vmatprep.subr.mxu0 0.0
  %1454 = vmatpush1.msra.mxu0 0.0
  %1455 = vmatprep.subr.mxu0 0.0
  %1456 = vmatpush1.msra.mxu0 0.0
  %1457 = vmatprep.subr.mxu0 0.0
  %1458 = vmatpush1.msra.mxu0 0.0
  %1459 = vmatprep.subr.mxu0 0.0
  %1460 = vmatpush1.msra.mxu0 0.0
  %1461 = vmatprep.subr.mxu0 0.0
  %1462 = vmatpush1.msra.mxu0 0.0
  %1463 = vmatprep.subr.mxu0 0.0
  %1464 = vmatpush1.msra.mxu0 0.0
  %1465 = vmatprep.subr.mxu0 0.0
  %1466 = vmatpush1.msra.mxu0 0.0
  %1467 = vmatprep.subr.mxu0 0.0
  %1468 = vmatpush1.msra.mxu0 0.0
  %1469 = vmatprep.subr.mxu0 0.0
  %1470 = vmatpush1.msra.mxu0 0.0
  %1471 = vmatprep.subr.mxu0 0.0
  %1472 = vmatpush1.msra.mxu0 0.0
  %1473 = vmatprep.subr.mxu0 0.0
  %1474 = vmatpush1.msra.mxu0 0.0
  %1475 = vmatprep.subr.mxu0 0.0
  %1476 = vmatpush1.msra.mxu0 0.0
  %1477 = vmatprep.subr.mxu0 0.0
  %1478 = vmatpush1.msra.mxu0 0.0
  %1479 = vmatprep.subr.mxu0 0.0
  %1480 = vmatpush1.msra.mxu0 0.0
  %1481 = vmatprep.subr.mxu0 0.0
  %1482 = vmatpush1.msra.mxu0 0.0
  %1483 = vmatprep.subr.mxu0 0.0
  %1484 = vmatpush1.msra.mxu0 0.0
  %1485 = vmatprep.subr.mxu0 0.0
  %1486 = vmatpush1.msra.mxu0 0.0
  %1487 = vmatprep.subr.mxu0 0.0
  %1488 = vmatpush1.msra.mxu0 0.0
  %1489 = vmatprep.subr.mxu0 0.0
  %1490 = vmatpush1.msra.mxu0 0.0
  %1491 = vmatprep.subr.mxu0 0.0
  %1492 = vmatpush1.msra.mxu0 0.0
  %1493 = vmatprep.subr.mxu0 0.0
  %1494 = vmatpush1.msra.mxu0 0.0
  %1495 = vmatprep.subr.mxu0 0.0
  %1496 = vmatpush1.msra.mxu0 0.0
  %1497 = vmatprep.subr.mxu0 0.0
  %1498 = vmatpush1.msra.mxu0 0.0
  %1499 = vmatprep.subr.mxu0 0.0
  %1500 = vmatpush1.msra.mxu0 0.0
  %1501 = vmatprep.subr.mxu0 0.0
  %1502 = vmatpush1.msra.mxu0 0.0
  %1503 = vmatprep.subr.mxu0 0.0
  %1504 = vmatpush1.msra.mxu0 0.0
  %1505 = vmatprep.subr.mxu0 0.0
  %1506 = vmatpush1.msra.mxu0 0.0
  %1507 = vmatprep.subr.mxu0 0.0
  %1508 = vmatpush1.msra.mxu0 0.0
  %1509 = vmatprep.mubr.f32.mxu0 0.0
  %1510 = vmatmul.mubr.f32.gmra.mrb[0].mxu0 %v1443
  %v1511 = vpop.f32.mrb[0].mxu0
  %v1512 = vadd.f32 %v1439, %v1511
  %v1513 = vpop.f32.mrb[0].mxu0
  %1514 = vdwg.mxu0
  %s1515 = scalar_lea.vmem %s3, 64
  %v1516 = vld [vmem:[%s1515] sm:$0xff]
  %v1517 = vld [vmem:[%s1515 + $0x8] sm:$0xff]
  %v1518 = vld [vmem:[%s1515 + $0x10] sm:$0xff]
  %v1519 = vld [vmem:[%s1515 + $0x18] sm:$0xff]
  %v1520 = vlaneseq
  %v1521 = vshrl.u32 %v1520, 7
  %v1522 = vsub.s32 2, %v1521
  %v1523 = vrot.slane %v25, %v1522
  %1524 = vmatprep.subr.mxu0 0.0
  %1525 = vmatpush1.msra.mxu0 %v1516
  %1526 = vmatprep.subr.mxu0 0.0
  %1527 = vmatpush1.msra.mxu0 %v1517
  %1528 = vmatprep.subr.mxu0 0.0
  %1529 = vmatpush1.msra.mxu0 %v1518
  %1530 = vmatprep.subr.mxu0 0.0
  %1531 = vmatpush1.msra.mxu0 %v1519
  %1532 = vmatprep.subr.mxu0 0.0
  %1533 = vmatpush1.msra.mxu0 0.0
  %1534 = vmatprep.subr.mxu0 0.0
  %1535 = vmatpush1.msra.mxu0 0.0
  %1536 = vmatprep.subr.mxu0 0.0
  %1537 = vmatpush1.msra.mxu0 0.0
  %1538 = vmatprep.subr.mxu0 0.0
  %1539 = vmatpush1.msra.mxu0 0.0
  %1540 = vmatprep.subr.mxu0 0.0
  %1541 = vmatpush1.msra.mxu0 0.0
  %1542 = vmatprep.subr.mxu0 0.0
  %1543 = vmatpush1.msra.mxu0 0.0
  %1544 = vmatprep.subr.mxu0 0.0
  %1545 = vmatpush1.msra.mxu0 0.0
  %1546 = vmatprep.subr.mxu0 0.0
  %1547 = vmatpush1.msra.mxu0 0.0
  %1548 = vmatprep.subr.mxu0 0.0
  %1549 = vmatpush1.msra.mxu0 0.0
  %1550 = vmatprep.subr.mxu0 0.0
  %1551 = vmatpush1.msra.mxu0 0.0
  %1552 = vmatprep.subr.mxu0 0.0
  %1553 = vmatpush1.msra.mxu0 0.0
  %1554 = vmatprep.subr.mxu0 0.0
  %1555 = vmatpush1.msra.mxu0 0.0
  %1556 = vmatprep.subr.mxu0 0.0
  %1557 = vmatpush1.msra.mxu0 0.0
  %1558 = vmatprep.subr.mxu0 0.0
  %1559 = vmatpush1.msra.mxu0 0.0
  %1560 = vmatprep.subr.mxu0 0.0
  %1561 = vmatpush1.msra.mxu0 0.0
  %1562 = vmatprep.subr.mxu0 0.0
  %1563 = vmatpush1.msra.mxu0 0.0
  %1564 = vmatprep.subr.mxu0 0.0
  %1565 = vmatpush1.msra.mxu0 0.0
  %1566 = vmatprep.subr.mxu0 0.0
  %1567 = vmatpush1.msra.mxu0 0.0
  %1568 = vmatprep.subr.mxu0 0.0
  %1569 = vmatpush1.msra.mxu0 0.0
  %1570 = vmatprep.subr.mxu0 0.0
  %1571 = vmatpush1.msra.mxu0 0.0
  %1572 = vmatprep.subr.mxu0 0.0
  %1573 = vmatpush1.msra.mxu0 0.0
  %1574 = vmatprep.subr.mxu0 0.0
  %1575 = vmatpush1.msra.mxu0 0.0
  %1576 = vmatprep.subr.mxu0 0.0
  %1577 = vmatpush1.msra.mxu0 0.0
  %1578 = vmatprep.subr.mxu0 0.0
  %1579 = vmatpush1.msra.mxu0 0.0
  %1580 = vmatprep.subr.mxu0 0.0
  %1581 = vmatpush1.msra.mxu0 0.0
  %1582 = vmatprep.subr.mxu0 0.0
  %1583 = vmatpush1.msra.mxu0 0.0
  %1584 = vmatprep.subr.mxu0 0.0
  %1585 = vmatpush1.msra.mxu0 0.0
  %1586 = vmatprep.subr.mxu0 0.0
  %1587 = vmatpush1.msra.mxu0 0.0
  %1588 = vmatprep.mubr.f32.mxu0 0.0
  %1589 = vmatmul.mubr.f32.gmra.mrb[0].mxu0 %v79
  %v1590 = vpop.f32.mrb[0].mxu0
  %v1591 = vadd.f32 %v1523, %v1590
  %v1592 = vpop.f32.mrb[0].mxu0
  %1593 = vmatprep.mubr.f32.mxu0 0.0
  %1594 = vmatmul.mubr.f32.gmra.mrb[0].mxu0 %v82
  %v1595 = vpop.f32.mrb[0].mxu0
  %v1596 = vadd.f32 %v1523, %v1595
  %v1597 = vpop.f32.mrb[0].mxu0
  %1598 = vdwg.mxu0
  %s1599 = scalar_lea.vmem %s3, 192
  %v1600 = vld [vmem:[%s1599] sm:$0xff]
  %v1601 = vld [vmem:[%s1599 + $0x8] sm:$0xff]
  %v1602 = vld [vmem:[%s1599 + $0x10] sm:$0xff]
  %v1603 = vld [vmem:[%s1599 + $0x18] sm:$0xff]
  %v1604 = vlaneseq
  %v1605 = vshrl.u32 %v1604, 7
  %v1606 = vsub.s32 6, %v1605
  %v1607 = vrot.slane %v25, %v1606
  %1608 = vmatprep.subr.mxu0 0.0
  %1609 = vmatpush1.msra.mxu0 %v1600
  %1610 = vmatprep.subr.mxu0 0.0
  %1611 = vmatpush1.msra.mxu0 %v1601
  %1612 = vmatprep.subr.mxu0 0.0
  %1613 = vmatpush1.msra.mxu0 %v1602
  %1614 = vmatprep.subr.mxu0 0.0
  %1615 = vmatpush1.msra.mxu0 %v1603
  %1616 = vmatprep.subr.mxu0 0.0
  %1617 = vmatpush1.msra.mxu0 0.0
  %1618 = vmatprep.subr.mxu0 0.0
  %1619 = vmatpush1.msra.mxu0 0.0
  %1620 = vmatprep.subr.mxu0 0.0
  %1621 = vmatpush1.msra.mxu0 0.0
  %1622 = vmatprep.subr.mxu0 0.0
  %1623 = vmatpush1.msra.mxu0 0.0
  %1624 = vmatprep.subr.mxu0 0.0
  %1625 = vmatpush1.msra.mxu0 0.0
  %1626 = vmatprep.subr.mxu0 0.0
  %1627 = vmatpush1.msra.mxu0 0.0
  %1628 = vmatprep.subr.mxu0 0.0
  %1629 = vmatpush1.msra.mxu0 0.0
  %1630 = vmatprep.subr.mxu0 0.0
  %1631 = vmatpush1.msra.mxu0 0.0
  %1632 = vmatprep.subr.mxu0 0.0
  %1633 = vmatpush1.msra.mxu0 0.0
  %1634 = vmatprep.subr.mxu0 0.0
  %1635 = vmatpush1.msra.mxu0 0.0
  %1636 = vmatprep.subr.mxu0 0.0
  %1637 = vmatpush1.msra.mxu0 0.0
  %1638 = vmatprep.subr.mxu0 0.0
  %1639 = vmatpush1.msra.mxu0 0.0
  %1640 = vmatprep.subr.mxu0 0.0
  %1641 = vmatpush1.msra.mxu0 0.0
  %1642 = vmatprep.subr.mxu0 0.0
  %1643 = vmatpush1.msra.mxu0 0.0
  %1644 = vmatprep.subr.mxu0 0.0
  %1645 = vmatpush1.msra.mxu0 0.0
  %1646 = vmatprep.subr.mxu0 0.0
  %1647 = vmatpush1.msra.mxu0 0.0
  %1648 = vmatprep.subr.mxu0 0.0
  %1649 = vmatpush1.msra.mxu0 0.0
  %1650 = vmatprep.subr.mxu0 0.0
  %1651 = vmatpush1.msra.mxu0 0.0
  %1652 = vmatprep.subr.mxu0 0.0
  %1653 = vmatpush1.msra.mxu0 0.0
  %1654 = vmatprep.subr.mxu0 0.0
  %1655 = vmatpush1.msra.mxu0 0.0
  %1656 = vmatprep.subr.mxu0 0.0
  %1657 = vmatpush1.msra.mxu0 0.0
  %1658 = vmatprep.subr.mxu0 0.0
  %1659 = vmatpush1.msra.mxu0 0.0
  %1660 = vmatprep.subr.mxu0 0.0
  %1661 = vmatpush1.msra.mxu0 0.0
  %1662 = vmatprep.subr.mxu0 0.0
  %1663 = vmatpush1.msra.mxu0 0.0
  %1664 = vmatprep.subr.mxu0 0.0
  %1665 = vmatpush1.msra.mxu0 0.0
  %1666 = vmatprep.subr.mxu0 0.0
  %1667 = vmatpush1.msra.mxu0 0.0
  %1668 = vmatprep.subr.mxu0 0.0
  %1669 = vmatpush1.msra.mxu0 0.0
  %1670 = vmatprep.subr.mxu0 0.0
  %1671 = vmatpush1.msra.mxu0 0.0
  %1672 = vmatprep.mubr.f32.mxu0 0.0
  %1673 = vmatmul.mubr.f32.gmra.mrb[0].mxu0 %v79
  %v1674 = vpop.f32.mrb[0].mxu0
  %v1675 = vadd.f32 %v1607, %v1674
  %v1676 = vpop.f32.mrb[0].mxu0
  %1677 = vmatprep.mubr.f32.mxu0 0.0
  %1678 = vmatmul.mubr.f32.gmra.mrb[0].mxu0 %v82
  %v1679 = vpop.f32.mrb[0].mxu0
  %v1680 = vadd.f32 %v1607, %v1679
  %v1681 = vpop.f32.mrb[0].mxu0
  %1682 = vdwg.mxu0
  %s1683 = scalar_lea.vmem %s3, 320
  %v1684 = vld [vmem:[%s1683] sm:$0xff]
  %v1685 = vld [vmem:[%s1683 + $0x8] sm:$0xff]
  %v1686 = vld [vmem:[%s1683 + $0x10] sm:$0xff]
  %v1687 = vld [vmem:[%s1683 + $0x18] sm:$0xff]
  %v1688 = vlaneseq
  %v1689 = vshrl.u32 %v1688, 7
  %v1690 = vsub.s32 2, %v1689
  %v1691 = vrot.slane %v26, %v1690
  %1692 = vmatprep.subr.mxu0 0.0
  %1693 = vmatpush1.msra.mxu0 %v1684
  %1694 = vmatprep.subr.mxu0 0.0
  %1695 = vmatpush1.msra.mxu0 %v1685
  %1696 = vmatprep.subr.mxu0 0.0
  %1697 = vmatpush1.msra.mxu0 %v1686
  %1698 = vmatprep.subr.mxu0 0.0
  %1699 = vmatpush1.msra.mxu0 %v1687
  %1700 = vmatprep.subr.mxu0 0.0
  %1701 = vmatpush1.msra.mxu0 0.0
  %1702 = vmatprep.subr.mxu0 0.0
  %1703 = vmatpush1.msra.mxu0 0.0
  %1704 = vmatprep.subr.mxu0 0.0
  %1705 = vmatpush1.msra.mxu0 0.0
  %1706 = vmatprep.subr.mxu0 0.0
  %1707 = vmatpush1.msra.mxu0 0.0
  %1708 = vmatprep.subr.mxu0 0.0
  %1709 = vmatpush1.msra.mxu0 0.0
  %1710 = vmatprep.subr.mxu0 0.0
  %1711 = vmatpush1.msra.mxu0 0.0
  %1712 = vmatprep.subr.mxu0 0.0
  %1713 = vmatpush1.msra.mxu0 0.0
  %1714 = vmatprep.subr.mxu0 0.0
  %1715 = vmatpush1.msra.mxu0 0.0
  %1716 = vmatprep.subr.mxu0 0.0
  %1717 = vmatpush1.msra.mxu0 0.0
  %1718 = vmatprep.subr.mxu0 0.0
  %1719 = vmatpush1.msra.mxu0 0.0
  %1720 = vmatprep.subr.mxu0 0.0
  %1721 = vmatpush1.msra.mxu0 0.0
  %1722 = vmatprep.subr.mxu0 0.0
  %1723 = vmatpush1.msra.mxu0 0.0
  %1724 = vmatprep.subr.mxu0 0.0
  %1725 = vmatpush1.msra.mxu0 0.0
  %1726 = vmatprep.subr.mxu0 0.0
  %1727 = vmatpush1.msra.mxu0 0.0
  %1728 = vmatprep.subr.mxu0 0.0
  %1729 = vmatpush1.msra.mxu0 0.0
  %1730 = vmatprep.subr.mxu0 0.0
  %1731 = vmatpush1.msra.mxu0 0.0
  %1732 = vmatprep.subr.mxu0 0.0
  %1733 = vmatpush1.msra.mxu0 0.0
  %1734 = vmatprep.subr.mxu0 0.0
  %1735 = vmatpush1.msra.mxu0 0.0
  %1736 = vmatprep.subr.mxu0 0.0
  %1737 = vmatpush1.msra.mxu0 0.0
  %1738 = vmatprep.subr.mxu0 0.0
  %1739 = vmatpush1.msra.mxu0 0.0
  %1740 = vmatprep.subr.mxu0 0.0
  %1741 = vmatpush1.msra.mxu0 0.0
  %1742 = vmatprep.subr.mxu0 0.0
  %1743 = vmatpush1.msra.mxu0 0.0
  %1744 = vmatprep.subr.mxu0 0.0
  %1745 = vmatpush1.msra.mxu0 0.0
  %1746 = vmatprep.subr.mxu0 0.0
  %1747 = vmatpush1.msra.mxu0 0.0
  %1748 = vmatprep.subr.mxu0 0.0
  %1749 = vmatpush1.msra.mxu0 0.0
  %1750 = vmatprep.subr.mxu0 0.0
  %1751 = vmatpush1.msra.mxu0 0.0
  %1752 = vmatprep.subr.mxu0 0.0
  %1753 = vmatpush1.msra.mxu0 0.0
  %1754 = vmatprep.subr.mxu0 0.0
  %1755 = vmatpush1.msra.mxu0 0.0
  %1756 = vmatprep.mubr.f32.mxu0 0.0
  %1757 = vmatmul.mubr.f32.gmra.mrb[0].mxu0 %v79
  %v1758 = vpop.f32.mrb[0].mxu0
  %v1759 = vadd.f32 %v1691, %v1758
  %v1760 = vpop.f32.mrb[0].mxu0
  %1761 = vmatprep.mubr.f32.mxu0 0.0
  %1762 = vmatmul.mubr.f32.gmra.mrb[0].mxu0 %v82
  %v1763 = vpop.f32.mrb[0].mxu0
  %v1764 = vadd.f32 %v1691, %v1763
  %v1765 = vpop.f32.mrb[0].mxu0
  %1766 = vdwg.mxu0
  %s1767 = scalar_lea.vmem %s4, 16
  %v1768 = vld [vmem:[%s1767] sm:$0xff]
  %v1770 = vsel %vm328, %v1591, 0
  %v1773 = vsel %vm328, %v1675, 0
  %1775 = vmatprep.subr.mxu0 0.0
  %1776 = vmatpush1.xpose.msra.mxu0 %v1773
  %1777 = vmatprep.subr.mxu0 0.0
  %1778 = vmatpush1.xpose.msra.mxu0 0.0
  %1779 = vmatprep.subr.mxu0 0.0
  %1780 = vmatpush1.xpose.msra.mxu0 0.0
  %1781 = vmatprep.subr.mxu0 0.0
  %1782 = vmatpush1.xpose.msra.mxu0 0.0
  %1783 = vmatprep.subr.mxu0 0.0
  %1784 = vmatpush1.xpose.msra.mxu0 0.0
  %1785 = vmatprep.subr.mxu0 0.0
  %1786 = vmatpush1.xpose.msra.mxu0 0.0
  %1787 = vmatprep.subr.mxu0 0.0
  %1788 = vmatpush1.xpose.msra.mxu0 0.0
  %1789 = vmatprep.subr.mxu0 0.0
  %1790 = vmatpush1.xpose.msra.mxu0 0.0
  %1791 = vmatprep.subr.mxu0 0.0
  %1792 = vmatpush1.xpose.msra.mxu0 0.0
  %1793 = vmatprep.subr.mxu0 0.0
  %1794 = vmatpush1.xpose.msra.mxu0 0.0
  %1795 = vmatprep.subr.mxu0 0.0
  %1796 = vmatpush1.xpose.msra.mxu0 0.0
  %1797 = vmatprep.subr.mxu0 0.0
  %1798 = vmatpush1.xpose.msra.mxu0 0.0
  %1799 = vmatprep.subr.mxu0 0.0
  %1800 = vmatpush1.xpose.msra.mxu0 0.0
  %1801 = vmatprep.subr.mxu0 0.0
  %1802 = vmatpush1.xpose.msra.mxu0 0.0
  %1803 = vmatprep.subr.mxu0 0.0
  %1804 = vmatpush1.xpose.msra.mxu0 0.0
  %1805 = vmatprep.subr.mxu0 0.0
  %1806 = vmatpush1.xpose.msra.mxu0 0.0
  %1807 = vmatprep.subr.mxu0 0.0
  %1808 = vmatpush1.xpose.msra.mxu0 0.0
  %1809 = vmatprep.subr.mxu0 0.0
  %1810 = vmatpush1.xpose.msra.mxu0 0.0
  %1811 = vmatprep.subr.mxu0 0.0
  %1812 = vmatpush1.xpose.msra.mxu0 0.0
  %1813 = vmatprep.subr.mxu0 0.0
  %1814 = vmatpush1.xpose.msra.mxu0 0.0
  %1815 = vmatprep.subr.mxu0 0.0
  %1816 = vmatpush1.xpose.msra.mxu0 0.0
  %1817 = vmatprep.subr.mxu0 0.0
  %1818 = vmatpush1.xpose.msra.mxu0 0.0
  %1819 = vmatprep.subr.mxu0 0.0
  %1820 = vmatpush1.xpose.msra.mxu0 0.0
  %1821 = vmatprep.subr.mxu0 0.0
  %1822 = vmatpush1.xpose.msra.mxu0 0.0
  %1823 = vmatprep.subr.mxu0 0.0
  %1824 = vmatpush1.xpose.msra.mxu0 0.0
  %1825 = vmatprep.subr.mxu0 0.0
  %1826 = vmatpush1.xpose.msra.mxu0 0.0
  %1827 = vmatprep.subr.mxu0 0.0
  %1828 = vmatpush1.xpose.msra.mxu0 0.0
  %1829 = vmatprep.subr.mxu0 0.0
  %1830 = vmatpush1.xpose.msra.mxu0 0.0
  %1831 = vmatprep.subr.mxu0 0.0
  %1832 = vmatpush1.xpose.msra.mxu0 0.0
  %1833 = vmatprep.subr.mxu0 0.0
  %1834 = vmatpush1.xpose.msra.mxu0 0.0
  %1835 = vmatprep.subr.mxu0 0.0
  %1836 = vmatpush1.xpose.msra.mxu0 0.0
  %1837 = vmatprep.subr.mxu0 0.0
  %1838 = vmatpush1.xpose.msra.mxu0 0.0
  %1839 = vmatprep.mubr.f32.mxu0 0.0
  %1840 = vmatmul.mubr.f32.gmra.mrb[0].mxu0 %v1770
  %v1841 = vpop.f32.mrb[0].mxu0
  %v1842 = vadd.f32 0.0, %v1841
  %v1843 = vpop.f32.mrb[0].mxu0
  %1844 = vdwg.mxu0
  %v1845 = vsel %vm328, %v1842, -inf
  %1846 = vmax.xlane.f32.xlu0 %v1845
  %v1847 = vpop.xlane.xlu0 %1846
  %v1848 = vsub.f32 %v1842, %v1847
  %v1849 = vmul.f32 %v1848, 1.442695
  %v1850 = vpow.pop %v1849
  %v1851 = vsel %vm328, %v1850, 0.0
  %1852 = vadd.xlane.f32.xlu0 %v1851
  %v1853 = vpop.xlane.xlu0 %1852
  %v1854 = vrcp.pop %v1853
  %v1855 = vmul.f32 %v1850, %v1854
  %v1857 = vsel %vm328, %v1855, 0
  %1859 = vmatprep.subr.mxu0 0.0
  %1860 = vmatpush1.msra.mxu0 %v1759
  %1861 = vmatprep.subr.mxu0 0.0
  %1862 = vmatpush1.msra.mxu0 0.0
  %1863 = vmatprep.subr.mxu0 0.0
  %1864 = vmatpush1.msra.mxu0 0.0
  %1865 = vmatprep.subr.mxu0 0.0
  %1866 = vmatpush1.msra.mxu0 0.0
  %1867 = vmatprep.subr.mxu0 0.0
  %1868 = vmatpush1.msra.mxu0 0.0
  %1869 = vmatprep.subr.mxu0 0.0
  %1870 = vmatpush1.msra.mxu0 0.0
  %1871 = vmatprep.subr.mxu0 0.0
  %1872 = vmatpush1.msra.mxu0 0.0
  %1873 = vmatprep.subr.mxu0 0.0
  %1874 = vmatpush1.msra.mxu0 0.0
  %1875 = vmatprep.subr.mxu0 0.0
  %1876 = vmatpush1.msra.mxu0 0.0
  %1877 = vmatprep.subr.mxu0 0.0
  %1878 = vmatpush1.msra.mxu0 0.0
  %1879 = vmatprep.subr.mxu0 0.0
  %1880 = vmatpush1.msra.mxu0 0.0
  %1881 = vmatprep.subr.mxu0 0.0
  %1882 = vmatpush1.msra.mxu0 0.0
  %1883 = vmatprep.subr.mxu0 0.0
  %1884 = vmatpush1.msra.mxu0 0.0
  %1885 = vmatprep.subr.mxu0 0.0
  %1886 = vmatpush1.msra.mxu0 0.0
  %1887 = vmatprep.subr.mxu0 0.0
  %1888 = vmatpush1.msra.mxu0 0.0
  %1889 = vmatprep.subr.mxu0 0.0
  %1890 = vmatpush1.msra.mxu0 0.0
  %1891 = vmatprep.subr.mxu0 0.0
  %1892 = vmatpush1.msra.mxu0 0.0
  %1893 = vmatprep.subr.mxu0 0.0
  %1894 = vmatpush1.msra.mxu0 0.0
  %1895 = vmatprep.subr.mxu0 0.0
  %1896 = vmatpush1.msra.mxu0 0.0
  %1897 = vmatprep.subr.mxu0 0.0
  %1898 = vmatpush1.msra.mxu0 0.0
  %1899 = vmatprep.subr.mxu0 0.0
  %1900 = vmatpush1.msra.mxu0 0.0
  %1901 = vmatprep.subr.mxu0 0.0
  %1902 = vmatpush1.msra.mxu0 0.0
  %1903 = vmatprep.subr.mxu0 0.0
  %1904 = vmatpush1.msra.mxu0 0.0
  %1905 = vmatprep.subr.mxu0 0.0
  %1906 = vmatpush1.msra.mxu0 0.0
  %1907 = vmatprep.subr.mxu0 0.0
  %1908 = vmatpush1.msra.mxu0 0.0
  %1909 = vmatprep.subr.mxu0 0.0
  %1910 = vmatpush1.msra.mxu0 0.0
  %1911 = vmatprep.subr.mxu0 0.0
  %1912 = vmatpush1.msra.mxu0 0.0
  %1913 = vmatprep.subr.mxu0 0.0
  %1914 = vmatpush1.msra.mxu0 0.0
  %1915 = vmatprep.subr.mxu0 0.0
  %1916 = vmatpush1.msra.mxu0 0.0
  %1917 = vmatprep.subr.mxu0 0.0
  %1918 = vmatpush1.msra.mxu0 0.0
  %1919 = vmatprep.subr.mxu0 0.0
  %1920 = vmatpush1.msra.mxu0 0.0
  %1921 = vmatprep.subr.mxu0 0.0
  %1922 = vmatpush1.msra.mxu0 0.0
  %1923 = vmatprep.mubr.f32.mxu0 0.0
  %1924 = vmatmul.mubr.f32.gmra.mrb[0].mxu0 %v1857
  %v1925 = vpop.f32.mrb[0].mxu0
  %v1926 = vadd.f32 0.0, %v1925
  %v1927 = vpop.f32.mrb[0].mxu0
  %1928 = vdwg.mxu0
  %v1930 = vsel %vm328, %v1926, 0
  %1932 = vmatprep.subr.mxu0 0.0
  %1933 = vmatpush1.msra.mxu0 %v1768
  %1934 = vmatprep.subr.mxu0 0.0
  %1935 = vmatpush1.msra.mxu0 0.0
  %1936 = vmatprep.subr.mxu0 0.0
  %1937 = vmatpush1.msra.mxu0 0.0
  %1938 = vmatprep.subr.mxu0 0.0
  %1939 = vmatpush1.msra.mxu0 0.0
  %1940 = vmatprep.subr.mxu0 0.0
  %1941 = vmatpush1.msra.mxu0 0.0
  %1942 = vmatprep.subr.mxu0 0.0
  %1943 = vmatpush1.msra.mxu0 0.0
  %1944 = vmatprep.subr.mxu0 0.0
  %1945 = vmatpush1.msra.mxu0 0.0
  %1946 = vmatprep.subr.mxu0 0.0
  %1947 = vmatpush1.msra.mxu0 0.0
  %1948 = vmatprep.subr.mxu0 0.0
  %1949 = vmatpush1.msra.mxu0 0.0
  %1950 = vmatprep.subr.mxu0 0.0
  %1951 = vmatpush1.msra.mxu0 0.0
  %1952 = vmatprep.subr.mxu0 0.0
  %1953 = vmatpush1.msra.mxu0 0.0
  %1954 = vmatprep.subr.mxu0 0.0
  %1955 = vmatpush1.msra.mxu0 0.0
  %1956 = vmatprep.subr.mxu0 0.0
  %1957 = vmatpush1.msra.mxu0 0.0
  %1958 = vmatprep.subr.mxu0 0.0
  %1959 = vmatpush1.msra.mxu0 0.0
  %1960 = vmatprep.subr.mxu0 0.0
  %1961 = vmatpush1.msra.mxu0 0.0
  %1962 = vmatprep.subr.mxu0 0.0
  %1963 = vmatpush1.msra.mxu0 0.0
  %1964 = vmatprep.subr.mxu0 0.0
  %1965 = vmatpush1.msra.mxu0 0.0
  %1966 = vmatprep.subr.mxu0 0.0
  %1967 = vmatpush1.msra.mxu0 0.0
  %1968 = vmatprep.subr.mxu0 0.0
  %1969 = vmatpush1.msra.mxu0 0.0
  %1970 = vmatprep.subr.mxu0 0.0
  %1971 = vmatpush1.msra.mxu0 0.0
  %1972 = vmatprep.subr.mxu0 0.0
  %1973 = vmatpush1.msra.mxu0 0.0
  %1974 = vmatprep.subr.mxu0 0.0
  %1975 = vmatpush1.msra.mxu0 0.0
  %1976 = vmatprep.subr.mxu0 0.0
  %1977 = vmatpush1.msra.mxu0 0.0
  %1978 = vmatprep.subr.mxu0 0.0
  %1979 = vmatpush1.msra.mxu0 0.0
  %1980 = vmatprep.subr.mxu0 0.0
  %1981 = vmatpush1.msra.mxu0 0.0
  %1982 = vmatprep.subr.mxu0 0.0
  %1983 = vmatpush1.msra.mxu0 0.0
  %1984 = vmatprep.subr.mxu0 0.0
  %1985 = vmatpush1.msra.mxu0 0.0
  %1986 = vmatprep.subr.mxu0 0.0
  %1987 = vmatpush1.msra.mxu0 0.0
  %1988 = vmatprep.subr.mxu0 0.0
  %1989 = vmatpush1.msra.mxu0 0.0
  %1990 = vmatprep.subr.mxu0 0.0
  %1991 = vmatpush1.msra.mxu0 0.0
  %1992 = vmatprep.subr.mxu0 0.0
  %1993 = vmatpush1.msra.mxu0 0.0
  %1994 = vmatprep.subr.mxu0 0.0
  %1995 = vmatpush1.msra.mxu0 0.0
  %1996 = vmatprep.mubr.f32.mxu0 0.0
  %1997 = vmatmul.mubr.f32.gmra.mrb[0].mxu0 %v1930
  %v1998 = vpop.f32.mrb[0].mxu0
  %v1999 = vadd.f32 0.0, %v1998
  %v2000 = vpop.f32.mrb[0].mxu0
  %2001 = vdwg.mxu0
  %v2002 = vadd.f32 %v1206, %v1999
  %v2004 = vsel %vm328, %v1596, 0
  %v2007 = vsel %vm328, %v1680, 0
  %2009 = vmatprep.subr.mxu0 0.0
  %2010 = vmatpush1.xpose.msra.mxu0 %v2007
  %2011 = vmatprep.subr.mxu0 0.0
  %2012 = vmatpush1.xpose.msra.mxu0 0.0
  %2013 = vmatprep.subr.mxu0 0.0
  %2014 = vmatpush1.xpose.msra.mxu0 0.0
  %2015 = vmatprep.subr.mxu0 0.0
  %2016 = vmatpush1.xpose.msra.mxu0 0.0
  %2017 = vmatprep.subr.mxu0 0.0
  %2018 = vmatpush1.xpose.msra.mxu0 0.0
  %2019 = vmatprep.subr.mxu0 0.0
  %2020 = vmatpush1.xpose.msra.mxu0 0.0
  %2021 = vmatprep.subr.mxu0 0.0
  %2022 = vmatpush1.xpose.msra.mxu0 0.0
  %2023 = vmatprep.subr.mxu0 0.0
  %2024 = vmatpush1.xpose.msra.mxu0 0.0
  %2025 = vmatprep.subr.mxu0 0.0
  %2026 = vmatpush1.xpose.msra.mxu0 0.0
  %2027 = vmatprep.subr.mxu0 0.0
  %2028 = vmatpush1.xpose.msra.mxu0 0.0
  %2029 = vmatprep.subr.mxu0 0.0
  %2030 = vmatpush1.xpose.msra.mxu0 0.0
  %2031 = vmatprep.subr.mxu0 0.0
  %2032 = vmatpush1.xpose.msra.mxu0 0.0
  %2033 = vmatprep.subr.mxu0 0.0
  %2034 = vmatpush1.xpose.msra.mxu0 0.0
  %2035 = vmatprep.subr.mxu0 0.0
  %2036 = vmatpush1.xpose.msra.mxu0 0.0
  %2037 = vmatprep.subr.mxu0 0.0
  %2038 = vmatpush1.xpose.msra.mxu0 0.0
  %2039 = vmatprep.subr.mxu0 0.0
  %2040 = vmatpush1.xpose.msra.mxu0 0.0
  %2041 = vmatprep.subr.mxu0 0.0
  %2042 = vmatpush1.xpose.msra.mxu0 0.0
  %2043 = vmatprep.subr.mxu0 0.0
  %2044 = vmatpush1.xpose.msra.mxu0 0.0
  %2045 = vmatprep.subr.mxu0 0.0
  %2046 = vmatpush1.xpose.msra.mxu0 0.0
  %2047 = vmatprep.subr.mxu0 0.0
  %2048 = vmatpush1.xpose.msra.mxu0 0.0
  %2049 = vmatprep.subr.mxu0 0.0
  %2050 = vmatpush1.xpose.msra.mxu0 0.0
  %2051 = vmatprep.subr.mxu0 0.0
  %2052 = vmatpush1.xpose.msra.mxu0 0.0
  %2053 = vmatprep.subr.mxu0 0.0
  %2054 = vmatpush1.xpose.msra.mxu0 0.0
  %2055 = vmatprep.subr.mxu0 0.0
  %2056 = vmatpush1.xpose.msra.mxu0 0.0
  %2057 = vmatprep.subr.mxu0 0.0
  %2058 = vmatpush1.xpose.msra.mxu0 0.0
  %2059 = vmatprep.subr.mxu0 0.0
  %2060 = vmatpush1.xpose.msra.mxu0 0.0
  %2061 = vmatprep.subr.mxu0 0.0
  %2062 = vmatpush1.xpose.msra.mxu0 0.0
  %2063 = vmatprep.subr.mxu0 0.0
  %2064 = vmatpush1.xpose.msra.mxu0 0.0
  %2065 = vmatprep.subr.mxu0 0.0
  %2066 = vmatpush1.xpose.msra.mxu0 0.0
  %2067 = vmatprep.subr.mxu0 0.0
  %2068 = vmatpush1.xpose.msra.mxu0 0.0
  %2069 = vmatprep.subr.mxu0 0.0
  %2070 = vmatpush1.xpose.msra.mxu0 0.0
  %2071 = vmatprep.subr.mxu0 0.0
  %2072 = vmatpush1.xpose.msra.mxu0 0.0
  %2073 = vmatprep.mubr.f32.mxu0 0.0
  %2074 = vmatmul.mubr.f32.gmra.mrb[0].mxu0 %v2004
  %v2075 = vpop.f32.mrb[0].mxu0
  %v2076 = vadd.f32 0.0, %v2075
  %v2077 = vpop.f32.mrb[0].mxu0
  %2078 = vdwg.mxu0
  %v2079 = vsel %vm328, %v2076, -inf
  %2080 = vmax.xlane.f32.xlu0 %v2079
  %v2081 = vpop.xlane.xlu0 %2080
  %v2082 = vsub.f32 %v2076, %v2081
  %v2083 = vmul.f32 %v2082, 1.442695
  %v2084 = vpow.pop %v2083
  %v2085 = vsel %vm328, %v2084, 0.0
  %2086 = vadd.xlane.f32.xlu0 %v2085
  %v2087 = vpop.xlane.xlu0 %2086
  %v2088 = vrcp.pop %v2087
  %v2089 = vmul.f32 %v2084, %v2088
  %v2091 = vsel %vm328, %v2089, 0
  %2093 = vmatprep.subr.mxu0 0.0
  %2094 = vmatpush1.msra.mxu0 %v1764
  %2095 = vmatprep.subr.mxu0 0.0
  %2096 = vmatpush1.msra.mxu0 0.0
  %2097 = vmatprep.subr.mxu0 0.0
  %2098 = vmatpush1.msra.mxu0 0.0
  %2099 = vmatprep.subr.mxu0 0.0
  %2100 = vmatpush1.msra.mxu0 0.0
  %2101 = vmatprep.subr.mxu0 0.0
  %2102 = vmatpush1.msra.mxu0 0.0
  %2103 = vmatprep.subr.mxu0 0.0
  %2104 = vmatpush1.msra.mxu0 0.0
  %2105 = vmatprep.subr.mxu0 0.0
  %2106 = vmatpush1.msra.mxu0 0.0
  %2107 = vmatprep.subr.mxu0 0.0
  %2108 = vmatpush1.msra.mxu0 0.0
  %2109 = vmatprep.subr.mxu0 0.0
  %2110 = vmatpush1.msra.mxu0 0.0
  %2111 = vmatprep.subr.mxu0 0.0
  %2112 = vmatpush1.msra.mxu0 0.0
  %2113 = vmatprep.subr.mxu0 0.0
  %2114 = vmatpush1.msra.mxu0 0.0
  %2115 = vmatprep.subr.mxu0 0.0
  %2116 = vmatpush1.msra.mxu0 0.0
  %2117 = vmatprep.subr.mxu0 0.0
  %2118 = vmatpush1.msra.mxu0 0.0
  %2119 = vmatprep.subr.mxu0 0.0
  %2120 = vmatpush1.msra.mxu0 0.0
  %2121 = vmatprep.subr.mxu0 0.0
  %2122 = vmatpush1.msra.mxu0 0.0
  %2123 = vmatprep.subr.mxu0 0.0
  %2124 = vmatpush1.msra.mxu0 0.0
  %2125 = vmatprep.subr.mxu0 0.0
  %2126 = vmatpush1.msra.mxu0 0.0
  %2127 = vmatprep.subr.mxu0 0.0
  %2128 = vmatpush1.msra.mxu0 0.0
  %2129 = vmatprep.subr.mxu0 0.0
  %2130 = vmatpush1.msra.mxu0 0.0
  %2131 = vmatprep.subr.mxu0 0.0
  %2132 = vmatpush1.msra.mxu0 0.0
  %2133 = vmatprep.subr.mxu0 0.0
  %2134 = vmatpush1.msra.mxu0 0.0
  %2135 = vmatprep.subr.mxu0 0.0
  %2136 = vmatpush1.msra.mxu0 0.0
  %2137 = vmatprep.subr.mxu0 0.0
  %2138 = vmatpush1.msra.mxu0 0.0
  %2139 = vmatprep.subr.mxu0 0.0
  %2140 = vmatpush1.msra.mxu0 0.0
  %2141 = vmatprep.subr.mxu0 0.0
  %2142 = vmatpush1.msra.mxu0 0.0
  %2143 = vmatprep.subr.mxu0 0.0
  %2144 = vmatpush1.msra.mxu0 0.0
  %2145 = vmatprep.subr.mxu0 0.0
  %2146 = vmatpush1.msra.mxu0 0.0
  %2147 = vmatprep.subr.mxu0 0.0
  %2148 = vmatpush1.msra.mxu0 0.0
  %2149 = vmatprep.subr.mxu0 0.0
  %2150 = vmatpush1.msra.mxu0 0.0
  %2151 = vmatprep.subr.mxu0 0.0
  %2152 = vmatpush1.msra.mxu0 0.0
  %2153 = vmatprep.subr.mxu0 0.0
  %2154 = vmatpush1.msra.mxu0 0.0
  %2155 = vmatprep.subr.mxu0 0.0
  %2156 = vmatpush1.msra.mxu0 0.0
  %2157 = vmatprep.mubr.f32.mxu0 0.0
  %2158 = vmatmul.mubr.f32.gmra.mrb[0].mxu0 %v2091
  %v2159 = vpop.f32.mrb[0].mxu0
  %v2160 = vadd.f32 0.0, %v2159
  %v2161 = vpop.f32.mrb[0].mxu0
  %2162 = vdwg.mxu0
  %v2164 = vsel %vm328, %v2160, 0
  %2166 = vmatprep.subr.mxu0 0.0
  %2167 = vmatpush1.msra.mxu0 %v1768
  %2168 = vmatprep.subr.mxu0 0.0
  %2169 = vmatpush1.msra.mxu0 0.0
  %2170 = vmatprep.subr.mxu0 0.0
  %2171 = vmatpush1.msra.mxu0 0.0
  %2172 = vmatprep.subr.mxu0 0.0
  %2173 = vmatpush1.msra.mxu0 0.0
  %2174 = vmatprep.subr.mxu0 0.0
  %2175 = vmatpush1.msra.mxu0 0.0
  %2176 = vmatprep.subr.mxu0 0.0
  %2177 = vmatpush1.msra.mxu0 0.0
  %2178 = vmatprep.subr.mxu0 0.0
  %2179 = vmatpush1.msra.mxu0 0.0
  %2180 = vmatprep.subr.mxu0 0.0
  %2181 = vmatpush1.msra.mxu0 0.0
  %2182 = vmatprep.subr.mxu0 0.0
  %2183 = vmatpush1.msra.mxu0 0.0
  %2184 = vmatprep.subr.mxu0 0.0
  %2185 = vmatpush1.msra.mxu0 0.0
  %2186 = vmatprep.subr.mxu0 0.0
  %2187 = vmatpush1.msra.mxu0 0.0
  %2188 = vmatprep.subr.mxu0 0.0
  %2189 = vmatpush1.msra.mxu0 0.0
  %2190 = vmatprep.subr.mxu0 0.0
  %2191 = vmatpush1.msra.mxu0 0.0
  %2192 = vmatprep.subr.mxu0 0.0
  %2193 = vmatpush1.msra.mxu0 0.0
  %2194 = vmatprep.subr.mxu0 0.0
  %2195 = vmatpush1.msra.mxu0 0.0
  %2196 = vmatprep.subr.mxu0 0.0
  %2197 = vmatpush1.msra.mxu0 0.0
  %2198 = vmatprep.subr.mxu0 0.0
  %2199 = vmatpush1.msra.mxu0 0.0
  %2200 = vmatprep.subr.mxu0 0.0
  %2201 = vmatpush1.msra.mxu0 0.0
  %2202 = vmatprep.subr.mxu0 0.0
  %2203 = vmatpush1.msra.mxu0 0.0
  %2204 = vmatprep.subr.mxu0 0.0
  %2205 = vmatpush1.msra.mxu0 0.0
  %2206 = vmatprep.subr.mxu0 0.0
  %2207 = vmatpush1.msra.mxu0 0.0
  %2208 = vmatprep.subr.mxu0 0.0
  %2209 = vmatpush1.msra.mxu0 0.0
  %2210 = vmatprep.subr.mxu0 0.0
  %2211 = vmatpush1.msra.mxu0 0.0
  %2212 = vmatprep.subr.mxu0 0.0
  %2213 = vmatpush1.msra.mxu0 0.0
  %2214 = vmatprep.subr.mxu0 0.0
  %2215 = vmatpush1.msra.mxu0 0.0
  %2216 = vmatprep.subr.mxu0 0.0
  %2217 = vmatpush1.msra.mxu0 0.0
  %2218 = vmatprep.subr.mxu0 0.0
  %2219 = vmatpush1.msra.mxu0 0.0
  %2220 = vmatprep.subr.mxu0 0.0
  %2221 = vmatpush1.msra.mxu0 0.0
  %2222 = vmatprep.subr.mxu0 0.0
  %2223 = vmatpush1.msra.mxu0 0.0
  %2224 = vmatprep.subr.mxu0 0.0
  %2225 = vmatpush1.msra.mxu0 0.0
  %2226 = vmatprep.subr.mxu0 0.0
  %2227 = vmatpush1.msra.mxu0 0.0
  %2228 = vmatprep.subr.mxu0 0.0
  %2229 = vmatpush1.msra.mxu0 0.0
  %2230 = vmatprep.mubr.f32.mxu0 0.0
  %2231 = vmatmul.mubr.f32.gmra.mrb[0].mxu0 %v2164
  %v2232 = vpop.f32.mrb[0].mxu0
  %v2233 = vadd.f32 0.0, %v2232
  %v2234 = vpop.f32.mrb[0].mxu0
  %2235 = vdwg.mxu0
  %v2236 = vadd.f32 %v1512, %v2233
  %s2237 = scalar_lea.vmem %s3, 96
  %v2238 = vld [vmem:[%s2237] sm:$0xff]
  %v2239 = vld [vmem:[%s2237 + $0x8] sm:$0xff]
  %v2240 = vld [vmem:[%s2237 + $0x10] sm:$0xff]
  %v2241 = vld [vmem:[%s2237 + $0x18] sm:$0xff]
  %v2242 = vlaneseq
  %v2243 = vshrl.u32 %v2242, 7
  %v2244 = vsub.s32 3, %v2243
  %v2245 = vrot.slane %v25, %v2244
  %2246 = vmatprep.subr.mxu0 0.0
  %2247 = vmatpush1.msra.mxu0 %v2238
  %2248 = vmatprep.subr.mxu0 0.0
  %2249 = vmatpush1.msra.mxu0 %v2239
  %2250 = vmatprep.subr.mxu0 0.0
  %2251 = vmatpush1.msra.mxu0 %v2240
  %2252 = vmatprep.subr.mxu0 0.0
  %2253 = vmatpush1.msra.mxu0 %v2241
  %2254 = vmatprep.subr.mxu0 0.0
  %2255 = vmatpush1.msra.mxu0 0.0
  %2256 = vmatprep.subr.mxu0 0.0
  %2257 = vmatpush1.msra.mxu0 0.0
  %2258 = vmatprep.subr.mxu0 0.0
  %2259 = vmatpush1.msra.mxu0 0.0
  %2260 = vmatprep.subr.mxu0 0.0
  %2261 = vmatpush1.msra.mxu0 0.0
  %2262 = vmatprep.subr.mxu0 0.0
  %2263 = vmatpush1.msra.mxu0 0.0
  %2264 = vmatprep.subr.mxu0 0.0
  %2265 = vmatpush1.msra.mxu0 0.0
  %2266 = vmatprep.subr.mxu0 0.0
  %2267 = vmatpush1.msra.mxu0 0.0
  %2268 = vmatprep.subr.mxu0 0.0
  %2269 = vmatpush1.msra.mxu0 0.0
  %2270 = vmatprep.subr.mxu0 0.0
  %2271 = vmatpush1.msra.mxu0 0.0
  %2272 = vmatprep.subr.mxu0 0.0
  %2273 = vmatpush1.msra.mxu0 0.0
  %2274 = vmatprep.subr.mxu0 0.0
  %2275 = vmatpush1.msra.mxu0 0.0
  %2276 = vmatprep.subr.mxu0 0.0
  %2277 = vmatpush1.msra.mxu0 0.0
  %2278 = vmatprep.subr.mxu0 0.0
  %2279 = vmatpush1.msra.mxu0 0.0
  %2280 = vmatprep.subr.mxu0 0.0
  %2281 = vmatpush1.msra.mxu0 0.0
  %2282 = vmatprep.subr.mxu0 0.0
  %2283 = vmatpush1.msra.mxu0 0.0
  %2284 = vmatprep.subr.mxu0 0.0
  %2285 = vmatpush1.msra.mxu0 0.0
  %2286 = vmatprep.subr.mxu0 0.0
  %2287 = vmatpush1.msra.mxu0 0.0
  %2288 = vmatprep.subr.mxu0 0.0
  %2289 = vmatpush1.msra.mxu0 0.0
  %2290 = vmatprep.subr.mxu0 0.0
  %2291 = vmatpush1.msra.mxu0 0.0
  %2292 = vmatprep.subr.mxu0 0.0
  %2293 = vmatpush1.msra.mxu0 0.0
  %2294 = vmatprep.subr.mxu0 0.0
  %2295 = vmatpush1.msra.mxu0 0.0
  %2296 = vmatprep.subr.mxu0 0.0
  %2297 = vmatpush1.msra.mxu0 0.0
  %2298 = vmatprep.subr.mxu0 0.0
  %2299 = vmatpush1.msra.mxu0 0.0
  %2300 = vmatprep.subr.mxu0 0.0
  %2301 = vmatpush1.msra.mxu0 0.0
  %2302 = vmatprep.subr.mxu0 0.0
  %2303 = vmatpush1.msra.mxu0 0.0
  %2304 = vmatprep.subr.mxu0 0.0
  %2305 = vmatpush1.msra.mxu0 0.0
  %2306 = vmatprep.subr.mxu0 0.0
  %2307 = vmatpush1.msra.mxu0 0.0
  %2308 = vmatprep.subr.mxu0 0.0
  %2309 = vmatpush1.msra.mxu0 0.0
  %2310 = vmatprep.mubr.f32.mxu0 0.0
  %2311 = vmatmul.mubr.f32.gmra.mrb[0].mxu0 %v79
  %v2312 = vpop.f32.mrb[0].mxu0
  %v2313 = vadd.f32 %v2245, %v2312
  %v2314 = vpop.f32.mrb[0].mxu0
  %2315 = vmatprep.mubr.f32.mxu0 0.0
  %2316 = vmatmul.mubr.f32.gmra.mrb[0].mxu0 %v82
  %v2317 = vpop.f32.mrb[0].mxu0
  %v2318 = vadd.f32 %v2245, %v2317
  %v2319 = vpop.f32.mrb[0].mxu0
  %2320 = vdwg.mxu0
  %s2321 = scalar_lea.vmem %s3, 224
  %v2322 = vld [vmem:[%s2321] sm:$0xff]
  %v2323 = vld [vmem:[%s2321 + $0x8] sm:$0xff]
  %v2324 = vld [vmem:[%s2321 + $0x10] sm:$0xff]
  %v2325 = vld [vmem:[%s2321 + $0x18] sm:$0xff]
  %v2326 = vlaneseq
  %v2327 = vshrl.u32 %v2326, 7
  %v2328 = vsub.s32 7, %v2327
  %v2329 = vrot.slane %v25, %v2328
  %2330 = vmatprep.subr.mxu0 0.0
  %2331 = vmatpush1.msra.mxu0 %v2322
  %2332 = vmatprep.subr.mxu0 0.0
  %2333 = vmatpush1.msra.mxu0 %v2323
  %2334 = vmatprep.subr.mxu0 0.0
  %2335 = vmatpush1.msra.mxu0 %v2324
  %2336 = vmatprep.subr.mxu0 0.0
  %2337 = vmatpush1.msra.mxu0 %v2325
  %2338 = vmatprep.subr.mxu0 0.0
  %2339 = vmatpush1.msra.mxu0 0.0
  %2340 = vmatprep.subr.mxu0 0.0
  %2341 = vmatpush1.msra.mxu0 0.0
  %2342 = vmatprep.subr.mxu0 0.0
  %2343 = vmatpush1.msra.mxu0 0.0
  %2344 = vmatprep.subr.mxu0 0.0
  %2345 = vmatpush1.msra.mxu0 0.0
  %2346 = vmatprep.subr.mxu0 0.0
  %2347 = vmatpush1.msra.mxu0 0.0
  %2348 = vmatprep.subr.mxu0 0.0
  %2349 = vmatpush1.msra.mxu0 0.0
  %2350 = vmatprep.subr.mxu0 0.0
  %2351 = vmatpush1.msra.mxu0 0.0
  %2352 = vmatprep.subr.mxu0 0.0
  %2353 = vmatpush1.msra.mxu0 0.0
  %2354 = vmatprep.subr.mxu0 0.0
  %2355 = vmatpush1.msra.mxu0 0.0
  %2356 = vmatprep.subr.mxu0 0.0
  %2357 = vmatpush1.msra.mxu0 0.0
  %2358 = vmatprep.subr.mxu0 0.0
  %2359 = vmatpush1.msra.mxu0 0.0
  %2360 = vmatprep.subr.mxu0 0.0
  %2361 = vmatpush1.msra.mxu0 0.0
  %2362 = vmatprep.subr.mxu0 0.0
  %2363 = vmatpush1.msra.mxu0 0.0
  %2364 = vmatprep.subr.mxu0 0.0
  %2365 = vmatpush1.msra.mxu0 0.0
  %2366 = vmatprep.subr.mxu0 0.0
  %2367 = vmatpush1.msra.mxu0 0.0
  %2368 = vmatprep.subr.mxu0 0.0
  %2369 = vmatpush1.msra.mxu0 0.0
  %2370 = vmatprep.subr.mxu0 0.0
  %2371 = vmatpush1.msra.mxu0 0.0
  %2372 = vmatprep.subr.mxu0 0.0
  %2373 = vmatpush1.msra.mxu0 0.0
  %2374 = vmatprep.subr.mxu0 0.0
  %2375 = vmatpush1.msra.mxu0 0.0
  %2376 = vmatprep.subr.mxu0 0.0
  %2377 = vmatpush1.msra.mxu0 0.0
  %2378 = vmatprep.subr.mxu0 0.0
  %2379 = vmatpush1.msra.mxu0 0.0
  %2380 = vmatprep.subr.mxu0 0.0
  %2381 = vmatpush1.msra.mxu0 0.0
  %2382 = vmatprep.subr.mxu0 0.0
  %2383 = vmatpush1.msra.mxu0 0.0
  %2384 = vmatprep.subr.mxu0 0.0
  %2385 = vmatpush1.msra.mxu0 0.0
  %2386 = vmatprep.subr.mxu0 0.0
  %2387 = vmatpush1.msra.mxu0 0.0
  %2388 = vmatprep.subr.mxu0 0.0
  %2389 = vmatpush1.msra.mxu0 0.0
  %2390 = vmatprep.subr.mxu0 0.0
  %2391 = vmatpush1.msra.mxu0 0.0
  %2392 = vmatprep.subr.mxu0 0.0
  %2393 = vmatpush1.msra.mxu0 0.0
  %2394 = vmatprep.mubr.f32.mxu0 0.0
  %2395 = vmatmul.mubr.f32.gmra.mrb[0].mxu0 %v79
  %v2396 = vpop.f32.mrb[0].mxu0
  %v2397 = vadd.f32 %v2329, %v2396
  %v2398 = vpop.f32.mrb[0].mxu0
  %2399 = vmatprep.mubr.f32.mxu0 0.0
  %2400 = vmatmul.mubr.f32.gmra.mrb[0].mxu0 %v82
  %v2401 = vpop.f32.mrb[0].mxu0
  %v2402 = vadd.f32 %v2329, %v2401
  %v2403 = vpop.f32.mrb[0].mxu0
  %2404 = vdwg.mxu0
  %s2405 = scalar_lea.vmem %s3, 352
  %v2406 = vld [vmem:[%s2405] sm:$0xff]
  %v2407 = vld [vmem:[%s2405 + $0x8] sm:$0xff]
  %v2408 = vld [vmem:[%s2405 + $0x10] sm:$0xff]
  %v2409 = vld [vmem:[%s2405 + $0x18] sm:$0xff]
  %v2410 = vlaneseq
  %v2411 = vshrl.u32 %v2410, 7
  %v2412 = vsub.s32 3, %v2411
  %v2413 = vrot.slane %v26, %v2412
  %2414 = vmatprep.subr.mxu0 0.0
  %2415 = vmatpush1.msra.mxu0 %v2406
  %2416 = vmatprep.subr.mxu0 0.0
  %2417 = vmatpush1.msra.mxu0 %v2407
  %2418 = vmatprep.subr.mxu0 0.0
  %2419 = vmatpush1.msra.mxu0 %v2408
  %2420 = vmatprep.subr.mxu0 0.0
  %2421 = vmatpush1.msra.mxu0 %v2409
  %2422 = vmatprep.subr.mxu0 0.0
  %2423 = vmatpush1.msra.mxu0 0.0
  %2424 = vmatprep.subr.mxu0 0.0
  %2425 = vmatpush1.msra.mxu0 0.0
  %2426 = vmatprep.subr.mxu0 0.0
  %2427 = vmatpush1.msra.mxu0 0.0
  %2428 = vmatprep.subr.mxu0 0.0
  %2429 = vmatpush1.msra.mxu0 0.0
  %2430 = vmatprep.subr.mxu0 0.0
  %2431 = vmatpush1.msra.mxu0 0.0
  %2432 = vmatprep.subr.mxu0 0.0
  %2433 = vmatpush1.msra.mxu0 0.0
  %2434 = vmatprep.subr.mxu0 0.0
  %2435 = vmatpush1.msra.mxu0 0.0
  %2436 = vmatprep.subr.mxu0 0.0
  %2437 = vmatpush1.msra.mxu0 0.0
  %2438 = vmatprep.subr.mxu0 0.0
  %2439 = vmatpush1.msra.mxu0 0.0
  %2440 = vmatprep.subr.mxu0 0.0
  %2441 = vmatpush1.msra.mxu0 0.0
  %2442 = vmatprep.subr.mxu0 0.0
  %2443 = vmatpush1.msra.mxu0 0.0
  %2444 = vmatprep.subr.mxu0 0.0
  %2445 = vmatpush1.msra.mxu0 0.0
  %2446 = vmatprep.subr.mxu0 0.0
  %2447 = vmatpush1.msra.mxu0 0.0
  %2448 = vmatprep.subr.mxu0 0.0
  %2449 = vmatpush1.msra.mxu0 0.0
  %2450 = vmatprep.subr.mxu0 0.0
  %2451 = vmatpush1.msra.mxu0 0.0
  %2452 = vmatprep.subr.mxu0 0.0
  %2453 = vmatpush1.msra.mxu0 0.0
  %2454 = vmatprep.subr.mxu0 0.0
  %2455 = vmatpush1.msra.mxu0 0.0
  %2456 = vmatprep.subr.mxu0 0.0
  %2457 = vmatpush1.msra.mxu0 0.0
  %2458 = vmatprep.subr.mxu0 0.0
  %2459 = vmatpush1.msra.mxu0 0.0
  %2460 = vmatprep.subr.mxu0 0.0
  %2461 = vmatpush1.msra.mxu0 0.0
  %2462 = vmatprep.subr.mxu0 0.0
  %2463 = vmatpush1.msra.mxu0 0.0
  %2464 = vmatprep.subr.mxu0 0.0
  %2465 = vmatpush1.msra.mxu0 0.0
  %2466 = vmatprep.subr.mxu0 0.0
  %2467 = vmatpush1.msra.mxu0 0.0
  %2468 = vmatprep.subr.mxu0 0.0
  %2469 = vmatpush1.msra.mxu0 0.0
  %2470 = vmatprep.subr.mxu0 0.0
  %2471 = vmatpush1.msra.mxu0 0.0
  %2472 = vmatprep.subr.mxu0 0.0
  %2473 = vmatpush1.msra.mxu0 0.0
  %2474 = vmatprep.subr.mxu0 0.0
  %2475 = vmatpush1.msra.mxu0 0.0
  %2476 = vmatprep.subr.mxu0 0.0
  %2477 = vmatpush1.msra.mxu0 0.0
  %2478 = vmatprep.mubr.f32.mxu0 0.0
  %2479 = vmatmul.mubr.f32.gmra.mrb[0].mxu0 %v79
  %v2480 = vpop.f32.mrb[0].mxu0
  %v2481 = vadd.f32 %v2413, %v2480
  %v2482 = vpop.f32.mrb[0].mxu0
  %2483 = vmatprep.mubr.f32.mxu0 0.0
  %2484 = vmatmul.mubr.f32.gmra.mrb[0].mxu0 %v82
  %v2485 = vpop.f32.mrb[0].mxu0
  %v2486 = vadd.f32 %v2413, %v2485
  %v2487 = vpop.f32.mrb[0].mxu0
  %2488 = vdwg.mxu0
  %s2489 = scalar_lea.vmem %s4, 24
  %v2490 = vld [vmem:[%s2489] sm:$0xff]
  %v2492 = vsel %vm328, %v2313, 0
  %v2495 = vsel %vm328, %v2397, 0
  %2497 = vmatprep.subr.mxu0 0.0
  %2498 = vmatpush1.xpose.msra.mxu0 %v2495
  %2499 = vmatprep.subr.mxu0 0.0
  %2500 = vmatpush1.xpose.msra.mxu0 0.0
  %2501 = vmatprep.subr.mxu0 0.0
  %2502 = vmatpush1.xpose.msra.mxu0 0.0
  %2503 = vmatprep.subr.mxu0 0.0
  %2504 = vmatpush1.xpose.msra.mxu0 0.0
  %2505 = vmatprep.subr.mxu0 0.0
  %2506 = vmatpush1.xpose.msra.mxu0 0.0
  %2507 = vmatprep.subr.mxu0 0.0
  %2508 = vmatpush1.xpose.msra.mxu0 0.0
  %2509 = vmatprep.subr.mxu0 0.0
  %2510 = vmatpush1.xpose.msra.mxu0 0.0
  %2511 = vmatprep.subr.mxu0 0.0
  %2512 = vmatpush1.xpose.msra.mxu0 0.0
  %2513 = vmatprep.subr.mxu0 0.0
  %2514 = vmatpush1.xpose.msra.mxu0 0.0
  %2515 = vmatprep.subr.mxu0 0.0
  %2516 = vmatpush1.xpose.msra.mxu0 0.0
  %2517 = vmatprep.subr.mxu0 0.0
  %2518 = vmatpush1.xpose.msra.mxu0 0.0
  %2519 = vmatprep.subr.mxu0 0.0
  %2520 = vmatpush1.xpose.msra.mxu0 0.0
  %2521 = vmatprep.subr.mxu0 0.0
  %2522 = vmatpush1.xpose.msra.mxu0 0.0
  %2523 = vmatprep.subr.mxu0 0.0
  %2524 = vmatpush1.xpose.msra.mxu0 0.0
  %2525 = vmatprep.subr.mxu0 0.0
  %2526 = vmatpush1.xpose.msra.mxu0 0.0
  %2527 = vmatprep.subr.mxu0 0.0
  %2528 = vmatpush1.xpose.msra.mxu0 0.0
  %2529 = vmatprep.subr.mxu0 0.0
  %2530 = vmatpush1.xpose.msra.mxu0 0.0
  %2531 = vmatprep.subr.mxu0 0.0
  %2532 = vmatpush1.xpose.msra.mxu0 0.0
  %2533 = vmatprep.subr.mxu0 0.0
  %2534 = vmatpush1.xpose.msra.mxu0 0.0
  %2535 = vmatprep.subr.mxu0 0.0
  %2536 = vmatpush1.xpose.msra.mxu0 0.0
  %2537 = vmatprep.subr.mxu0 0.0
  %2538 = vmatpush1.xpose.msra.mxu0 0.0
  %2539 = vmatprep.subr.mxu0 0.0
  %2540 = vmatpush1.xpose.msra.mxu0 0.0
  %2541 = vmatprep.subr.mxu0 0.0
  %2542 = vmatpush1.xpose.msra.mxu0 0.0
  %2543 = vmatprep.subr.mxu0 0.0
  %2544 = vmatpush1.xpose.msra.mxu0 0.0
  %2545 = vmatprep.subr.mxu0 0.0
  %2546 = vmatpush1.xpose.msra.mxu0 0.0
  %2547 = vmatprep.subr.mxu0 0.0
  %2548 = vmatpush1.xpose.msra.mxu0 0.0
  %2549 = vmatprep.subr.mxu0 0.0
  %2550 = vmatpush1.xpose.msra.mxu0 0.0
  %2551 = vmatprep.subr.mxu0 0.0
  %2552 = vmatpush1.xpose.msra.mxu0 0.0
  %2553 = vmatprep.subr.mxu0 0.0
  %2554 = vmatpush1.xpose.msra.mxu0 0.0
  %2555 = vmatprep.subr.mxu0 0.0
  %2556 = vmatpush1.xpose.msra.mxu0 0.0
  %2557 = vmatprep.subr.mxu0 0.0
  %2558 = vmatpush1.xpose.msra.mxu0 0.0
  %2559 = vmatprep.subr.mxu0 0.0
  %2560 = vmatpush1.xpose.msra.mxu0 0.0
  %2561 = vmatprep.mubr.f32.mxu0 0.0
  %2562 = vmatmul.mubr.f32.gmra.mrb[0].mxu0 %v2492
  %v2563 = vpop.f32.mrb[0].mxu0
  %v2564 = vadd.f32 0.0, %v2563
  %v2565 = vpop.f32.mrb[0].mxu0
  %2566 = vdwg.mxu0
  %v2567 = vsel %vm328, %v2564, -inf
  %2568 = vmax.xlane.f32.xlu0 %v2567
  %v2569 = vpop.xlane.xlu0 %2568
  %v2570 = vsub.f32 %v2564, %v2569
  %v2571 = vmul.f32 %v2570, 1.442695
  %v2572 = vpow.pop %v2571
  %v2573 = vsel %vm328, %v2572, 0.0
  %2574 = vadd.xlane.f32.xlu0 %v2573
  %v2575 = vpop.xlane.xlu0 %2574
  %v2576 = vrcp.pop %v2575
  %v2577 = vmul.f32 %v2572, %v2576
  %v2579 = vsel %vm328, %v2577, 0
  %2581 = vmatprep.subr.mxu0 0.0
  %2582 = vmatpush1.msra.mxu0 %v2481
  %2583 = vmatprep.subr.mxu0 0.0
  %2584 = vmatpush1.msra.mxu0 0.0
  %2585 = vmatprep.subr.mxu0 0.0
  %2586 = vmatpush1.msra.mxu0 0.0
  %2587 = vmatprep.subr.mxu0 0.0
  %2588 = vmatpush1.msra.mxu0 0.0
  %2589 = vmatprep.subr.mxu0 0.0
  %2590 = vmatpush1.msra.mxu0 0.0
  %2591 = vmatprep.subr.mxu0 0.0
  %2592 = vmatpush1.msra.mxu0 0.0
  %2593 = vmatprep.subr.mxu0 0.0
  %2594 = vmatpush1.msra.mxu0 0.0
  %2595 = vmatprep.subr.mxu0 0.0
  %2596 = vmatpush1.msra.mxu0 0.0
  %2597 = vmatprep.subr.mxu0 0.0
  %2598 = vmatpush1.msra.mxu0 0.0
  %2599 = vmatprep.subr.mxu0 0.0
  %2600 = vmatpush1.msra.mxu0 0.0
  %2601 = vmatprep.subr.mxu0 0.0
  %2602 = vmatpush1.msra.mxu0 0.0
  %2603 = vmatprep.subr.mxu0 0.0
  %2604 = vmatpush1.msra.mxu0 0.0
  %2605 = vmatprep.subr.mxu0 0.0
  %2606 = vmatpush1.msra.mxu0 0.0
  %2607 = vmatprep.subr.mxu0 0.0
  %2608 = vmatpush1.msra.mxu0 0.0
  %2609 = vmatprep.subr.mxu0 0.0
  %2610 = vmatpush1.msra.mxu0 0.0
  %2611 = vmatprep.subr.mxu0 0.0
  %2612 = vmatpush1.msra.mxu0 0.0
  %2613 = vmatprep.subr.mxu0 0.0
  %2614 = vmatpush1.msra.mxu0 0.0
  %2615 = vmatprep.subr.mxu0 0.0
  %2616 = vmatpush1.msra.mxu0 0.0
  %2617 = vmatprep.subr.mxu0 0.0
  %2618 = vmatpush1.msra.mxu0 0.0
  %2619 = vmatprep.subr.mxu0 0.0
  %2620 = vmatpush1.msra.mxu0 0.0
  %2621 = vmatprep.subr.mxu0 0.0
  %2622 = vmatpush1.msra.mxu0 0.0
  %2623 = vmatprep.subr.mxu0 0.0
  %2624 = vmatpush1.msra.mxu0 0.0
  %2625 = vmatprep.subr.mxu0 0.0
  %2626 = vmatpush1.msra.mxu0 0.0
  %2627 = vmatprep.subr.mxu0 0.0
  %2628 = vmatpush1.msra.mxu0 0.0
  %2629 = vmatprep.subr.mxu0 0.0
  %2630 = vmatpush1.msra.mxu0 0.0
  %2631 = vmatprep.subr.mxu0 0.0
  %2632 = vmatpush1.msra.mxu0 0.0
  %2633 = vmatprep.subr.mxu0 0.0
  %2634 = vmatpush1.msra.mxu0 0.0
  %2635 = vmatprep.subr.mxu0 0.0
  %2636 = vmatpush1.msra.mxu0 0.0
  %2637 = vmatprep.subr.mxu0 0.0
  %2638 = vmatpush1.msra.mxu0 0.0
  %2639 = vmatprep.subr.mxu0 0.0
  %2640 = vmatpush1.msra.mxu0 0.0
  %2641 = vmatprep.subr.mxu0 0.0
  %2642 = vmatpush1.msra.mxu0 0.0
  %2643 = vmatprep.subr.mxu0 0.0
  %2644 = vmatpush1.msra.mxu0 0.0
  %2645 = vmatprep.mubr.f32.mxu0 0.0
  %2646 = vmatmul.mubr.f32.gmra.mrb[0].mxu0 %v2579
  %v2647 = vpop.f32.mrb[0].mxu0
  %v2648 = vadd.f32 0.0, %v2647
  %v2649 = vpop.f32.mrb[0].mxu0
  %2650 = vdwg.mxu0
  %v2652 = vsel %vm328, %v2648, 0
  %2654 = vmatprep.subr.mxu0 0.0
  %2655 = vmatpush1.msra.mxu0 %v2490
  %2656 = vmatprep.subr.mxu0 0.0
  %2657 = vmatpush1.msra.mxu0 0.0
  %2658 = vmatprep.subr.mxu0 0.0
  %2659 = vmatpush1.msra.mxu0 0.0
  %2660 = vmatprep.subr.mxu0 0.0
  %2661 = vmatpush1.msra.mxu0 0.0
  %2662 = vmatprep.subr.mxu0 0.0
  %2663 = vmatpush1.msra.mxu0 0.0
  %2664 = vmatprep.subr.mxu0 0.0
  %2665 = vmatpush1.msra.mxu0 0.0
  %2666 = vmatprep.subr.mxu0 0.0
  %2667 = vmatpush1.msra.mxu0 0.0
  %2668 = vmatprep.subr.mxu0 0.0
  %2669 = vmatpush1.msra.mxu0 0.0
  %2670 = vmatprep.subr.mxu0 0.0
  %2671 = vmatpush1.msra.mxu0 0.0
  %2672 = vmatprep.subr.mxu0 0.0
  %2673 = vmatpush1.msra.mxu0 0.0
  %2674 = vmatprep.subr.mxu0 0.0
  %2675 = vmatpush1.msra.mxu0 0.0
  %2676 = vmatprep.subr.mxu0 0.0
  %2677 = vmatpush1.msra.mxu0 0.0
  %2678 = vmatprep.subr.mxu0 0.0
  %2679 = vmatpush1.msra.mxu0 0.0
  %2680 = vmatprep.subr.mxu0 0.0
  %2681 = vmatpush1.msra.mxu0 0.0
  %2682 = vmatprep.subr.mxu0 0.0
  %2683 = vmatpush1.msra.mxu0 0.0
  %2684 = vmatprep.subr.mxu0 0.0
  %2685 = vmatpush1.msra.mxu0 0.0
  %2686 = vmatprep.subr.mxu0 0.0
  %2687 = vmatpush1.msra.mxu0 0.0
  %2688 = vmatprep.subr.mxu0 0.0
  %2689 = vmatpush1.msra.mxu0 0.0
  %2690 = vmatprep.subr.mxu0 0.0
  %2691 = vmatpush1.msra.mxu0 0.0
  %2692 = vmatprep.subr.mxu0 0.0
  %2693 = vmatpush1.msra.mxu0 0.0
  %2694 = vmatprep.subr.mxu0 0.0
  %2695 = vmatpush1.msra.mxu0 0.0
  %2696 = vmatprep.subr.mxu0 0.0
  %2697 = vmatpush1.msra.mxu0 0.0
  %2698 = vmatprep.subr.mxu0 0.0
  %2699 = vmatpush1.msra.mxu0 0.0
  %2700 = vmatprep.subr.mxu0 0.0
  %2701 = vmatpush1.msra.mxu0 0.0
  %2702 = vmatprep.subr.mxu0 0.0
  %2703 = vmatpush1.msra.mxu0 0.0
  %2704 = vmatprep.subr.mxu0 0.0
  %2705 = vmatpush1.msra.mxu0 0.0
  %2706 = vmatprep.subr.mxu0 0.0
  %2707 = vmatpush1.msra.mxu0 0.0
  %2708 = vmatprep.subr.mxu0 0.0
  %2709 = vmatpush1.msra.mxu0 0.0
  %2710 = vmatprep.subr.mxu0 0.0
  %2711 = vmatpush1.msra.mxu0 0.0
  %2712 = vmatprep.subr.mxu0 0.0
  %2713 = vmatpush1.msra.mxu0 0.0
  %2714 = vmatprep.subr.mxu0 0.0
  %2715 = vmatpush1.msra.mxu0 0.0
  %2716 = vmatprep.subr.mxu0 0.0
  %2717 = vmatpush1.msra.mxu0 0.0
  %2718 = vmatprep.mubr.f32.mxu0 0.0
  %2719 = vmatmul.mubr.f32.gmra.mrb[0].mxu0 %v2652
  %v2720 = vpop.f32.mrb[0].mxu0
  %v2721 = vadd.f32 0.0, %v2720
  %v2722 = vpop.f32.mrb[0].mxu0
  %2723 = vdwg.mxu0
  %v2724 = vadd.f32 %v2002, %v2721
  %v2726 = vsel %vm328, %v2318, 0
  %v2729 = vsel %vm328, %v2402, 0
  %2731 = vmatprep.subr.mxu0 0.0
  %2732 = vmatpush1.xpose.msra.mxu0 %v2729
  %2733 = vmatprep.subr.mxu0 0.0
  %2734 = vmatpush1.xpose.msra.mxu0 0.0
  %2735 = vmatprep.subr.mxu0 0.0
  %2736 = vmatpush1.xpose.msra.mxu0 0.0
  %2737 = vmatprep.subr.mxu0 0.0
  %2738 = vmatpush1.xpose.msra.mxu0 0.0
  %2739 = vmatprep.subr.mxu0 0.0
  %2740 = vmatpush1.xpose.msra.mxu0 0.0
  %2741 = vmatprep.subr.mxu0 0.0
  %2742 = vmatpush1.xpose.msra.mxu0 0.0
  %2743 = vmatprep.subr.mxu0 0.0
  %2744 = vmatpush1.xpose.msra.mxu0 0.0
  %2745 = vmatprep.subr.mxu0 0.0
  %2746 = vmatpush1.xpose.msra.mxu0 0.0
  %2747 = vmatprep.subr.mxu0 0.0
  %2748 = vmatpush1.xpose.msra.mxu0 0.0
  %2749 = vmatprep.subr.mxu0 0.0
  %2750 = vmatpush1.xpose.msra.mxu0 0.0
  %2751 = vmatprep.subr.mxu0 0.0
  %2752 = vmatpush1.xpose.msra.mxu0 0.0
  %2753 = vmatprep.subr.mxu0 0.0
  %2754 = vmatpush1.xpose.msra.mxu0 0.0
  %2755 = vmatprep.subr.mxu0 0.0
  %2756 = vmatpush1.xpose.msra.mxu0 0.0
  %2757 = vmatprep.subr.mxu0 0.0
  %2758 = vmatpush1.xpose.msra.mxu0 0.0
  %2759 = vmatprep.subr.mxu0 0.0
  %2760 = vmatpush1.xpose.msra.mxu0 0.0
  %2761 = vmatprep.subr.mxu0 0.0
  %2762 = vmatpush1.xpose.msra.mxu0 0.0
  %2763 = vmatprep.subr.mxu0 0.0
  %2764 = vmatpush1.xpose.msra.mxu0 0.0
  %2765 = vmatprep.subr.mxu0 0.0
  %2766 = vmatpush1.xpose.msra.mxu0 0.0
  %2767 = vmatprep.subr.mxu0 0.0
  %2768 = vmatpush1.xpose.msra.mxu0 0.0
  %2769 = vmatprep.subr.mxu0 0.0
  %2770 = vmatpush1.xpose.msra.mxu0 0.0
  %2771 = vmatprep.subr.mxu0 0.0
  %2772 = vmatpush1.xpose.msra.mxu0 0.0
  %2773 = vmatprep.subr.mxu0 0.0
  %2774 = vmatpush1.xpose.msra.mxu0 0.0
  %2775 = vmatprep.subr.mxu0 0.0
  %2776 = vmatpush1.xpose.msra.mxu0 0.0
  %2777 = vmatprep.subr.mxu0 0.0
  %2778 = vmatpush1.xpose.msra.mxu0 0.0
  %2779 = vmatprep.subr.mxu0 0.0
  %2780 = vmatpush1.xpose.msra.mxu0 0.0
  %2781 = vmatprep.subr.mxu0 0.0
  %2782 = vmatpush1.xpose.msra.mxu0 0.0
  %2783 = vmatprep.subr.mxu0 0.0
  %2784 = vmatpush1.xpose.msra.mxu0 0.0
  %2785 = vmatprep.subr.mxu0 0.0
  %2786 = vmatpush1.xpose.msra.mxu0 0.0
  %2787 = vmatprep.subr.mxu0 0.0
  %2788 = vmatpush1.xpose.msra.mxu0 0.0
  %2789 = vmatprep.subr.mxu0 0.0
  %2790 = vmatpush1.xpose.msra.mxu0 0.0
  %2791 = vmatprep.subr.mxu0 0.0
  %2792 = vmatpush1.xpose.msra.mxu0 0.0
  %2793 = vmatprep.subr.mxu0 0.0
  %2794 = vmatpush1.xpose.msra.mxu0 0.0
  %2795 = vmatprep.mubr.f32.mxu0 0.0
  %2796 = vmatmul.mubr.f32.gmra.mrb[0].mxu0 %v2726
  %v2797 = vpop.f32.mrb[0].mxu0
  %v2798 = vadd.f32 0.0, %v2797
  %v2799 = vpop.f32.mrb[0].mxu0
  %2800 = vdwg.mxu0
  %v2801 = vsel %vm328, %v2798, -inf
  %2802 = vmax.xlane.f32.xlu0 %v2801
  %v2803 = vpop.xlane.xlu0 %2802
  %v2804 = vsub.f32 %v2798, %v2803
  %v2805 = vmul.f32 %v2804, 1.442695
  %v2806 = vpow.pop %v2805
  %v2807 = vsel %vm328, %v2806, 0.0
  %2808 = vadd.xlane.f32.xlu0 %v2807
  %v2809 = vpop.xlane.xlu0 %2808
  %v2810 = vrcp.pop %v2809
  %v2811 = vmul.f32 %v2806, %v2810
  %v2813 = vsel %vm328, %v2811, 0
  %2815 = vmatprep.subr.mxu0 0.0
  %2816 = vmatpush1.msra.mxu0 %v2486
  %2817 = vmatprep.subr.mxu0 0.0
  %2818 = vmatpush1.msra.mxu0 0.0
  %2819 = vmatprep.subr.mxu0 0.0
  %2820 = vmatpush1.msra.mxu0 0.0
  %2821 = vmatprep.subr.mxu0 0.0
  %2822 = vmatpush1.msra.mxu0 0.0
  %2823 = vmatprep.subr.mxu0 0.0
  %2824 = vmatpush1.msra.mxu0 0.0
  %2825 = vmatprep.subr.mxu0 0.0
  %2826 = vmatpush1.msra.mxu0 0.0
  %2827 = vmatprep.subr.mxu0 0.0
  %2828 = vmatpush1.msra.mxu0 0.0
  %2829 = vmatprep.subr.mxu0 0.0
  %2830 = vmatpush1.msra.mxu0 0.0
  %2831 = vmatprep.subr.mxu0 0.0
  %2832 = vmatpush1.msra.mxu0 0.0
  %2833 = vmatprep.subr.mxu0 0.0
  %2834 = vmatpush1.msra.mxu0 0.0
  %2835 = vmatprep.subr.mxu0 0.0
  %2836 = vmatpush1.msra.mxu0 0.0
  %2837 = vmatprep.subr.mxu0 0.0
  %2838 = vmatpush1.msra.mxu0 0.0
  %2839 = vmatprep.subr.mxu0 0.0
  %2840 = vmatpush1.msra.mxu0 0.0
  %2841 = vmatprep.subr.mxu0 0.0
  %2842 = vmatpush1.msra.mxu0 0.0
  %2843 = vmatprep.subr.mxu0 0.0
  %2844 = vmatpush1.msra.mxu0 0.0
  %2845 = vmatprep.subr.mxu0 0.0
  %2846 = vmatpush1.msra.mxu0 0.0
  %2847 = vmatprep.subr.mxu0 0.0
  %2848 = vmatpush1.msra.mxu0 0.0
  %2849 = vmatprep.subr.mxu0 0.0
  %2850 = vmatpush1.msra.mxu0 0.0
  %2851 = vmatprep.subr.mxu0 0.0
  %2852 = vmatpush1.msra.mxu0 0.0
  %2853 = vmatprep.subr.mxu0 0.0
  %2854 = vmatpush1.msra.mxu0 0.0
  %2855 = vmatprep.subr.mxu0 0.0
  %2856 = vmatpush1.msra.mxu0 0.0
  %2857 = vmatprep.subr.mxu0 0.0
  %2858 = vmatpush1.msra.mxu0 0.0
  %2859 = vmatprep.subr.mxu0 0.0
  %2860 = vmatpush1.msra.mxu0 0.0
  %2861 = vmatprep.subr.mxu0 0.0
  %2862 = vmatpush1.msra.mxu0 0.0
  %2863 = vmatprep.subr.mxu0 0.0
  %2864 = vmatpush1.msra.mxu0 0.0
  %2865 = vmatprep.subr.mxu0 0.0
  %2866 = vmatpush1.msra.mxu0 0.0
  %2867 = vmatprep.subr.mxu0 0.0
  %2868 = vmatpush1.msra.mxu0 0.0
  %2869 = vmatprep.subr.mxu0 0.0
  %2870 = vmatpush1.msra.mxu0 0.0
  %2871 = vmatprep.subr.mxu0 0.0
  %2872 = vmatpush1.msra.mxu0 0.0
  %2873 = vmatprep.subr.mxu0 0.0
  %2874 = vmatpush1.msra.mxu0 0.0
  %2875 = vmatprep.subr.mxu0 0.0
  %2876 = vmatpush1.msra.mxu0 0.0
  %2877 = vmatprep.subr.mxu0 0.0
  %2878 = vmatpush1.msra.mxu0 0.0
  %2879 = vmatprep.mubr.f32.mxu0 0.0
  %2880 = vmatmul.mubr.f32.gmra.mrb[0].mxu0 %v2813
  %v2881 = vpop.f32.mrb[0].mxu0
  %v2882 = vadd.f32 0.0, %v2881
  %v2883 = vpop.f32.mrb[0].mxu0
  %2884 = vdwg.mxu0
  %v2886 = vsel %vm328, %v2882, 0
  %2888 = vmatprep.subr.mxu0 0.0
  %2889 = vmatpush1.msra.mxu0 %v2490
  %2890 = vmatprep.subr.mxu0 0.0
  %2891 = vmatpush1.msra.mxu0 0.0
  %2892 = vmatprep.subr.mxu0 0.0
  %2893 = vmatpush1.msra.mxu0 0.0
  %2894 = vmatprep.subr.mxu0 0.0
  %2895 = vmatpush1.msra.mxu0 0.0
  %2896 = vmatprep.subr.mxu0 0.0
  %2897 = vmatpush1.msra.mxu0 0.0
  %2898 = vmatprep.subr.mxu0 0.0
  %2899 = vmatpush1.msra.mxu0 0.0
  %2900 = vmatprep.subr.mxu0 0.0
  %2901 = vmatpush1.msra.mxu0 0.0
  %2902 = vmatprep.subr.mxu0 0.0
  %2903 = vmatpush1.msra.mxu0 0.0
  %2904 = vmatprep.subr.mxu0 0.0
  %2905 = vmatpush1.msra.mxu0 0.0
  %2906 = vmatprep.subr.mxu0 0.0
  %2907 = vmatpush1.msra.mxu0 0.0
  %2908 = vmatprep.subr.mxu0 0.0
  %2909 = vmatpush1.msra.mxu0 0.0
  %2910 = vmatprep.subr.mxu0 0.0
  %2911 = vmatpush1.msra.mxu0 0.0
  %2912 = vmatprep.subr.mxu0 0.0
  %2913 = vmatpush1.msra.mxu0 0.0
  %2914 = vmatprep.subr.mxu0 0.0
  %2915 = vmatpush1.msra.mxu0 0.0
  %2916 = vmatprep.subr.mxu0 0.0
  %2917 = vmatpush1.msra.mxu0 0.0
  %2918 = vmatprep.subr.mxu0 0.0
  %2919 = vmatpush1.msra.mxu0 0.0
  %2920 = vmatprep.subr.mxu0 0.0
  %2921 = vmatpush1.msra.mxu0 0.0
  %2922 = vmatprep.subr.mxu0 0.0
  %2923 = vmatpush1.msra.mxu0 0.0
  %2924 = vmatprep.subr.mxu0 0.0
  %2925 = vmatpush1.msra.mxu0 0.0
  %2926 = vmatprep.subr.mxu0 0.0
  %2927 = vmatpush1.msra.mxu0 0.0
  %2928 = vmatprep.subr.mxu0 0.0
  %2929 = vmatpush1.msra.mxu0 0.0
  %2930 = vmatprep.subr.mxu0 0.0
  %2931 = vmatpush1.msra.mxu0 0.0
  %2932 = vmatprep.subr.mxu0 0.0
  %2933 = vmatpush1.msra.mxu0 0.0
  %2934 = vmatprep.subr.mxu0 0.0
  %2935 = vmatpush1.msra.mxu0 0.0
  %2936 = vmatprep.subr.mxu0 0.0
  %2937 = vmatpush1.msra.mxu0 0.0
  %2938 = vmatprep.subr.mxu0 0.0
  %2939 = vmatpush1.msra.mxu0 0.0
  %2940 = vmatprep.subr.mxu0 0.0
  %2941 = vmatpush1.msra.mxu0 0.0
  %2942 = vmatprep.subr.mxu0 0.0
  %2943 = vmatpush1.msra.mxu0 0.0
  %2944 = vmatprep.subr.mxu0 0.0
  %2945 = vmatpush1.msra.mxu0 0.0
  %2946 = vmatprep.subr.mxu0 0.0
  %2947 = vmatpush1.msra.mxu0 0.0
  %2948 = vmatprep.subr.mxu0 0.0
  %2949 = vmatpush1.msra.mxu0 0.0
  %2950 = vmatprep.subr.mxu0 0.0
  %2951 = vmatpush1.msra.mxu0 0.0
  %2952 = vmatprep.mubr.f32.mxu0 0.0
  %2953 = vmatmul.mubr.f32.gmra.mrb[0].mxu0 %v2886
  %v2954 = vpop.f32.mrb[0].mxu0
  %v2955 = vadd.f32 0.0, %v2954
  %v2956 = vpop.f32.mrb[0].mxu0
  %2957 = vdwg.mxu0
  %v2958 = vadd.f32 %v2236, %v2955
  %v2959 = vadd.f32 %v68, %v2724
  %v2960 = vadd.f32 %v69, %v2958
  %v2961 = vlaneseq
  %v2962 = vshrl.u32 %v2961, 7
  %v2963 = vsub.s32 2, %v2962
  %v2964 = vrot.slane %v23, %v2963
  %v2965 = vadd.f32 %v2959, %v2964
  %v2966 = vadd.f32 %v2960, %v2964
  %v2967 = vsel %vm30, %v2965, 0.0
  %2968 = vadd.xlane.f32.xlu0 %v2967
  %v2969 = vpop.xlane.xlu0 %2968
  %v2970 = vsel %vm30, %v2966, 0.0
  %2971 = vadd.xlane.f32.xlu0 %v2970
  %v2972 = vpop.xlane.xlu0 %2971
  %v2973 = vmul.f32 %v2969, %v37
  %v2974 = vmul.f32 %v2972, %v37
  %v2975 = vsub.f32 %v2965, %v2973
  %v2976 = vsub.f32 %v2966, %v2974
  %v2977 = vmul.f32 %v2975, %v2975
  %v2978 = vmul.f32 %v2976, %v2976
  %v2979 = vsel %vm30, %v2977, 0.0
  %2980 = vadd.xlane.f32.xlu0 %v2979
  %v2981 = vpop.xlane.xlu0 %2980
  %v2982 = vsel %vm30, %v2978, 0.0
  %2983 = vadd.xlane.f32.xlu0 %v2982
  %v2984 = vpop.xlane.xlu0 %2983
  %v2985 = vmul.f32 %v2981, %v37
  %v2986 = vmul.f32 %v2984, %v37
  %v2987 = vadd.f32 %v2985, 1e-05
  %v2988 = vadd.f32 %v2986, 1e-05
  %v2989 = vrsqrt.pop %v2987
  %v2990 = vrsqrt.pop %v2988
  %v2991 = vmul.f32 %v2975, %v2989
  %v2992 = vmul.f32 %v2976, %v2990
  %v2993 = vlaneseq
  %v2994 = vshrl.u32 %v2993, 7
  %v2995 = vsub.s32 3, %v2994
  %v2996 = vrot.slane %v23, %v2995
  %v2997 = vmul.f32 %v2991, %v2996
  %v2998 = vmul.f32 %v2992, %v2996
  %v2999 = vlaneseq
  %v3000 = vshrl.u32 %v2999, 7
  %v3001 = vsub.s32 4, %v3000
  %v3002 = vrot.slane %v23, %v3001
  %v3003 = vadd.f32 %v2997, %v3002
  %v3004 = vadd.f32 %v2998, %v3002
  %v3005 = vld [vmem:[%s5] sm:$0xff]
  %v3006 = vld [vmem:[%s5 + $0x8] sm:$0xff]
  %v3007 = vld [vmem:[%s5 + $0x10] sm:$0xff]
  %v3008 = vld [vmem:[%s5 + $0x18] sm:$0xff]
  %v3009 = vlaneseq
  %v3010 = vshrl.u32 %v3009, 7
  %v3011 = vsub.s32 5, %v3010
  %v3012 = vrot.slane %v23, %v3011
  %v3014 = vsel %vm30, %v3003, 0
  %v3017 = vsel %vm30, %v3004, 0
  %3019 = vmatprep.subr.mxu0 0.0
  %3020 = vmatpush1.msra.mxu0 %v3005
  %3021 = vmatprep.subr.mxu0 0.0
  %3022 = vmatpush1.msra.mxu0 %v3006
  %3023 = vmatprep.subr.mxu0 0.0
  %3024 = vmatpush1.msra.mxu0 %v3007
  %3025 = vmatprep.subr.mxu0 0.0
  %3026 = vmatpush1.msra.mxu0 %v3008
  %3027 = vmatprep.subr.mxu0 0.0
  %3028 = vmatpush1.msra.mxu0 0.0
  %3029 = vmatprep.subr.mxu0 0.0
  %3030 = vmatpush1.msra.mxu0 0.0
  %3031 = vmatprep.subr.mxu0 0.0
  %3032 = vmatpush1.msra.mxu0 0.0
  %3033 = vmatprep.subr.mxu0 0.0
  %3034 = vmatpush1.msra.mxu0 0.0
  %3035 = vmatprep.subr.mxu0 0.0
  %3036 = vmatpush1.msra.mxu0 0.0
  %3037 = vmatprep.subr.mxu0 0.0
  %3038 = vmatpush1.msra.mxu0 0.0
  %3039 = vmatprep.subr.mxu0 0.0
  %3040 = vmatpush1.msra.mxu0 0.0
  %3041 = vmatprep.subr.mxu0 0.0
  %3042 = vmatpush1.msra.mxu0 0.0
  %3043 = vmatprep.subr.mxu0 0.0
  %3044 = vmatpush1.msra.mxu0 0.0
  %3045 = vmatprep.subr.mxu0 0.0
  %3046 = vmatpush1.msra.mxu0 0.0
  %3047 = vmatprep.subr.mxu0 0.0
  %3048 = vmatpush1.msra.mxu0 0.0
  %3049 = vmatprep.subr.mxu0 0.0
  %3050 = vmatpush1.msra.mxu0 0.0
  %3051 = vmatprep.subr.mxu0 0.0
  %3052 = vmatpush1.msra.mxu0 0.0
  %3053 = vmatprep.subr.mxu0 0.0
  %3054 = vmatpush1.msra.mxu0 0.0
  %3055 = vmatprep.subr.mxu0 0.0
  %3056 = vmatpush1.msra.mxu0 0.0
  %3057 = vmatprep.subr.mxu0 0.0
  %3058 = vmatpush1.msra.mxu0 0.0
  %3059 = vmatprep.subr.mxu0 0.0
  %3060 = vmatpush1.msra.mxu0 0.0
  %3061 = vmatprep.subr.mxu0 0.0
  %3062 = vmatpush1.msra.mxu0 0.0
  %3063 = vmatprep.subr.mxu0 0.0
  %3064 = vmatpush1.msra.mxu0 0.0
  %3065 = vmatprep.subr.mxu0 0.0
  %3066 = vmatpush1.msra.mxu0 0.0
  %3067 = vmatprep.subr.mxu0 0.0
  %3068 = vmatpush1.msra.mxu0 0.0
  %3069 = vmatprep.subr.mxu0 0.0
  %3070 = vmatpush1.msra.mxu0 0.0
  %3071 = vmatprep.subr.mxu0 0.0
  %3072 = vmatpush1.msra.mxu0 0.0
  %3073 = vmatprep.subr.mxu0 0.0
  %3074 = vmatpush1.msra.mxu0 0.0
  %3075 = vmatprep.subr.mxu0 0.0
  %3076 = vmatpush1.msra.mxu0 0.0
  %3077 = vmatprep.subr.mxu0 0.0
  %3078 = vmatpush1.msra.mxu0 0.0
  %3079 = vmatprep.subr.mxu0 0.0
  %3080 = vmatpush1.msra.mxu0 0.0
  %3081 = vmatprep.subr.mxu0 0.0
  %3082 = vmatpush1.msra.mxu0 0.0
  %3083 = vmatprep.mubr.f32.mxu0 0.0
  %3084 = vmatmul.mubr.f32.gmra.mrb[0].mxu0 %v3014
  %v3085 = vpop.f32.mrb[0].mxu0
  %v3086 = vadd.f32 %v3012, %v3085
  %v3087 = vpop.f32.mrb[0].mxu0
  %3088 = vmatprep.mubr.f32.mxu0 0.0
  %3089 = vmatmul.mubr.f32.gmra.mrb[0].mxu0 %v3017
  %v3090 = vpop.f32.mrb[0].mxu0
  %v3091 = vadd.f32 %v3012, %v3090
  %v3092 = vpop.f32.mrb[0].mxu0
  %3093 = vdwg.mxu0
  %v3094 = vadd.f32 %v3003, %v3086
  %v3095 = vadd.f32 %v3004, %v3091
  %v3096 = vsel %vm30, %v3094, 0.0
  %3097 = vadd.xlane.f32.xlu0 %v3096
  %v3098 = vpop.xlane.xlu0 %3097
  %v3099 = vsel %vm30, %v3095, 0.0
  %3100 = vadd.xlane.f32.xlu0 %v3099
  %v3101 = vpop.xlane.xlu0 %3100
  %v3102 = vmul.f32 %v3098, %v37
  %v3103 = vmul.f32 %v3101, %v37
  %v3104 = vsub.f32 %v3094, %v3102
  %v3105 = vsub.f32 %v3095, %v3103
  %v3106 = vmul.f32 %v3104, %v3104
  %v3107 = vmul.f32 %v3105, %v3105
  %v3108 = vsel %vm30, %v3106, 0.0
  %3109 = vadd.xlane.f32.xlu0 %v3108
  %v3110 = vpop.xlane.xlu0 %3109
  %v3111 = vsel %vm30, %v3107, 0.0
  %3112 = vadd.xlane.f32.xlu0 %v3111
  %v3113 = vpop.xlane.xlu0 %3112
  %v3114 = vmul.f32 %v3110, %v37
  %v3115 = vmul.f32 %v3113, %v37
  %v3116 = vadd.f32 %v3114, 1e-05
  %v3117 = vadd.f32 %v3115, 1e-05
  %v3118 = vrsqrt.pop %v3116
  %v3119 = vrsqrt.pop %v3117
  %v3120 = vmul.f32 %v3104, %v3118
  %v3121 = vmul.f32 %v3105, %v3119
  %v3122 = vlaneseq
  %v3123 = vshrl.u32 %v3122, 7
  %v3124 = vsub.s32 6, %v3123
  %v3125 = vrot.slane %v23, %v3124
  %v3126 = vmul.f32 %v3120, %v3125
  %v3127 = vmul.f32 %v3121, %v3125
  %v3128 = vlaneseq
  %v3129 = vshrl.u32 %v3128, 7
  %v3130 = vsub.s32 7, %v3129
  %v3131 = vrot.slane %v23, %v3130
  %v3132 = vadd.f32 %v3126, %v3131
  %v3133 = vadd.f32 %v3127, %v3131
  %s3134 = scalar_lea.vmem %s3, 384
  %v3135 = vld [vmem:[%s3134] sm:$0xff]
  %v3136 = vld [vmem:[%s3134 + $0x8] sm:$0xff]
  %v3137 = vld [vmem:[%s3134 + $0x10] sm:$0xff]
  %v3138 = vld [vmem:[%s3134 + $0x18] sm:$0xff]
  %v3139 = vlaneseq
  %v3140 = vshrl.u32 %v3139, 7
  %v3141 = vsub.s32 4, %v3140
  %v3142 = vrot.slane %v26, %v3141
  %v3144 = vsel %vm30, %v3132, 0
  %v3147 = vsel %vm30, %v3133, 0
  %3149 = vmatprep.subr.mxu0 0.0
  %3150 = vmatpush1.msra.mxu0 %v3135
  %3151 = vmatprep.subr.mxu0 0.0
  %3152 = vmatpush1.msra.mxu0 %v3136
  %3153 = vmatprep.subr.mxu0 0.0
  %3154 = vmatpush1.msra.mxu0 %v3137
  %3155 = vmatprep.subr.mxu0 0.0
  %3156 = vmatpush1.msra.mxu0 %v3138
  %3157 = vmatprep.subr.mxu0 0.0
  %3158 = vmatpush1.msra.mxu0 0.0
  %3159 = vmatprep.subr.mxu0 0.0
  %3160 = vmatpush1.msra.mxu0 0.0
  %3161 = vmatprep.subr.mxu0 0.0
  %3162 = vmatpush1.msra.mxu0 0.0
  %3163 = vmatprep.subr.mxu0 0.0
  %3164 = vmatpush1.msra.mxu0 0.0
  %3165 = vmatprep.subr.mxu0 0.0
  %3166 = vmatpush1.msra.mxu0 0.0
  %3167 = vmatprep.subr.mxu0 0.0
  %3168 = vmatpush1.msra.mxu0 0.0
  %3169 = vmatprep.subr.mxu0 0.0
  %3170 = vmatpush1.msra.mxu0 0.0
  %3171 = vmatprep.subr.mxu0 0.0
  %3172 = vmatpush1.msra.mxu0 0.0
  %3173 = vmatprep.subr.mxu0 0.0
  %3174 = vmatpush1.msra.mxu0 0.0
  %3175 = vmatprep.subr.mxu0 0.0
  %3176 = vmatpush1.msra.mxu0 0.0
  %3177 = vmatprep.subr.mxu0 0.0
  %3178 = vmatpush1.msra.mxu0 0.0
  %3179 = vmatprep.subr.mxu0 0.0
  %3180 = vmatpush1.msra.mxu0 0.0
  %3181 = vmatprep.subr.mxu0 0.0
  %3182 = vmatpush1.msra.mxu0 0.0
  %3183 = vmatprep.subr.mxu0 0.0
  %3184 = vmatpush1.msra.mxu0 0.0
  %3185 = vmatprep.subr.mxu0 0.0
  %3186 = vmatpush1.msra.mxu0 0.0
  %3187 = vmatprep.subr.mxu0 0.0
  %3188 = vmatpush1.msra.mxu0 0.0
  %3189 = vmatprep.subr.mxu0 0.0
  %3190 = vmatpush1.msra.mxu0 0.0
  %3191 = vmatprep.subr.mxu0 0.0
  %3192 = vmatpush1.msra.mxu0 0.0
  %3193 = vmatprep.subr.mxu0 0.0
  %3194 = vmatpush1.msra.mxu0 0.0
  %3195 = vmatprep.subr.mxu0 0.0
  %3196 = vmatpush1.msra.mxu0 0.0
  %3197 = vmatprep.subr.mxu0 0.0
  %3198 = vmatpush1.msra.mxu0 0.0
  %3199 = vmatprep.subr.mxu0 0.0
  %3200 = vmatpush1.msra.mxu0 0.0
  %3201 = vmatprep.subr.mxu0 0.0
  %3202 = vmatpush1.msra.mxu0 0.0
  %3203 = vmatprep.subr.mxu0 0.0
  %3204 = vmatpush1.msra.mxu0 0.0
  %3205 = vmatprep.subr.mxu0 0.0
  %3206 = vmatpush1.msra.mxu0 0.0
  %3207 = vmatprep.subr.mxu0 0.0
  %3208 = vmatpush1.msra.mxu0 0.0
  %3209 = vmatprep.subr.mxu0 0.0
  %3210 = vmatpush1.msra.mxu0 0.0
  %3211 = vmatprep.subr.mxu0 0.0
  %3212 = vmatpush1.msra.mxu0 0.0
  %3213 = vmatprep.mubr.f32.mxu0 0.0
  %3214 = vmatmul.mubr.f32.gmra.mrb[0].mxu0 %v3144
  %v3215 = vpop.f32.mrb[0].mxu0
  %v3216 = vadd.f32 %v3142, %v3215
  %v3217 = vpop.f32.mrb[0].mxu0
  %3218 = vmatprep.mubr.f32.mxu0 0.0
  %3219 = vmatmul.mubr.f32.gmra.mrb[0].mxu0 %v3147
  %v3220 = vpop.f32.mrb[0].mxu0
  %v3221 = vadd.f32 %v3142, %v3220
  %v3222 = vpop.f32.mrb[0].mxu0
  %3223 = vdwg.mxu0
  %s3224 = scalar_lea.vmem %s3, 512
  %v3225 = vld [vmem:[%s3224] sm:$0xff]
  %v3226 = vld [vmem:[%s3224 + $0x8] sm:$0xff]
  %v3227 = vld [vmem:[%s3224 + $0x10] sm:$0xff]
  %v3228 = vld [vmem:[%s3224 + $0x18] sm:$0xff]
  %v3229 = vlaneseq
  %v3230 = vshrl.u32 %v3229, 7
  %v3231 = vsub.s32 0, %v3230
  %v3232 = vrot.slane %v27, %v3231
  %3233 = vmatprep.subr.mxu0 0.0
  %3234 = vmatpush1.msra.mxu0 %v3225
  %3235 = vmatprep.subr.mxu0 0.0
  %3236 = vmatpush1.msra.mxu0 %v3226
  %3237 = vmatprep.subr.mxu0 0.0
  %3238 = vmatpush1.msra.mxu0 %v3227
  %3239 = vmatprep.subr.mxu0 0.0
  %3240 = vmatpush1.msra.mxu0 %v3228
  %3241 = vmatprep.subr.mxu0 0.0
  %3242 = vmatpush1.msra.mxu0 0.0
  %3243 = vmatprep.subr.mxu0 0.0
  %3244 = vmatpush1.msra.mxu0 0.0
  %3245 = vmatprep.subr.mxu0 0.0
  %3246 = vmatpush1.msra.mxu0 0.0
  %3247 = vmatprep.subr.mxu0 0.0
  %3248 = vmatpush1.msra.mxu0 0.0
  %3249 = vmatprep.subr.mxu0 0.0
  %3250 = vmatpush1.msra.mxu0 0.0
  %3251 = vmatprep.subr.mxu0 0.0
  %3252 = vmatpush1.msra.mxu0 0.0
  %3253 = vmatprep.subr.mxu0 0.0
  %3254 = vmatpush1.msra.mxu0 0.0
  %3255 = vmatprep.subr.mxu0 0.0
  %3256 = vmatpush1.msra.mxu0 0.0
  %3257 = vmatprep.subr.mxu0 0.0
  %3258 = vmatpush1.msra.mxu0 0.0
  %3259 = vmatprep.subr.mxu0 0.0
  %3260 = vmatpush1.msra.mxu0 0.0
  %3261 = vmatprep.subr.mxu0 0.0
  %3262 = vmatpush1.msra.mxu0 0.0
  %3263 = vmatprep.subr.mxu0 0.0
  %3264 = vmatpush1.msra.mxu0 0.0
  %3265 = vmatprep.subr.mxu0 0.0
  %3266 = vmatpush1.msra.mxu0 0.0
  %3267 = vmatprep.subr.mxu0 0.0
  %3268 = vmatpush1.msra.mxu0 0.0
  %3269 = vmatprep.subr.mxu0 0.0
  %3270 = vmatpush1.msra.mxu0 0.0
  %3271 = vmatprep.subr.mxu0 0.0
  %3272 = vmatpush1.msra.mxu0 0.0
  %3273 = vmatprep.subr.mxu0 0.0
  %3274 = vmatpush1.msra.mxu0 0.0
  %3275 = vmatprep.subr.mxu0 0.0
  %3276 = vmatpush1.msra.mxu0 0.0
  %3277 = vmatprep.subr.mxu0 0.0
  %3278 = vmatpush1.msra.mxu0 0.0
  %3279 = vmatprep.subr.mxu0 0.0
  %3280 = vmatpush1.msra.mxu0 0.0
  %3281 = vmatprep.subr.mxu0 0.0
  %3282 = vmatpush1.msra.mxu0 0.0
  %3283 = vmatprep.subr.mxu0 0.0
  %3284 = vmatpush1.msra.mxu0 0.0
  %3285 = vmatprep.subr.mxu0 0.0
  %3286 = vmatpush1.msra.mxu0 0.0
  %3287 = vmatprep.subr.mxu0 0.0
  %3288 = vmatpush1.msra.mxu0 0.0
  %3289 = vmatprep.subr.mxu0 0.0
  %3290 = vmatpush1.msra.mxu0 0.0
  %3291 = vmatprep.subr.mxu0 0.0
  %3292 = vmatpush1.msra.mxu0 0.0
  %3293 = vmatprep.subr.mxu0 0.0
  %3294 = vmatpush1.msra.mxu0 0.0
  %3295 = vmatprep.subr.mxu0 0.0
  %3296 = vmatpush1.msra.mxu0 0.0
  %3297 = vmatprep.mubr.f32.mxu0 0.0
  %3298 = vmatmul.mubr.f32.gmra.mrb[0].mxu0 %v3144
  %v3299 = vpop.f32.mrb[0].mxu0
  %v3300 = vadd.f32 %v3232, %v3299
  %v3301 = vpop.f32.mrb[0].mxu0
  %3302 = vmatprep.mubr.f32.mxu0 0.0
  %3303 = vmatmul.mubr.f32.gmra.mrb[0].mxu0 %v3147
  %v3304 = vpop.f32.mrb[0].mxu0
  %v3305 = vadd.f32 %v3232, %v3304
  %v3306 = vpop.f32.mrb[0].mxu0
  %3307 = vdwg.mxu0
  %s3308 = scalar_lea.vmem %s3, 640
  %v3309 = vld [vmem:[%s3308] sm:$0xff]
  %v3310 = vld [vmem:[%s3308 + $0x8] sm:$0xff]
  %v3311 = vld [vmem:[%s3308 + $0x10] sm:$0xff]
  %v3312 = vld [vmem:[%s3308 + $0x18] sm:$0xff]
  %v3313 = vlaneseq
  %v3314 = vshrl.u32 %v3313, 7
  %v3315 = vsub.s32 4, %v3314
  %v3316 = vrot.slane %v27, %v3315
  %3317 = vmatprep.subr.mxu0 0.0
  %3318 = vmatpush1.msra.mxu0 %v3309
  %3319 = vmatprep.subr.mxu0 0.0
  %3320 = vmatpush1.msra.mxu0 %v3310
  %3321 = vmatprep.subr.mxu0 0.0
  %3322 = vmatpush1.msra.mxu0 %v3311
  %3323 = vmatprep.subr.mxu0 0.0
  %3324 = vmatpush1.msra.mxu0 %v3312
  %3325 = vmatprep.subr.mxu0 0.0
  %3326 = vmatpush1.msra.mxu0 0.0
  %3327 = vmatprep.subr.mxu0 0.0
  %3328 = vmatpush1.msra.mxu0 0.0
  %3329 = vmatprep.subr.mxu0 0.0
  %3330 = vmatpush1.msra.mxu0 0.0
  %3331 = vmatprep.subr.mxu0 0.0
  %3332 = vmatpush1.msra.mxu0 0.0
  %3333 = vmatprep.subr.mxu0 0.0
  %3334 = vmatpush1.msra.mxu0 0.0
  %3335 = vmatprep.subr.mxu0 0.0
  %3336 = vmatpush1.msra.mxu0 0.0
  %3337 = vmatprep.subr.mxu0 0.0
  %3338 = vmatpush1.msra.mxu0 0.0
  %3339 = vmatprep.subr.mxu0 0.0
  %3340 = vmatpush1.msra.mxu0 0.0
  %3341 = vmatprep.subr.mxu0 0.0
  %3342 = vmatpush1.msra.mxu0 0.0
  %3343 = vmatprep.subr.mxu0 0.0
  %3344 = vmatpush1.msra.mxu0 0.0
  %3345 = vmatprep.subr.mxu0 0.0
  %3346 = vmatpush1.msra.mxu0 0.0
  %3347 = vmatprep.subr.mxu0 0.0
  %3348 = vmatpush1.msra.mxu0 0.0
  %3349 = vmatprep.subr.mxu0 0.0
  %3350 = vmatpush1.msra.mxu0 0.0
  %3351 = vmatprep.subr.mxu0 0.0
  %3352 = vmatpush1.msra.mxu0 0.0
  %3353 = vmatprep.subr.mxu0 0.0
  %3354 = vmatpush1.msra.mxu0 0.0
  %3355 = vmatprep.subr.mxu0 0.0
  %3356 = vmatpush1.msra.mxu0 0.0
  %3357 = vmatprep.subr.mxu0 0.0
  %3358 = vmatpush1.msra.mxu0 0.0
  %3359 = vmatprep.subr.mxu0 0.0
  %3360 = vmatpush1.msra.mxu0 0.0
  %3361 = vmatprep.subr.mxu0 0.0
  %3362 = vmatpush1.msra.mxu0 0.0
  %3363 = vmatprep.subr.mxu0 0.0
  %3364 = vmatpush1.msra.mxu0 0.0
  %3365 = vmatprep.subr.mxu0 0.0
  %3366 = vmatpush1.msra.mxu0 0.0
  %3367 = vmatprep.subr.mxu0 0.0
  %3368 = vmatpush1.msra.mxu0 0.0
  %3369 = vmatprep.subr.mxu0 0.0
  %3370 = vmatpush1.msra.mxu0 0.0
  %3371 = vmatprep.subr.mxu0 0.0
  %3372 = vmatpush1.msra.mxu0 0.0
  %3373 = vmatprep.subr.mxu0 0.0
  %3374 = vmatpush1.msra.mxu0 0.0
  %3375 = vmatprep.subr.mxu0 0.0
  %3376 = vmatpush1.msra.mxu0 0.0
  %3377 = vmatprep.subr.mxu0 0.0
  %3378 = vmatpush1.msra.mxu0 0.0
  %3379 = vmatprep.subr.mxu0 0.0
  %3380 = vmatpush1.msra.mxu0 0.0
  %3381 = vmatprep.mubr.f32.mxu0 0.0
  %3382 = vmatmul.mubr.f32.gmra.mrb[0].mxu0 %v3144
  %v3383 = vpop.f32.mrb[0].mxu0
  %v3384 = vadd.f32 %v3316, %v3383
  %v3385 = vpop.f32.mrb[0].mxu0
  %3386 = vmatprep.mubr.f32.mxu0 0.0
  %3387 = vmatmul.mubr.f32.gmra.mrb[0].mxu0 %v3147
  %v3388 = vpop.f32.mrb[0].mxu0
  %v3389 = vadd.f32 %v3316, %v3388
  %v3390 = vpop.f32.mrb[0].mxu0
  %3391 = vdwg.mxu0
  %s3392 = scalar_lea.vmem %s4, 32
  %v3393 = vld [vmem:[%s3392] sm:$0xff]
  %v3395 = vsel %vm328, %v3216, 0
  %v3398 = vsel %vm328, %v3300, 0
  %3400 = vmatprep.subr.mxu0 0.0
  %3401 = vmatpush1.xpose.msra.mxu0 %v3398
  %3402 = vmatprep.subr.mxu0 0.0
  %3403 = vmatpush1.xpose.msra.mxu0 0.0
  %3404 = vmatprep.subr.mxu0 0.0
  %3405 = vmatpush1.xpose.msra.mxu0 0.0
  %3406 = vmatprep.subr.mxu0 0.0
  %3407 = vmatpush1.xpose.msra.mxu0 0.0
  %3408 = vmatprep.subr.mxu0 0.0
  %3409 = vmatpush1.xpose.msra.mxu0 0.0
  %3410 = vmatprep.subr.mxu0 0.0
  %3411 = vmatpush1.xpose.msra.mxu0 0.0
  %3412 = vmatprep.subr.mxu0 0.0
  %3413 = vmatpush1.xpose.msra.mxu0 0.0
  %3414 = vmatprep.subr.mxu0 0.0
  %3415 = vmatpush1.xpose.msra.mxu0 0.0
  %3416 = vmatprep.subr.mxu0 0.0
  %3417 = vmatpush1.xpose.msra.mxu0 0.0
  %3418 = vmatprep.subr.mxu0 0.0
  %3419 = vmatpush1.xpose.msra.mxu0 0.0
  %3420 = vmatprep.subr.mxu0 0.0
  %3421 = vmatpush1.xpose.msra.mxu0 0.0
  %3422 = vmatprep.subr.mxu0 0.0
  %3423 = vmatpush1.xpose.msra.mxu0 0.0
  %3424 = vmatprep.subr.mxu0 0.0
  %3425 = vmatpush1.xpose.msra.mxu0 0.0
  %3426 = vmatprep.subr.mxu0 0.0
  %3427 = vmatpush1.xpose.msra.mxu0 0.0
  %3428 = vmatprep.subr.mxu0 0.0
  %3429 = vmatpush1.xpose.msra.mxu0 0.0
  %3430 = vmatprep.subr.mxu0 0.0
  %3431 = vmatpush1.xpose.msra.mxu0 0.0
  %3432 = vmatprep.subr.mxu0 0.0
  %3433 = vmatpush1.xpose.msra.mxu0 0.0
  %3434 = vmatprep.subr.mxu0 0.0
  %3435 = vmatpush1.xpose.msra.mxu0 0.0
  %3436 = vmatprep.subr.mxu0 0.0
  %3437 = vmatpush1.xpose.msra.mxu0 0.0
  %3438 = vmatprep.subr.mxu0 0.0
  %3439 = vmatpush1.xpose.msra.mxu0 0.0
  %3440 = vmatprep.subr.mxu0 0.0
  %3441 = vmatpush1.xpose.msra.mxu0 0.0
  %3442 = vmatprep.subr.mxu0 0.0
  %3443 = vmatpush1.xpose.msra.mxu0 0.0
  %3444 = vmatprep.subr.mxu0 0.0
  %3445 = vmatpush1.xpose.msra.mxu0 0.0
  %3446 = vmatprep.subr.mxu0 0.0
  %3447 = vmatpush1.xpose.msra.mxu0 0.0
  %3448 = vmatprep.subr.mxu0 0.0
  %3449 = vmatpush1.xpose.msra.mxu0 0.0
  %3450 = vmatprep.subr.mxu0 0.0
  %3451 = vmatpush1.xpose.msra.mxu0 0.0
  %3452 = vmatprep.subr.mxu0 0.0
  %3453 = vmatpush1.xpose.msra.mxu0 0.0
  %3454 = vmatprep.subr.mxu0 0.0
  %3455 = vmatpush1.xpose.msra.mxu0 0.0
  %3456 = vmatprep.subr.mxu0 0.0
  %3457 = vmatpush1.xpose.msra.mxu0 0.0
  %3458 = vmatprep.subr.mxu0 0.0
  %3459 = vmatpush1.xpose.msra.mxu0 0.0
  %3460 = vmatprep.subr.mxu0 0.0
  %3461 = vmatpush1.xpose.msra.mxu0 0.0
  %3462 = vmatprep.subr.mxu0 0.0
  %3463 = vmatpush1.xpose.msra.mxu0 0.0
  %3464 = vmatprep.mubr.f32.mxu0 0.0
  %3465 = vmatmul.mubr.f32.gmra.mrb[0].mxu0 %v3395
  %v3466 = vpop.f32.mrb[0].mxu0
  %v3467 = vadd.f32 0.0, %v3466
  %v3468 = vpop.f32.mrb[0].mxu0
  %3469 = vdwg.mxu0
  %v3470 = vsel %vm328, %v3467, -inf
  %3471 = vmax.xlane.f32.xlu0 %v3470
  %v3472 = vpop.xlane.xlu0 %3471
  %v3473 = vsub.f32 %v3467, %v3472
  %v3474 = vmul.f32 %v3473, 1.442695
  %v3475 = vpow.pop %v3474
  %v3476 = vsel %vm328, %v3475, 0.0
  %3477 = vadd.xlane.f32.xlu0 %v3476
  %v3478 = vpop.xlane.xlu0 %3477
  %v3479 = vrcp.pop %v3478
  %v3480 = vmul.f32 %v3475, %v3479
  %v3482 = vsel %vm328, %v3480, 0
  %3484 = vmatprep.subr.mxu0 0.0
  %3485 = vmatpush1.msra.mxu0 %v3384
  %3486 = vmatprep.subr.mxu0 0.0
  %3487 = vmatpush1.msra.mxu0 0.0
  %3488 = vmatprep.subr.mxu0 0.0
  %3489 = vmatpush1.msra.mxu0 0.0
  %3490 = vmatprep.subr.mxu0 0.0
  %3491 = vmatpush1.msra.mxu0 0.0
  %3492 = vmatprep.subr.mxu0 0.0
  %3493 = vmatpush1.msra.mxu0 0.0
  %3494 = vmatprep.subr.mxu0 0.0
  %3495 = vmatpush1.msra.mxu0 0.0
  %3496 = vmatprep.subr.mxu0 0.0
  %3497 = vmatpush1.msra.mxu0 0.0
  %3498 = vmatprep.subr.mxu0 0.0
  %3499 = vmatpush1.msra.mxu0 0.0
  %3500 = vmatprep.subr.mxu0 0.0
  %3501 = vmatpush1.msra.mxu0 0.0
  %3502 = vmatprep.subr.mxu0 0.0
  %3503 = vmatpush1.msra.mxu0 0.0
  %3504 = vmatprep.subr.mxu0 0.0
  %3505 = vmatpush1.msra.mxu0 0.0
  %3506 = vmatprep.subr.mxu0 0.0
  %3507 = vmatpush1.msra.mxu0 0.0
  %3508 = vmatprep.subr.mxu0 0.0
  %3509 = vmatpush1.msra.mxu0 0.0
  %3510 = vmatprep.subr.mxu0 0.0
  %3511 = vmatpush1.msra.mxu0 0.0
  %3512 = vmatprep.subr.mxu0 0.0
  %3513 = vmatpush1.msra.mxu0 0.0
  %3514 = vmatprep.subr.mxu0 0.0
  %3515 = vmatpush1.msra.mxu0 0.0
  %3516 = vmatprep.subr.mxu0 0.0
  %3517 = vmatpush1.msra.mxu0 0.0
  %3518 = vmatprep.subr.mxu0 0.0
  %3519 = vmatpush1.msra.mxu0 0.0
  %3520 = vmatprep.subr.mxu0 0.0
  %3521 = vmatpush1.msra.mxu0 0.0
  %3522 = vmatprep.subr.mxu0 0.0
  %3523 = vmatpush1.msra.mxu0 0.0
  %3524 = vmatprep.subr.mxu0 0.0
  %3525 = vmatpush1.msra.mxu0 0.0
  %3526 = vmatprep.subr.mxu0 0.0
  %3527 = vmatpush1.msra.mxu0 0.0
  %3528 = vmatprep.subr.mxu0 0.0
  %3529 = vmatpush1.msra.mxu0 0.0
  %3530 = vmatprep.subr.mxu0 0.0
  %3531 = vmatpush1.msra.mxu0 0.0
  %3532 = vmatprep.subr.mxu0 0.0
  %3533 = vmatpush1.msra.mxu0 0.0
  %3534 = vmatprep.subr.mxu0 0.0
  %3535 = vmatpush1.msra.mxu0 0.0
  %3536 = vmatprep.subr.mxu0 0.0
  %3537 = vmatpush1.msra.mxu0 0.0
  %3538 = vmatprep.subr.mxu0 0.0
  %3539 = vmatpush1.msra.mxu0 0.0
  %3540 = vmatprep.subr.mxu0 0.0
  %3541 = vmatpush1.msra.mxu0 0.0
  %3542 = vmatprep.subr.mxu0 0.0
  %3543 = vmatpush1.msra.mxu0 0.0
  %3544 = vmatprep.subr.mxu0 0.0
  %3545 = vmatpush1.msra.mxu0 0.0
  %3546 = vmatprep.subr.mxu0 0.0
  %3547 = vmatpush1.msra.mxu0 0.0
  %3548 = vmatprep.mubr.f32.mxu0 0.0
  %3549 = vmatmul.mubr.f32.gmra.mrb[0].mxu0 %v3482
  %v3550 = vpop.f32.mrb[0].mxu0
  %v3551 = vadd.f32 0.0, %v3550
  %v3552 = vpop.f32.mrb[0].mxu0
  %3553 = vdwg.mxu0
  %v3555 = vsel %vm328, %v3221, 0
  %v3558 = vsel %vm328, %v3305, 0
  %3560 = vmatprep.subr.mxu0 0.0
  %3561 = vmatpush1.xpose.msra.mxu0 %v3558
  %3562 = vmatprep.subr.mxu0 0.0
  %3563 = vmatpush1.xpose.msra.mxu0 0.0
  %3564 = vmatprep.subr.mxu0 0.0
  %3565 = vmatpush1.xpose.msra.mxu0 0.0
  %3566 = vmatprep.subr.mxu0 0.0
  %3567 = vmatpush1.xpose.msra.mxu0 0.0
  %3568 = vmatprep.subr.mxu0 0.0
  %3569 = vmatpush1.xpose.msra.mxu0 0.0
  %3570 = vmatprep.subr.mxu0 0.0
  %3571 = vmatpush1.xpose.msra.mxu0 0.0
  %3572 = vmatprep.subr.mxu0 0.0
  %3573 = vmatpush1.xpose.msra.mxu0 0.0
  %3574 = vmatprep.subr.mxu0 0.0
  %3575 = vmatpush1.xpose.msra.mxu0 0.0
  %3576 = vmatprep.subr.mxu0 0.0
  %3577 = vmatpush1.xpose.msra.mxu0 0.0
  %3578 = vmatprep.subr.mxu0 0.0
  %3579 = vmatpush1.xpose.msra.mxu0 0.0
  %3580 = vmatprep.subr.mxu0 0.0
  %3581 = vmatpush1.xpose.msra.mxu0 0.0
  %3582 = vmatprep.subr.mxu0 0.0
  %3583 = vmatpush1.xpose.msra.mxu0 0.0
  %3584 = vmatprep.subr.mxu0 0.0
  %3585 = vmatpush1.xpose.msra.mxu0 0.0
  %3586 = vmatprep.subr.mxu0 0.0
  %3587 = vmatpush1.xpose.msra.mxu0 0.0
  %3588 = vmatprep.subr.mxu0 0.0
  %3589 = vmatpush1.xpose.msra.mxu0 0.0
  %3590 = vmatprep.subr.mxu0 0.0
  %3591 = vmatpush1.xpose.msra.mxu0 0.0
  %3592 = vmatprep.subr.mxu0 0.0
  %3593 = vmatpush1.xpose.msra.mxu0 0.0
  %3594 = vmatprep.subr.mxu0 0.0
  %3595 = vmatpush1.xpose.msra.mxu0 0.0
  %3596 = vmatprep.subr.mxu0 0.0
  %3597 = vmatpush1.xpose.msra.mxu0 0.0
  %3598 = vmatprep.subr.mxu0 0.0
  %3599 = vmatpush1.xpose.msra.mxu0 0.0
  %3600 = vmatprep.subr.mxu0 0.0
  %3601 = vmatpush1.xpose.msra.mxu0 0.0
  %3602 = vmatprep.subr.mxu0 0.0
  %3603 = vmatpush1.xpose.msra.mxu0 0.0
  %3604 = vmatprep.subr.mxu0 0.0
  %3605 = vmatpush1.xpose.msra.mxu0 0.0
  %3606 = vmatprep.subr.mxu0 0.0
  %3607 = vmatpush1.xpose.msra.mxu0 0.0
  %3608 = vmatprep.subr.mxu0 0.0
  %3609 = vmatpush1.xpose.msra.mxu0 0.0
  %3610 = vmatprep.subr.mxu0 0.0
  %3611 = vmatpush1.xpose.msra.mxu0 0.0
  %3612 = vmatprep.subr.mxu0 0.0
  %3613 = vmatpush1.xpose.msra.mxu0 0.0
  %3614 = vmatprep.subr.mxu0 0.0
  %3615 = vmatpush1.xpose.msra.mxu0 0.0
  %3616 = vmatprep.subr.mxu0 0.0
  %3617 = vmatpush1.xpose.msra.mxu0 0.0
  %3618 = vmatprep.subr.mxu0 0.0
  %3619 = vmatpush1.xpose.msra.mxu0 0.0
  %3620 = vmatprep.subr.mxu0 0.0
  %3621 = vmatpush1.xpose.msra.mxu0 0.0
  %3622 = vmatprep.subr.mxu0 0.0
  %3623 = vmatpush1.xpose.msra.mxu0 0.0
  %3624 = vmatprep.mubr.f32.mxu0 0.0
  %3625 = vmatmul.mubr.f32.gmra.mrb[0].mxu0 %v3555
  %v3626 = vpop.f32.mrb[0].mxu0
  %v3627 = vadd.f32 0.0, %v3626
  %v3628 = vpop.f32.mrb[0].mxu0
  %3629 = vdwg.mxu0
  %v3630 = vsel %vm328, %v3627, -inf
  %3631 = vmax.xlane.f32.xlu0 %v3630
  %v3632 = vpop.xlane.xlu0 %3631
  %v3633 = vsub.f32 %v3627, %v3632
  %v3634 = vmul.f32 %v3633, 1.442695
  %v3635 = vpow.pop %v3634
  %v3636 = vsel %vm328, %v3635, 0.0
  %3637 = vadd.xlane.f32.xlu0 %v3636
  %v3638 = vpop.xlane.xlu0 %3637
  %v3639 = vrcp.pop %v3638
  %v3640 = vmul.f32 %v3635, %v3639
  %v3642 = vsel %vm328, %v3640, 0
  %3644 = vmatprep.subr.mxu0 0.0
  %3645 = vmatpush1.msra.mxu0 %v3389
  %3646 = vmatprep.subr.mxu0 0.0
  %3647 = vmatpush1.msra.mxu0 0.0
  %3648 = vmatprep.subr.mxu0 0.0
  %3649 = vmatpush1.msra.mxu0 0.0
  %3650 = vmatprep.subr.mxu0 0.0
  %3651 = vmatpush1.msra.mxu0 0.0
  %3652 = vmatprep.subr.mxu0 0.0
  %3653 = vmatpush1.msra.mxu0 0.0
  %3654 = vmatprep.subr.mxu0 0.0
  %3655 = vmatpush1.msra.mxu0 0.0
  %3656 = vmatprep.subr.mxu0 0.0
  %3657 = vmatpush1.msra.mxu0 0.0
  %3658 = vmatprep.subr.mxu0 0.0
  %3659 = vmatpush1.msra.mxu0 0.0
  %3660 = vmatprep.subr.mxu0 0.0
  %3661 = vmatpush1.msra.mxu0 0.0
  %3662 = vmatprep.subr.mxu0 0.0
  %3663 = vmatpush1.msra.mxu0 0.0
  %3664 = vmatprep.subr.mxu0 0.0
  %3665 = vmatpush1.msra.mxu0 0.0
  %3666 = vmatprep.subr.mxu0 0.0
  %3667 = vmatpush1.msra.mxu0 0.0
  %3668 = vmatprep.subr.mxu0 0.0
  %3669 = vmatpush1.msra.mxu0 0.0
  %3670 = vmatprep.subr.mxu0 0.0
  %3671 = vmatpush1.msra.mxu0 0.0
  %3672 = vmatprep.subr.mxu0 0.0
  %3673 = vmatpush1.msra.mxu0 0.0
  %3674 = vmatprep.subr.mxu0 0.0
  %3675 = vmatpush1.msra.mxu0 0.0
  %3676 = vmatprep.subr.mxu0 0.0
  %3677 = vmatpush1.msra.mxu0 0.0
  %3678 = vmatprep.subr.mxu0 0.0
  %3679 = vmatpush1.msra.mxu0 0.0
  %3680 = vmatprep.subr.mxu0 0.0
  %3681 = vmatpush1.msra.mxu0 0.0
  %3682 = vmatprep.subr.mxu0 0.0
  %3683 = vmatpush1.msra.mxu0 0.0
  %3684 = vmatprep.subr.mxu0 0.0
  %3685 = vmatpush1.msra.mxu0 0.0
  %3686 = vmatprep.subr.mxu0 0.0
  %3687 = vmatpush1.msra.mxu0 0.0
  %3688 = vmatprep.subr.mxu0 0.0
  %3689 = vmatpush1.msra.mxu0 0.0
  %3690 = vmatprep.subr.mxu0 0.0
  %3691 = vmatpush1.msra.mxu0 0.0
  %3692 = vmatprep.subr.mxu0 0.0
  %3693 = vmatpush1.msra.mxu0 0.0
  %3694 = vmatprep.subr.mxu0 0.0
  %3695 = vmatpush1.msra.mxu0 0.0
  %3696 = vmatprep.subr.mxu0 0.0
  %3697 = vmatpush1.msra.mxu0 0.0
  %3698 = vmatprep.subr.mxu0 0.0
  %3699 = vmatpush1.msra.mxu0 0.0
  %3700 = vmatprep.subr.mxu0 0.0
  %3701 = vmatpush1.msra.mxu0 0.0
  %3702 = vmatprep.subr.mxu0 0.0
  %3703 = vmatpush1.msra.mxu0 0.0
  %3704 = vmatprep.subr.mxu0 0.0
  %3705 = vmatpush1.msra.mxu0 0.0
  %3706 = vmatprep.subr.mxu0 0.0
  %3707 = vmatpush1.msra.mxu0 0.0
  %3708 = vmatprep.mubr.f32.mxu0 0.0
  %3709 = vmatmul.mubr.f32.gmra.mrb[0].mxu0 %v3642
  %v3710 = vpop.f32.mrb[0].mxu0
  %v3711 = vadd.f32 0.0, %v3710
  %v3712 = vpop.f32.mrb[0].mxu0
  %3713 = vdwg.mxu0
  %s3714 = scalar_lea.vmem %s3, 416
  %v3715 = vld [vmem:[%s3714] sm:$0xff]
  %v3716 = vld [vmem:[%s3714 + $0x8] sm:$0xff]
  %v3717 = vld [vmem:[%s3714 + $0x10] sm:$0xff]
  %v3718 = vld [vmem:[%s3714 + $0x18] sm:$0xff]
  %v3719 = vlaneseq
  %v3720 = vshrl.u32 %v3719, 7
  %v3721 = vsub.s32 5, %v3720
  %v3722 = vrot.slane %v26, %v3721
  %3723 = vmatprep.subr.mxu0 0.0
  %3724 = vmatpush1.msra.mxu0 %v3715
  %3725 = vmatprep.subr.mxu0 0.0
  %3726 = vmatpush1.msra.mxu0 %v3716
  %3727 = vmatprep.subr.mxu0 0.0
  %3728 = vmatpush1.msra.mxu0 %v3717
  %3729 = vmatprep.subr.mxu0 0.0
  %3730 = vmatpush1.msra.mxu0 %v3718
  %3731 = vmatprep.subr.mxu0 0.0
  %3732 = vmatpush1.msra.mxu0 0.0
  %3733 = vmatprep.subr.mxu0 0.0
  %3734 = vmatpush1.msra.mxu0 0.0
  %3735 = vmatprep.subr.mxu0 0.0
  %3736 = vmatpush1.msra.mxu0 0.0
  %3737 = vmatprep.subr.mxu0 0.0
  %3738 = vmatpush1.msra.mxu0 0.0
  %3739 = vmatprep.subr.mxu0 0.0
  %3740 = vmatpush1.msra.mxu0 0.0
  %3741 = vmatprep.subr.mxu0 0.0
  %3742 = vmatpush1.msra.mxu0 0.0
  %3743 = vmatprep.subr.mxu0 0.0
  %3744 = vmatpush1.msra.mxu0 0.0
  %3745 = vmatprep.subr.mxu0 0.0
  %3746 = vmatpush1.msra.mxu0 0.0
  %3747 = vmatprep.subr.mxu0 0.0
  %3748 = vmatpush1.msra.mxu0 0.0
  %3749 = vmatprep.subr.mxu0 0.0
  %3750 = vmatpush1.msra.mxu0 0.0
  %3751 = vmatprep.subr.mxu0 0.0
  %3752 = vmatpush1.msra.mxu0 0.0
  %3753 = vmatprep.subr.mxu0 0.0
  %3754 = vmatpush1.msra.mxu0 0.0
  %3755 = vmatprep.subr.mxu0 0.0
  %3756 = vmatpush1.msra.mxu0 0.0
  %3757 = vmatprep.subr.mxu0 0.0
  %3758 = vmatpush1.msra.mxu0 0.0
  %3759 = vmatprep.subr.mxu0 0.0
  %3760 = vmatpush1.msra.mxu0 0.0
  %3761 = vmatprep.subr.mxu0 0.0
  %3762 = vmatpush1.msra.mxu0 0.0
  %3763 = vmatprep.subr.mxu0 0.0
  %3764 = vmatpush1.msra.mxu0 0.0
  %3765 = vmatprep.subr.mxu0 0.0
  %3766 = vmatpush1.msra.mxu0 0.0
  %3767 = vmatprep.subr.mxu0 0.0
  %3768 = vmatpush1.msra.mxu0 0.0
  %3769 = vmatprep.subr.mxu0 0.0
  %3770 = vmatpush1.msra.mxu0 0.0
  %3771 = vmatprep.subr.mxu0 0.0
  %3772 = vmatpush1.msra.mxu0 0.0
  %3773 = vmatprep.subr.mxu0 0.0
  %3774 = vmatpush1.msra.mxu0 0.0
  %3775 = vmatprep.subr.mxu0 0.0
  %3776 = vmatpush1.msra.mxu0 0.0
  %3777 = vmatprep.subr.mxu0 0.0
  %3778 = vmatpush1.msra.mxu0 0.0
  %3779 = vmatprep.subr.mxu0 0.0
  %3780 = vmatpush1.msra.mxu0 0.0
  %3781 = vmatprep.subr.mxu0 0.0
  %3782 = vmatpush1.msra.mxu0 0.0
  %3783 = vmatprep.subr.mxu0 0.0
  %3784 = vmatpush1.msra.mxu0 0.0
  %3785 = vmatprep.subr.mxu0 0.0
  %3786 = vmatpush1.msra.mxu0 0.0
  %3787 = vmatprep.mubr.f32.mxu0 0.0
  %3788 = vmatmul.mubr.f32.gmra.mrb[0].mxu0 %v3144
  %v3789 = vpop.f32.mrb[0].mxu0
  %v3790 = vadd.f32 %v3722, %v3789
  %v3791 = vpop.f32.mrb[0].mxu0
  %3792 = vmatprep.mubr.f32.mxu0 0.0
  %3793 = vmatmul.mubr.f32.gmra.mrb[0].mxu0 %v3147
  %v3794 = vpop.f32.mrb[0].mxu0
  %v3795 = vadd.f32 %v3722, %v3794
  %v3796 = vpop.f32.mrb[0].mxu0
  %3797 = vdwg.mxu0
  %s3798 = scalar_lea.vmem %s3, 544
  %v3799 = vld [vmem:[%s3798] sm:$0xff]
  %v3800 = vld [vmem:[%s3798 + $0x8] sm:$0xff]
  %v3801 = vld [vmem:[%s3798 + $0x10] sm:$0xff]
  %v3802 = vld [vmem:[%s3798 + $0x18] sm:$0xff]
  %v3803 = vlaneseq
  %v3804 = vshrl.u32 %v3803, 7
  %v3805 = vsub.s32 1, %v3804
  %v3806 = vrot.slane %v27, %v3805
  %3807 = vmatprep.subr.mxu0 0.0
  %3808 = vmatpush1.msra.mxu0 %v3799
  %3809 = vmatprep.subr.mxu0 0.0
  %3810 = vmatpush1.msra.mxu0 %v3800
  %3811 = vmatprep.subr.mxu0 0.0
  %3812 = vmatpush1.msra.mxu0 %v3801
  %3813 = vmatprep.subr.mxu0 0.0
  %3814 = vmatpush1.msra.mxu0 %v3802
  %3815 = vmatprep.subr.mxu0 0.0
  %3816 = vmatpush1.msra.mxu0 0.0
  %3817 = vmatprep.subr.mxu0 0.0
  %3818 = vmatpush1.msra.mxu0 0.0
  %3819 = vmatprep.subr.mxu0 0.0
  %3820 = vmatpush1.msra.mxu0 0.0
  %3821 = vmatprep.subr.mxu0 0.0
  %3822 = vmatpush1.msra.mxu0 0.0
  %3823 = vmatprep.subr.mxu0 0.0
  %3824 = vmatpush1.msra.mxu0 0.0
  %3825 = vmatprep.subr.mxu0 0.0
  %3826 = vmatpush1.msra.mxu0 0.0
  %3827 = vmatprep.subr.mxu0 0.0
  %3828 = vmatpush1.msra.mxu0 0.0
  %3829 = vmatprep.subr.mxu0 0.0
  %3830 = vmatpush1.msra.mxu0 0.0
  %3831 = vmatprep.subr.mxu0 0.0
  %3832 = vmatpush1.msra.mxu0 0.0
  %3833 = vmatprep.subr.mxu0 0.0
  %3834 = vmatpush1.msra.mxu0 0.0
  %3835 = vmatprep.subr.mxu0 0.0
  %3836 = vmatpush1.msra.mxu0 0.0
  %3837 = vmatprep.subr.mxu0 0.0
  %3838 = vmatpush1.msra.mxu0 0.0
  %3839 = vmatprep.subr.mxu0 0.0
  %3840 = vmatpush1.msra.mxu0 0.0
  %3841 = vmatprep.subr.mxu0 0.0
  %3842 = vmatpush1.msra.mxu0 0.0
  %3843 = vmatprep.subr.mxu0 0.0
  %3844 = vmatpush1.msra.mxu0 0.0
  %3845 = vmatprep.subr.mxu0 0.0
  %3846 = vmatpush1.msra.mxu0 0.0
  %3847 = vmatprep.subr.mxu0 0.0
  %3848 = vmatpush1.msra.mxu0 0.0
  %3849 = vmatprep.subr.mxu0 0.0
  %3850 = vmatpush1.msra.mxu0 0.0
  %3851 = vmatprep.subr.mxu0 0.0
  %3852 = vmatpush1.msra.mxu0 0.0
  %3853 = vmatprep.subr.mxu0 0.0
  %3854 = vmatpush1.msra.mxu0 0.0
  %3855 = vmatprep.subr.mxu0 0.0
  %3856 = vmatpush1.msra.mxu0 0.0
  %3857 = vmatprep.subr.mxu0 0.0
  %3858 = vmatpush1.msra.mxu0 0.0
  %3859 = vmatprep.subr.mxu0 0.0
  %3860 = vmatpush1.msra.mxu0 0.0
  %3861 = vmatprep.subr.mxu0 0.0
  %3862 = vmatpush1.msra.mxu0 0.0
  %3863 = vmatprep.subr.mxu0 0.0
  %3864 = vmatpush1.msra.mxu0 0.0
  %3865 = vmatprep.subr.mxu0 0.0
  %3866 = vmatpush1.msra.mxu0 0.0
  %3867 = vmatprep.subr.mxu0 0.0
  %3868 = vmatpush1.msra.mxu0 0.0
  %3869 = vmatprep.subr.mxu0 0.0
  %3870 = vmatpush1.msra.mxu0 0.0
  %3871 = vmatprep.mubr.f32.mxu0 0.0
  %3872 = vmatmul.mubr.f32.gmra.mrb[0].mxu0 %v3144
  %v3873 = vpop.f32.mrb[0].mxu0
  %v3874 = vadd.f32 %v3806, %v3873
  %v3875 = vpop.f32.mrb[0].mxu0
  %3876 = vmatprep.mubr.f32.mxu0 0.0
  %3877 = vmatmul.mubr.f32.gmra.mrb[0].mxu0 %v3147
  %v3878 = vpop.f32.mrb[0].mxu0
  %v3879 = vadd.f32 %v3806, %v3878
  %v3880 = vpop.f32.mrb[0].mxu0
  %3881 = vdwg.mxu0
  %s3882 = scalar_lea.vmem %s3, 672
  %v3883 = vld [vmem:[%s3882] sm:$0xff]
  %v3884 = vld [vmem:[%s3882 + $0x8] sm:$0xff]
  %v3885 = vld [vmem:[%s3882 + $0x10] sm:$0xff]
  %v3886 = vld [vmem:[%s3882 + $0x18] sm:$0xff]
  %v3887 = vlaneseq
  %v3888 = vshrl.u32 %v3887, 7
  %v3889 = vsub.s32 5, %v3888
  %v3890 = vrot.slane %v27, %v3889
  %3891 = vmatprep.subr.mxu0 0.0
  %3892 = vmatpush1.msra.mxu0 %v3883
  %3893 = vmatprep.subr.mxu0 0.0
  %3894 = vmatpush1.msra.mxu0 %v3884
  %3895 = vmatprep.subr.mxu0 0.0
  %3896 = vmatpush1.msra.mxu0 %v3885
  %3897 = vmatprep.subr.mxu0 0.0
  %3898 = vmatpush1.msra.mxu0 %v3886
  %3899 = vmatprep.subr.mxu0 0.0
  %3900 = vmatpush1.msra.mxu0 0.0
  %3901 = vmatprep.subr.mxu0 0.0
  %3902 = vmatpush1.msra.mxu0 0.0
  %3903 = vmatprep.subr.mxu0 0.0
  %3904 = vmatpush1.msra.mxu0 0.0
  %3905 = vmatprep.subr.mxu0 0.0
  %3906 = vmatpush1.msra.mxu0 0.0
  %3907 = vmatprep.subr.mxu0 0.0
  %3908 = vmatpush1.msra.mxu0 0.0
  %3909 = vmatprep.subr.mxu0 0.0
  %3910 = vmatpush1.msra.mxu0 0.0
  %3911 = vmatprep.subr.mxu0 0.0
  %3912 = vmatpush1.msra.mxu0 0.0
  %3913 = vmatprep.subr.mxu0 0.0
  %3914 = vmatpush1.msra.mxu0 0.0
  %3915 = vmatprep.subr.mxu0 0.0
  %3916 = vmatpush1.msra.mxu0 0.0
  %3917 = vmatprep.subr.mxu0 0.0
  %3918 = vmatpush1.msra.mxu0 0.0
  %3919 = vmatprep.subr.mxu0 0.0
  %3920 = vmatpush1.msra.mxu0 0.0
  %3921 = vmatprep.subr.mxu0 0.0
  %3922 = vmatpush1.msra.mxu0 0.0
  %3923 = vmatprep.subr.mxu0 0.0
  %3924 = vmatpush1.msra.mxu0 0.0
  %3925 = vmatprep.subr.mxu0 0.0
  %3926 = vmatpush1.msra.mxu0 0.0
  %3927 = vmatprep.subr.mxu0 0.0
  %3928 = vmatpush1.msra.mxu0 0.0
  %3929 = vmatprep.subr.mxu0 0.0
  %3930 = vmatpush1.msra.mxu0 0.0
  %3931 = vmatprep.subr.mxu0 0.0
  %3932 = vmatpush1.msra.mxu0 0.0
  %3933 = vmatprep.subr.mxu0 0.0
  %3934 = vmatpush1.msra.mxu0 0.0
  %3935 = vmatprep.subr.mxu0 0.0
  %3936 = vmatpush1.msra.mxu0 0.0
  %3937 = vmatprep.subr.mxu0 0.0
  %3938 = vmatpush1.msra.mxu0 0.0
  %3939 = vmatprep.subr.mxu0 0.0
  %3940 = vmatpush1.msra.mxu0 0.0
  %3941 = vmatprep.subr.mxu0 0.0
  %3942 = vmatpush1.msra.mxu0 0.0
  %3943 = vmatprep.subr.mxu0 0.0
  %3944 = vmatpush1.msra.mxu0 0.0
  %3945 = vmatprep.subr.mxu0 0.0
  %3946 = vmatpush1.msra.mxu0 0.0
  %3947 = vmatprep.subr.mxu0 0.0
  %3948 = vmatpush1.msra.mxu0 0.0
  %3949 = vmatprep.subr.mxu0 0.0
  %3950 = vmatpush1.msra.mxu0 0.0
  %3951 = vmatprep.subr.mxu0 0.0
  %3952 = vmatpush1.msra.mxu0 0.0
  %3953 = vmatprep.subr.mxu0 0.0
  %3954 = vmatpush1.msra.mxu0 0.0
  %3955 = vmatprep.mubr.f32.mxu0 0.0
  %3956 = vmatmul.mubr.f32.gmra.mrb[0].mxu0 %v3144
  %v3957 = vpop.f32.mrb[0].mxu0
  %v3958 = vadd.f32 %v3890, %v3957
  %v3959 = vpop.f32.mrb[0].mxu0
  %3960 = vmatprep.mubr.f32.mxu0 0.0
  %3961 = vmatmul.mubr.f32.gmra.mrb[0].mxu0 %v3147
  %v3962 = vpop.f32.mrb[0].mxu0
  %v3963 = vadd.f32 %v3890, %v3962
  %v3964 = vpop.f32.mrb[0].mxu0
  %3965 = vdwg.mxu0
  %s3966 = scalar_lea.vmem %s4, 40
  %v3967 = vld [vmem:[%s3966] sm:$0xff]
  %v3969 = vsel %vm328, %v3790, 0
  %v3972 = vsel %vm328, %v3874, 0
  %3974 = vmatprep.subr.mxu0 0.0
  %3975 = vmatpush1.xpose.msra.mxu0 %v3972
  %3976 = vmatprep.subr.mxu0 0.0
  %3977 = vmatpush1.xpose.msra.mxu0 0.0
  %3978 = vmatprep.subr.mxu0 0.0
  %3979 = vmatpush1.xpose.msra.mxu0 0.0
  %3980 = vmatprep.subr.mxu0 0.0
  %3981 = vmatpush1.xpose.msra.mxu0 0.0
  %3982 = vmatprep.subr.mxu0 0.0
  %3983 = vmatpush1.xpose.msra.mxu0 0.0
  %3984 = vmatprep.subr.mxu0 0.0
  %3985 = vmatpush1.xpose.msra.mxu0 0.0
  %3986 = vmatprep.subr.mxu0 0.0
  %3987 = vmatpush1.xpose.msra.mxu0 0.0
  %3988 = vmatprep.subr.mxu0 0.0
  %3989 = vmatpush1.xpose.msra.mxu0 0.0
  %3990 = vmatprep.subr.mxu0 0.0
  %3991 = vmatpush1.xpose.msra.mxu0 0.0
  %3992 = vmatprep.subr.mxu0 0.0
  %3993 = vmatpush1.xpose.msra.mxu0 0.0
  %3994 = vmatprep.subr.mxu0 0.0
  %3995 = vmatpush1.xpose.msra.mxu0 0.0
  %3996 = vmatprep.subr.mxu0 0.0
  %3997 = vmatpush1.xpose.msra.mxu0 0.0
  %3998 = vmatprep.subr.mxu0 0.0
  %3999 = vmatpush1.xpose.msra.mxu0 0.0
  %4000 = vmatprep.subr.mxu0 0.0
  %4001 = vmatpush1.xpose.msra.mxu0 0.0
  %4002 = vmatprep.subr.mxu0 0.0
  %4003 = vmatpush1.xpose.msra.mxu0 0.0
  %4004 = vmatprep.subr.mxu0 0.0
  %4005 = vmatpush1.xpose.msra.mxu0 0.0
  %4006 = vmatprep.subr.mxu0 0.0
  %4007 = vmatpush1.xpose.msra.mxu0 0.0
  %4008 = vmatprep.subr.mxu0 0.0
  %4009 = vmatpush1.xpose.msra.mxu0 0.0
  %4010 = vmatprep.subr.mxu0 0.0
  %4011 = vmatpush1.xpose.msra.mxu0 0.0
  %4012 = vmatprep.subr.mxu0 0.0
  %4013 = vmatpush1.xpose.msra.mxu0 0.0
  %4014 = vmatprep.subr.mxu0 0.0
  %4015 = vmatpush1.xpose.msra.mxu0 0.0
  %4016 = vmatprep.subr.mxu0 0.0
  %4017 = vmatpush1.xpose.msra.mxu0 0.0
  %4018 = vmatprep.subr.mxu0 0.0
  %4019 = vmatpush1.xpose.msra.mxu0 0.0
  %4020 = vmatprep.subr.mxu0 0.0
  %4021 = vmatpush1.xpose.msra.mxu0 0.0
  %4022 = vmatprep.subr.mxu0 0.0
  %4023 = vmatpush1.xpose.msra.mxu0 0.0
  %4024 = vmatprep.subr.mxu0 0.0
  %4025 = vmatpush1.xpose.msra.mxu0 0.0
  %4026 = vmatprep.subr.mxu0 0.0
  %4027 = vmatpush1.xpose.msra.mxu0 0.0
  %4028 = vmatprep.subr.mxu0 0.0
  %4029 = vmatpush1.xpose.msra.mxu0 0.0
  %4030 = vmatprep.subr.mxu0 0.0
  %4031 = vmatpush1.xpose.msra.mxu0 0.0
  %4032 = vmatprep.subr.mxu0 0.0
  %4033 = vmatpush1.xpose.msra.mxu0 0.0
  %4034 = vmatprep.subr.mxu0 0.0
  %4035 = vmatpush1.xpose.msra.mxu0 0.0
  %4036 = vmatprep.subr.mxu0 0.0
  %4037 = vmatpush1.xpose.msra.mxu0 0.0
  %4038 = vmatprep.mubr.f32.mxu0 0.0
  %4039 = vmatmul.mubr.f32.gmra.mrb[0].mxu0 %v3969
  %v4040 = vpop.f32.mrb[0].mxu0
  %v4041 = vadd.f32 0.0, %v4040
  %v4042 = vpop.f32.mrb[0].mxu0
  %4043 = vdwg.mxu0
  %v4044 = vsel %vm328, %v4041, -inf
  %4045 = vmax.xlane.f32.xlu0 %v4044
  %v4046 = vpop.xlane.xlu0 %4045
  %v4047 = vsub.f32 %v4041, %v4046
  %v4048 = vmul.f32 %v4047, 1.442695
  %v4049 = vpow.pop %v4048
  %v4050 = vsel %vm328, %v4049, 0.0
  %4051 = vadd.xlane.f32.xlu0 %v4050
  %v4052 = vpop.xlane.xlu0 %4051
  %v4053 = vrcp.pop %v4052
  %v4054 = vmul.f32 %v4049, %v4053
  %v4056 = vsel %vm328, %v4054, 0
  %4058 = vmatprep.subr.mxu0 0.0
  %4059 = vmatpush1.msra.mxu0 %v3958
  %4060 = vmatprep.subr.mxu0 0.0
  %4061 = vmatpush1.msra.mxu0 0.0
  %4062 = vmatprep.subr.mxu0 0.0
  %4063 = vmatpush1.msra.mxu0 0.0
  %4064 = vmatprep.subr.mxu0 0.0
  %4065 = vmatpush1.msra.mxu0 0.0
  %4066 = vmatprep.subr.mxu0 0.0
  %4067 = vmatpush1.msra.mxu0 0.0
  %4068 = vmatprep.subr.mxu0 0.0
  %4069 = vmatpush1.msra.mxu0 0.0
  %4070 = vmatprep.subr.mxu0 0.0
  %4071 = vmatpush1.msra.mxu0 0.0
  %4072 = vmatprep.subr.mxu0 0.0
  %4073 = vmatpush1.msra.mxu0 0.0
  %4074 = vmatprep.subr.mxu0 0.0
  %4075 = vmatpush1.msra.mxu0 0.0
  %4076 = vmatprep.subr.mxu0 0.0
  %4077 = vmatpush1.msra.mxu0 0.0
  %4078 = vmatprep.subr.mxu0 0.0
  %4079 = vmatpush1.msra.mxu0 0.0
  %4080 = vmatprep.subr.mxu0 0.0
  %4081 = vmatpush1.msra.mxu0 0.0
  %4082 = vmatprep.subr.mxu0 0.0
  %4083 = vmatpush1.msra.mxu0 0.0
  %4084 = vmatprep.subr.mxu0 0.0
  %4085 = vmatpush1.msra.mxu0 0.0
  %4086 = vmatprep.subr.mxu0 0.0
  %4087 = vmatpush1.msra.mxu0 0.0
  %4088 = vmatprep.subr.mxu0 0.0
  %4089 = vmatpush1.msra.mxu0 0.0
  %4090 = vmatprep.subr.mxu0 0.0
  %4091 = vmatpush1.msra.mxu0 0.0
  %4092 = vmatprep.subr.mxu0 0.0
  %4093 = vmatpush1.msra.mxu0 0.0
  %4094 = vmatprep.subr.mxu0 0.0
  %4095 = vmatpush1.msra.mxu0 0.0
  %4096 = vmatprep.subr.mxu0 0.0
  %4097 = vmatpush1.msra.mxu0 0.0
  %4098 = vmatprep.subr.mxu0 0.0
  %4099 = vmatpush1.msra.mxu0 0.0
  %4100 = vmatprep.subr.mxu0 0.0
  %4101 = vmatpush1.msra.mxu0 0.0
  %4102 = vmatprep.subr.mxu0 0.0
  %4103 = vmatpush1.msra.mxu0 0.0
  %4104 = vmatprep.subr.mxu0 0.0
  %4105 = vmatpush1.msra.mxu0 0.0
  %4106 = vmatprep.subr.mxu0 0.0
  %4107 = vmatpush1.msra.mxu0 0.0
  %4108 = vmatprep.subr.mxu0 0.0
  %4109 = vmatpush1.msra.mxu0 0.0
  %4110 = vmatprep.subr.mxu0 0.0
  %4111 = vmatpush1.msra.mxu0 0.0
  %4112 = vmatprep.subr.mxu0 0.0
  %4113 = vmatpush1.msra.mxu0 0.0
  %4114 = vmatprep.subr.mxu0 0.0
  %4115 = vmatpush1.msra.mxu0 0.0
  %4116 = vmatprep.subr.mxu0 0.0
  %4117 = vmatpush1.msra.mxu0 0.0
  %4118 = vmatprep.subr.mxu0 0.0
  %4119 = vmatpush1.msra.mxu0 0.0
  %4120 = vmatprep.subr.mxu0 0.0
  %4121 = vmatpush1.msra.mxu0 0.0
  %4122 = vmatprep.mubr.f32.mxu0 0.0
  %4123 = vmatmul.mubr.f32.gmra.mrb[0].mxu0 %v4056
  %v4124 = vpop.f32.mrb[0].mxu0
  %v4125 = vadd.f32 0.0, %v4124
  %v4126 = vpop.f32.mrb[0].mxu0
  %4127 = vdwg.mxu0
  %v4129 = vsel %vm328, %v4125, 0
  %4131 = vmatprep.subr.mxu0 0.0
  %4132 = vmatpush1.msra.mxu0 %v3967
  %4133 = vmatprep.subr.mxu0 0.0
  %4134 = vmatpush1.msra.mxu0 0.0
  %4135 = vmatprep.subr.mxu0 0.0
  %4136 = vmatpush1.msra.mxu0 0.0
  %4137 = vmatprep.subr.mxu0 0.0
  %4138 = vmatpush1.msra.mxu0 0.0
  %4139 = vmatprep.subr.mxu0 0.0
  %4140 = vmatpush1.msra.mxu0 0.0
  %4141 = vmatprep.subr.mxu0 0.0
  %4142 = vmatpush1.msra.mxu0 0.0
  %4143 = vmatprep.subr.mxu0 0.0
  %4144 = vmatpush1.msra.mxu0 0.0
  %4145 = vmatprep.subr.mxu0 0.0
  %4146 = vmatpush1.msra.mxu0 0.0
  %4147 = vmatprep.subr.mxu0 0.0
  %4148 = vmatpush1.msra.mxu0 0.0
  %4149 = vmatprep.subr.mxu0 0.0
  %4150 = vmatpush1.msra.mxu0 0.0
  %4151 = vmatprep.subr.mxu0 0.0
  %4152 = vmatpush1.msra.mxu0 0.0
  %4153 = vmatprep.subr.mxu0 0.0
  %4154 = vmatpush1.msra.mxu0 0.0
  %4155 = vmatprep.subr.mxu0 0.0
  %4156 = vmatpush1.msra.mxu0 0.0
  %4157 = vmatprep.subr.mxu0 0.0
  %4158 = vmatpush1.msra.mxu0 0.0
  %4159 = vmatprep.subr.mxu0 0.0
  %4160 = vmatpush1.msra.mxu0 0.0
  %4161 = vmatprep.subr.mxu0 0.0
  %4162 = vmatpush1.msra.mxu0 0.0
  %4163 = vmatprep.subr.mxu0 0.0
  %4164 = vmatpush1.msra.mxu0 0.0
  %4165 = vmatprep.subr.mxu0 0.0
  %4166 = vmatpush1.msra.mxu0 0.0
  %4167 = vmatprep.subr.mxu0 0.0
  %4168 = vmatpush1.msra.mxu0 0.0
  %4169 = vmatprep.subr.mxu0 0.0
  %4170 = vmatpush1.msra.mxu0 0.0
  %4171 = vmatprep.subr.mxu0 0.0
  %4172 = vmatpush1.msra.mxu0 0.0
  %4173 = vmatprep.subr.mxu0 0.0
  %4174 = vmatpush1.msra.mxu0 0.0
  %4175 = vmatprep.subr.mxu0 0.0
  %4176 = vmatpush1.msra.mxu0 0.0
  %4177 = vmatprep.subr.mxu0 0.0
  %4178 = vmatpush1.msra.mxu0 0.0
  %4179 = vmatprep.subr.mxu0 0.0
  %4180 = vmatpush1.msra.mxu0 0.0
  %4181 = vmatprep.subr.mxu0 0.0
  %4182 = vmatpush1.msra.mxu0 0.0
  %4183 = vmatprep.subr.mxu0 0.0
  %4184 = vmatpush1.msra.mxu0 0.0
  %4185 = vmatprep.subr.mxu0 0.0
  %4186 = vmatpush1.msra.mxu0 0.0
  %4187 = vmatprep.subr.mxu0 0.0
  %4188 = vmatpush1.msra.mxu0 0.0
  %4189 = vmatprep.subr.mxu0 0.0
  %4190 = vmatpush1.msra.mxu0 0.0
  %4191 = vmatprep.subr.mxu0 0.0
  %4192 = vmatpush1.msra.mxu0 0.0
  %4193 = vmatprep.subr.mxu0 0.0
  %4194 = vmatpush1.msra.mxu0 0.0
  %4195 = vmatprep.mubr.f32.mxu0 0.0
  %4196 = vmatmul.mubr.f32.gmra.mrb[0].mxu0 %v4129
  %v4197 = vpop.f32.mrb[0].mxu0
  %v4198 = vadd.f32 0.0, %v4197
  %v4199 = vpop.f32.mrb[0].mxu0
  %4200 = vdwg.mxu0
  %v4202 = vsel %vm328, %v3551, 0
  %4204 = vmatprep.subr.mxu0 0.0
  %4205 = vmatpush1.msra.mxu0 %v3393
  %4206 = vmatprep.subr.mxu0 0.0
  %4207 = vmatpush1.msra.mxu0 0.0
  %4208 = vmatprep.subr.mxu0 0.0
  %4209 = vmatpush1.msra.mxu0 0.0
  %4210 = vmatprep.subr.mxu0 0.0
  %4211 = vmatpush1.msra.mxu0 0.0
  %4212 = vmatprep.subr.mxu0 0.0
  %4213 = vmatpush1.msra.mxu0 0.0
  %4214 = vmatprep.subr.mxu0 0.0
  %4215 = vmatpush1.msra.mxu0 0.0
  %4216 = vmatprep.subr.mxu0 0.0
  %4217 = vmatpush1.msra.mxu0 0.0
  %4218 = vmatprep.subr.mxu0 0.0
  %4219 = vmatpush1.msra.mxu0 0.0
  %4220 = vmatprep.subr.mxu0 0.0
  %4221 = vmatpush1.msra.mxu0 0.0
  %4222 = vmatprep.subr.mxu0 0.0
  %4223 = vmatpush1.msra.mxu0 0.0
  %4224 = vmatprep.subr.mxu0 0.0
  %4225 = vmatpush1.msra.mxu0 0.0
  %4226 = vmatprep.subr.mxu0 0.0
  %4227 = vmatpush1.msra.mxu0 0.0
  %4228 = vmatprep.subr.mxu0 0.0
  %4229 = vmatpush1.msra.mxu0 0.0
  %4230 = vmatprep.subr.mxu0 0.0
  %4231 = vmatpush1.msra.mxu0 0.0
  %4232 = vmatprep.subr.mxu0 0.0
  %4233 = vmatpush1.msra.mxu0 0.0
  %4234 = vmatprep.subr.mxu0 0.0
  %4235 = vmatpush1.msra.mxu0 0.0
  %4236 = vmatprep.subr.mxu0 0.0
  %4237 = vmatpush1.msra.mxu0 0.0
  %4238 = vmatprep.subr.mxu0 0.0
  %4239 = vmatpush1.msra.mxu0 0.0
  %4240 = vmatprep.subr.mxu0 0.0
  %4241 = vmatpush1.msra.mxu0 0.0
  %4242 = vmatprep.subr.mxu0 0.0
  %4243 = vmatpush1.msra.mxu0 0.0
  %4244 = vmatprep.subr.mxu0 0.0
  %4245 = vmatpush1.msra.mxu0 0.0
  %4246 = vmatprep.subr.mxu0 0.0
  %4247 = vmatpush1.msra.mxu0 0.0
  %4248 = vmatprep.subr.mxu0 0.0
  %4249 = vmatpush1.msra.mxu0 0.0
  %4250 = vmatprep.subr.mxu0 0.0
  %4251 = vmatpush1.msra.mxu0 0.0
  %4252 = vmatprep.subr.mxu0 0.0
  %4253 = vmatpush1.msra.mxu0 0.0
  %4254 = vmatprep.subr.mxu0 0.0
  %4255 = vmatpush1.msra.mxu0 0.0
  %4256 = vmatprep.subr.mxu0 0.0
  %4257 = vmatpush1.msra.mxu0 0.0
  %4258 = vmatprep.subr.mxu0 0.0
  %4259 = vmatpush1.msra.mxu0 0.0
  %4260 = vmatprep.subr.mxu0 0.0
  %4261 = vmatpush1.msra.mxu0 0.0
  %4262 = vmatprep.subr.mxu0 0.0
  %4263 = vmatpush1.msra.mxu0 0.0
  %4264 = vmatprep.subr.mxu0 0.0
  %4265 = vmatpush1.msra.mxu0 0.0
  %4266 = vmatprep.subr.mxu0 0.0
  %4267 = vmatpush1.msra.mxu0 0.0
  %4268 = vmatprep.mubr.f32.mxu0 0.0
  %4269 = vmatmul.mubr.f32.gmra.mrb[0].mxu0 %v4202
  %v4270 = vpop.f32.mrb[0].mxu0
  %v4271 = vadd.f32 %v4198, %v4270
  %v4272 = vpop.f32.mrb[0].mxu0
  %4273 = vdwg.mxu0
  %v4275 = vsel %vm328, %v3795, 0
  %v4278 = vsel %vm328, %v3879, 0
  %4280 = vmatprep.subr.mxu0 0.0
  %4281 = vmatpush1.xpose.msra.mxu0 %v4278
  %4282 = vmatprep.subr.mxu0 0.0
  %4283 = vmatpush1.xpose.msra.mxu0 0.0
  %4284 = vmatprep.subr.mxu0 0.0
  %4285 = vmatpush1.xpose.msra.mxu0 0.0
  %4286 = vmatprep.subr.mxu0 0.0
  %4287 = vmatpush1.xpose.msra.mxu0 0.0
  %4288 = vmatprep.subr.mxu0 0.0
  %4289 = vmatpush1.xpose.msra.mxu0 0.0
  %4290 = vmatprep.subr.mxu0 0.0
  %4291 = vmatpush1.xpose.msra.mxu0 0.0
  %4292 = vmatprep.subr.mxu0 0.0
  %4293 = vmatpush1.xpose.msra.mxu0 0.0
  %4294 = vmatprep.subr.mxu0 0.0
  %4295 = vmatpush1.xpose.msra.mxu0 0.0
  %4296 = vmatprep.subr.mxu0 0.0
  %4297 = vmatpush1.xpose.msra.mxu0 0.0
  %4298 = vmatprep.subr.mxu0 0.0
  %4299 = vmatpush1.xpose.msra.mxu0 0.0
  %4300 = vmatprep.subr.mxu0 0.0
  %4301 = vmatpush1.xpose.msra.mxu0 0.0
  %4302 = vmatprep.subr.mxu0 0.0
  %4303 = vmatpush1.xpose.msra.mxu0 0.0
  %4304 = vmatprep.subr.mxu0 0.0
  %4305 = vmatpush1.xpose.msra.mxu0 0.0
  %4306 = vmatprep.subr.mxu0 0.0
  %4307 = vmatpush1.xpose.msra.mxu0 0.0
  %4308 = vmatprep.subr.mxu0 0.0
  %4309 = vmatpush1.xpose.msra.mxu0 0.0
  %4310 = vmatprep.subr.mxu0 0.0
  %4311 = vmatpush1.xpose.msra.mxu0 0.0
  %4312 = vmatprep.subr.mxu0 0.0
  %4313 = vmatpush1.xpose.msra.mxu0 0.0
  %4314 = vmatprep.subr.mxu0 0.0
  %4315 = vmatpush1.xpose.msra.mxu0 0.0
  %4316 = vmatprep.subr.mxu0 0.0
  %4317 = vmatpush1.xpose.msra.mxu0 0.0
  %4318 = vmatprep.subr.mxu0 0.0
  %4319 = vmatpush1.xpose.msra.mxu0 0.0
  %4320 = vmatprep.subr.mxu0 0.0
  %4321 = vmatpush1.xpose.msra.mxu0 0.0
  %4322 = vmatprep.subr.mxu0 0.0
  %4323 = vmatpush1.xpose.msra.mxu0 0.0
  %4324 = vmatprep.subr.mxu0 0.0
  %4325 = vmatpush1.xpose.msra.mxu0 0.0
  %4326 = vmatprep.subr.mxu0 0.0
  %4327 = vmatpush1.xpose.msra.mxu0 0.0
  %4328 = vmatprep.subr.mxu0 0.0
  %4329 = vmatpush1.xpose.msra.mxu0 0.0
  %4330 = vmatprep.subr.mxu0 0.0
  %4331 = vmatpush1.xpose.msra.mxu0 0.0
  %4332 = vmatprep.subr.mxu0 0.0
  %4333 = vmatpush1.xpose.msra.mxu0 0.0
  %4334 = vmatprep.subr.mxu0 0.0
  %4335 = vmatpush1.xpose.msra.mxu0 0.0
  %4336 = vmatprep.subr.mxu0 0.0
  %4337 = vmatpush1.xpose.msra.mxu0 0.0
  %4338 = vmatprep.subr.mxu0 0.0
  %4339 = vmatpush1.xpose.msra.mxu0 0.0
  %4340 = vmatprep.subr.mxu0 0.0
  %4341 = vmatpush1.xpose.msra.mxu0 0.0
  %4342 = vmatprep.subr.mxu0 0.0
  %4343 = vmatpush1.xpose.msra.mxu0 0.0
  %4344 = vmatprep.mubr.f32.mxu0 0.0
  %4345 = vmatmul.mubr.f32.gmra.mrb[0].mxu0 %v4275
  %v4346 = vpop.f32.mrb[0].mxu0
  %v4347 = vadd.f32 0.0, %v4346
  %v4348 = vpop.f32.mrb[0].mxu0
  %4349 = vdwg.mxu0
  %v4350 = vsel %vm328, %v4347, -inf
  %4351 = vmax.xlane.f32.xlu0 %v4350
  %v4352 = vpop.xlane.xlu0 %4351
  %v4353 = vsub.f32 %v4347, %v4352
  %v4354 = vmul.f32 %v4353, 1.442695
  %v4355 = vpow.pop %v4354
  %v4356 = vsel %vm328, %v4355, 0.0
  %4357 = vadd.xlane.f32.xlu0 %v4356
  %v4358 = vpop.xlane.xlu0 %4357
  %v4359 = vrcp.pop %v4358
  %v4360 = vmul.f32 %v4355, %v4359
  %v4362 = vsel %vm328, %v4360, 0
  %4364 = vmatprep.subr.mxu0 0.0
  %4365 = vmatpush1.msra.mxu0 %v3963
  %4366 = vmatprep.subr.mxu0 0.0
  %4367 = vmatpush1.msra.mxu0 0.0
  %4368 = vmatprep.subr.mxu0 0.0
  %4369 = vmatpush1.msra.mxu0 0.0
  %4370 = vmatprep.subr.mxu0 0.0
  %4371 = vmatpush1.msra.mxu0 0.0
  %4372 = vmatprep.subr.mxu0 0.0
  %4373 = vmatpush1.msra.mxu0 0.0
  %4374 = vmatprep.subr.mxu0 0.0
  %4375 = vmatpush1.msra.mxu0 0.0
  %4376 = vmatprep.subr.mxu0 0.0
  %4377 = vmatpush1.msra.mxu0 0.0
  %4378 = vmatprep.subr.mxu0 0.0
  %4379 = vmatpush1.msra.mxu0 0.0
  %4380 = vmatprep.subr.mxu0 0.0
  %4381 = vmatpush1.msra.mxu0 0.0
  %4382 = vmatprep.subr.mxu0 0.0
  %4383 = vmatpush1.msra.mxu0 0.0
  %4384 = vmatprep.subr.mxu0 0.0
  %4385 = vmatpush1.msra.mxu0 0.0
  %4386 = vmatprep.subr.mxu0 0.0
  %4387 = vmatpush1.msra.mxu0 0.0
  %4388 = vmatprep.subr.mxu0 0.0
  %4389 = vmatpush1.msra.mxu0 0.0
  %4390 = vmatprep.subr.mxu0 0.0
  %4391 = vmatpush1.msra.mxu0 0.0
  %4392 = vmatprep.subr.mxu0 0.0
  %4393 = vmatpush1.msra.mxu0 0.0
  %4394 = vmatprep.subr.mxu0 0.0
  %4395 = vmatpush1.msra.mxu0 0.0
  %4396 = vmatprep.subr.mxu0 0.0
  %4397 = vmatpush1.msra.mxu0 0.0
  %4398 = vmatprep.subr.mxu0 0.0
  %4399 = vmatpush1.msra.mxu0 0.0
  %4400 = vmatprep.subr.mxu0 0.0
  %4401 = vmatpush1.msra.mxu0 0.0
  %4402 = vmatprep.subr.mxu0 0.0
  %4403 = vmatpush1.msra.mxu0 0.0
  %4404 = vmatprep.subr.mxu0 0.0
  %4405 = vmatpush1.msra.mxu0 0.0
  %4406 = vmatprep.subr.mxu0 0.0
  %4407 = vmatpush1.msra.mxu0 0.0
  %4408 = vmatprep.subr.mxu0 0.0
  %4409 = vmatpush1.msra.mxu0 0.0
  %4410 = vmatprep.subr.mxu0 0.0
  %4411 = vmatpush1.msra.mxu0 0.0
  %4412 = vmatprep.subr.mxu0 0.0
  %4413 = vmatpush1.msra.mxu0 0.0
  %4414 = vmatprep.subr.mxu0 0.0
  %4415 = vmatpush1.msra.mxu0 0.0
  %4416 = vmatprep.subr.mxu0 0.0
  %4417 = vmatpush1.msra.mxu0 0.0
  %4418 = vmatprep.subr.mxu0 0.0
  %4419 = vmatpush1.msra.mxu0 0.0
  %4420 = vmatprep.subr.mxu0 0.0
  %4421 = vmatpush1.msra.mxu0 0.0
  %4422 = vmatprep.subr.mxu0 0.0
  %4423 = vmatpush1.msra.mxu0 0.0
  %4424 = vmatprep.subr.mxu0 0.0
  %4425 = vmatpush1.msra.mxu0 0.0
  %4426 = vmatprep.subr.mxu0 0.0
  %4427 = vmatpush1.msra.mxu0 0.0
  %4428 = vmatprep.mubr.f32.mxu0 0.0
  %4429 = vmatmul.mubr.f32.gmra.mrb[0].mxu0 %v4362
  %v4430 = vpop.f32.mrb[0].mxu0
  %v4431 = vadd.f32 0.0, %v4430
  %v4432 = vpop.f32.mrb[0].mxu0
  %4433 = vdwg.mxu0
  %v4435 = vsel %vm328, %v4431, 0
  %4437 = vmatprep.subr.mxu0 0.0
  %4438 = vmatpush1.msra.mxu0 %v3967
  %4439 = vmatprep.subr.mxu0 0.0
  %4440 = vmatpush1.msra.mxu0 0.0
  %4441 = vmatprep.subr.mxu0 0.0
  %4442 = vmatpush1.msra.mxu0 0.0
  %4443 = vmatprep.subr.mxu0 0.0
  %4444 = vmatpush1.msra.mxu0 0.0
  %4445 = vmatprep.subr.mxu0 0.0
  %4446 = vmatpush1.msra.mxu0 0.0
  %4447 = vmatprep.subr.mxu0 0.0
  %4448 = vmatpush1.msra.mxu0 0.0
  %4449 = vmatprep.subr.mxu0 0.0
  %4450 = vmatpush1.msra.mxu0 0.0
  %4451 = vmatprep.subr.mxu0 0.0
  %4452 = vmatpush1.msra.mxu0 0.0
  %4453 = vmatprep.subr.mxu0 0.0
  %4454 = vmatpush1.msra.mxu0 0.0
  %4455 = vmatprep.subr.mxu0 0.0
  %4456 = vmatpush1.msra.mxu0 0.0
  %4457 = vmatprep.subr.mxu0 0.0
  %4458 = vmatpush1.msra.mxu0 0.0
  %4459 = vmatprep.subr.mxu0 0.0
  %4460 = vmatpush1.msra.mxu0 0.0
  %4461 = vmatprep.subr.mxu0 0.0
  %4462 = vmatpush1.msra.mxu0 0.0
  %4463 = vmatprep.subr.mxu0 0.0
  %4464 = vmatpush1.msra.mxu0 0.0
  %4465 = vmatprep.subr.mxu0 0.0
  %4466 = vmatpush1.msra.mxu0 0.0
  %4467 = vmatprep.subr.mxu0 0.0
  %4468 = vmatpush1.msra.mxu0 0.0
  %4469 = vmatprep.subr.mxu0 0.0
  %4470 = vmatpush1.msra.mxu0 0.0
  %4471 = vmatprep.subr.mxu0 0.0
  %4472 = vmatpush1.msra.mxu0 0.0
  %4473 = vmatprep.subr.mxu0 0.0
  %4474 = vmatpush1.msra.mxu0 0.0
  %4475 = vmatprep.subr.mxu0 0.0
  %4476 = vmatpush1.msra.mxu0 0.0
  %4477 = vmatprep.subr.mxu0 0.0
  %4478 = vmatpush1.msra.mxu0 0.0
  %4479 = vmatprep.subr.mxu0 0.0
  %4480 = vmatpush1.msra.mxu0 0.0
  %4481 = vmatprep.subr.mxu0 0.0
  %4482 = vmatpush1.msra.mxu0 0.0
  %4483 = vmatprep.subr.mxu0 0.0
  %4484 = vmatpush1.msra.mxu0 0.0
  %4485 = vmatprep.subr.mxu0 0.0
  %4486 = vmatpush1.msra.mxu0 0.0
  %4487 = vmatprep.subr.mxu0 0.0
  %4488 = vmatpush1.msra.mxu0 0.0
  %4489 = vmatprep.subr.mxu0 0.0
  %4490 = vmatpush1.msra.mxu0 0.0
  %4491 = vmatprep.subr.mxu0 0.0
  %4492 = vmatpush1.msra.mxu0 0.0
  %4493 = vmatprep.subr.mxu0 0.0
  %4494 = vmatpush1.msra.mxu0 0.0
  %4495 = vmatprep.subr.mxu0 0.0
  %4496 = vmatpush1.msra.mxu0 0.0
  %4497 = vmatprep.subr.mxu0 0.0
  %4498 = vmatpush1.msra.mxu0 0.0
  %4499 = vmatprep.subr.mxu0 0.0
  %4500 = vmatpush1.msra.mxu0 0.0
  %4501 = vmatprep.mubr.f32.mxu0 0.0
  %4502 = vmatmul.mubr.f32.gmra.mrb[0].mxu0 %v4435
  %v4503 = vpop.f32.mrb[0].mxu0
  %v4504 = vadd.f32 0.0, %v4503
  %v4505 = vpop.f32.mrb[0].mxu0
  %4506 = vdwg.mxu0
  %v4508 = vsel %vm328, %v3711, 0
  %4510 = vmatprep.subr.mxu0 0.0
  %4511 = vmatpush1.msra.mxu0 %v3393
  %4512 = vmatprep.subr.mxu0 0.0
  %4513 = vmatpush1.msra.mxu0 0.0
  %4514 = vmatprep.subr.mxu0 0.0
  %4515 = vmatpush1.msra.mxu0 0.0
  %4516 = vmatprep.subr.mxu0 0.0
  %4517 = vmatpush1.msra.mxu0 0.0
  %4518 = vmatprep.subr.mxu0 0.0
  %4519 = vmatpush1.msra.mxu0 0.0
  %4520 = vmatprep.subr.mxu0 0.0
  %4521 = vmatpush1.msra.mxu0 0.0
  %4522 = vmatprep.subr.mxu0 0.0
  %4523 = vmatpush1.msra.mxu0 0.0
  %4524 = vmatprep.subr.mxu0 0.0
  %4525 = vmatpush1.msra.mxu0 0.0
  %4526 = vmatprep.subr.mxu0 0.0
  %4527 = vmatpush1.msra.mxu0 0.0
  %4528 = vmatprep.subr.mxu0 0.0
  %4529 = vmatpush1.msra.mxu0 0.0
  %4530 = vmatprep.subr.mxu0 0.0
  %4531 = vmatpush1.msra.mxu0 0.0
  %4532 = vmatprep.subr.mxu0 0.0
  %4533 = vmatpush1.msra.mxu0 0.0
  %4534 = vmatprep.subr.mxu0 0.0
  %4535 = vmatpush1.msra.mxu0 0.0
  %4536 = vmatprep.subr.mxu0 0.0
  %4537 = vmatpush1.msra.mxu0 0.0
  %4538 = vmatprep.subr.mxu0 0.0
  %4539 = vmatpush1.msra.mxu0 0.0
  %4540 = vmatprep.subr.mxu0 0.0
  %4541 = vmatpush1.msra.mxu0 0.0
  %4542 = vmatprep.subr.mxu0 0.0
  %4543 = vmatpush1.msra.mxu0 0.0
  %4544 = vmatprep.subr.mxu0 0.0
  %4545 = vmatpush1.msra.mxu0 0.0
  %4546 = vmatprep.subr.mxu0 0.0
  %4547 = vmatpush1.msra.mxu0 0.0
  %4548 = vmatprep.subr.mxu0 0.0
  %4549 = vmatpush1.msra.mxu0 0.0
  %4550 = vmatprep.subr.mxu0 0.0
  %4551 = vmatpush1.msra.mxu0 0.0
  %4552 = vmatprep.subr.mxu0 0.0
  %4553 = vmatpush1.msra.mxu0 0.0
  %4554 = vmatprep.subr.mxu0 0.0
  %4555 = vmatpush1.msra.mxu0 0.0
  %4556 = vmatprep.subr.mxu0 0.0
  %4557 = vmatpush1.msra.mxu0 0.0
  %4558 = vmatprep.subr.mxu0 0.0
  %4559 = vmatpush1.msra.mxu0 0.0
  %4560 = vmatprep.subr.mxu0 0.0
  %4561 = vmatpush1.msra.mxu0 0.0
  %4562 = vmatprep.subr.mxu0 0.0
  %4563 = vmatpush1.msra.mxu0 0.0
  %4564 = vmatprep.subr.mxu0 0.0
  %4565 = vmatpush1.msra.mxu0 0.0
  %4566 = vmatprep.subr.mxu0 0.0
  %4567 = vmatpush1.msra.mxu0 0.0
  %4568 = vmatprep.subr.mxu0 0.0
  %4569 = vmatpush1.msra.mxu0 0.0
  %4570 = vmatprep.subr.mxu0 0.0
  %4571 = vmatpush1.msra.mxu0 0.0
  %4572 = vmatprep.subr.mxu0 0.0
  %4573 = vmatpush1.msra.mxu0 0.0
  %4574 = vmatprep.mubr.f32.mxu0 0.0
  %4575 = vmatmul.mubr.f32.gmra.mrb[0].mxu0 %v4508
  %v4576 = vpop.f32.mrb[0].mxu0
  %v4577 = vadd.f32 %v4504, %v4576
  %v4578 = vpop.f32.mrb[0].mxu0
  %4579 = vdwg.mxu0
  %s4580 = scalar_lea.vmem %s3, 448
  %v4581 = vld [vmem:[%s4580] sm:$0xff]
  %v4582 = vld [vmem:[%s4580 + $0x8] sm:$0xff]
  %v4583 = vld [vmem:[%s4580 + $0x10] sm:$0xff]
  %v4584 = vld [vmem:[%s4580 + $0x18] sm:$0xff]
  %v4585 = vlaneseq
  %v4586 = vshrl.u32 %v4585, 7
  %v4587 = vsub.s32 6, %v4586
  %v4588 = vrot.slane %v26, %v4587
  %4589 = vmatprep.subr.mxu0 0.0
  %4590 = vmatpush1.msra.mxu0 %v4581
  %4591 = vmatprep.subr.mxu0 0.0
  %4592 = vmatpush1.msra.mxu0 %v4582
  %4593 = vmatprep.subr.mxu0 0.0
  %4594 = vmatpush1.msra.mxu0 %v4583
  %4595 = vmatprep.subr.mxu0 0.0
  %4596 = vmatpush1.msra.mxu0 %v4584
  %4597 = vmatprep.subr.mxu0 0.0
  %4598 = vmatpush1.msra.mxu0 0.0
  %4599 = vmatprep.subr.mxu0 0.0
  %4600 = vmatpush1.msra.mxu0 0.0
  %4601 = vmatprep.subr.mxu0 0.0
  %4602 = vmatpush1.msra.mxu0 0.0
  %4603 = vmatprep.subr.mxu0 0.0
  %4604 = vmatpush1.msra.mxu0 0.0
  %4605 = vmatprep.subr.mxu0 0.0
  %4606 = vmatpush1.msra.mxu0 0.0
  %4607 = vmatprep.subr.mxu0 0.0
  %4608 = vmatpush1.msra.mxu0 0.0
  %4609 = vmatprep.subr.mxu0 0.0
  %4610 = vmatpush1.msra.mxu0 0.0
  %4611 = vmatprep.subr.mxu0 0.0
  %4612 = vmatpush1.msra.mxu0 0.0
  %4613 = vmatprep.subr.mxu0 0.0
  %4614 = vmatpush1.msra.mxu0 0.0
  %4615 = vmatprep.subr.mxu0 0.0
  %4616 = vmatpush1.msra.mxu0 0.0
  %4617 = vmatprep.subr.mxu0 0.0
  %4618 = vmatpush1.msra.mxu0 0.0
  %4619 = vmatprep.subr.mxu0 0.0
  %4620 = vmatpush1.msra.mxu0 0.0
  %4621 = vmatprep.subr.mxu0 0.0
  %4622 = vmatpush1.msra.mxu0 0.0
  %4623 = vmatprep.subr.mxu0 0.0
  %4624 = vmatpush1.msra.mxu0 0.0
  %4625 = vmatprep.subr.mxu0 0.0
  %4626 = vmatpush1.msra.mxu0 0.0
  %4627 = vmatprep.subr.mxu0 0.0
  %4628 = vmatpush1.msra.mxu0 0.0
  %4629 = vmatprep.subr.mxu0 0.0
  %4630 = vmatpush1.msra.mxu0 0.0
  %4631 = vmatprep.subr.mxu0 0.0
  %4632 = vmatpush1.msra.mxu0 0.0
  %4633 = vmatprep.subr.mxu0 0.0
  %4634 = vmatpush1.msra.mxu0 0.0
  %4635 = vmatprep.subr.mxu0 0.0
  %4636 = vmatpush1.msra.mxu0 0.0
  %4637 = vmatprep.subr.mxu0 0.0
  %4638 = vmatpush1.msra.mxu0 0.0
  %4639 = vmatprep.subr.mxu0 0.0
  %4640 = vmatpush1.msra.mxu0 0.0
  %4641 = vmatprep.subr.mxu0 0.0
  %4642 = vmatpush1.msra.mxu0 0.0
  %4643 = vmatprep.subr.mxu0 0.0
  %4644 = vmatpush1.msra.mxu0 0.0
  %4645 = vmatprep.subr.mxu0 0.0
  %4646 = vmatpush1.msra.mxu0 0.0
  %4647 = vmatprep.subr.mxu0 0.0
  %4648 = vmatpush1.msra.mxu0 0.0
  %4649 = vmatprep.subr.mxu0 0.0
  %4650 = vmatpush1.msra.mxu0 0.0
  %4651 = vmatprep.subr.mxu0 0.0
  %4652 = vmatpush1.msra.mxu0 0.0
  %4653 = vmatprep.mubr.f32.mxu0 0.0
  %4654 = vmatmul.mubr.f32.gmra.mrb[0].mxu0 %v3144
  %v4655 = vpop.f32.mrb[0].mxu0
  %v4656 = vadd.f32 %v4588, %v4655
  %v4657 = vpop.f32.mrb[0].mxu0
  %4658 = vmatprep.mubr.f32.mxu0 0.0
  %4659 = vmatmul.mubr.f32.gmra.mrb[0].mxu0 %v3147
  %v4660 = vpop.f32.mrb[0].mxu0
  %v4661 = vadd.f32 %v4588, %v4660
  %v4662 = vpop.f32.mrb[0].mxu0
  %4663 = vdwg.mxu0
  %s4664 = scalar_lea.vmem %s3, 576
  %v4665 = vld [vmem:[%s4664] sm:$0xff]
  %v4666 = vld [vmem:[%s4664 + $0x8] sm:$0xff]
  %v4667 = vld [vmem:[%s4664 + $0x10] sm:$0xff]
  %v4668 = vld [vmem:[%s4664 + $0x18] sm:$0xff]
  %v4669 = vlaneseq
  %v4670 = vshrl.u32 %v4669, 7
  %v4671 = vsub.s32 2, %v4670
  %v4672 = vrot.slane %v27, %v4671
  %4673 = vmatprep.subr.mxu0 0.0
  %4674 = vmatpush1.msra.mxu0 %v4665
  %4675 = vmatprep.subr.mxu0 0.0
  %4676 = vmatpush1.msra.mxu0 %v4666
  %4677 = vmatprep.subr.mxu0 0.0
  %4678 = vmatpush1.msra.mxu0 %v4667
  %4679 = vmatprep.subr.mxu0 0.0
  %4680 = vmatpush1.msra.mxu0 %v4668
  %4681 = vmatprep.subr.mxu0 0.0
  %4682 = vmatpush1.msra.mxu0 0.0
  %4683 = vmatprep.subr.mxu0 0.0
  %4684 = vmatpush1.msra.mxu0 0.0
  %4685 = vmatprep.subr.mxu0 0.0
  %4686 = vmatpush1.msra.mxu0 0.0
  %4687 = vmatprep.subr.mxu0 0.0
  %4688 = vmatpush1.msra.mxu0 0.0
  %4689 = vmatprep.subr.mxu0 0.0
  %4690 = vmatpush1.msra.mxu0 0.0
  %4691 = vmatprep.subr.mxu0 0.0
  %4692 = vmatpush1.msra.mxu0 0.0
  %4693 = vmatprep.subr.mxu0 0.0
  %4694 = vmatpush1.msra.mxu0 0.0
  %4695 = vmatprep.subr.mxu0 0.0
  %4696 = vmatpush1.msra.mxu0 0.0
  %4697 = vmatprep.subr.mxu0 0.0
  %4698 = vmatpush1.msra.mxu0 0.0
  %4699 = vmatprep.subr.mxu0 0.0
  %4700 = vmatpush1.msra.mxu0 0.0
  %4701 = vmatprep.subr.mxu0 0.0
  %4702 = vmatpush1.msra.mxu0 0.0
  %4703 = vmatprep.subr.mxu0 0.0
  %4704 = vmatpush1.msra.mxu0 0.0
  %4705 = vmatprep.subr.mxu0 0.0
  %4706 = vmatpush1.msra.mxu0 0.0
  %4707 = vmatprep.subr.mxu0 0.0
  %4708 = vmatpush1.msra.mxu0 0.0
  %4709 = vmatprep.subr.mxu0 0.0
  %4710 = vmatpush1.msra.mxu0 0.0
  %4711 = vmatprep.subr.mxu0 0.0
  %4712 = vmatpush1.msra.mxu0 0.0
  %4713 = vmatprep.subr.mxu0 0.0
  %4714 = vmatpush1.msra.mxu0 0.0
  %4715 = vmatprep.subr.mxu0 0.0
  %4716 = vmatpush1.msra.mxu0 0.0
  %4717 = vmatprep.subr.mxu0 0.0
  %4718 = vmatpush1.msra.mxu0 0.0
  %4719 = vmatprep.subr.mxu0 0.0
  %4720 = vmatpush1.msra.mxu0 0.0
  %4721 = vmatprep.subr.mxu0 0.0
  %4722 = vmatpush1.msra.mxu0 0.0
  %4723 = vmatprep.subr.mxu0 0.0
  %4724 = vmatpush1.msra.mxu0 0.0
  %4725 = vmatprep.subr.mxu0 0.0
  %4726 = vmatpush1.msra.mxu0 0.0
  %4727 = vmatprep.subr.mxu0 0.0
  %4728 = vmatpush1.msra.mxu0 0.0
  %4729 = vmatprep.subr.mxu0 0.0
  %4730 = vmatpush1.msra.mxu0 0.0
  %4731 = vmatprep.subr.mxu0 0.0
  %4732 = vmatpush1.msra.mxu0 0.0
  %4733 = vmatprep.subr.mxu0 0.0
  %4734 = vmatpush1.msra.mxu0 0.0
  %4735 = vmatprep.subr.mxu0 0.0
  %4736 = vmatpush1.msra.mxu0 0.0
  %4737 = vmatprep.mubr.f32.mxu0 0.0
  %4738 = vmatmul.mubr.f32.gmra.mrb[0].mxu0 %v3144
  %v4739 = vpop.f32.mrb[0].mxu0
  %v4740 = vadd.f32 %v4672, %v4739
  %v4741 = vpop.f32.mrb[0].mxu0
  %4742 = vmatprep.mubr.f32.mxu0 0.0
  %4743 = vmatmul.mubr.f32.gmra.mrb[0].mxu0 %v3147
  %v4744 = vpop.f32.mrb[0].mxu0
  %v4745 = vadd.f32 %v4672, %v4744
  %v4746 = vpop.f32.mrb[0].mxu0
  %4747 = vdwg.mxu0
  %s4748 = scalar_lea.vmem %s3, 704
  %v4749 = vld [vmem:[%s4748] sm:$0xff]
  %v4750 = vld [vmem:[%s4748 + $0x8] sm:$0xff]
  %v4751 = vld [vmem:[%s4748 + $0x10] sm:$0xff]
  %v4752 = vld [vmem:[%s4748 + $0x18] sm:$0xff]
  %v4753 = vlaneseq
  %v4754 = vshrl.u32 %v4753, 7
  %v4755 = vsub.s32 6, %v4754
  %v4756 = vrot.slane %v27, %v4755
  %4757 = vmatprep.subr.mxu0 0.0
  %4758 = vmatpush1.msra.mxu0 %v4749
  %4759 = vmatprep.subr.mxu0 0.0
  %4760 = vmatpush1.msra.mxu0 %v4750
  %4761 = vmatprep.subr.mxu0 0.0
  %4762 = vmatpush1.msra.mxu0 %v4751
  %4763 = vmatprep.subr.mxu0 0.0
  %4764 = vmatpush1.msra.mxu0 %v4752
  %4765 = vmatprep.subr.mxu0 0.0
  %4766 = vmatpush1.msra.mxu0 0.0
  %4767 = vmatprep.subr.mxu0 0.0
  %4768 = vmatpush1.msra.mxu0 0.0
  %4769 = vmatprep.subr.mxu0 0.0
  %4770 = vmatpush1.msra.mxu0 0.0
  %4771 = vmatprep.subr.mxu0 0.0
  %4772 = vmatpush1.msra.mxu0 0.0
  %4773 = vmatprep.subr.mxu0 0.0
  %4774 = vmatpush1.msra.mxu0 0.0
  %4775 = vmatprep.subr.mxu0 0.0
  %4776 = vmatpush1.msra.mxu0 0.0
  %4777 = vmatprep.subr.mxu0 0.0
  %4778 = vmatpush1.msra.mxu0 0.0
  %4779 = vmatprep.subr.mxu0 0.0
  %4780 = vmatpush1.msra.mxu0 0.0
  %4781 = vmatprep.subr.mxu0 0.0
  %4782 = vmatpush1.msra.mxu0 0.0
  %4783 = vmatprep.subr.mxu0 0.0
  %4784 = vmatpush1.msra.mxu0 0.0
  %4785 = vmatprep.subr.mxu0 0.0
  %4786 = vmatpush1.msra.mxu0 0.0
  %4787 = vmatprep.subr.mxu0 0.0
  %4788 = vmatpush1.msra.mxu0 0.0
  %4789 = vmatprep.subr.mxu0 0.0
  %4790 = vmatpush1.msra.mxu0 0.0
  %4791 = vmatprep.subr.mxu0 0.0
  %4792 = vmatpush1.msra.mxu0 0.0
  %4793 = vmatprep.subr.mxu0 0.0
  %4794 = vmatpush1.msra.mxu0 0.0
  %4795 = vmatprep.subr.mxu0 0.0
  %4796 = vmatpush1.msra.mxu0 0.0
  %4797 = vmatprep.subr.mxu0 0.0
  %4798 = vmatpush1.msra.mxu0 0.0
  %4799 = vmatprep.subr.mxu0 0.0
  %4800 = vmatpush1.msra.mxu0 0.0
  %4801 = vmatprep.subr.mxu0 0.0
  %4802 = vmatpush1.msra.mxu0 0.0
  %4803 = vmatprep.subr.mxu0 0.0
  %4804 = vmatpush1.msra.mxu0 0.0
  %4805 = vmatprep.subr.mxu0 0.0
  %4806 = vmatpush1.msra.mxu0 0.0
  %4807 = vmatprep.subr.mxu0 0.0
  %4808 = vmatpush1.msra.mxu0 0.0
  %4809 = vmatprep.subr.mxu0 0.0
  %4810 = vmatpush1.msra.mxu0 0.0
  %4811 = vmatprep.subr.mxu0 0.0
  %4812 = vmatpush1.msra.mxu0 0.0
  %4813 = vmatprep.subr.mxu0 0.0
  %4814 = vmatpush1.msra.mxu0 0.0
  %4815 = vmatprep.subr.mxu0 0.0
  %4816 = vmatpush1.msra.mxu0 0.0
  %4817 = vmatprep.subr.mxu0 0.0
  %4818 = vmatpush1.msra.mxu0 0.0
  %4819 = vmatprep.subr.mxu0 0.0
  %4820 = vmatpush1.msra.mxu0 0.0
  %4821 = vmatprep.mubr.f32.mxu0 0.0
  %4822 = vmatmul.mubr.f32.gmra.mrb[0].mxu0 %v3144
  %v4823 = vpop.f32.mrb[0].mxu0
  %v4824 = vadd.f32 %v4756, %v4823
  %v4825 = vpop.f32.mrb[0].mxu0
  %4826 = vmatprep.mubr.f32.mxu0 0.0
  %4827 = vmatmul.mubr.f32.gmra.mrb[0].mxu0 %v3147
  %v4828 = vpop.f32.mrb[0].mxu0
  %v4829 = vadd.f32 %v4756, %v4828
  %v4830 = vpop.f32.mrb[0].mxu0
  %4831 = vdwg.mxu0
  %s4832 = scalar_lea.vmem %s4, 48
  %v4833 = vld [vmem:[%s4832] sm:$0xff]
  %v4835 = vsel %vm328, %v4656, 0
  %v4838 = vsel %vm328, %v4740, 0
  %4840 = vmatprep.subr.mxu0 0.0
  %4841 = vmatpush1.xpose.msra.mxu0 %v4838
  %4842 = vmatprep.subr.mxu0 0.0
  %4843 = vmatpush1.xpose.msra.mxu0 0.0
  %4844 = vmatprep.subr.mxu0 0.0
  %4845 = vmatpush1.xpose.msra.mxu0 0.0
  %4846 = vmatprep.subr.mxu0 0.0
  %4847 = vmatpush1.xpose.msra.mxu0 0.0
  %4848 = vmatprep.subr.mxu0 0.0
  %4849 = vmatpush1.xpose.msra.mxu0 0.0
  %4850 = vmatprep.subr.mxu0 0.0
  %4851 = vmatpush1.xpose.msra.mxu0 0.0
  %4852 = vmatprep.subr.mxu0 0.0
  %4853 = vmatpush1.xpose.msra.mxu0 0.0
  %4854 = vmatprep.subr.mxu0 0.0
  %4855 = vmatpush1.xpose.msra.mxu0 0.0
  %4856 = vmatprep.subr.mxu0 0.0
  %4857 = vmatpush1.xpose.msra.mxu0 0.0
  %4858 = vmatprep.subr.mxu0 0.0
  %4859 = vmatpush1.xpose.msra.mxu0 0.0
  %4860 = vmatprep.subr.mxu0 0.0
  %4861 = vmatpush1.xpose.msra.mxu0 0.0
  %4862 = vmatprep.subr.mxu0 0.0
  %4863 = vmatpush1.xpose.msra.mxu0 0.0
  %4864 = vmatprep.subr.mxu0 0.0
  %4865 = vmatpush1.xpose.msra.mxu0 0.0
  %4866 = vmatprep.subr.mxu0 0.0
  %4867 = vmatpush1.xpose.msra.mxu0 0.0
  %4868 = vmatprep.subr.mxu0 0.0
  %4869 = vmatpush1.xpose.msra.mxu0 0.0
  %4870 = vmatprep.subr.mxu0 0.0
  %4871 = vmatpush1.xpose.msra.mxu0 0.0
  %4872 = vmatprep.subr.mxu0 0.0
  %4873 = vmatpush1.xpose.msra.mxu0 0.0
  %4874 = vmatprep.subr.mxu0 0.0
  %4875 = vmatpush1.xpose.msra.mxu0 0.0
  %4876 = vmatprep.subr.mxu0 0.0
  %4877 = vmatpush1.xpose.msra.mxu0 0.0
  %4878 = vmatprep.subr.mxu0 0.0
  %4879 = vmatpush1.xpose.msra.mxu0 0.0
  %4880 = vmatprep.subr.mxu0 0.0
  %4881 = vmatpush1.xpose.msra.mxu0 0.0
  %4882 = vmatprep.subr.mxu0 0.0
  %4883 = vmatpush1.xpose.msra.mxu0 0.0
  %4884 = vmatprep.subr.mxu0 0.0
  %4885 = vmatpush1.xpose.msra.mxu0 0.0
  %4886 = vmatprep.subr.mxu0 0.0
  %4887 = vmatpush1.xpose.msra.mxu0 0.0
  %4888 = vmatprep.subr.mxu0 0.0
  %4889 = vmatpush1.xpose.msra.mxu0 0.0
  %4890 = vmatprep.subr.mxu0 0.0
  %4891 = vmatpush1.xpose.msra.mxu0 0.0
  %4892 = vmatprep.subr.mxu0 0.0
  %4893 = vmatpush1.xpose.msra.mxu0 0.0
  %4894 = vmatprep.subr.mxu0 0.0
  %4895 = vmatpush1.xpose.msra.mxu0 0.0
  %4896 = vmatprep.subr.mxu0 0.0
  %4897 = vmatpush1.xpose.msra.mxu0 0.0
  %4898 = vmatprep.subr.mxu0 0.0
  %4899 = vmatpush1.xpose.msra.mxu0 0.0
  %4900 = vmatprep.subr.mxu0 0.0
  %4901 = vmatpush1.xpose.msra.mxu0 0.0
  %4902 = vmatprep.subr.mxu0 0.0
  %4903 = vmatpush1.xpose.msra.mxu0 0.0
  %4904 = vmatprep.mubr.f32.mxu0 0.0
  %4905 = vmatmul.mubr.f32.gmra.mrb[0].mxu0 %v4835
  %v4906 = vpop.f32.mrb[0].mxu0
  %v4907 = vadd.f32 0.0, %v4906
  %v4908 = vpop.f32.mrb[0].mxu0
  %4909 = vdwg.mxu0
  %v4910 = vsel %vm328, %v4907, -inf
  %4911 = vmax.xlane.f32.xlu0 %v4910
  %v4912 = vpop.xlane.xlu0 %4911
  %v4913 = vsub.f32 %v4907, %v4912
  %v4914 = vmul.f32 %v4913, 1.442695
  %v4915 = vpow.pop %v4914
  %v4916 = vsel %vm328, %v4915, 0.0
  %4917 = vadd.xlane.f32.xlu0 %v4916
  %v4918 = vpop.xlane.xlu0 %4917
  %v4919 = vrcp.pop %v4918
  %v4920 = vmul.f32 %v4915, %v4919
  %v4922 = vsel %vm328, %v4920, 0
  %4924 = vmatprep.subr.mxu0 0.0
  %4925 = vmatpush1.msra.mxu0 %v4824
  %4926 = vmatprep.subr.mxu0 0.0
  %4927 = vmatpush1.msra.mxu0 0.0
  %4928 = vmatprep.subr.mxu0 0.0
  %4929 = vmatpush1.msra.mxu0 0.0
  %4930 = vmatprep.subr.mxu0 0.0
  %4931 = vmatpush1.msra.mxu0 0.0
  %4932 = vmatprep.subr.mxu0 0.0
  %4933 = vmatpush1.msra.mxu0 0.0
  %4934 = vmatprep.subr.mxu0 0.0
  %4935 = vmatpush1.msra.mxu0 0.0
  %4936 = vmatprep.subr.mxu0 0.0
  %4937 = vmatpush1.msra.mxu0 0.0
  %4938 = vmatprep.subr.mxu0 0.0
  %4939 = vmatpush1.msra.mxu0 0.0
  %4940 = vmatprep.subr.mxu0 0.0
  %4941 = vmatpush1.msra.mxu0 0.0
  %4942 = vmatprep.subr.mxu0 0.0
  %4943 = vmatpush1.msra.mxu0 0.0
  %4944 = vmatprep.subr.mxu0 0.0
  %4945 = vmatpush1.msra.mxu0 0.0
  %4946 = vmatprep.subr.mxu0 0.0
  %4947 = vmatpush1.msra.mxu0 0.0
  %4948 = vmatprep.subr.mxu0 0.0
  %4949 = vmatpush1.msra.mxu0 0.0
  %4950 = vmatprep.subr.mxu0 0.0
  %4951 = vmatpush1.msra.mxu0 0.0
  %4952 = vmatprep.subr.mxu0 0.0
  %4953 = vmatpush1.msra.mxu0 0.0
  %4954 = vmatprep.subr.mxu0 0.0
  %4955 = vmatpush1.msra.mxu0 0.0
  %4956 = vmatprep.subr.mxu0 0.0
  %4957 = vmatpush1.msra.mxu0 0.0
  %4958 = vmatprep.subr.mxu0 0.0
  %4959 = vmatpush1.msra.mxu0 0.0
  %4960 = vmatprep.subr.mxu0 0.0
  %4961 = vmatpush1.msra.mxu0 0.0
  %4962 = vmatprep.subr.mxu0 0.0
  %4963 = vmatpush1.msra.mxu0 0.0
  %4964 = vmatprep.subr.mxu0 0.0
  %4965 = vmatpush1.msra.mxu0 0.0
  %4966 = vmatprep.subr.mxu0 0.0
  %4967 = vmatpush1.msra.mxu0 0.0
  %4968 = vmatprep.subr.mxu0 0.0
  %4969 = vmatpush1.msra.mxu0 0.0
  %4970 = vmatprep.subr.mxu0 0.0
  %4971 = vmatpush1.msra.mxu0 0.0
  %4972 = vmatprep.subr.mxu0 0.0
  %4973 = vmatpush1.msra.mxu0 0.0
  %4974 = vmatprep.subr.mxu0 0.0
  %4975 = vmatpush1.msra.mxu0 0.0
  %4976 = vmatprep.subr.mxu0 0.0
  %4977 = vmatpush1.msra.mxu0 0.0
  %4978 = vmatprep.subr.mxu0 0.0
  %4979 = vmatpush1.msra.mxu0 0.0
  %4980 = vmatprep.subr.mxu0 0.0
  %4981 = vmatpush1.msra.mxu0 0.0
  %4982 = vmatprep.subr.mxu0 0.0
  %4983 = vmatpush1.msra.mxu0 0.0
  %4984 = vmatprep.subr.mxu0 0.0
  %4985 = vmatpush1.msra.mxu0 0.0
  %4986 = vmatprep.subr.mxu0 0.0
  %4987 = vmatpush1.msra.mxu0 0.0
  %4988 = vmatprep.mubr.f32.mxu0 0.0
  %4989 = vmatmul.mubr.f32.gmra.mrb[0].mxu0 %v4922
  %v4990 = vpop.f32.mrb[0].mxu0
  %v4991 = vadd.f32 0.0, %v4990
  %v4992 = vpop.f32.mrb[0].mxu0
  %4993 = vdwg.mxu0
  %v4995 = vsel %vm328, %v4991, 0
  %4997 = vmatprep.subr.mxu0 0.0
  %4998 = vmatpush1.msra.mxu0 %v4833
  %4999 = vmatprep.subr.mxu0 0.0
  %5000 = vmatpush1.msra.mxu0 0.0
  %5001 = vmatprep.subr.mxu0 0.0
  %5002 = vmatpush1.msra.mxu0 0.0
  %5003 = vmatprep.subr.mxu0 0.0
  %5004 = vmatpush1.msra.mxu0 0.0
  %5005 = vmatprep.subr.mxu0 0.0
  %5006 = vmatpush1.msra.mxu0 0.0
  %5007 = vmatprep.subr.mxu0 0.0
  %5008 = vmatpush1.msra.mxu0 0.0
  %5009 = vmatprep.subr.mxu0 0.0
  %5010 = vmatpush1.msra.mxu0 0.0
  %5011 = vmatprep.subr.mxu0 0.0
  %5012 = vmatpush1.msra.mxu0 0.0
  %5013 = vmatprep.subr.mxu0 0.0
  %5014 = vmatpush1.msra.mxu0 0.0
  %5015 = vmatprep.subr.mxu0 0.0
  %5016 = vmatpush1.msra.mxu0 0.0
  %5017 = vmatprep.subr.mxu0 0.0
  %5018 = vmatpush1.msra.mxu0 0.0
  %5019 = vmatprep.subr.mxu0 0.0
  %5020 = vmatpush1.msra.mxu0 0.0
  %5021 = vmatprep.subr.mxu0 0.0
  %5022 = vmatpush1.msra.mxu0 0.0
  %5023 = vmatprep.subr.mxu0 0.0
  %5024 = vmatpush1.msra.mxu0 0.0
  %5025 = vmatprep.subr.mxu0 0.0
  %5026 = vmatpush1.msra.mxu0 0.0
  %5027 = vmatprep.subr.mxu0 0.0
  %5028 = vmatpush1.msra.mxu0 0.0
  %5029 = vmatprep.subr.mxu0 0.0
  %5030 = vmatpush1.msra.mxu0 0.0
  %5031 = vmatprep.subr.mxu0 0.0
  %5032 = vmatpush1.msra.mxu0 0.0
  %5033 = vmatprep.subr.mxu0 0.0
  %5034 = vmatpush1.msra.mxu0 0.0
  %5035 = vmatprep.subr.mxu0 0.0
  %5036 = vmatpush1.msra.mxu0 0.0
  %5037 = vmatprep.subr.mxu0 0.0
  %5038 = vmatpush1.msra.mxu0 0.0
  %5039 = vmatprep.subr.mxu0 0.0
  %5040 = vmatpush1.msra.mxu0 0.0
  %5041 = vmatprep.subr.mxu0 0.0
  %5042 = vmatpush1.msra.mxu0 0.0
  %5043 = vmatprep.subr.mxu0 0.0
  %5044 = vmatpush1.msra.mxu0 0.0
  %5045 = vmatprep.subr.mxu0 0.0
  %5046 = vmatpush1.msra.mxu0 0.0
  %5047 = vmatprep.subr.mxu0 0.0
  %5048 = vmatpush1.msra.mxu0 0.0
  %5049 = vmatprep.subr.mxu0 0.0
  %5050 = vmatpush1.msra.mxu0 0.0
  %5051 = vmatprep.subr.mxu0 0.0
  %5052 = vmatpush1.msra.mxu0 0.0
  %5053 = vmatprep.subr.mxu0 0.0
  %5054 = vmatpush1.msra.mxu0 0.0
  %5055 = vmatprep.subr.mxu0 0.0
  %5056 = vmatpush1.msra.mxu0 0.0
  %5057 = vmatprep.subr.mxu0 0.0
  %5058 = vmatpush1.msra.mxu0 0.0
  %5059 = vmatprep.subr.mxu0 0.0
  %5060 = vmatpush1.msra.mxu0 0.0
  %5061 = vmatprep.mubr.f32.mxu0 0.0
  %5062 = vmatmul.mubr.f32.gmra.mrb[0].mxu0 %v4995
  %v5063 = vpop.f32.mrb[0].mxu0
  %v5064 = vadd.f32 0.0, %v5063
  %v5065 = vpop.f32.mrb[0].mxu0
  %5066 = vdwg.mxu0
  %v5067 = vadd.f32 %v4271, %v5064
  %v5069 = vsel %vm328, %v4661, 0
  %v5072 = vsel %vm328, %v4745, 0
  %5074 = vmatprep.subr.mxu0 0.0
  %5075 = vmatpush1.xpose.msra.mxu0 %v5072
  %5076 = vmatprep.subr.mxu0 0.0
  %5077 = vmatpush1.xpose.msra.mxu0 0.0
  %5078 = vmatprep.subr.mxu0 0.0
  %5079 = vmatpush1.xpose.msra.mxu0 0.0
  %5080 = vmatprep.subr.mxu0 0.0
  %5081 = vmatpush1.xpose.msra.mxu0 0.0
  %5082 = vmatprep.subr.mxu0 0.0
  %5083 = vmatpush1.xpose.msra.mxu0 0.0
  %5084 = vmatprep.subr.mxu0 0.0
  %5085 = vmatpush1.xpose.msra.mxu0 0.0
  %5086 = vmatprep.subr.mxu0 0.0
  %5087 = vmatpush1.xpose.msra.mxu0 0.0
  %5088 = vmatprep.subr.mxu0 0.0
  %5089 = vmatpush1.xpose.msra.mxu0 0.0
  %5090 = vmatprep.subr.mxu0 0.0
  %5091 = vmatpush1.xpose.msra.mxu0 0.0
  %5092 = vmatprep.subr.mxu0 0.0
  %5093 = vmatpush1.xpose.msra.mxu0 0.0
  %5094 = vmatprep.subr.mxu0 0.0
  %5095 = vmatpush1.xpose.msra.mxu0 0.0
  %5096 = vmatprep.subr.mxu0 0.0
  %5097 = vmatpush1.xpose.msra.mxu0 0.0
  %5098 = vmatprep.subr.mxu0 0.0
  %5099 = vmatpush1.xpose.msra.mxu0 0.0
  %5100 = vmatprep.subr.mxu0 0.0
  %5101 = vmatpush1.xpose.msra.mxu0 0.0
  %5102 = vmatprep.subr.mxu0 0.0
  %5103 = vmatpush1.xpose.msra.mxu0 0.0
  %5104 = vmatprep.subr.mxu0 0.0
  %5105 = vmatpush1.xpose.msra.mxu0 0.0
  %5106 = vmatprep.subr.mxu0 0.0
  %5107 = vmatpush1.xpose.msra.mxu0 0.0
  %5108 = vmatprep.subr.mxu0 0.0
  %5109 = vmatpush1.xpose.msra.mxu0 0.0
  %5110 = vmatprep.subr.mxu0 0.0
  %5111 = vmatpush1.xpose.msra.mxu0 0.0
  %5112 = vmatprep.subr.mxu0 0.0
  %5113 = vmatpush1.xpose.msra.mxu0 0.0
  %5114 = vmatprep.subr.mxu0 0.0
  %5115 = vmatpush1.xpose.msra.mxu0 0.0
  %5116 = vmatprep.subr.mxu0 0.0
  %5117 = vmatpush1.xpose.msra.mxu0 0.0
  %5118 = vmatprep.subr.mxu0 0.0
  %5119 = vmatpush1.xpose.msra.mxu0 0.0
  %5120 = vmatprep.subr.mxu0 0.0
  %5121 = vmatpush1.xpose.msra.mxu0 0.0
  %5122 = vmatprep.subr.mxu0 0.0
  %5123 = vmatpush1.xpose.msra.mxu0 0.0
  %5124 = vmatprep.subr.mxu0 0.0
  %5125 = vmatpush1.xpose.msra.mxu0 0.0
  %5126 = vmatprep.subr.mxu0 0.0
  %5127 = vmatpush1.xpose.msra.mxu0 0.0
  %5128 = vmatprep.subr.mxu0 0.0
  %5129 = vmatpush1.xpose.msra.mxu0 0.0
  %5130 = vmatprep.subr.mxu0 0.0
  %5131 = vmatpush1.xpose.msra.mxu0 0.0
  %5132 = vmatprep.subr.mxu0 0.0
  %5133 = vmatpush1.xpose.msra.mxu0 0.0
  %5134 = vmatprep.subr.mxu0 0.0
  %5135 = vmatpush1.xpose.msra.mxu0 0.0
  %5136 = vmatprep.subr.mxu0 0.0
  %5137 = vmatpush1.xpose.msra.mxu0 0.0
  %5138 = vmatprep.mubr.f32.mxu0 0.0
  %5139 = vmatmul.mubr.f32.gmra.mrb[0].mxu0 %v5069
  %v5140 = vpop.f32.mrb[0].mxu0
  %v5141 = vadd.f32 0.0, %v5140
  %v5142 = vpop.f32.mrb[0].mxu0
  %5143 = vdwg.mxu0
  %v5144 = vsel %vm328, %v5141, -inf
  %5145 = vmax.xlane.f32.xlu0 %v5144
  %v5146 = vpop.xlane.xlu0 %5145
  %v5147 = vsub.f32 %v5141, %v5146
  %v5148 = vmul.f32 %v5147, 1.442695
  %v5149 = vpow.pop %v5148
  %v5150 = vsel %vm328, %v5149, 0.0
  %5151 = vadd.xlane.f32.xlu0 %v5150
  %v5152 = vpop.xlane.xlu0 %5151
  %v5153 = vrcp.pop %v5152
  %v5154 = vmul.f32 %v5149, %v5153
  %v5156 = vsel %vm328, %v5154, 0
  %5158 = vmatprep.subr.mxu0 0.0
  %5159 = vmatpush1.msra.mxu0 %v4829
  %5160 = vmatprep.subr.mxu0 0.0
  %5161 = vmatpush1.msra.mxu0 0.0
  %5162 = vmatprep.subr.mxu0 0.0
  %5163 = vmatpush1.msra.mxu0 0.0
  %5164 = vmatprep.subr.mxu0 0.0
  %5165 = vmatpush1.msra.mxu0 0.0
  %5166 = vmatprep.subr.mxu0 0.0
  %5167 = vmatpush1.msra.mxu0 0.0
  %5168 = vmatprep.subr.mxu0 0.0
  %5169 = vmatpush1.msra.mxu0 0.0
  %5170 = vmatprep.subr.mxu0 0.0
  %5171 = vmatpush1.msra.mxu0 0.0
  %5172 = vmatprep.subr.mxu0 0.0
  %5173 = vmatpush1.msra.mxu0 0.0
  %5174 = vmatprep.subr.mxu0 0.0
  %5175 = vmatpush1.msra.mxu0 0.0
  %5176 = vmatprep.subr.mxu0 0.0
  %5177 = vmatpush1.msra.mxu0 0.0
  %5178 = vmatprep.subr.mxu0 0.0
  %5179 = vmatpush1.msra.mxu0 0.0
  %5180 = vmatprep.subr.mxu0 0.0
  %5181 = vmatpush1.msra.mxu0 0.0
  %5182 = vmatprep.subr.mxu0 0.0
  %5183 = vmatpush1.msra.mxu0 0.0
  %5184 = vmatprep.subr.mxu0 0.0
  %5185 = vmatpush1.msra.mxu0 0.0
  %5186 = vmatprep.subr.mxu0 0.0
  %5187 = vmatpush1.msra.mxu0 0.0
  %5188 = vmatprep.subr.mxu0 0.0
  %5189 = vmatpush1.msra.mxu0 0.0
  %5190 = vmatprep.subr.mxu0 0.0
  %5191 = vmatpush1.msra.mxu0 0.0
  %5192 = vmatprep.subr.mxu0 0.0
  %5193 = vmatpush1.msra.mxu0 0.0
  %5194 = vmatprep.subr.mxu0 0.0
  %5195 = vmatpush1.msra.mxu0 0.0
  %5196 = vmatprep.subr.mxu0 0.0
  %5197 = vmatpush1.msra.mxu0 0.0
  %5198 = vmatprep.subr.mxu0 0.0
  %5199 = vmatpush1.msra.mxu0 0.0
  %5200 = vmatprep.subr.mxu0 0.0
  %5201 = vmatpush1.msra.mxu0 0.0
  %5202 = vmatprep.subr.mxu0 0.0
  %5203 = vmatpush1.msra.mxu0 0.0
  %5204 = vmatprep.subr.mxu0 0.0
  %5205 = vmatpush1.msra.mxu0 0.0
  %5206 = vmatprep.subr.mxu0 0.0
  %5207 = vmatpush1.msra.mxu0 0.0
  %5208 = vmatprep.subr.mxu0 0.0
  %5209 = vmatpush1.msra.mxu0 0.0
  %5210 = vmatprep.subr.mxu0 0.0
  %5211 = vmatpush1.msra.mxu0 0.0
  %5212 = vmatprep.subr.mxu0 0.0
  %5213 = vmatpush1.msra.mxu0 0.0
  %5214 = vmatprep.subr.mxu0 0.0
  %5215 = vmatpush1.msra.mxu0 0.0
  %5216 = vmatprep.subr.mxu0 0.0
  %5217 = vmatpush1.msra.mxu0 0.0
  %5218 = vmatprep.subr.mxu0 0.0
  %5219 = vmatpush1.msra.mxu0 0.0
  %5220 = vmatprep.subr.mxu0 0.0
  %5221 = vmatpush1.msra.mxu0 0.0
  %5222 = vmatprep.mubr.f32.mxu0 0.0
  %5223 = vmatmul.mubr.f32.gmra.mrb[0].mxu0 %v5156
  %v5224 = vpop.f32.mrb[0].mxu0
  %v5225 = vadd.f32 0.0, %v5224
  %v5226 = vpop.f32.mrb[0].mxu0
  %5227 = vdwg.mxu0
  %v5229 = vsel %vm328, %v5225, 0
  %5231 = vmatprep.subr.mxu0 0.0
  %5232 = vmatpush1.msra.mxu0 %v4833
  %5233 = vmatprep.subr.mxu0 0.0
  %5234 = vmatpush1.msra.mxu0 0.0
  %5235 = vmatprep.subr.mxu0 0.0
  %5236 = vmatpush1.msra.mxu0 0.0
  %5237 = vmatprep.subr.mxu0 0.0
  %5238 = vmatpush1.msra.mxu0 0.0
  %5239 = vmatprep.subr.mxu0 0.0
  %5240 = vmatpush1.msra.mxu0 0.0
  %5241 = vmatprep.subr.mxu0 0.0
  %5242 = vmatpush1.msra.mxu0 0.0
  %5243 = vmatprep.subr.mxu0 0.0
  %5244 = vmatpush1.msra.mxu0 0.0
  %5245 = vmatprep.subr.mxu0 0.0
  %5246 = vmatpush1.msra.mxu0 0.0
  %5247 = vmatprep.subr.mxu0 0.0
  %5248 = vmatpush1.msra.mxu0 0.0
  %5249 = vmatprep.subr.mxu0 0.0
  %5250 = vmatpush1.msra.mxu0 0.0
  %5251 = vmatprep.subr.mxu0 0.0
  %5252 = vmatpush1.msra.mxu0 0.0
  %5253 = vmatprep.subr.mxu0 0.0
  %5254 = vmatpush1.msra.mxu0 0.0
  %5255 = vmatprep.subr.mxu0 0.0
  %5256 = vmatpush1.msra.mxu0 0.0
  %5257 = vmatprep.subr.mxu0 0.0
  %5258 = vmatpush1.msra.mxu0 0.0
  %5259 = vmatprep.subr.mxu0 0.0
  %5260 = vmatpush1.msra.mxu0 0.0
  %5261 = vmatprep.subr.mxu0 0.0
  %5262 = vmatpush1.msra.mxu0 0.0
  %5263 = vmatprep.subr.mxu0 0.0
  %5264 = vmatpush1.msra.mxu0 0.0
  %5265 = vmatprep.subr.mxu0 0.0
  %5266 = vmatpush1.msra.mxu0 0.0
  %5267 = vmatprep.subr.mxu0 0.0
  %5268 = vmatpush1.msra.mxu0 0.0
  %5269 = vmatprep.subr.mxu0 0.0
  %5270 = vmatpush1.msra.mxu0 0.0
  %5271 = vmatprep.subr.mxu0 0.0
  %5272 = vmatpush1.msra.mxu0 0.0
  %5273 = vmatprep.subr.mxu0 0.0
  %5274 = vmatpush1.msra.mxu0 0.0
  %5275 = vmatprep.subr.mxu0 0.0
  %5276 = vmatpush1.msra.mxu0 0.0
  %5277 = vmatprep.subr.mxu0 0.0
  %5278 = vmatpush1.msra.mxu0 0.0
  %5279 = vmatprep.subr.mxu0 0.0
  %5280 = vmatpush1.msra.mxu0 0.0
  %5281 = vmatprep.subr.mxu0 0.0
  %5282 = vmatpush1.msra.mxu0 0.0
  %5283 = vmatprep.subr.mxu0 0.0
  %5284 = vmatpush1.msra.mxu0 0.0
  %5285 = vmatprep.subr.mxu0 0.0
  %5286 = vmatpush1.msra.mxu0 0.0
  %5287 = vmatprep.subr.mxu0 0.0
  %5288 = vmatpush1.msra.mxu0 0.0
  %5289 = vmatprep.subr.mxu0 0.0
  %5290 = vmatpush1.msra.mxu0 0.0
  %5291 = vmatprep.subr.mxu0 0.0
  %5292 = vmatpush1.msra.mxu0 0.0
  %5293 = vmatprep.subr.mxu0 0.0
  %5294 = vmatpush1.msra.mxu0 0.0
  %5295 = vmatprep.mubr.f32.mxu0 0.0
  %5296 = vmatmul.mubr.f32.gmra.mrb[0].mxu0 %v5229
  %v5297 = vpop.f32.mrb[0].mxu0
  %v5298 = vadd.f32 0.0, %v5297
  %v5299 = vpop.f32.mrb[0].mxu0
  %5300 = vdwg.mxu0
  %v5301 = vadd.f32 %v4577, %v5298
  %s5302 = scalar_lea.vmem %s3, 480
  %v5303 = vld [vmem:[%s5302] sm:$0xff]
  %v5304 = vld [vmem:[%s5302 + $0x8] sm:$0xff]
  %v5305 = vld [vmem:[%s5302 + $0x10] sm:$0xff]
  %v5306 = vld [vmem:[%s5302 + $0x18] sm:$0xff]
  %v5307 = vlaneseq
  %v5308 = vshrl.u32 %v5307, 7
  %v5309 = vsub.s32 7, %v5308
  %v5310 = vrot.slane %v26, %v5309
  %5311 = vmatprep.subr.mxu0 0.0
  %5312 = vmatpush1.msra.mxu0 %v5303
  %5313 = vmatprep.subr.mxu0 0.0
  %5314 = vmatpush1.msra.mxu0 %v5304
  %5315 = vmatprep.subr.mxu0 0.0
  %5316 = vmatpush1.msra.mxu0 %v5305
  %5317 = vmatprep.subr.mxu0 0.0
  %5318 = vmatpush1.msra.mxu0 %v5306
  %5319 = vmatprep.subr.mxu0 0.0
  %5320 = vmatpush1.msra.mxu0 0.0
  %5321 = vmatprep.subr.mxu0 0.0
  %5322 = vmatpush1.msra.mxu0 0.0
  %5323 = vmatprep.subr.mxu0 0.0
  %5324 = vmatpush1.msra.mxu0 0.0
  %5325 = vmatprep.subr.mxu0 0.0
  %5326 = vmatpush1.msra.mxu0 0.0
  %5327 = vmatprep.subr.mxu0 0.0
  %5328 = vmatpush1.msra.mxu0 0.0
  %5329 = vmatprep.subr.mxu0 0.0
  %5330 = vmatpush1.msra.mxu0 0.0
  %5331 = vmatprep.subr.mxu0 0.0
  %5332 = vmatpush1.msra.mxu0 0.0
  %5333 = vmatprep.subr.mxu0 0.0
  %5334 = vmatpush1.msra.mxu0 0.0
  %5335 = vmatprep.subr.mxu0 0.0
  %5336 = vmatpush1.msra.mxu0 0.0
  %5337 = vmatprep.subr.mxu0 0.0
  %5338 = vmatpush1.msra.mxu0 0.0
  %5339 = vmatprep.subr.mxu0 0.0
  %5340 = vmatpush1.msra.mxu0 0.0
  %5341 = vmatprep.subr.mxu0 0.0
  %5342 = vmatpush1.msra.mxu0 0.0
  %5343 = vmatprep.subr.mxu0 0.0
  %5344 = vmatpush1.msra.mxu0 0.0
  %5345 = vmatprep.subr.mxu0 0.0
  %5346 = vmatpush1.msra.mxu0 0.0
  %5347 = vmatprep.subr.mxu0 0.0
  %5348 = vmatpush1.msra.mxu0 0.0
  %5349 = vmatprep.subr.mxu0 0.0
  %5350 = vmatpush1.msra.mxu0 0.0
  %5351 = vmatprep.subr.mxu0 0.0
  %5352 = vmatpush1.msra.mxu0 0.0
  %5353 = vmatprep.subr.mxu0 0.0
  %5354 = vmatpush1.msra.mxu0 0.0
  %5355 = vmatprep.subr.mxu0 0.0
  %5356 = vmatpush1.msra.mxu0 0.0
  %5357 = vmatprep.subr.mxu0 0.0
  %5358 = vmatpush1.msra.mxu0 0.0
  %5359 = vmatprep.subr.mxu0 0.0
  %5360 = vmatpush1.msra.mxu0 0.0
  %5361 = vmatprep.subr.mxu0 0.0
  %5362 = vmatpush1.msra.mxu0 0.0
  %5363 = vmatprep.subr.mxu0 0.0
  %5364 = vmatpush1.msra.mxu0 0.0
  %5365 = vmatprep.subr.mxu0 0.0
  %5366 = vmatpush1.msra.mxu0 0.0
  %5367 = vmatprep.subr.mxu0 0.0
  %5368 = vmatpush1.msra.mxu0 0.0
  %5369 = vmatprep.subr.mxu0 0.0
  %5370 = vmatpush1.msra.mxu0 0.0
  %5371 = vmatprep.subr.mxu0 0.0
  %5372 = vmatpush1.msra.mxu0 0.0
  %5373 = vmatprep.subr.mxu0 0.0
  %5374 = vmatpush1.msra.mxu0 0.0
  %5375 = vmatprep.mubr.f32.mxu0 0.0
  %5376 = vmatmul.mubr.f32.gmra.mrb[0].mxu0 %v3144
  %v5377 = vpop.f32.mrb[0].mxu0
  %v5378 = vadd.f32 %v5310, %v5377
  %v5379 = vpop.f32.mrb[0].mxu0
  %5380 = vmatprep.mubr.f32.mxu0 0.0
  %5381 = vmatmul.mubr.f32.gmra.mrb[0].mxu0 %v3147
  %v5382 = vpop.f32.mrb[0].mxu0
  %v5383 = vadd.f32 %v5310, %v5382
  %v5384 = vpop.f32.mrb[0].mxu0
  %5385 = vdwg.mxu0
  %s5386 = scalar_lea.vmem %s3, 608
  %v5387 = vld [vmem:[%s5386] sm:$0xff]
  %v5388 = vld [vmem:[%s5386 + $0x8] sm:$0xff]
  %v5389 = vld [vmem:[%s5386 + $0x10] sm:$0xff]
  %v5390 = vld [vmem:[%s5386 + $0x18] sm:$0xff]
  %v5391 = vlaneseq
  %v5392 = vshrl.u32 %v5391, 7
  %v5393 = vsub.s32 3, %v5392
  %v5394 = vrot.slane %v27, %v5393
  %5395 = vmatprep.subr.mxu0 0.0
  %5396 = vmatpush1.msra.mxu0 %v5387
  %5397 = vmatprep.subr.mxu0 0.0
  %5398 = vmatpush1.msra.mxu0 %v5388
  %5399 = vmatprep.subr.mxu0 0.0
  %5400 = vmatpush1.msra.mxu0 %v5389
  %5401 = vmatprep.subr.mxu0 0.0
  %5402 = vmatpush1.msra.mxu0 %v5390
  %5403 = vmatprep.subr.mxu0 0.0
  %5404 = vmatpush1.msra.mxu0 0.0
  %5405 = vmatprep.subr.mxu0 0.0
  %5406 = vmatpush1.msra.mxu0 0.0
  %5407 = vmatprep.subr.mxu0 0.0
  %5408 = vmatpush1.msra.mxu0 0.0
  %5409 = vmatprep.subr.mxu0 0.0
  %5410 = vmatpush1.msra.mxu0 0.0
  %5411 = vmatprep.subr.mxu0 0.0
  %5412 = vmatpush1.msra.mxu0 0.0
  %5413 = vmatprep.subr.mxu0 0.0
  %5414 = vmatpush1.msra.mxu0 0.0
  %5415 = vmatprep.subr.mxu0 0.0
  %5416 = vmatpush1.msra.mxu0 0.0
  %5417 = vmatprep.subr.mxu0 0.0
  %5418 = vmatpush1.msra.mxu0 0.0
  %5419 = vmatprep.subr.mxu0 0.0
  %5420 = vmatpush1.msra.mxu0 0.0
  %5421 = vmatprep.subr.mxu0 0.0
  %5422 = vmatpush1.msra.mxu0 0.0
  %5423 = vmatprep.subr.mxu0 0.0
  %5424 = vmatpush1.msra.mxu0 0.0
  %5425 = vmatprep.subr.mxu0 0.0
  %5426 = vmatpush1.msra.mxu0 0.0
  %5427 = vmatprep.subr.mxu0 0.0
  %5428 = vmatpush1.msra.mxu0 0.0
  %5429 = vmatprep.subr.mxu0 0.0
  %5430 = vmatpush1.msra.mxu0 0.0
  %5431 = vmatprep.subr.mxu0 0.0
  %5432 = vmatpush1.msra.mxu0 0.0
  %5433 = vmatprep.subr.mxu0 0.0
  %5434 = vmatpush1.msra.mxu0 0.0
  %5435 = vmatprep.subr.mxu0 0.0
  %5436 = vmatpush1.msra.mxu0 0.0
  %5437 = vmatprep.subr.mxu0 0.0
  %5438 = vmatpush1.msra.mxu0 0.0
  %5439 = vmatprep.subr.mxu0 0.0
  %5440 = vmatpush1.msra.mxu0 0.0
  %5441 = vmatprep.subr.mxu0 0.0
  %5442 = vmatpush1.msra.mxu0 0.0
  %5443 = vmatprep.subr.mxu0 0.0
  %5444 = vmatpush1.msra.mxu0 0.0
  %5445 = vmatprep.subr.mxu0 0.0
  %5446 = vmatpush1.msra.mxu0 0.0
  %5447 = vmatprep.subr.mxu0 0.0
  %5448 = vmatpush1.msra.mxu0 0.0
  %5449 = vmatprep.subr.mxu0 0.0
  %5450 = vmatpush1.msra.mxu0 0.0
  %5451 = vmatprep.subr.mxu0 0.0
  %5452 = vmatpush1.msra.mxu0 0.0
  %5453 = vmatprep.subr.mxu0 0.0
  %5454 = vmatpush1.msra.mxu0 0.0
  %5455 = vmatprep.subr.mxu0 0.0
  %5456 = vmatpush1.msra.mxu0 0.0
  %5457 = vmatprep.subr.mxu0 0.0
  %5458 = vmatpush1.msra.mxu0 0.0
  %5459 = vmatprep.mubr.f32.mxu0 0.0
  %5460 = vmatmul.mubr.f32.gmra.mrb[0].mxu0 %v3144
  %v5461 = vpop.f32.mrb[0].mxu0
  %v5462 = vadd.f32 %v5394, %v5461
  %v5463 = vpop.f32.mrb[0].mxu0
  %5464 = vmatprep.mubr.f32.mxu0 0.0
  %5465 = vmatmul.mubr.f32.gmra.mrb[0].mxu0 %v3147
  %v5466 = vpop.f32.mrb[0].mxu0
  %v5467 = vadd.f32 %v5394, %v5466
  %v5468 = vpop.f32.mrb[0].mxu0
  %5469 = vdwg.mxu0
  %s5470 = scalar_lea.vmem %s3, 736
  %v5471 = vld [vmem:[%s5470] sm:$0xff]
  %v5472 = vld [vmem:[%s5470 + $0x8] sm:$0xff]
  %v5473 = vld [vmem:[%s5470 + $0x10] sm:$0xff]
  %v5474 = vld [vmem:[%s5470 + $0x18] sm:$0xff]
  %v5475 = vlaneseq
  %v5476 = vshrl.u32 %v5475, 7
  %v5477 = vsub.s32 7, %v5476
  %v5478 = vrot.slane %v27, %v5477
  %5479 = vmatprep.subr.mxu0 0.0
  %5480 = vmatpush1.msra.mxu0 %v5471
  %5481 = vmatprep.subr.mxu0 0.0
  %5482 = vmatpush1.msra.mxu0 %v5472
  %5483 = vmatprep.subr.mxu0 0.0
  %5484 = vmatpush1.msra.mxu0 %v5473
  %5485 = vmatprep.subr.mxu0 0.0
  %5486 = vmatpush1.msra.mxu0 %v5474
  %5487 = vmatprep.subr.mxu0 0.0
  %5488 = vmatpush1.msra.mxu0 0.0
  %5489 = vmatprep.subr.mxu0 0.0
  %5490 = vmatpush1.msra.mxu0 0.0
  %5491 = vmatprep.subr.mxu0 0.0
  %5492 = vmatpush1.msra.mxu0 0.0
  %5493 = vmatprep.subr.mxu0 0.0
  %5494 = vmatpush1.msra.mxu0 0.0
  %5495 = vmatprep.subr.mxu0 0.0
  %5496 = vmatpush1.msra.mxu0 0.0
  %5497 = vmatprep.subr.mxu0 0.0
  %5498 = vmatpush1.msra.mxu0 0.0
  %5499 = vmatprep.subr.mxu0 0.0
  %5500 = vmatpush1.msra.mxu0 0.0
  %5501 = vmatprep.subr.mxu0 0.0
  %5502 = vmatpush1.msra.mxu0 0.0
  %5503 = vmatprep.subr.mxu0 0.0
  %5504 = vmatpush1.msra.mxu0 0.0
  %5505 = vmatprep.subr.mxu0 0.0
  %5506 = vmatpush1.msra.mxu0 0.0
  %5507 = vmatprep.subr.mxu0 0.0
  %5508 = vmatpush1.msra.mxu0 0.0
  %5509 = vmatprep.subr.mxu0 0.0
  %5510 = vmatpush1.msra.mxu0 0.0
  %5511 = vmatprep.subr.mxu0 0.0
  %5512 = vmatpush1.msra.mxu0 0.0
  %5513 = vmatprep.subr.mxu0 0.0
  %5514 = vmatpush1.msra.mxu0 0.0
  %5515 = vmatprep.subr.mxu0 0.0
  %5516 = vmatpush1.msra.mxu0 0.0
  %5517 = vmatprep.subr.mxu0 0.0
  %5518 = vmatpush1.msra.mxu0 0.0
  %5519 = vmatprep.subr.mxu0 0.0
  %5520 = vmatpush1.msra.mxu0 0.0
  %5521 = vmatprep.subr.mxu0 0.0
  %5522 = vmatpush1.msra.mxu0 0.0
  %5523 = vmatprep.subr.mxu0 0.0
  %5524 = vmatpush1.msra.mxu0 0.0
  %5525 = vmatprep.subr.mxu0 0.0
  %5526 = vmatpush1.msra.mxu0 0.0
  %5527 = vmatprep.subr.mxu0 0.0
  %5528 = vmatpush1.msra.mxu0 0.0
  %5529 = vmatprep.subr.mxu0 0.0
  %5530 = vmatpush1.msra.mxu0 0.0
  %5531 = vmatprep.subr.mxu0 0.0
  %5532 = vmatpush1.msra.mxu0 0.0
  %5533 = vmatprep.subr.mxu0 0.0
  %5534 = vmatpush1.msra.mxu0 0.0
  %5535 = vmatprep.subr.mxu0 0.0
  %5536 = vmatpush1.msra.mxu0 0.0
  %5537 = vmatprep.subr.mxu0 0.0
  %5538 = vmatpush1.msra.mxu0 0.0
  %5539 = vmatprep.subr.mxu0 0.0
  %5540 = vmatpush1.msra.mxu0 0.0
  %5541 = vmatprep.subr.mxu0 0.0
  %5542 = vmatpush1.msra.mxu0 0.0
  %5543 = vmatprep.mubr.f32.mxu0 0.0
  %5544 = vmatmul.mubr.f32.gmra.mrb[0].mxu0 %v3144
  %v5545 = vpop.f32.mrb[0].mxu0
  %v5546 = vadd.f32 %v5478, %v5545
  %v5547 = vpop.f32.mrb[0].mxu0
  %5548 = vmatprep.mubr.f32.mxu0 0.0
  %5549 = vmatmul.mubr.f32.gmra.mrb[0].mxu0 %v3147
  %v5550 = vpop.f32.mrb[0].mxu0
  %v5551 = vadd.f32 %v5478, %v5550
  %v5552 = vpop.f32.mrb[0].mxu0
  %5553 = vdwg.mxu0
  %s5554 = scalar_lea.vmem %s4, 56
  %v5555 = vld [vmem:[%s5554] sm:$0xff]
  %v5557 = vsel %vm328, %v5378, 0
  %v5560 = vsel %vm328, %v5462, 0
  %5562 = vmatprep.subr.mxu0 0.0
  %5563 = vmatpush1.xpose.msra.mxu0 %v5560
  %5564 = vmatprep.subr.mxu0 0.0
  %5565 = vmatpush1.xpose.msra.mxu0 0.0
  %5566 = vmatprep.subr.mxu0 0.0
  %5567 = vmatpush1.xpose.msra.mxu0 0.0
  %5568 = vmatprep.subr.mxu0 0.0
  %5569 = vmatpush1.xpose.msra.mxu0 0.0
  %5570 = vmatprep.subr.mxu0 0.0
  %5571 = vmatpush1.xpose.msra.mxu0 0.0
  %5572 = vmatprep.subr.mxu0 0.0
  %5573 = vmatpush1.xpose.msra.mxu0 0.0
  %5574 = vmatprep.subr.mxu0 0.0
  %5575 = vmatpush1.xpose.msra.mxu0 0.0
  %5576 = vmatprep.subr.mxu0 0.0
  %5577 = vmatpush1.xpose.msra.mxu0 0.0
  %5578 = vmatprep.subr.mxu0 0.0
  %5579 = vmatpush1.xpose.msra.mxu0 0.0
  %5580 = vmatprep.subr.mxu0 0.0
  %5581 = vmatpush1.xpose.msra.mxu0 0.0
  %5582 = vmatprep.subr.mxu0 0.0
  %5583 = vmatpush1.xpose.msra.mxu0 0.0
  %5584 = vmatprep.subr.mxu0 0.0
  %5585 = vmatpush1.xpose.msra.mxu0 0.0
  %5586 = vmatprep.subr.mxu0 0.0
  %5587 = vmatpush1.xpose.msra.mxu0 0.0
  %5588 = vmatprep.subr.mxu0 0.0
  %5589 = vmatpush1.xpose.msra.mxu0 0.0
  %5590 = vmatprep.subr.mxu0 0.0
  %5591 = vmatpush1.xpose.msra.mxu0 0.0
  %5592 = vmatprep.subr.mxu0 0.0
  %5593 = vmatpush1.xpose.msra.mxu0 0.0
  %5594 = vmatprep.subr.mxu0 0.0
  %5595 = vmatpush1.xpose.msra.mxu0 0.0
  %5596 = vmatprep.subr.mxu0 0.0
  %5597 = vmatpush1.xpose.msra.mxu0 0.0
  %5598 = vmatprep.subr.mxu0 0.0
  %5599 = vmatpush1.xpose.msra.mxu0 0.0
  %5600 = vmatprep.subr.mxu0 0.0
  %5601 = vmatpush1.xpose.msra.mxu0 0.0
  %5602 = vmatprep.subr.mxu0 0.0
  %5603 = vmatpush1.xpose.msra.mxu0 0.0
  %5604 = vmatprep.subr.mxu0 0.0
  %5605 = vmatpush1.xpose.msra.mxu0 0.0
  %5606 = vmatprep.subr.mxu0 0.0
  %5607 = vmatpush1.xpose.msra.mxu0 0.0
  %5608 = vmatprep.subr.mxu0 0.0
  %5609 = vmatpush1.xpose.msra.mxu0 0.0
  %5610 = vmatprep.subr.mxu0 0.0
  %5611 = vmatpush1.xpose.msra.mxu0 0.0
  %5612 = vmatprep.subr.mxu0 0.0
  %5613 = vmatpush1.xpose.msra.mxu0 0.0
  %5614 = vmatprep.subr.mxu0 0.0
  %5615 = vmatpush1.xpose.msra.mxu0 0.0
  %5616 = vmatprep.subr.mxu0 0.0
  %5617 = vmatpush1.xpose.msra.mxu0 0.0
  %5618 = vmatprep.subr.mxu0 0.0
  %5619 = vmatpush1.xpose.msra.mxu0 0.0
  %5620 = vmatprep.subr.mxu0 0.0
  %5621 = vmatpush1.xpose.msra.mxu0 0.0
  %5622 = vmatprep.subr.mxu0 0.0
  %5623 = vmatpush1.xpose.msra.mxu0 0.0
  %5624 = vmatprep.subr.mxu0 0.0
  %5625 = vmatpush1.xpose.msra.mxu0 0.0
  %5626 = vmatprep.mubr.f32.mxu0 0.0
  %5627 = vmatmul.mubr.f32.gmra.mrb[0].mxu0 %v5557
  %v5628 = vpop.f32.mrb[0].mxu0
  %v5629 = vadd.f32 0.0, %v5628
  %v5630 = vpop.f32.mrb[0].mxu0
  %5631 = vdwg.mxu0
  %v5632 = vsel %vm328, %v5629, -inf
  %5633 = vmax.xlane.f32.xlu0 %v5632
  %v5634 = vpop.xlane.xlu0 %5633
  %v5635 = vsub.f32 %v5629, %v5634
  %v5636 = vmul.f32 %v5635, 1.442695
  %v5637 = vpow.pop %v5636
  %v5638 = vsel %vm328, %v5637, 0.0
  %5639 = vadd.xlane.f32.xlu0 %v5638
  %v5640 = vpop.xlane.xlu0 %5639
  %v5641 = vrcp.pop %v5640
  %v5642 = vmul.f32 %v5637, %v5641
  %v5644 = vsel %vm328, %v5642, 0
  %5646 = vmatprep.subr.mxu0 0.0
  %5647 = vmatpush1.msra.mxu0 %v5546
  %5648 = vmatprep.subr.mxu0 0.0
  %5649 = vmatpush1.msra.mxu0 0.0
  %5650 = vmatprep.subr.mxu0 0.0
  %5651 = vmatpush1.msra.mxu0 0.0
  %5652 = vmatprep.subr.mxu0 0.0
  %5653 = vmatpush1.msra.mxu0 0.0
  %5654 = vmatprep.subr.mxu0 0.0
  %5655 = vmatpush1.msra.mxu0 0.0
  %5656 = vmatprep.subr.mxu0 0.0
  %5657 = vmatpush1.msra.mxu0 0.0
  %5658 = vmatprep.subr.mxu0 0.0
  %5659 = vmatpush1.msra.mxu0 0.0
  %5660 = vmatprep.subr.mxu0 0.0
  %5661 = vmatpush1.msra.mxu0 0.0
  %5662 = vmatprep.subr.mxu0 0.0
  %5663 = vmatpush1.msra.mxu0 0.0
  %5664 = vmatprep.subr.mxu0 0.0
  %5665 = vmatpush1.msra.mxu0 0.0
  %5666 = vmatprep.subr.mxu0 0.0
  %5667 = vmatpush1.msra.mxu0 0.0
  %5668 = vmatprep.subr.mxu0 0.0
  %5669 = vmatpush1.msra.mxu0 0.0
  %5670 = vmatprep.subr.mxu0 0.0
  %5671 = vmatpush1.msra.mxu0 0.0
  %5672 = vmatprep.subr.mxu0 0.0
  %5673 = vmatpush1.msra.mxu0 0.0
  %5674 = vmatprep.subr.mxu0 0.0
  %5675 = vmatpush1.msra.mxu0 0.0
  %5676 = vmatprep.subr.mxu0 0.0
  %5677 = vmatpush1.msra.mxu0 0.0
  %5678 = vmatprep.subr.mxu0 0.0
  %5679 = vmatpush1.msra.mxu0 0.0
  %5680 = vmatprep.subr.mxu0 0.0
  %5681 = vmatpush1.msra.mxu0 0.0
  %5682 = vmatprep.subr.mxu0 0.0
  %5683 = vmatpush1.msra.mxu0 0.0
  %5684 = vmatprep.subr.mxu0 0.0
  %5685 = vmatpush1.msra.mxu0 0.0
  %5686 = vmatprep.subr.mxu0 0.0
  %5687 = vmatpush1.msra.mxu0 0.0
  %5688 = vmatprep.subr.mxu0 0.0
  %5689 = vmatpush1.msra.mxu0 0.0
  %5690 = vmatprep.subr.mxu0 0.0
  %5691 = vmatpush1.msra.mxu0 0.0
  %5692 = vmatprep.subr.mxu0 0.0
  %5693 = vmatpush1.msra.mxu0 0.0
  %5694 = vmatprep.subr.mxu0 0.0
  %5695 = vmatpush1.msra.mxu0 0.0
  %5696 = vmatprep.subr.mxu0 0.0
  %5697 = vmatpush1.msra.mxu0 0.0
  %5698 = vmatprep.subr.mxu0 0.0
  %5699 = vmatpush1.msra.mxu0 0.0
  %5700 = vmatprep.subr.mxu0 0.0
  %5701 = vmatpush1.msra.mxu0 0.0
  %5702 = vmatprep.subr.mxu0 0.0
  %5703 = vmatpush1.msra.mxu0 0.0
  %5704 = vmatprep.subr.mxu0 0.0
  %5705 = vmatpush1.msra.mxu0 0.0
  %5706 = vmatprep.subr.mxu0 0.0
  %5707 = vmatpush1.msra.mxu0 0.0
  %5708 = vmatprep.subr.mxu0 0.0
  %5709 = vmatpush1.msra.mxu0 0.0
  %5710 = vmatprep.mubr.f32.mxu0 0.0
  %5711 = vmatmul.mubr.f32.gmra.mrb[0].mxu0 %v5644
  %v5712 = vpop.f32.mrb[0].mxu0
  %v5713 = vadd.f32 0.0, %v5712
  %v5714 = vpop.f32.mrb[0].mxu0
  %5715 = vdwg.mxu0
  %v5717 = vsel %vm328, %v5713, 0
  %5719 = vmatprep.subr.mxu0 0.0
  %5720 = vmatpush1.msra.mxu0 %v5555
  %5721 = vmatprep.subr.mxu0 0.0
  %5722 = vmatpush1.msra.mxu0 0.0
  %5723 = vmatprep.subr.mxu0 0.0
  %5724 = vmatpush1.msra.mxu0 0.0
  %5725 = vmatprep.subr.mxu0 0.0
  %5726 = vmatpush1.msra.mxu0 0.0
  %5727 = vmatprep.subr.mxu0 0.0
  %5728 = vmatpush1.msra.mxu0 0.0
  %5729 = vmatprep.subr.mxu0 0.0
  %5730 = vmatpush1.msra.mxu0 0.0
  %5731 = vmatprep.subr.mxu0 0.0
  %5732 = vmatpush1.msra.mxu0 0.0
  %5733 = vmatprep.subr.mxu0 0.0
  %5734 = vmatpush1.msra.mxu0 0.0
  %5735 = vmatprep.subr.mxu0 0.0
  %5736 = vmatpush1.msra.mxu0 0.0
  %5737 = vmatprep.subr.mxu0 0.0
  %5738 = vmatpush1.msra.mxu0 0.0
  %5739 = vmatprep.subr.mxu0 0.0
  %5740 = vmatpush1.msra.mxu0 0.0
  %5741 = vmatprep.subr.mxu0 0.0
  %5742 = vmatpush1.msra.mxu0 0.0
  %5743 = vmatprep.subr.mxu0 0.0
  %5744 = vmatpush1.msra.mxu0 0.0
  %5745 = vmatprep.subr.mxu0 0.0
  %5746 = vmatpush1.msra.mxu0 0.0
  %5747 = vmatprep.subr.mxu0 0.0
  %5748 = vmatpush1.msra.mxu0 0.0
  %5749 = vmatprep.subr.mxu0 0.0
  %5750 = vmatpush1.msra.mxu0 0.0
  %5751 = vmatprep.subr.mxu0 0.0
  %5752 = vmatpush1.msra.mxu0 0.0
  %5753 = vmatprep.subr.mxu0 0.0
  %5754 = vmatpush1.msra.mxu0 0.0
  %5755 = vmatprep.subr.mxu0 0.0
  %5756 = vmatpush1.msra.mxu0 0.0
  %5757 = vmatprep.subr.mxu0 0.0
  %5758 = vmatpush1.msra.mxu0 0.0
  %5759 = vmatprep.subr.mxu0 0.0
  %5760 = vmatpush1.msra.mxu0 0.0
  %5761 = vmatprep.subr.mxu0 0.0
  %5762 = vmatpush1.msra.mxu0 0.0
  %5763 = vmatprep.subr.mxu0 0.0
  %5764 = vmatpush1.msra.mxu0 0.0
  %5765 = vmatprep.subr.mxu0 0.0
  %5766 = vmatpush1.msra.mxu0 0.0
  %5767 = vmatprep.subr.mxu0 0.0
  %5768 = vmatpush1.msra.mxu0 0.0
  %5769 = vmatprep.subr.mxu0 0.0
  %5770 = vmatpush1.msra.mxu0 0.0
  %5771 = vmatprep.subr.mxu0 0.0
  %5772 = vmatpush1.msra.mxu0 0.0
  %5773 = vmatprep.subr.mxu0 0.0
  %5774 = vmatpush1.msra.mxu0 0.0
  %5775 = vmatprep.subr.mxu0 0.0
  %5776 = vmatpush1.msra.mxu0 0.0
  %5777 = vmatprep.subr.mxu0 0.0
  %5778 = vmatpush1.msra.mxu0 0.0
  %5779 = vmatprep.subr.mxu0 0.0
  %5780 = vmatpush1.msra.mxu0 0.0
  %5781 = vmatprep.subr.mxu0 0.0
  %5782 = vmatpush1.msra.mxu0 0.0
  %5783 = vmatprep.mubr.f32.mxu0 0.0
  %5784 = vmatmul.mubr.f32.gmra.mrb[0].mxu0 %v5717
  %v5785 = vpop.f32.mrb[0].mxu0
  %v5786 = vadd.f32 0.0, %v5785
  %v5787 = vpop.f32.mrb[0].mxu0
  %5788 = vdwg.mxu0
  %v5789 = vadd.f32 %v5067, %v5786
  %v5791 = vsel %vm328, %v5383, 0
  %v5794 = vsel %vm328, %v5467, 0
  %5796 = vmatprep.subr.mxu0 0.0
  %5797 = vmatpush1.xpose.msra.mxu0 %v5794
  %5798 = vmatprep.subr.mxu0 0.0
  %5799 = vmatpush1.xpose.msra.mxu0 0.0
  %5800 = vmatprep.subr.mxu0 0.0
  %5801 = vmatpush1.xpose.msra.mxu0 0.0
  %5802 = vmatprep.subr.mxu0 0.0
  %5803 = vmatpush1.xpose.msra.mxu0 0.0
  %5804 = vmatprep.subr.mxu0 0.0
  %5805 = vmatpush1.xpose.msra.mxu0 0.0
  %5806 = vmatprep.subr.mxu0 0.0
  %5807 = vmatpush1.xpose.msra.mxu0 0.0
  %5808 = vmatprep.subr.mxu0 0.0
  %5809 = vmatpush1.xpose.msra.mxu0 0.0
  %5810 = vmatprep.subr.mxu0 0.0
  %5811 = vmatpush1.xpose.msra.mxu0 0.0
  %5812 = vmatprep.subr.mxu0 0.0
  %5813 = vmatpush1.xpose.msra.mxu0 0.0
  %5814 = vmatprep.subr.mxu0 0.0
  %5815 = vmatpush1.xpose.msra.mxu0 0.0
  %5816 = vmatprep.subr.mxu0 0.0
  %5817 = vmatpush1.xpose.msra.mxu0 0.0
  %5818 = vmatprep.subr.mxu0 0.0
  %5819 = vmatpush1.xpose.msra.mxu0 0.0
  %5820 = vmatprep.subr.mxu0 0.0
  %5821 = vmatpush1.xpose.msra.mxu0 0.0
  %5822 = vmatprep.subr.mxu0 0.0
  %5823 = vmatpush1.xpose.msra.mxu0 0.0
  %5824 = vmatprep.subr.mxu0 0.0
  %5825 = vmatpush1.xpose.msra.mxu0 0.0
  %5826 = vmatprep.subr.mxu0 0.0
  %5827 = vmatpush1.xpose.msra.mxu0 0.0
  %5828 = vmatprep.subr.mxu0 0.0
  %5829 = vmatpush1.xpose.msra.mxu0 0.0
  %5830 = vmatprep.subr.mxu0 0.0
  %5831 = vmatpush1.xpose.msra.mxu0 0.0
  %5832 = vmatprep.subr.mxu0 0.0
  %5833 = vmatpush1.xpose.msra.mxu0 0.0
  %5834 = vmatprep.subr.mxu0 0.0
  %5835 = vmatpush1.xpose.msra.mxu0 0.0
  %5836 = vmatprep.subr.mxu0 0.0
  %5837 = vmatpush1.xpose.msra.mxu0 0.0
  %5838 = vmatprep.subr.mxu0 0.0
  %5839 = vmatpush1.xpose.msra.mxu0 0.0
  %5840 = vmatprep.subr.mxu0 0.0
  %5841 = vmatpush1.xpose.msra.mxu0 0.0
  %5842 = vmatprep.subr.mxu0 0.0
  %5843 = vmatpush1.xpose.msra.mxu0 0.0
  %5844 = vmatprep.subr.mxu0 0.0
  %5845 = vmatpush1.xpose.msra.mxu0 0.0
  %5846 = vmatprep.subr.mxu0 0.0
  %5847 = vmatpush1.xpose.msra.mxu0 0.0
  %5848 = vmatprep.subr.mxu0 0.0
  %5849 = vmatpush1.xpose.msra.mxu0 0.0
  %5850 = vmatprep.subr.mxu0 0.0
  %5851 = vmatpush1.xpose.msra.mxu0 0.0
  %5852 = vmatprep.subr.mxu0 0.0
  %5853 = vmatpush1.xpose.msra.mxu0 0.0
  %5854 = vmatprep.subr.mxu0 0.0
  %5855 = vmatpush1.xpose.msra.mxu0 0.0
  %5856 = vmatprep.subr.mxu0 0.0
  %5857 = vmatpush1.xpose.msra.mxu0 0.0
  %5858 = vmatprep.subr.mxu0 0.0
  %5859 = vmatpush1.xpose.msra.mxu0 0.0
  %5860 = vmatprep.mubr.f32.mxu0 0.0
  %5861 = vmatmul.mubr.f32.gmra.mrb[0].mxu0 %v5791
  %v5862 = vpop.f32.mrb[0].mxu0
  %v5863 = vadd.f32 0.0, %v5862
  %v5864 = vpop.f32.mrb[0].mxu0
  %5865 = vdwg.mxu0
  %v5866 = vsel %vm328, %v5863, -inf
  %5867 = vmax.xlane.f32.xlu0 %v5866
  %v5868 = vpop.xlane.xlu0 %5867
  %v5869 = vsub.f32 %v5863, %v5868
  %v5870 = vmul.f32 %v5869, 1.442695
  %v5871 = vpow.pop %v5870
  %v5872 = vsel %vm328, %v5871, 0.0
  %5873 = vadd.xlane.f32.xlu0 %v5872
  %v5874 = vpop.xlane.xlu0 %5873
  %v5875 = vrcp.pop %v5874
  %v5876 = vmul.f32 %v5871, %v5875
  %v5878 = vsel %vm328, %v5876, 0
  %5880 = vmatprep.subr.mxu0 0.0
  %5881 = vmatpush1.msra.mxu0 %v5551
  %5882 = vmatprep.subr.mxu0 0.0
  %5883 = vmatpush1.msra.mxu0 0.0
  %5884 = vmatprep.subr.mxu0 0.0
  %5885 = vmatpush1.msra.mxu0 0.0
  %5886 = vmatprep.subr.mxu0 0.0
  %5887 = vmatpush1.msra.mxu0 0.0
  %5888 = vmatprep.subr.mxu0 0.0
  %5889 = vmatpush1.msra.mxu0 0.0
  %5890 = vmatprep.subr.mxu0 0.0
  %5891 = vmatpush1.msra.mxu0 0.0
  %5892 = vmatprep.subr.mxu0 0.0
  %5893 = vmatpush1.msra.mxu0 0.0
  %5894 = vmatprep.subr.mxu0 0.0
  %5895 = vmatpush1.msra.mxu0 0.0
  %5896 = vmatprep.subr.mxu0 0.0
  %5897 = vmatpush1.msra.mxu0 0.0
  %5898 = vmatprep.subr.mxu0 0.0
  %5899 = vmatpush1.msra.mxu0 0.0
  %5900 = vmatprep.subr.mxu0 0.0
  %5901 = vmatpush1.msra.mxu0 0.0
  %5902 = vmatprep.subr.mxu0 0.0
  %5903 = vmatpush1.msra.mxu0 0.0
  %5904 = vmatprep.subr.mxu0 0.0
  %5905 = vmatpush1.msra.mxu0 0.0
  %5906 = vmatprep.subr.mxu0 0.0
  %5907 = vmatpush1.msra.mxu0 0.0
  %5908 = vmatprep.subr.mxu0 0.0
  %5909 = vmatpush1.msra.mxu0 0.0
  %5910 = vmatprep.subr.mxu0 0.0
  %5911 = vmatpush1.msra.mxu0 0.0
  %5912 = vmatprep.subr.mxu0 0.0
  %5913 = vmatpush1.msra.mxu0 0.0
  %5914 = vmatprep.subr.mxu0 0.0
  %5915 = vmatpush1.msra.mxu0 0.0
  %5916 = vmatprep.subr.mxu0 0.0
  %5917 = vmatpush1.msra.mxu0 0.0
  %5918 = vmatprep.subr.mxu0 0.0
  %5919 = vmatpush1.msra.mxu0 0.0
  %5920 = vmatprep.subr.mxu0 0.0
  %5921 = vmatpush1.msra.mxu0 0.0
  %5922 = vmatprep.subr.mxu0 0.0
  %5923 = vmatpush1.msra.mxu0 0.0
  %5924 = vmatprep.subr.mxu0 0.0
  %5925 = vmatpush1.msra.mxu0 0.0
  %5926 = vmatprep.subr.mxu0 0.0
  %5927 = vmatpush1.msra.mxu0 0.0
  %5928 = vmatprep.subr.mxu0 0.0
  %5929 = vmatpush1.msra.mxu0 0.0
  %5930 = vmatprep.subr.mxu0 0.0
  %5931 = vmatpush1.msra.mxu0 0.0
  %5932 = vmatprep.subr.mxu0 0.0
  %5933 = vmatpush1.msra.mxu0 0.0
  %5934 = vmatprep.subr.mxu0 0.0
  %5935 = vmatpush1.msra.mxu0 0.0
  %5936 = vmatprep.subr.mxu0 0.0
  %5937 = vmatpush1.msra.mxu0 0.0
  %5938 = vmatprep.subr.mxu0 0.0
  %5939 = vmatpush1.msra.mxu0 0.0
  %5940 = vmatprep.subr.mxu0 0.0
  %5941 = vmatpush1.msra.mxu0 0.0
  %5942 = vmatprep.subr.mxu0 0.0
  %5943 = vmatpush1.msra.mxu0 0.0
  %5944 = vmatprep.mubr.f32.mxu0 0.0
  %5945 = vmatmul.mubr.f32.gmra.mrb[0].mxu0 %v5878
  %v5946 = vpop.f32.mrb[0].mxu0
  %v5947 = vadd.f32 0.0, %v5946
  %v5948 = vpop.f32.mrb[0].mxu0
  %5949 = vdwg.mxu0
  %v5951 = vsel %vm328, %v5947, 0
  %5953 = vmatprep.subr.mxu0 0.0
  %5954 = vmatpush1.msra.mxu0 %v5555
  %5955 = vmatprep.subr.mxu0 0.0
  %5956 = vmatpush1.msra.mxu0 0.0
  %5957 = vmatprep.subr.mxu0 0.0
  %5958 = vmatpush1.msra.mxu0 0.0
  %5959 = vmatprep.subr.mxu0 0.0
  %5960 = vmatpush1.msra.mxu0 0.0
  %5961 = vmatprep.subr.mxu0 0.0
  %5962 = vmatpush1.msra.mxu0 0.0
  %5963 = vmatprep.subr.mxu0 0.0
  %5964 = vmatpush1.msra.mxu0 0.0
  %5965 = vmatprep.subr.mxu0 0.0
  %5966 = vmatpush1.msra.mxu0 0.0
  %5967 = vmatprep.subr.mxu0 0.0
  %5968 = vmatpush1.msra.mxu0 0.0
  %5969 = vmatprep.subr.mxu0 0.0
  %5970 = vmatpush1.msra.mxu0 0.0
  %5971 = vmatprep.subr.mxu0 0.0
  %5972 = vmatpush1.msra.mxu0 0.0
  %5973 = vmatprep.subr.mxu0 0.0
  %5974 = vmatpush1.msra.mxu0 0.0
  %5975 = vmatprep.subr.mxu0 0.0
  %5976 = vmatpush1.msra.mxu0 0.0
  %5977 = vmatprep.subr.mxu0 0.0
  %5978 = vmatpush1.msra.mxu0 0.0
  %5979 = vmatprep.subr.mxu0 0.0
  %5980 = vmatpush1.msra.mxu0 0.0
  %5981 = vmatprep.subr.mxu0 0.0
  %5982 = vmatpush1.msra.mxu0 0.0
  %5983 = vmatprep.subr.mxu0 0.0
  %5984 = vmatpush1.msra.mxu0 0.0
  %5985 = vmatprep.subr.mxu0 0.0
  %5986 = vmatpush1.msra.mxu0 0.0
  %5987 = vmatprep.subr.mxu0 0.0
  %5988 = vmatpush1.msra.mxu0 0.0
  %5989 = vmatprep.subr.mxu0 0.0
  %5990 = vmatpush1.msra.mxu0 0.0
  %5991 = vmatprep.subr.mxu0 0.0
  %5992 = vmatpush1.msra.mxu0 0.0
  %5993 = vmatprep.subr.mxu0 0.0
  %5994 = vmatpush1.msra.mxu0 0.0
  %5995 = vmatprep.subr.mxu0 0.0
  %5996 = vmatpush1.msra.mxu0 0.0
  %5997 = vmatprep.subr.mxu0 0.0
  %5998 = vmatpush1.msra.mxu0 0.0
  %5999 = vmatprep.subr.mxu0 0.0
  %6000 = vmatpush1.msra.mxu0 0.0
  %6001 = vmatprep.subr.mxu0 0.0
  %6002 = vmatpush1.msra.mxu0 0.0
  %6003 = vmatprep.subr.mxu0 0.0
  %6004 = vmatpush1.msra.mxu0 0.0
  %6005 = vmatprep.subr.mxu0 0.0
  %6006 = vmatpush1.msra.mxu0 0.0
  %6007 = vmatprep.subr.mxu0 0.0
  %6008 = vmatpush1.msra.mxu0 0.0
  %6009 = vmatprep.subr.mxu0 0.0
  %6010 = vmatpush1.msra.mxu0 0.0
  %6011 = vmatprep.subr.mxu0 0.0
  %6012 = vmatpush1.msra.mxu0 0.0
  %6013 = vmatprep.subr.mxu0 0.0
  %6014 = vmatpush1.msra.mxu0 0.0
  %6015 = vmatprep.subr.mxu0 0.0
  %6016 = vmatpush1.msra.mxu0 0.0
  %6017 = vmatprep.mubr.f32.mxu0 0.0
  %6018 = vmatmul.mubr.f32.gmra.mrb[0].mxu0 %v5951
  %v6019 = vpop.f32.mrb[0].mxu0
  %v6020 = vadd.f32 0.0, %v6019
  %v6021 = vpop.f32.mrb[0].mxu0
  %6022 = vdwg.mxu0
  %v6023 = vadd.f32 %v5301, %v6020
  %v6024 = vadd.f32 %v3132, %v5789
  %v6025 = vadd.f32 %v3133, %v6023
  %v6026 = vlaneseq
  %v6027 = vshrl.u32 %v6026, 7
  %v6028 = vsub.s32 0, %v6027
  %v6029 = vrot.slane %v24, %v6028
  %v6030 = vadd.f32 %v6024, %v6029
  %v6031 = vadd.f32 %v6025, %v6029
  %v6032 = vsel %vm30, %v6030, 0.0
  %6033 = vadd.xlane.f32.xlu0 %v6032
  %v6034 = vpop.xlane.xlu0 %6033
  %v6035 = vsel %vm30, %v6031, 0.0
  %6036 = vadd.xlane.f32.xlu0 %v6035
  %v6037 = vpop.xlane.xlu0 %6036
  %v6038 = vmul.f32 %v6034, %v37
  %v6039 = vmul.f32 %v6037, %v37
  %v6040 = vsub.f32 %v6030, %v6038
  %v6041 = vsub.f32 %v6031, %v6039
  %v6042 = vmul.f32 %v6040, %v6040
  %v6043 = vmul.f32 %v6041, %v6041
  %v6044 = vsel %vm30, %v6042, 0.0
  %6045 = vadd.xlane.f32.xlu0 %v6044
  %v6046 = vpop.xlane.xlu0 %6045
  %v6047 = vsel %vm30, %v6043, 0.0
  %6048 = vadd.xlane.f32.xlu0 %v6047
  %v6049 = vpop.xlane.xlu0 %6048
  %v6050 = vmul.f32 %v6046, %v37
  %v6051 = vmul.f32 %v6049, %v37
  %v6052 = vadd.f32 %v6050, 1e-05
  %v6053 = vadd.f32 %v6051, 1e-05
  %v6054 = vrsqrt.pop %v6052
  %v6055 = vrsqrt.pop %v6053
  %v6056 = vmul.f32 %v6040, %v6054
  %v6057 = vmul.f32 %v6041, %v6055
  %v6058 = vlaneseq
  %v6059 = vshrl.u32 %v6058, 7
  %v6060 = vsub.s32 1, %v6059
  %v6061 = vrot.slane %v24, %v6060
  %v6062 = vmul.f32 %v6056, %v6061
  %v6063 = vmul.f32 %v6057, %v6061
  %v6064 = vlaneseq
  %v6065 = vshrl.u32 %v6064, 7
  %v6066 = vsub.s32 2, %v6065
  %v6067 = vrot.slane %v24, %v6066
  %v6068 = vadd.f32 %v6062, %v6067
  %v6069 = vadd.f32 %v6063, %v6067
  %s6070 = scalar_lea.vmem %s5, 32
  %v6071 = vld [vmem:[%s6070] sm:$0xff]
  %v6072 = vld [vmem:[%s6070 + $0x8] sm:$0xff]
  %v6073 = vld [vmem:[%s6070 + $0x10] sm:$0xff]
  %v6074 = vld [vmem:[%s6070 + $0x18] sm:$0xff]
  %v6075 = vlaneseq
  %v6076 = vshrl.u32 %v6075, 7
  %v6077 = vsub.s32 3, %v6076
  %v6078 = vrot.slane %v24, %v6077
  %v6080 = vsel %vm30, %v6068, 0
  %v6083 = vsel %vm30, %v6069, 0
  %6085 = vmatprep.subr.mxu0 0.0
  %6086 = vmatpush1.msra.mxu0 %v6071
  %6087 = vmatprep.subr.mxu0 0.0
  %6088 = vmatpush1.msra.mxu0 %v6072
  %6089 = vmatprep.subr.mxu0 0.0
  %6090 = vmatpush1.msra.mxu0 %v6073
  %6091 = vmatprep.subr.mxu0 0.0
  %6092 = vmatpush1.msra.mxu0 %v6074
  %6093 = vmatprep.subr.mxu0 0.0
  %6094 = vmatpush1.msra.mxu0 0.0
  %6095 = vmatprep.subr.mxu0 0.0
  %6096 = vmatpush1.msra.mxu0 0.0
  %6097 = vmatprep.subr.mxu0 0.0
  %6098 = vmatpush1.msra.mxu0 0.0
  %6099 = vmatprep.subr.mxu0 0.0
  %6100 = vmatpush1.msra.mxu0 0.0
  %6101 = vmatprep.subr.mxu0 0.0
  %6102 = vmatpush1.msra.mxu0 0.0
  %6103 = vmatprep.subr.mxu0 0.0
  %6104 = vmatpush1.msra.mxu0 0.0
  %6105 = vmatprep.subr.mxu0 0.0
  %6106 = vmatpush1.msra.mxu0 0.0
  %6107 = vmatprep.subr.mxu0 0.0
  %6108 = vmatpush1.msra.mxu0 0.0
  %6109 = vmatprep.subr.mxu0 0.0
  %6110 = vmatpush1.msra.mxu0 0.0
  %6111 = vmatprep.subr.mxu0 0.0
  %6112 = vmatpush1.msra.mxu0 0.0
  %6113 = vmatprep.subr.mxu0 0.0
  %6114 = vmatpush1.msra.mxu0 0.0
  %6115 = vmatprep.subr.mxu0 0.0
  %6116 = vmatpush1.msra.mxu0 0.0
  %6117 = vmatprep.subr.mxu0 0.0
  %6118 = vmatpush1.msra.mxu0 0.0
  %6119 = vmatprep.subr.mxu0 0.0
  %6120 = vmatpush1.msra.mxu0 0.0
  %6121 = vmatprep.subr.mxu0 0.0
  %6122 = vmatpush1.msra.mxu0 0.0
  %6123 = vmatprep.subr.mxu0 0.0
  %6124 = vmatpush1.msra.mxu0 0.0
  %6125 = vmatprep.subr.mxu0 0.0
  %6126 = vmatpush1.msra.mxu0 0.0
  %6127 = vmatprep.subr.mxu0 0.0
  %6128 = vmatpush1.msra.mxu0 0.0
  %6129 = vmatprep.subr.mxu0 0.0
  %6130 = vmatpush1.msra.mxu0 0.0
  %6131 = vmatprep.subr.mxu0 0.0
  %6132 = vmatpush1.msra.mxu0 0.0
  %6133 = vmatprep.subr.mxu0 0.0
  %6134 = vmatpush1.msra.mxu0 0.0
  %6135 = vmatprep.subr.mxu0 0.0
  %6136 = vmatpush1.msra.mxu0 0.0
  %6137 = vmatprep.subr.mxu0 0.0
  %6138 = vmatpush1.msra.mxu0 0.0
  %6139 = vmatprep.subr.mxu0 0.0
  %6140 = vmatpush1.msra.mxu0 0.0
  %6141 = vmatprep.subr.mxu0 0.0
  %6142 = vmatpush1.msra.mxu0 0.0
  %6143 = vmatprep.subr.mxu0 0.0
  %6144 = vmatpush1.msra.mxu0 0.0
  %6145 = vmatprep.subr.mxu0 0.0
  %6146 = vmatpush1.msra.mxu0 0.0
  %6147 = vmatprep.subr.mxu0 0.0
  %6148 = vmatpush1.msra.mxu0 0.0
  %6149 = vmatprep.mubr.f32.mxu0 0.0
  %6150 = vmatmul.mubr.f32.gmra.mrb[0].mxu0 %v6080
  %v6151 = vpop.f32.mrb[0].mxu0
  %v6152 = vadd.f32 %v6078, %v6151
  %v6153 = vpop.f32.mrb[0].mxu0
  %6154 = vmatprep.mubr.f32.mxu0 0.0
  %6155 = vmatmul.mubr.f32.gmra.mrb[0].mxu0 %v6083
  %v6156 = vpop.f32.mrb[0].mxu0
  %v6157 = vadd.f32 %v6078, %v6156
  %v6158 = vpop.f32.mrb[0].mxu0
  %6159 = vdwg.mxu0
  %v6160 = vadd.f32 %v6068, %v6152
  %v6161 = vadd.f32 %v6069, %v6157
  %v6162 = vsel %vm30, %v6160, 0.0
  %6163 = vadd.xlane.f32.xlu0 %v6162
  %v6164 = vpop.xlane.xlu0 %6163
  %v6165 = vsel %vm30, %v6161, 0.0
  %6166 = vadd.xlane.f32.xlu0 %v6165
  %v6167 = vpop.xlane.xlu0 %6166
  %v6168 = vmul.f32 %v6164, %v37
  %v6169 = vmul.f32 %v6167, %v37
  %v6170 = vsub.f32 %v6160, %v6168
  %v6171 = vsub.f32 %v6161, %v6169
  %v6172 = vmul.f32 %v6170, %v6170
  %v6173 = vmul.f32 %v6171, %v6171
  %v6174 = vsel %vm30, %v6172, 0.0
  %6175 = vadd.xlane.f32.xlu0 %v6174
  %v6176 = vpop.xlane.xlu0 %6175
  %v6177 = vsel %vm30, %v6173, 0.0
  %6178 = vadd.xlane.f32.xlu0 %v6177
  %v6179 = vpop.xlane.xlu0 %6178
  %v6180 = vmul.f32 %v6176, %v37
  %v6181 = vmul.f32 %v6179, %v37
  %v6182 = vadd.f32 %v6180, 1e-05
  %v6183 = vadd.f32 %v6181, 1e-05
  %v6184 = vrsqrt.pop %v6182
  %v6185 = vrsqrt.pop %v6183
  %v6186 = vmul.f32 %v6170, %v6184
  %v6187 = vmul.f32 %v6171, %v6185
  %v6188 = vlaneseq
  %v6189 = vshrl.u32 %v6188, 7
  %v6190 = vsub.s32 4, %v6189
  %v6191 = vrot.slane %v24, %v6190
  %v6192 = vmul.f32 %v6186, %v6191
  %v6193 = vmul.f32 %v6187, %v6191
  %v6194 = vlaneseq
  %v6195 = vshrl.u32 %v6194, 7
  %v6196 = vsub.s32 5, %v6195
  %v6197 = vrot.slane %v24, %v6196
  %v6198 = vadd.f32 %v6192, %v6197
  %v6199 = vadd.f32 %v6193, %v6197
  %v6201 = vrot.slane %v6199, 7
  %vm6203 = vcmask 1040384
  %v6204 = vsel %vm6203, %v6198, %v6201
  %s6205 = scalar_lea.vmem %s5, 64
  %v6206 = vld [vmem:[%s6205] sm:$0xff]
  %v6207 = vld [vmem:[%s6205 + $0x8] sm:$0xff]
  %v6208 = vld [vmem:[%s6205 + $0x10] sm:$0xff]
  %v6209 = vld [vmem:[%s6205 + $0x18] sm:$0xff]
  %v6210 = vlaneseq
  %v6211 = vshrl.u32 %v6210, 7
  %v6212 = vsub.s32 6, %v6211
  %v6213 = vrot.slane %v24, %v6212
  %v6215 = vsel %vm30, %v6204, 0
  %6217 = vmatprep.subr.mxu0 0.0
  %6218 = vmatpush1.msra.mxu0 %v6206
  %6219 = vmatprep.subr.mxu0 0.0
  %6220 = vmatpush1.msra.mxu0 %v6207
  %6221 = vmatprep.subr.mxu0 0.0
  %6222 = vmatpush1.msra.mxu0 %v6208
  %6223 = vmatprep.subr.mxu0 0.0
  %6224 = vmatpush1.msra.mxu0 %v6209
  %6225 = vmatprep.subr.mxu0 0.0
  %6226 = vmatpush1.msra.mxu0 0.0
  %6227 = vmatprep.subr.mxu0 0.0
  %6228 = vmatpush1.msra.mxu0 0.0
  %6229 = vmatprep.subr.mxu0 0.0
  %6230 = vmatpush1.msra.mxu0 0.0
  %6231 = vmatprep.subr.mxu0 0.0
  %6232 = vmatpush1.msra.mxu0 0.0
  %6233 = vmatprep.subr.mxu0 0.0
  %6234 = vmatpush1.msra.mxu0 0.0
  %6235 = vmatprep.subr.mxu0 0.0
  %6236 = vmatpush1.msra.mxu0 0.0
  %6237 = vmatprep.subr.mxu0 0.0
  %6238 = vmatpush1.msra.mxu0 0.0
  %6239 = vmatprep.subr.mxu0 0.0
  %6240 = vmatpush1.msra.mxu0 0.0
  %6241 = vmatprep.subr.mxu0 0.0
  %6242 = vmatpush1.msra.mxu0 0.0
  %6243 = vmatprep.subr.mxu0 0.0
  %6244 = vmatpush1.msra.mxu0 0.0
  %6245 = vmatprep.subr.mxu0 0.0
  %6246 = vmatpush1.msra.mxu0 0.0
  %6247 = vmatprep.subr.mxu0 0.0
  %6248 = vmatpush1.msra.mxu0 0.0
  %6249 = vmatprep.subr.mxu0 0.0
  %6250 = vmatpush1.msra.mxu0 0.0
  %6251 = vmatprep.subr.mxu0 0.0
  %6252 = vmatpush1.msra.mxu0 0.0
  %6253 = vmatprep.subr.mxu0 0.0
  %6254 = vmatpush1.msra.mxu0 0.0
  %6255 = vmatprep.subr.mxu0 0.0
  %6256 = vmatpush1.msra.mxu0 0.0
  %6257 = vmatprep.subr.mxu0 0.0
  %6258 = vmatpush1.msra.mxu0 0.0
  %6259 = vmatprep.subr.mxu0 0.0
  %6260 = vmatpush1.msra.mxu0 0.0
  %6261 = vmatprep.subr.mxu0 0.0
  %6262 = vmatpush1.msra.mxu0 0.0
  %6263 = vmatprep.subr.mxu0 0.0
  %6264 = vmatpush1.msra.mxu0 0.0
  %6265 = vmatprep.subr.mxu0 0.0
  %6266 = vmatpush1.msra.mxu0 0.0
  %6267 = vmatprep.subr.mxu0 0.0
  %6268 = vmatpush1.msra.mxu0 0.0
  %6269 = vmatprep.subr.mxu0 0.0
  %6270 = vmatpush1.msra.mxu0 0.0
  %6271 = vmatprep.subr.mxu0 0.0
  %6272 = vmatpush1.msra.mxu0 0.0
  %6273 = vmatprep.subr.mxu0 0.0
  %6274 = vmatpush1.msra.mxu0 0.0
  %6275 = vmatprep.subr.mxu0 0.0
  %6276 = vmatpush1.msra.mxu0 0.0
  %6277 = vmatprep.subr.mxu0 0.0
  %6278 = vmatpush1.msra.mxu0 0.0
  %6279 = vmatprep.subr.mxu0 0.0
  %6280 = vmatpush1.msra.mxu0 0.0
  %6281 = vmatprep.mubr.f32.mxu0 0.0
  %6282 = vmatmul.mubr.f32.gmra.mrb[0].mxu0 %v6215
  %v6283 = vpop.f32.mrb[0].mxu0
  %v6284 = vadd.f32 %v6213, %v6283
  %v6285 = vpop.f32.mrb[0].mxu0
  %6286 = vdwg.mxu0
  %s6287 = scalar_lea.vmem %s5, 96
  %v6288 = vld [vmem:[%s6287] sm:$0xff]
  %v6289 = vld [vmem:[%s6287 + $0x8] sm:$0xff]
  %v6290 = vld [vmem:[%s6287 + $0x10] sm:$0xff]
  %v6291 = vld [vmem:[%s6287 + $0x18] sm:$0xff]
  %v6292 = vlaneseq
  %v6293 = vshrl.u32 %v6292, 7
  %v6294 = vsub.s32 7, %v6293
  %v6295 = vrot.slane %v24, %v6294
  %v6297 = vsel %vm30, %v6284, 0
  %6299 = vmatprep.subr.mxu0 0.0
  %6300 = vmatpush1.msra.mxu0 %v6288
  %6301 = vmatprep.subr.mxu0 0.0
  %6302 = vmatpush1.msra.mxu0 %v6289
  %6303 = vmatprep.subr.mxu0 0.0
  %6304 = vmatpush1.msra.mxu0 %v6290
  %6305 = vmatprep.subr.mxu0 0.0
  %6306 = vmatpush1.msra.mxu0 %v6291
  %6307 = vmatprep.subr.mxu0 0.0
  %6308 = vmatpush1.msra.mxu0 0.0
  %6309 = vmatprep.subr.mxu0 0.0
  %6310 = vmatpush1.msra.mxu0 0.0
  %6311 = vmatprep.subr.mxu0 0.0
  %6312 = vmatpush1.msra.mxu0 0.0
  %6313 = vmatprep.subr.mxu0 0.0
  %6314 = vmatpush1.msra.mxu0 0.0
  %6315 = vmatprep.subr.mxu0 0.0
  %6316 = vmatpush1.msra.mxu0 0.0
  %6317 = vmatprep.subr.mxu0 0.0
  %6318 = vmatpush1.msra.mxu0 0.0
  %6319 = vmatprep.subr.mxu0 0.0
  %6320 = vmatpush1.msra.mxu0 0.0
  %6321 = vmatprep.subr.mxu0 0.0
  %6322 = vmatpush1.msra.mxu0 0.0
  %6323 = vmatprep.subr.mxu0 0.0
  %6324 = vmatpush1.msra.mxu0 0.0
  %6325 = vmatprep.subr.mxu0 0.0
  %6326 = vmatpush1.msra.mxu0 0.0
  %6327 = vmatprep.subr.mxu0 0.0
  %6328 = vmatpush1.msra.mxu0 0.0
  %6329 = vmatprep.subr.mxu0 0.0
  %6330 = vmatpush1.msra.mxu0 0.0
  %6331 = vmatprep.subr.mxu0 0.0
  %6332 = vmatpush1.msra.mxu0 0.0
  %6333 = vmatprep.subr.mxu0 0.0
  %6334 = vmatpush1.msra.mxu0 0.0
  %6335 = vmatprep.subr.mxu0 0.0
  %6336 = vmatpush1.msra.mxu0 0.0
  %6337 = vmatprep.subr.mxu0 0.0
  %6338 = vmatpush1.msra.mxu0 0.0
  %6339 = vmatprep.subr.mxu0 0.0
  %6340 = vmatpush1.msra.mxu0 0.0
  %6341 = vmatprep.subr.mxu0 0.0
  %6342 = vmatpush1.msra.mxu0 0.0
  %6343 = vmatprep.subr.mxu0 0.0
  %6344 = vmatpush1.msra.mxu0 0.0
  %6345 = vmatprep.subr.mxu0 0.0
  %6346 = vmatpush1.msra.mxu0 0.0
  %6347 = vmatprep.subr.mxu0 0.0
  %6348 = vmatpush1.msra.mxu0 0.0
  %6349 = vmatprep.subr.mxu0 0.0
  %6350 = vmatpush1.msra.mxu0 0.0
  %6351 = vmatprep.subr.mxu0 0.0
  %6352 = vmatpush1.msra.mxu0 0.0
  %6353 = vmatprep.subr.mxu0 0.0
  %6354 = vmatpush1.msra.mxu0 0.0
  %6355 = vmatprep.subr.mxu0 0.0
  %6356 = vmatpush1.msra.mxu0 0.0
  %6357 = vmatprep.subr.mxu0 0.0
  %6358 = vmatpush1.msra.mxu0 0.0
  %6359 = vmatprep.subr.mxu0 0.0
  %6360 = vmatpush1.msra.mxu0 0.0
  %6361 = vmatprep.subr.mxu0 0.0
  %6362 = vmatpush1.msra.mxu0 0.0
  %6363 = vmatprep.mubr.f32.mxu0 0.0
  %6364 = vmatmul.mubr.f32.gmra.mrb[0].mxu0 %v6297
  %v6365 = vpop.f32.mrb[0].mxu0
  %v6366 = vadd.f32 %v6295, %v6365
  %v6367 = vpop.f32.mrb[0].mxu0
  %6368 = vdwg.mxu0
  %6370 = vrot.lane.b32.xlu0 %v6366, 32
  %v6371 = vpop.permute.xlu0 %6370
  %v6373 = vsel %vm30, %v6204, %v6371
  %vm6374 = vcmask 517120
  %6375 = vst.msk [vmem:[%s6] sm:$0x3] %vm6374, %v6373
  // Predicated region
  $region26: #{bert_forward.1} parent=0 // pred_check
    _
  $region27: #{bert_forward.1} parent=0 // pred_check_branch
    %6377 = sbr.rel (0) target = $region29
  $region28: #{bert_forward.1} parent=0 // pred_region
    _
  $region29: #{bert_forward.1} parent=0 // pred_fallthru
    _
  // Predicated region
  $region30: #{bert_forward.1} parent=0 // pred_check
    _
  $region31: #{bert_forward.1} parent=0 // pred_check_branch
    %6379 = sbr.rel (0) target = $region33
  $region32: #{bert_forward.1} parent=0 // pred_region
    _
  $region33: #{bert_forward.1} parent=0 // pred_fallthru
    _

</llo_original>
